<compile_context>
chip_gen: v7x
topology: tpu7x:2x2x1
jax: 0.10.0
libtpu: 0.0.40
codegen_flags: <defaults>
</compile_context>

<pallas_src>
import functools

import jax
import jax.numpy as jnp
from jax import lax
from jax.experimental import pallas as pl
from jax.experimental.pallas import tpu as pltpu

# Matmul operand dtype.  Default f32 so the kernels also run under the CPU
# interpreter used for checking (its dot thunk rejects bf16 x bf16 -> f32).
# On real TPU hardware set this to jnp.bfloat16 for full-rate MXU.
_MM_DTYPE = jnp.float32

_VMEM_LIMIT = 32 * 1024 * 1024        # safe everywhere incl. v7x (64 MiB physical)
_VMEM_LIMIT_BIG = 64 * 1024 * 1024    # attention pass holds full-C k / vT blocks
_VMEM = pl.BlockSpec(memory_space=pltpu.MemorySpace.VMEM)


def _pick_tile(dim, max_tile=256):
    """Largest tile <= max_tile that divides dim and is a multiple of 8 (else dim)."""
    if dim <= max_tile:
        return dim
    for t in range(max_tile, 7, -8):
        if dim % t == 0:
            return t
    return dim


# ----------------------------- Pallas kernels -----------------------------

def _tab_proj_kernel(x_ref, wk_ref, wv_ref, bk_ref, bv_ref, k_ref, vt_ref):
    """TABlock k/v projections for one channel-row tile (v emitted transposed).

    x_ref  : (1, TC, N)  channel-row tile of x
    w*_ref : (N, N)      pre-transposed (in, out) weights
    k_ref  : (1, TC, N)  k tile
    vt_ref : (1, N, TC)  v tile, transposed so the attention pass never transposes
    """
    x = x_ref[0].astype(_MM_DTYPE)
    wk = wk_ref[...].astype(_MM_DTYPE)
    wv = wv_ref[...].astype(_MM_DTYPE)
    k = jnp.dot(x, wk, preferred_element_type=jnp.float32) + bk_ref[...]
    v = jnp.dot(x, wv, preferred_element_type=jnp.float32) + bv_ref[...]
    k_ref[0] = k
    vt_ref[0] = v.T   # one transpose per channel tile, amortized over the q tiles


def _tab_attn_kernel(xq_ref, k_ref, vt_ref, xr_ref, wq_ref, bq_ref, out_ref, *, norm):
    """Channel attention with fused permute + residual.

    xq_ref : (1, TC, N)  channel-row tile of x (q projection source)
    k_ref  : (1, C,  N)  full k   (precomputed, constant index over the c axis)
    vt_ref : (1, N,  C)  full v^T (precomputed)
    xr_ref : (1, N, TC)  x viewed as (N, C), column tile (residual, permuted layout)
    out    : (1, N, TC)  column tile of (attn @ v)^T + residual
    """
    xq = xq_ref[0].astype(_MM_DTYPE)                                     # (TC, N)
    q = jnp.dot(xq, wq_ref[...].astype(_MM_DTYPE),
                preferred_element_type=jnp.float32) + bq_ref[...]        # (TC, N)

    k = k_ref[0].astype(_MM_DTYPE)                                       # (C, N)
    # attn = q @ k^T * norm  -> (TC, C); softmax over the full-C last dim is exact.
    attn = lax.dot_general(q.astype(_MM_DTYPE), k,
                           (((1,), (1,)), ((), ())),
                           preferred_element_type=jnp.float32) * norm
    attn = attn - jnp.max(attn, axis=-1, keepdims=True)
    attn = jnp.exp(attn)
    attn = attn / jnp.sum(attn, axis=-1, keepdims=True)

    vt = vt_ref[0].astype(_MM_DTYPE)                                     # (N, C)
    # yT = (attn @ v)^T produced directly: contract the shared C axis (A @ B^T form).
    yt = lax.dot_general(vt, attn.astype(_MM_DTYPE),
                         (((1,), (1,)), ((), ())),
                         preferred_element_type=jnp.float32)             # (N, TC)
    # PyTorch quirk "(attn @ v).transpose(1,2).reshape(B,C,N)" == row-major flatten
    # of y^T, so write in (N, TC) layout and add the (N, C)-viewed residual here.
    out_ref[0] = yt + xr_ref[0]


def _conv1x1_kernel(x_ref, w_ref, b_ref, y_ref):
    # x block: (1, Cin, HW); w block: (TCout, Cin); b block: (TCout, 1).
    x = x_ref[0].astype(_MM_DTYPE)
    w = w_ref[...].astype(_MM_DTYPE)
    y_ref[0] = jnp.dot(w, x, preferred_element_type=jnp.float32) + b_ref[...]


def _linear_kernel(x_ref, w_ref, b_ref, o_ref):
    # nn.Linear with pre-transposed weight: y = x @ W (in, out) + b (1, out).
    o_ref[...] = (jnp.dot(x_ref[...].astype(_MM_DTYPE),
                          w_ref[...].astype(_MM_DTYPE),
                          preferred_element_type=jnp.float32) + b_ref[...])


def _head_kernel(x_ref, w1_ref, b1_ref, w2_ref, b2_ref, out_ref):
    """Fused fc_score / fc_weight MLPs + weighted-mean score for one image.

    x_ref : (1, M, D) tokens (+ projected obj token)
    w1    : (D, 2D)  = [fc_score.W1^T | fc_weight.W1^T]
    w2    : (2D, 2)  block-diagonal: col0 = fc_score.W2, col1 = fc_weight.W2
    out   : (1, 1, 1) per-image score
    """
    xb = x_ref[0].astype(_MM_DTYPE)                                      # (M, D)
    h = jnp.dot(xb, w1_ref[...].astype(_MM_DTYPE),
                preferred_element_type=jnp.float32) + b1_ref[...]
    h = jnp.maximum(h, 0.0)                                              # (M, 2D) ReLU (both branches)
    z = (jnp.dot(h.astype(_MM_DTYPE), w2_ref[...].astype(_MM_DTYPE),
                 preferred_element_type=jnp.float32) + b2_ref[...])      # (M, 2)
    f = jnp.maximum(z[:, 0:1], 0.0)                                      # fc_score: ReLU
    w = jax.nn.sigmoid(z[:, 1:2])                                        # fc_weight: Sigmoid
    num = jnp.sum(f * w, axis=0, keepdims=True)                          # (1, 1)
    den = jnp.sum(w, axis=0, keepdims=True)                              # (1, 1)
    out_ref[0] = num / den


# ----------------------------- kernel wrappers -----------------------------

def tablock(x, p):
    """TABlock(dim=N) applied to x of shape (B, C, N)."""
    B, C, N = x.shape
    tc = _pick_tile(C, 256)
    norm = float(N) ** (-0.5)

    # Pass 1: k / v projections, computed once per channel tile (hoisted out of
    # the attention tile loop); v is emitted pre-transposed as (N, C).
    k, vt = pl.pallas_call(
        _tab_proj_kernel,
        out_shape=(jax.ShapeDtypeStruct((B, C, N), jnp.float32),
                   jax.ShapeDtypeStruct((B, N, C), jnp.float32)),
        grid=(B, C // tc),
        in_specs=[
            pl.BlockSpec((1, tc, N), lambda b, c: (b, c, 0)),   # x row tile
            pl.BlockSpec((N, N), lambda b, c: (0, 0)),          # wk
            pl.BlockSpec((N, N), lambda b, c: (0, 0)),          # wv
            pl.BlockSpec((1, N), lambda b, c: (0, 0)),          # bk
            pl.BlockSpec((1, N), lambda b, c: (0, 0)),          # bv
        ],
        out_specs=(pl.BlockSpec((1, tc, N), lambda b, c: (b, c, 0)),
                   pl.BlockSpec((1, N, tc), lambda b, c: (b, 0, c))),
        compiler_params=pltpu.CompilerParams(
            dimension_semantics=("parallel", "parallel"),
            vmem_limit_bytes=_VMEM_LIMIT),
    )(x, p["wk"], p["wv"], p["bk"], p["bv"])

    # Pass 2: q projection + attention + fused permute/residual, written in the
    # permuted (N, C) layout so the reshape back to (B, C, N) is free.
    x_nc = x.reshape(B, N, C)  # metadata-only row-major re-view (residual source)
    kernel = functools.partial(_tab_attn_kernel, norm=norm)
    y_nc = pl.pallas_call(
        kernel,
        out_shape=jax.ShapeDtypeStruct((B, N, C), jnp.float32),
        grid=(B, C // tc),
        in_specs=[
            pl.BlockSpec((1, tc, N), lambda b, c: (b, c, 0)),   # x row tile (q)
            pl.BlockSpec((1, C, N), lambda b, c: (b, 0, 0)),    # full k
            pl.BlockSpec((1, N, C), lambda b, c: (b, 0, 0)),    # full v^T
            pl.BlockSpec((1, N, tc), lambda b, c: (b, 0, c)),   # residual view
            pl.BlockSpec((N, N), lambda b, c: (0, 0)),          # wq
            pl.BlockSpec((1, N), lambda b, c: (0, 0)),          # bq
        ],
        out_specs=pl.BlockSpec((1, N, tc), lambda b, c: (b, 0, c)),
        compiler_params=pltpu.CompilerParams(
            dimension_semantics=("parallel", "parallel"),
            vmem_limit_bytes=_VMEM_LIMIT_BIG),
    )(x, k, vt, x_nc, p["wq"], p["bq"])
    # Row-major flatten of (B, N, C) == PyTorch (attn@v).transpose(1,2).reshape(B,C,N) + x.
    return y_nc.reshape(B, C, N)


def conv1x1(x, w, b):
    """1x1 Conv2d on flattened-spatial layout: x (B, Cin, HW) -> (B, Cout, HW)."""
    B, Cin, HW = x.shape
    Cout = w.shape[0]
    tco = _pick_tile(Cout, 256)
    return pl.pallas_call(
        _conv1x1_kernel,
        out_shape=jax.ShapeDtypeStruct((B, Cout, HW), jnp.float32),
        grid=(B, Cout // tco),
        in_specs=[
            pl.BlockSpec((1, Cin, HW), lambda i, c: (i, 0, 0)),
            pl.BlockSpec((tco, Cin), lambda i, c: (c, 0)),
            pl.BlockSpec((tco, 1), lambda i, c: (c, 0)),
        ],
        out_specs=pl.BlockSpec((1, tco, HW), lambda i, c: (i, c, 0)),
        compiler_params=pltpu.CompilerParams(
            dimension_semantics=("parallel", "parallel"),
            vmem_limit_bytes=_VMEM_LIMIT),
    )(x, w, b)


def linear(x, w, b):
    """nn.Linear with pre-transposed weight: x (M, in) @ w (in, out) + b (1, out)."""
    return pl.pallas_call(
        _linear_kernel,
        out_shape=jax.ShapeDtypeStruct((x.shape[0], w.shape[1]), jnp.float32),
        in_specs=[_VMEM, _VMEM, _VMEM],
        out_specs=_VMEM,
        compiler_params=pltpu.CompilerParams(vmem_limit_bytes=_VMEM_LIMIT),
    )(x, w, b)


def head(xcat, p):
    """Fused fc_score / fc_weight + per-image weighted-mean score. xcat: (B, M, D)."""
    B, M, D = xcat.shape
    out = pl.pallas_call(
        _head_kernel,
        out_shape=jax.ShapeDtypeStruct((B, 1, 1), jnp.float32),
        grid=(B,),
        in_specs=[
            pl.BlockSpec((1, M, D), lambda b: (b, 0, 0)),
            pl.BlockSpec((D, 2 * D), lambda b: (0, 0)),
            pl.BlockSpec((1, 2 * D), lambda b: (0, 0)),
            pl.BlockSpec((2 * D, 2), lambda b: (0, 0)),
            pl.BlockSpec((1, 2), lambda b: (0, 0)),
        ],
        out_specs=pl.BlockSpec((1, 1, 1), lambda b: (b, 0, 0)),
        compiler_params=pltpu.CompilerParams(
            dimension_semantics=("parallel",),
            vmem_limit_bytes=_VMEM_LIMIT),
    )(xcat, p["head_w1"], p["head_b1"], p["head_w2"], p["head_b2"])
    return out[:, 0, 0]                                                   # (B,)


# ----------------------------- parameters -----------------------------

def _init_linear(key, in_dim, out_dim, scale=0.05):
    kw, kb = jax.random.split(key)
    w = scale * jax.random.normal(kw, (in_dim, out_dim), jnp.float32)     # (in, out)
    b = scale * jax.random.normal(kb, (1, out_dim), jnp.float32)
    return w, b


def init_params(key, embed_dim, input_size, obj_dim, num_tab=2):
    N = input_size * input_size
    D = embed_dim // 2
    keys = iter(jax.random.split(key, 64))
    params = {}

    def tab_params():
        p = {}
        for name in ("q", "k", "v"):
            w, b = _init_linear(next(keys), N, N)
            p["w" + name] = w.astype(_MM_DTYPE)    # pre-transposed (in, out)
            p["b" + name] = b
        return p

    params["tablock1"] = [tab_params() for _ in range(num_tab)]
    params["tablock2"] = [tab_params() for _ in range(num_tab)]
    params["tablock3"] = [tab_params() for _ in range(num_tab)]

    for name, cin, cout in (("conv1", embed_dim * 4, embed_dim),
                            ("conv2", embed_dim, D),
                            ("conv3", D, D)):
        w, b = _init_linear(next(keys), cin, cout)
        params[name + "_w"] = w.T.astype(_MM_DTYPE)        # (Cout, Cin): y = W @ x
        params[name + "_b"] = b.reshape(cout, 1)

    # Head: fuse fc_score / fc_weight layer-1 into one (D, 2D) weight, and the two
    # (D, 1) layer-2 heads into a block-diagonal (2D, 2) weight.
    ws1, bs1 = _init_linear(next(keys), D, D)
    ww1, bw1 = _init_linear(next(keys), D, D)
    ws2, bs2 = _init_linear(next(keys), D, 1)
    ww2, bw2 = _init_linear(next(keys), D, 1)
    params["head_w1"] = jnp.concatenate([ws1, ww1], axis=1).astype(_MM_DTYPE)  # (D, 2D)
    params["head_b1"] = jnp.concatenate([bs1, bw1], axis=1)                    # (1, 2D)
    w2 = jnp.zeros((2 * D, 2), jnp.float32)
    w2 = w2.at[:D, 0].set(ws2[:, 0]).at[D:, 1].set(ww2[:, 0])
    params["head_w2"] = w2.astype(_MM_DTYPE)                                   # (2D, 2)
    params["head_b2"] = jnp.concatenate([bs2, bw2], axis=1)                    # (1, 2)

    w, b = _init_linear(next(keys), obj_dim, D)
    params["fc_dim_w"], params["fc_dim_b"] = w.astype(_MM_DTYPE), b
    w, b = _init_linear(next(keys), embed_dim, 1)
    params["fc_ce_w"], params["fc_ce_b"] = w.astype(_MM_DTYPE), b
    return params


# ----------------------------- forward -----------------------------

def maniqa_forward(params, vit_feature, block_feats, obj):
    """
    vit_feature : (B, 1+HW, E)  -- stand-in for self.vit.forward_features(x)
    block_feats : tuple of 4 arrays (B, 1+HW, E) -- stand-ins for hook outputs 6..9
    obj         : (B, 1, OBJ_DIM)
    """
    B = vit_feature.shape[0]
    cls_x = vit_feature[:, 0, :]                                     # (B, E)

    # extract_feature: cat block outputs (drop cls token) along channels.
    x = jnp.concatenate([f[:, 1:, :] for f in block_feats], axis=2)  # (B, HW, 4E)
    x = jnp.swapaxes(x, 1, 2)                                        # 'b (h w) c -> b c (h w)'

    for p in params["tablock1"]:
        x = tablock(x, p)
    x = conv1x1(x, params["conv1_w"], params["conv1_b"])             # (B, E, HW)
    # TODO(synk): MANIQA SwinTransformer1 (external module, not in source) -> identity stub.

    for p in params["tablock2"]:
        x = tablock(x, p)
    x = conv1x1(x, params["conv2_w"], params["conv2_b"])             # (B, E//2, HW)
    # TODO(synk): swintransformer2 identity stub.

    for p in params["tablock3"]:
        x = tablock(x, p)
    x = conv1x1(x, params["conv3_w"], params["conv3_b"])             # (B, E//2, HW)
    # TODO(synk): swintransformer3 identity stub.

    x = jnp.swapaxes(x, 1, 2)                                        # 'b c h w -> b (h w) c'

    obj_p = linear(obj.reshape(B, -1), params["fc_dim_w"], params["fc_dim_b"])  # (B, E//2)
    xcat = jnp.concatenate([x, obj_p[:, None, :]], axis=1)           # (B, HW+1, E//2)

    score = head(xcat, params)                                       # (B,)
    ce = linear(cls_x, params["fc_ce_w"], params["fc_ce_b"])         # (B, 1)
    return score, ce


# ----------------------------- main -----------------------------

if __name__ == "__main__":
    B = 2
    EMBED_DIM = 32          # must be even (embed_dim // 2 used downstream)
    INPUT_SIZE = 8          # img_size // patch_size  ->  HW = 64 tokens
    HW = INPUT_SIZE * INPUT_SIZE
    OBJ_DIM = 128           # small stand-in for the 2048-dim obj feature

    root = jax.random.PRNGKey(0)
    k_par, k_feat, k_b6, k_b7, k_b8, k_b9, k_obj = jax.random.split(root, 7)

    params = init_params(k_par, EMBED_DIM, INPUT_SIZE, OBJ_DIM, num_tab=2)

    # TODO(synk): timm ViT backbone is not translatable here; its feature output and
    # the 4 hooked block outputs are supplied as deterministic synthetic inputs.
    vit_feature = 0.1 * jax.random.normal(k_feat, (B, HW + 1, EMBED_DIM), jnp.float32)
    block_feats = tuple(0.1 * jax.random.normal(k, (B, HW + 1, EMBED_DIM), jnp.float32)
                        for k in (k_b6, k_b7, k_b8, k_b9))
    obj = jax.random.normal(k_obj, (B, 1, OBJ_DIM), jnp.float32)

    fwd = jax.jit(maniqa_forward)
    score, ce = fwd(params, vit_feature, block_feats, obj)
    jax.block_until_ready((score, ce))

    assert score.shape == (B,) and ce.shape == (B, 1)
    assert bool(jnp.all(jnp.isfinite(score))) and bool(jnp.all(jnp.isfinite(ce)))
    print("KERNEL_OK")
</pallas_src>

<mosaic_0001>
module attributes {stable_mosaic.version = 11 : i64} {
  func.func @_tab_proj_kernel(%arg0: i32, %arg1: i32, %arg2: memref<1x128x64xf32, #tpu.memory_space<vmem>>, %arg3: memref<64x64xf32, #tpu.memory_space<vmem>>, %arg4: memref<64x64xf32, #tpu.memory_space<vmem>>, %arg5: memref<1x64xf32, #tpu.memory_space<vmem>>, %arg6: memref<1x64xf32, #tpu.memory_space<vmem>>, %arg7: memref<1x128x64xf32, #tpu.memory_space<vmem>>, %arg8: memref<1x64x128xf32, #tpu.memory_space<vmem>>) attributes {dimension_semantics = [#tpu.dimension_semantics<parallel>, #tpu.dimension_semantics<parallel>], iteration_bounds = array<i64: 2, 1>, scalar_prefetch = 0 : i64, scratch_operands = 0 : i64, tpu.core_type = #tpu.core_type<tc>, window_params = [{transform_indices = @transform_0, window_bounds = array<i64: 1, 128, 64>}, {pipeline_mode = #tpu.pipeline_mode<synchronous>, transform_indices = @transform_1, window_bounds = array<i64: 64, 64>}, {pipeline_mode = #tpu.pipeline_mode<synchronous>, transform_indices = @transform_2, window_bounds = array<i64: 64, 64>}, {pipeline_mode = #tpu.pipeline_mode<synchronous>, transform_indices = @transform_3, window_bounds = array<i64: 1, 64>}, {pipeline_mode = #tpu.pipeline_mode<synchronous>, transform_indices = @transform_4, window_bounds = array<i64: 1, 64>}, {transform_indices = @transform_5, window_bounds = array<i64: 1, 128, 64>}, {transform_indices = @transform_6, window_bounds = array<i64: 1, 64, 128>}]} {
    %c0 = arith.constant 0 : index
    %c0_0 = arith.constant 0 : index
    %c0_1 = arith.constant 0 : index
    %0 = vector.load %arg2[%c0, %c0_0, %c0_1] : memref<1x128x64xf32, #tpu.memory_space<vmem>>, vector<1x128x64xf32>
    %1 = vector.shape_cast %0 : vector<1x128x64xf32> to vector<128x64xf32>
    %c0_2 = arith.constant 0 : index
    %c0_3 = arith.constant 0 : index
    %2 = vector.load %arg3[%c0_2, %c0_3] : memref<64x64xf32, #tpu.memory_space<vmem>>, vector<64x64xf32>
    %c0_4 = arith.constant 0 : index
    %c0_5 = arith.constant 0 : index
    %3 = vector.load %arg4[%c0_4, %c0_5] : memref<64x64xf32, #tpu.memory_space<vmem>>, vector<64x64xf32>
    %cst = arith.constant dense<0.000000e+00> : vector<128x64xf32>
    %4 = tpu.matmul %1, %2, %cst {dimension_numbers = #tpu.dot_dimension_numbers<[1], [0], [0], [1], [0, 0, 1, 1], [], []>} : vector<128x64xf32>, vector<64x64xf32>, vector<128x64xf32> -> vector<128x64xf32>
    %c0_6 = arith.constant 0 : index
    %c0_7 = arith.constant 0 : index
    %5 = vector.load %arg5[%c0_6, %c0_7] : memref<1x64xf32, #tpu.memory_space<vmem>>, vector<1x64xf32>
    %6 = vector.broadcast %5 : vector<1x64xf32> to vector<128x64xf32>
    %7 = arith.addf %4, %6 : vector<128x64xf32>
    %cst_8 = arith.constant dense<0.000000e+00> : vector<128x64xf32>
    %8 = tpu.matmul %1, %3, %cst_8 {dimension_numbers = #tpu.dot_dimension_numbers<[1], [0], [0], [1], [0, 0, 1, 1], [], []>} : vector<128x64xf32>, vector<64x64xf32>, vector<128x64xf32> -> vector<128x64xf32>
    %c0_9 = arith.constant 0 : index
    %c0_10 = arith.constant 0 : index
    %9 = vector.load %arg6[%c0_9, %c0_10] : memref<1x64xf32, #tpu.memory_space<vmem>>, vector<1x64xf32>
    %10 = vector.broadcast %9 : vector<1x64xf32> to vector<128x64xf32>
    %11 = arith.addf %8, %10 : vector<128x64xf32>
    %c0_11 = arith.constant 0 : index
    %c0_12 = arith.constant 0 : index
    %c0_13 = arith.constant 0 : index
    %12 = vector.load %arg7[%c0_11, %c0_12, %c0_13] : memref<1x128x64xf32, #tpu.memory_space<vmem>>, vector<1x128x64xf32>
    %13 = vector.shape_cast %12 : vector<1x128x64xf32> to vector<128x64xf32>
    %14 = vector.shape_cast %7 : vector<128x64xf32> to vector<1x128x64xf32>
    tpu.vector_store %arg7[%c0_11, %c0_12, %c0_13], %14 {strides = array<i32>} : memref<1x128x64xf32, #tpu.memory_space<vmem>>, vector<1x128x64xf32>,
    %15 = tpu.transpose %11, [1, 0] : vector<128x64xf32> -> vector<64x128xf32>
    %c0_14 = arith.constant 0 : index
    %c0_15 = arith.constant 0 : index
    %c0_16 = arith.constant 0 : index
    %16 = vector.load %arg8[%c0_14, %c0_15, %c0_16] : memref<1x64x128xf32, #tpu.memory_space<vmem>>, vector<1x64x128xf32>
    %17 = vector.shape_cast %16 : vector<1x64x128xf32> to vector<64x128xf32>
    %18 = vector.shape_cast %15 : vector<64x128xf32> to vector<1x64x128xf32>
    tpu.vector_store %arg8[%c0_14, %c0_15, %c0_16], %18 {strides = array<i32>} : memref<1x64x128xf32, #tpu.memory_space<vmem>>, vector<1x64x128xf32>,
    return
  }
  func.func @transform_0(%arg0: i32, %arg1: i32) -> (i32, i32, i32) {
    %c0_i32 = arith.constant 0 : i32
    %c0_i32_0 = arith.constant 0 : i32
    return %arg0, %arg1, %c0_i32 : i32, i32, i32
  }
  func.func @transform_1(%arg0: i32, %arg1: i32) -> (i32, i32) {
    %c0_i32 = arith.constant 0 : i32
    %c0_i32_0 = arith.constant 0 : i32
    %c0_i32_1 = arith.constant 0 : i32
    return %c0_i32, %c0_i32_0 : i32, i32
  }
  func.func @transform_2(%arg0: i32, %arg1: i32) -> (i32, i32) {
    %c0_i32 = arith.constant 0 : i32
    %c0_i32_0 = arith.constant 0 : i32
    %c0_i32_1 = arith.constant 0 : i32
    return %c0_i32, %c0_i32_0 : i32, i32
  }
  func.func @transform_3(%arg0: i32, %arg1: i32) -> (i32, i32) {
    %c0_i32 = arith.constant 0 : i32
    %c0_i32_0 = arith.constant 0 : i32
    %c0_i32_1 = arith.constant 0 : i32
    return %c0_i32, %c0_i32_0 : i32, i32
  }
  func.func @transform_4(%arg0: i32, %arg1: i32) -> (i32, i32) {
    %c0_i32 = arith.constant 0 : i32
    %c0_i32_0 = arith.constant 0 : i32
    %c0_i32_1 = arith.constant 0 : i32
    return %c0_i32, %c0_i32_0 : i32, i32
  }
  func.func @transform_5(%arg0: i32, %arg1: i32) -> (i32, i32, i32) {
    %c0_i32 = arith.constant 0 : i32
    %c0_i32_0 = arith.constant 0 : i32
    return %arg0, %arg1, %c0_i32 : i32, i32, i32
  }
  func.func @transform_6(%arg0: i32, %arg1: i32) -> (i32, i32, i32) {
    %c0_i32 = arith.constant 0 : i32
    %c0_i32_0 = arith.constant 0 : i32
    return %arg0, %c0_i32, %arg1 : i32, i32, i32
  }
}

module attributes {stable_mosaic.version = 11 : i64} {
  func.func @_tab_attn_kernel(%arg0: i32, %arg1: i32, %arg2: memref<1x128x64xf32, #tpu.memory_space<vmem>>, %arg3: memref<1x128x64xf32, #tpu.memory_space<vmem>>, %arg4: memref<1x64x128xf32, #tpu.memory_space<vmem>>, %arg5: memref<1x64x128xf32, #tpu.memory_space<vmem>>, %arg6: memref<64x64xf32, #tpu.memory_space<vmem>>, %arg7: memref<1x64xf32, #tpu.memory_space<vmem>>, %arg8: memref<1x64x128xf32, #tpu.memory_space<vmem>>) attributes {dimension_semantics = [#tpu.dimension_semantics<parallel>, #tpu.dimension_semantics<parallel>], iteration_bounds = array<i64: 2, 1>, scalar_prefetch = 0 : i64, scratch_operands = 0 : i64, tpu.core_type = #tpu.core_type<tc>, window_params = [{transform_indices = @transform_0, window_bounds = array<i64: 1, 128, 64>}, {transform_indices = @transform_1, window_bounds = array<i64: 1, 128, 64>}, {transform_indices = @transform_2, window_bounds = array<i64: 1, 64, 128>}, {transform_indices = @transform_3, window_bounds = array<i64: 1, 64, 128>}, {pipeline_mode = #tpu.pipeline_mode<synchronous>, transform_indices = @transform_4, window_bounds = array<i64: 64, 64>}, {pipeline_mode = #tpu.pipeline_mode<synchronous>, transform_indices = @transform_5, window_bounds = array<i64: 1, 64>}, {transform_indices = @transform_6, window_bounds = array<i64: 1, 64, 128>}]} {
    %c0 = arith.constant 0 : index
    %c0_0 = arith.constant 0 : index
    %c0_1 = arith.constant 0 : index
    %0 = vector.load %arg2[%c0, %c0_0, %c0_1] : memref<1x128x64xf32, #tpu.memory_space<vmem>>, vector<1x128x64xf32>
    %1 = vector.shape_cast %0 : vector<1x128x64xf32> to vector<128x64xf32>
    %c0_2 = arith.constant 0 : index
    %c0_3 = arith.constant 0 : index
    %2 = vector.load %arg6[%c0_2, %c0_3] : memref<64x64xf32, #tpu.memory_space<vmem>>, vector<64x64xf32>
    %cst = arith.constant dense<0.000000e+00> : vector<128x64xf32>
    %3 = tpu.matmul %1, %2, %cst {dimension_numbers = #tpu.dot_dimension_numbers<[1], [0], [0], [1], [0, 0, 1, 1], [], []>} : vector<128x64xf32>, vector<64x64xf32>, vector<128x64xf32> -> vector<128x64xf32>
    %c0_4 = arith.constant 0 : index
    %c0_5 = arith.constant 0 : index
    %4 = vector.load %arg7[%c0_4, %c0_5] : memref<1x64xf32, #tpu.memory_space<vmem>>, vector<1x64xf32>
    %5 = vector.broadcast %4 : vector<1x64xf32> to vector<128x64xf32>
    %6 = arith.addf %3, %5 : vector<128x64xf32>
    %c0_6 = arith.constant 0 : index
    %c0_7 = arith.constant 0 : index
    %c0_8 = arith.constant 0 : index
    %7 = vector.load %arg3[%c0_6, %c0_7, %c0_8] : memref<1x128x64xf32, #tpu.memory_space<vmem>>, vector<1x128x64xf32>
    %8 = vector.shape_cast %7 : vector<1x128x64xf32> to vector<128x64xf32>
    %cst_9 = arith.constant dense<0.000000e+00> : vector<128x128xf32>
    %9 = tpu.matmul %6, %8, %cst_9 {dimension_numbers = #tpu.dot_dimension_numbers<[1], [1], [0], [0], [0, 0, 1, 0], [], []>} : vector<128x64xf32>, vector<128x64xf32>, vector<128x128xf32> -> vector<128x128xf32>
    %cst_10 = arith.constant 1.250000e-01 : f32
    %10 = vector.broadcast %cst_10 : f32 to vector<128x128xf32>
    %11 = arith.mulf %9, %10 : vector<128x128xf32>
    %cst_11 = arith.constant dense<0xFF800000> : vector<128xf32>
    %12 = vector.multi_reduction <maximumf>, %11, %cst_11 [1] : vector<128x128xf32> to vector<128xf32>
    %13 = vector.shape_cast %12 : vector<128xf32> to vector<128x1xf32>
    %14 = vector.broadcast %13 : vector<128x1xf32> to vector<128x128xf32>
    %15 = arith.subf %11, %14 : vector<128x128xf32>
    %16 = math.exp %15 : vector<128x128xf32>
    %cst_12 = arith.constant dense<0.000000e+00> : vector<128xf32>
    %17 = vector.multi_reduction <add>, %16, %cst_12 [1] : vector<128x128xf32> to vector<128xf32>
    %18 = vector.shape_cast %17 : vector<128xf32> to vector<128x1xf32>
    %19 = vector.broadcast %18 : vector<128x1xf32> to vector<128x128xf32>
    %20 = arith.divf %16, %19 : vector<128x128xf32>
    %c0_13 = arith.constant 0 : index
    %c0_14 = arith.constant 0 : index
    %c0_15 = arith.constant 0 : index
    %21 = vector.load %arg4[%c0_13, %c0_14, %c0_15] : memref<1x64x128xf32, #tpu.memory_space<vmem>>, vector<1x64x128xf32>
    %22 = vector.shape_cast %21 : vector<1x64x128xf32> to vector<64x128xf32>
    %cst_16 = arith.constant dense<0.000000e+00> : vector<64x128xf32>
    %23 = tpu.matmul %22, %20, %cst_16 {dimension_numbers = #tpu.dot_dimension_numbers<[1], [1], [0], [0], [0, 0, 1, 0], [], []>} : vector<64x128xf32>, vector<128x128xf32>, vector<64x128xf32> -> vector<64x128xf32>
    %c0_17 = arith.constant 0 : index
    %c0_18 = arith.constant 0 : index
    %c0_19 = arith.constant 0 : index
    %24 = vector.load %arg5[%c0_17, %c0_18, %c0_19] : memref<1x64x128xf32, #tpu.memory_space<vmem>>, vector<1x64x128xf32>
    %25 = vector.shape_cast %24 : vector<1x64x128xf32> to vector<64x128xf32>
    %26 = arith.addf %23, %25 : vector<64x128xf32>
    %c0_20 = arith.constant 0 : index
    %c0_21 = arith.constant 0 : index
    %c0_22 = arith.constant 0 : index
    %27 = vector.load %arg8[%c0_20, %c0_21, %c0_22] : memref<1x64x128xf32, #tpu.memory_space<vmem>>, vector<1x64x128xf32>
    %28 = vector.shape_cast %27 : vector<1x64x128xf32> to vector<64x128xf32>
    %29 = vector.shape_cast %26 : vector<64x128xf32> to vector<1x64x128xf32>
    tpu.vector_store %arg8[%c0_20, %c0_21, %c0_22], %29 {strides = array<i32>} : memref<1x64x128xf32, #tpu.memory_space<vmem>>, vector<1x64x128xf32>,
    return
  }
  func.func @transform_0(%arg0: i32, %arg1: i32) -> (i32, i32, i32) {
    %c0_i32 = arith.constant 0 : i32
    %c0_i32_0 = arith.constant 0 : i32
    return %arg0, %arg1, %c0_i32 : i32, i32, i32
  }
  func.func @transform_1(%arg0: i32, %arg1: i32) -> (i32, i32, i32) {
    %c0_i32 = arith.constant 0 : i32
    %c0_i32_0 = arith.constant 0 : i32
    %c0_i32_1 = arith.constant 0 : i32
    return %arg0, %c0_i32, %c0_i32_0 : i32, i32, i32
  }
  func.func @transform_2(%arg0: i32, %arg1: i32) -> (i32, i32, i32) {
    %c0_i32 = arith.constant 0 : i32
    %c0_i32_0 = arith.constant 0 : i32
    %c0_i32_1 = arith.constant 0 : i32
    return %arg0, %c0_i32, %c0_i32_0 : i32, i32, i32
  }
  func.func @transform_3(%arg0: i32, %arg1: i32) -> (i32, i32, i32) {
    %c0_i32 = arith.constant 0 : i32
    %c0_i32_0 = arith.constant 0 : i32
    return %arg0, %c0_i32, %arg1 : i32, i32, i32
  }
  func.func @transform_4(%arg0: i32, %arg1: i32) -> (i32, i32) {
    %c0_i32 = arith.constant 0 : i32
    %c0_i32_0 = arith.constant 0 : i32
    %c0_i32_1 = arith.constant 0 : i32
    return %c0_i32, %c0_i32_0 : i32, i32
  }
  func.func @transform_5(%arg0: i32, %arg1: i32) -> (i32, i32) {
    %c0_i32 = arith.constant 0 : i32
    %c0_i32_0 = arith.constant 0 : i32
    %c0_i32_1 = arith.constant 0 : i32
    return %c0_i32, %c0_i32_0 : i32, i32
  }
  func.func @transform_6(%arg0: i32, %arg1: i32) -> (i32, i32, i32) {
    %c0_i32 = arith.constant 0 : i32
    %c0_i32_0 = arith.constant 0 : i32
    return %arg0, %c0_i32, %arg1 : i32, i32, i32
  }
}

module attributes {stable_mosaic.version = 11 : i64} {
  func.func @_conv1x1_kernel(%arg0: i32, %arg1: i32, %arg2: memref<1x128x64xf32, #tpu.memory_space<vmem>>, %arg3: memref<32x128xf32, #tpu.memory_space<vmem>>, %arg4: memref<32x1xf32, #tpu.memory_space<vmem>>, %arg5: memref<1x32x64xf32, #tpu.memory_space<vmem>>) attributes {dimension_semantics = [#tpu.dimension_semantics<parallel>, #tpu.dimension_semantics<parallel>], iteration_bounds = array<i64: 2, 1>, scalar_prefetch = 0 : i64, scratch_operands = 0 : i64, tpu.core_type = #tpu.core_type<tc>, window_params = [{transform_indices = @transform_0, window_bounds = array<i64: 1, 128, 64>}, {transform_indices = @transform_1, window_bounds = array<i64: 32, 128>}, {transform_indices = @transform_2, window_bounds = array<i64: 32, 1>}, {transform_indices = @transform_3, window_bounds = array<i64: 1, 32, 64>}]} {
    %c0 = arith.constant 0 : index
    %c0_0 = arith.constant 0 : index
    %c0_1 = arith.constant 0 : index
    %0 = vector.load %arg2[%c0, %c0_0, %c0_1] : memref<1x128x64xf32, #tpu.memory_space<vmem>>, vector<1x128x64xf32>
    %1 = vector.shape_cast %0 : vector<1x128x64xf32> to vector<128x64xf32>
    %c0_2 = arith.constant 0 : index
    %c0_3 = arith.constant 0 : index
    %2 = vector.load %arg3[%c0_2, %c0_3] : memref<32x128xf32, #tpu.memory_space<vmem>>, vector<32x128xf32>
    %cst = arith.constant dense<0.000000e+00> : vector<32x64xf32>
    %3 = tpu.matmul %2, %1, %cst {dimension_numbers = #tpu.dot_dimension_numbers<[1], [0], [0], [1], [0, 0, 1, 1], [], []>} : vector<32x128xf32>, vector<128x64xf32>, vector<32x64xf32> -> vector<32x64xf32>
    %c0_4 = arith.constant 0 : index
    %c0_5 = arith.constant 0 : index
    %4 = vector.load %arg4[%c0_4, %c0_5] : memref<32x1xf32, #tpu.memory_space<vmem>>, vector<32x1xf32>
    %5 = vector.broadcast %4 : vector<32x1xf32> to vector<32x64xf32>
    %6 = arith.addf %3, %5 : vector<32x64xf32>
    %c0_6 = arith.constant 0 : index
    %c0_7 = arith.constant 0 : index
    %c0_8 = arith.constant 0 : index
    %7 = vector.load %arg5[%c0_6, %c0_7, %c0_8] : memref<1x32x64xf32, #tpu.memory_space<vmem>>, vector<1x32x64xf32>
    %8 = vector.shape_cast %7 : vector<1x32x64xf32> to vector<32x64xf32>
    %9 = vector.shape_cast %6 : vector<32x64xf32> to vector<1x32x64xf32>
    tpu.vector_store %arg5[%c0_6, %c0_7, %c0_8], %9 {strides = array<i32>} : memref<1x32x64xf32, #tpu.memory_space<vmem>>, vector<1x32x64xf32>,
    return
  }
  func.func @transform_0(%arg0: i32, %arg1: i32) -> (i32, i32, i32) {
    %c0_i32 = arith.constant 0 : i32
    %c0_i32_0 = arith.constant 0 : i32
    %c0_i32_1 = arith.constant 0 : i32
    return %arg0, %c0_i32, %c0_i32_0 : i32, i32, i32
  }
  func.func @transform_1(%arg0: i32, %arg1: i32) -> (i32, i32) {
    %c0_i32 = arith.constant 0 : i32
    %c0_i32_0 = arith.constant 0 : i32
    return %arg1, %c0_i32 : i32, i32
  }
  func.func @transform_2(%arg0: i32, %arg1: i32) -> (i32, i32) {
    %c0_i32 = arith.constant 0 : i32
    %c0_i32_0 = arith.constant 0 : i32
    return %arg1, %c0_i32 : i32, i32
  }
  func.func @transform_3(%arg0: i32, %arg1: i32) -> (i32, i32, i32) {
    %c0_i32 = arith.constant 0 : i32
    %c0_i32_0 = arith.constant 0 : i32
    return %arg0, %arg1, %c0_i32 : i32, i32, i32
  }
}

module attributes {stable_mosaic.version = 11 : i64} {
  func.func @_tab_proj_kernel(%arg0: i32, %arg1: i32, %arg2: memref<1x32x64xf32, #tpu.memory_space<vmem>>, %arg3: memref<64x64xf32, #tpu.memory_space<vmem>>, %arg4: memref<64x64xf32, #tpu.memory_space<vmem>>, %arg5: memref<1x64xf32, #tpu.memory_space<vmem>>, %arg6: memref<1x64xf32, #tpu.memory_space<vmem>>, %arg7: memref<1x32x64xf32, #tpu.memory_space<vmem>>, %arg8: memref<1x64x32xf32, #tpu.memory_space<vmem>>) attributes {dimension_semantics = [#tpu.dimension_semantics<parallel>, #tpu.dimension_semantics<parallel>], iteration_bounds = array<i64: 2, 1>, scalar_prefetch = 0 : i64, scratch_operands = 0 : i64, tpu.core_type = #tpu.core_type<tc>, window_params = [{transform_indices = @transform_0, window_bounds = array<i64: 1, 32, 64>}, {pipeline_mode = #tpu.pipeline_mode<synchronous>, transform_indices = @transform_1, window_bounds = array<i64: 64, 64>}, {pipeline_mode = #tpu.pipeline_mode<synchronous>, transform_indices = @transform_2, window_bounds = array<i64: 64, 64>}, {pipeline_mode = #tpu.pipeline_mode<synchronous>, transform_indices = @transform_3, window_bounds = array<i64: 1, 64>}, {pipeline_mode = #tpu.pipeline_mode<synchronous>, transform_indices = @transform_4, window_bounds = array<i64: 1, 64>}, {transform_indices = @transform_5, window_bounds = array<i64: 1, 32, 64>}, {transform_indices = @transform_6, window_bounds = array<i64: 1, 64, 32>}]} {
    %c0 = arith.constant 0 : index
    %c0_0 = arith.constant 0 : index
    %c0_1 = arith.constant 0 : index
    %0 = vector.load %arg2[%c0, %c0_0, %c0_1] : memref<1x32x64xf32, #tpu.memory_space<vmem>>, vector<1x32x64xf32>
    %1 = vector.shape_cast %0 : vector<1x32x64xf32> to vector<32x64xf32>
    %c0_2 = arith.constant 0 : index
    %c0_3 = arith.constant 0 : index
    %2 = vector.load %arg3[%c0_2, %c0_3] : memref<64x64xf32, #tpu.memory_space<vmem>>, vector<64x64xf32>
    %c0_4 = arith.constant 0 : index
    %c0_5 = arith.constant 0 : index
    %3 = vector.load %arg4[%c0_4, %c0_5] : memref<64x64xf32, #tpu.memory_space<vmem>>, vector<64x64xf32>
    %cst = arith.constant dense<0.000000e+00> : vector<32x64xf32>
    %4 = tpu.matmul %1, %2, %cst {dimension_numbers = #tpu.dot_dimension_numbers<[1], [0], [0], [1], [0, 0, 1, 1], [], []>} : vector<32x64xf32>, vector<64x64xf32>, vector<32x64xf32> -> vector<32x64xf32>
    %c0_6 = arith.constant 0 : index
    %c0_7 = arith.constant 0 : index
    %5 = vector.load %arg5[%c0_6, %c0_7] : memref<1x64xf32, #tpu.memory_space<vmem>>, vector<1x64xf32>
    %6 = vector.broadcast %5 : vector<1x64xf32> to vector<32x64xf32>
    %7 = arith.addf %4, %6 : vector<32x64xf32>
    %cst_8 = arith.constant dense<0.000000e+00> : vector<32x64xf32>
    %8 = tpu.matmul %1, %3, %cst_8 {dimension_numbers = #tpu.dot_dimension_numbers<[1], [0], [0], [1], [0, 0, 1, 1], [], []>} : vector<32x64xf32>, vector<64x64xf32>, vector<32x64xf32> -> vector<32x64xf32>
    %c0_9 = arith.constant 0 : index
    %c0_10 = arith.constant 0 : index
    %9 = vector.load %arg6[%c0_9, %c0_10] : memref<1x64xf32, #tpu.memory_space<vmem>>, vector<1x64xf32>
    %10 = vector.broadcast %9 : vector<1x64xf32> to vector<32x64xf32>
    %11 = arith.addf %8, %10 : vector<32x64xf32>
    %c0_11 = arith.constant 0 : index
    %c0_12 = arith.constant 0 : index
    %c0_13 = arith.constant 0 : index
    %12 = vector.load %arg7[%c0_11, %c0_12, %c0_13] : memref<1x32x64xf32, #tpu.memory_space<vmem>>, vector<1x32x64xf32>
    %13 = vector.shape_cast %12 : vector<1x32x64xf32> to vector<32x64xf32>
    %14 = vector.shape_cast %7 : vector<32x64xf32> to vector<1x32x64xf32>
    tpu.vector_store %arg7[%c0_11, %c0_12, %c0_13], %14 {strides = array<i32>} : memref<1x32x64xf32, #tpu.memory_space<vmem>>, vector<1x32x64xf32>,
    %15 = tpu.transpose %11, [1, 0] : vector<32x64xf32> -> vector<64x32xf32>
    %c0_14 = arith.constant 0 : index
    %c0_15 = arith.constant 0 : index
    %c0_16 = arith.constant 0 : index
    %16 = vector.load %arg8[%c0_14, %c0_15, %c0_16] : memref<1x64x32xf32, #tpu.memory_space<vmem>>, vector<1x64x32xf32>
    %17 = vector.shape_cast %16 : vector<1x64x32xf32> to vector<64x32xf32>
    %18 = vector.shape_cast %15 : vector<64x32xf32> to vector<1x64x32xf32>
    tpu.vector_store %arg8[%c0_14, %c0_15, %c0_16], %18 {strides = array<i32>} : memref<1x64x32xf32, #tpu.memory_space<vmem>>, vector<1x64x32xf32>,
    return
  }
  func.func @transform_0(%arg0: i32, %arg1: i32) -> (i32, i32, i32) {
    %c0_i32 = arith.constant 0 : i32
    %c0_i32_0 = arith.constant 0 : i32
    return %arg0, %arg1, %c0_i32 : i32, i32, i32
  }
  func.func @transform_1(%arg0: i32, %arg1: i32) -> (i32, i32) {
    %c0_i32 = arith.constant 0 : i32
    %c0_i32_0 = arith.constant 0 : i32
    %c0_i32_1 = arith.constant 0 : i32
    return %c0_i32, %c0_i32_0 : i32, i32
  }
  func.func @transform_2(%arg0: i32, %arg1: i32) -> (i32, i32) {
    %c0_i32 = arith.constant 0 : i32
    %c0_i32_0 = arith.constant 0 : i32
    %c0_i32_1 = arith.constant 0 : i32
    return %c0_i32, %c0_i32_0 : i32, i32
  }
  func.func @transform_3(%arg0: i32, %arg1: i32) -> (i32, i32) {
    %c0_i32 = arith.constant 0 : i32
    %c0_i32_0 = arith.constant 0 : i32
    %c0_i32_1 = arith.constant 0 : i32
    return %c0_i32, %c0_i32_0 : i32, i32
  }
  func.func @transform_4(%arg0: i32, %arg1: i32) -> (i32, i32) {
    %c0_i32 = arith.constant 0 : i32
    %c0_i32_0 = arith.constant 0 : i32
    %c0_i32_1 = arith.constant 0 : i32
    return %c0_i32, %c0_i32_0 : i32, i32
  }
  func.func @transform_5(%arg0: i32, %arg1: i32) -> (i32, i32, i32) {
    %c0_i32 = arith.constant 0 : i32
    %c0_i32_0 = arith.constant 0 : i32
    return %arg0, %arg1, %c0_i32 : i32, i32, i32
  }
  func.func @transform_6(%arg0: i32, %arg1: i32) -> (i32, i32, i32) {
    %c0_i32 = arith.constant 0 : i32
    %c0_i32_0 = arith.constant 0 : i32
    return %arg0, %c0_i32, %arg1 : i32, i32, i32
  }
}

module attributes {stable_mosaic.version = 11 : i64} {
  func.func @_tab_attn_kernel(%arg0: i32, %arg1: i32, %arg2: memref<1x32x64xf32, #tpu.memory_space<vmem>>, %arg3: memref<1x32x64xf32, #tpu.memory_space<vmem>>, %arg4: memref<1x64x32xf32, #tpu.memory_space<vmem>>, %arg5: memref<1x64x32xf32, #tpu.memory_space<vmem>>, %arg6: memref<64x64xf32, #tpu.memory_space<vmem>>, %arg7: memref<1x64xf32, #tpu.memory_space<vmem>>, %arg8: memref<1x64x32xf32, #tpu.memory_space<vmem>>) attributes {dimension_semantics = [#tpu.dimension_semantics<parallel>, #tpu.dimension_semantics<parallel>], iteration_bounds = array<i64: 2, 1>, scalar_prefetch = 0 : i64, scratch_operands = 0 : i64, tpu.core_type = #tpu.core_type<tc>, window_params = [{transform_indices = @transform_0, window_bounds = array<i64: 1, 32, 64>}, {transform_indices = @transform_1, window_bounds = array<i64: 1, 32, 64>}, {transform_indices = @transform_2, window_bounds = array<i64: 1, 64, 32>}, {transform_indices = @transform_3, window_bounds = array<i64: 1, 64, 32>}, {pipeline_mode = #tpu.pipeline_mode<synchronous>, transform_indices = @transform_4, window_bounds = array<i64: 64, 64>}, {pipeline_mode = #tpu.pipeline_mode<synchronous>, transform_indices = @transform_5, window_bounds = array<i64: 1, 64>}, {transform_indices = @transform_6, window_bounds = array<i64: 1, 64, 32>}]} {
    %c0 = arith.constant 0 : index
    %c0_0 = arith.constant 0 : index
    %c0_1 = arith.constant 0 : index
    %0 = vector.load %arg2[%c0, %c0_0, %c0_1] : memref<1x32x64xf32, #tpu.memory_space<vmem>>, vector<1x32x64xf32>
    %1 = vector.shape_cast %0 : vector<1x32x64xf32> to vector<32x64xf32>
    %c0_2 = arith.constant 0 : index
    %c0_3 = arith.constant 0 : index
    %2 = vector.load %arg6[%c0_2, %c0_3] : memref<64x64xf32, #tpu.memory_space<vmem>>, vector<64x64xf32>
    %cst = arith.constant dense<0.000000e+00> : vector<32x64xf32>
    %3 = tpu.matmul %1, %2, %cst {dimension_numbers = #tpu.dot_dimension_numbers<[1], [0], [0], [1], [0, 0, 1, 1], [], []>} : vector<32x64xf32>, vector<64x64xf32>, vector<32x64xf32> -> vector<32x64xf32>
    %c0_4 = arith.constant 0 : index
    %c0_5 = arith.constant 0 : index
    %4 = vector.load %arg7[%c0_4, %c0_5] : memref<1x64xf32, #tpu.memory_space<vmem>>, vector<1x64xf32>
    %5 = vector.broadcast %4 : vector<1x64xf32> to vector<32x64xf32>
    %6 = arith.addf %3, %5 : vector<32x64xf32>
    %c0_6 = arith.constant 0 : index
    %c0_7 = arith.constant 0 : index
    %c0_8 = arith.constant 0 : index
    %7 = vector.load %arg3[%c0_6, %c0_7, %c0_8] : memref<1x32x64xf32, #tpu.memory_space<vmem>>, vector<1x32x64xf32>
    %8 = vector.shape_cast %7 : vector<1x32x64xf32> to vector<32x64xf32>
    %cst_9 = arith.constant dense<0.000000e+00> : vector<32x32xf32>
    %9 = tpu.matmul %6, %8, %cst_9 {dimension_numbers = #tpu.dot_dimension_numbers<[1], [1], [0], [0], [0, 0, 1, 0], [], []>} : vector<32x64xf32>, vector<32x64xf32>, vector<32x32xf32> -> vector<32x32xf32>
    %cst_10 = arith.constant 1.250000e-01 : f32
    %10 = vector.broadcast %cst_10 : f32 to vector<32x32xf32>
    %11 = arith.mulf %9, %10 : vector<32x32xf32>
    %cst_11 = arith.constant dense<0xFF800000> : vector<32xf32>
    %12 = vector.multi_reduction <maximumf>, %11, %cst_11 [1] : vector<32x32xf32> to vector<32xf32>
    %13 = vector.shape_cast %12 : vector<32xf32> to vector<32x1xf32>
    %14 = vector.broadcast %13 : vector<32x1xf32> to vector<32x32xf32>
    %15 = arith.subf %11, %14 : vector<32x32xf32>
    %16 = math.exp %15 : vector<32x32xf32>
    %cst_12 = arith.constant dense<0.000000e+00> : vector<32xf32>
    %17 = vector.multi_reduction <add>, %16, %cst_12 [1] : vector<32x32xf32> to vector<32xf32>
    %18 = vector.shape_cast %17 : vector<32xf32> to vector<32x1xf32>
    %19 = vector.broadcast %18 : vector<32x1xf32> to vector<32x32xf32>
    %20 = arith.divf %16, %19 : vector<32x32xf32>
    %c0_13 = arith.constant 0 : index
    %c0_14 = arith.constant 0 : index
    %c0_15 = arith.constant 0 : index
    %21 = vector.load %arg4[%c0_13, %c0_14, %c0_15] : memref<1x64x32xf32, #tpu.memory_space<vmem>>, vector<1x64x32xf32>
    %22 = vector.shape_cast %21 : vector<1x64x32xf32> to vector<64x32xf32>
    %cst_16 = arith.constant dense<0.000000e+00> : vector<64x32xf32>
    %23 = tpu.matmul %22, %20, %cst_16 {dimension_numbers = #tpu.dot_dimension_numbers<[1], [1], [0], [0], [0, 0, 1, 0], [], []>} : vector<64x32xf32>, vector<32x32xf32>, vector<64x32xf32> -> vector<64x32xf32>
    %c0_17 = arith.constant 0 : index
    %c0_18 = arith.constant 0 : index
    %c0_19 = arith.constant 0 : index
    %24 = vector.load %arg5[%c0_17, %c0_18, %c0_19] : memref<1x64x32xf32, #tpu.memory_space<vmem>>, vector<1x64x32xf32>
    %25 = vector.shape_cast %24 : vector<1x64x32xf32> to vector<64x32xf32>
    %26 = arith.addf %23, %25 : vector<64x32xf32>
    %c0_20 = arith.constant 0 : index
    %c0_21 = arith.constant 0 : index
    %c0_22 = arith.constant 0 : index
    %27 = vector.load %arg8[%c0_20, %c0_21, %c0_22] : memref<1x64x32xf32, #tpu.memory_space<vmem>>, vector<1x64x32xf32>
    %28 = vector.shape_cast %27 : vector<1x64x32xf32> to vector<64x32xf32>
    %29 = vector.shape_cast %26 : vector<64x32xf32> to vector<1x64x32xf32>
    tpu.vector_store %arg8[%c0_20, %c0_21, %c0_22], %29 {strides = array<i32>} : memref<1x64x32xf32, #tpu.memory_space<vmem>>, vector<1x64x32xf32>,
    return
  }
  func.func @transform_0(%arg0: i32, %arg1: i32) -> (i32, i32, i32) {
    %c0_i32 = arith.constant 0 : i32
    %c0_i32_0 = arith.constant 0 : i32
    return %arg0, %arg1, %c0_i32 : i32, i32, i32
  }
  func.func @transform_1(%arg0: i32, %arg1: i32) -> (i32, i32, i32) {
    %c0_i32 = arith.constant 0 : i32
    %c0_i32_0 = arith.constant 0 : i32
    %c0_i32_1 = arith.constant 0 : i32
    return %arg0, %c0_i32, %c0_i32_0 : i32, i32, i32
  }
  func.func @transform_2(%arg0: i32, %arg1: i32) -> (i32, i32, i32) {
    %c0_i32 = arith.constant 0 : i32
    %c0_i32_0 = arith.constant 0 : i32
    %c0_i32_1 = arith.constant 0 : i32
    return %arg0, %c0_i32, %c0_i32_0 : i32, i32, i32
  }
  func.func @transform_3(%arg0: i32, %arg1: i32) -> (i32, i32, i32) {
    %c0_i32 = arith.constant 0 : i32
    %c0_i32_0 = arith.constant 0 : i32
    return %arg0, %c0_i32, %arg1 : i32, i32, i32
  }
  func.func @transform_4(%arg0: i32, %arg1: i32) -> (i32, i32) {
    %c0_i32 = arith.constant 0 : i32
    %c0_i32_0 = arith.constant 0 : i32
    %c0_i32_1 = arith.constant 0 : i32
    return %c0_i32, %c0_i32_0 : i32, i32
  }
  func.func @transform_5(%arg0: i32, %arg1: i32) -> (i32, i32) {
    %c0_i32 = arith.constant 0 : i32
    %c0_i32_0 = arith.constant 0 : i32
    %c0_i32_1 = arith.constant 0 : i32
    return %c0_i32, %c0_i32_0 : i32, i32
  }
  func.func @transform_6(%arg0: i32, %arg1: i32) -> (i32, i32, i32) {
    %c0_i32 = arith.constant 0 : i32
    %c0_i32_0 = arith.constant 0 : i32
    return %arg0, %c0_i32, %arg1 : i32, i32, i32
  }
}

module attributes {stable_mosaic.version = 11 : i64} {
  func.func @_conv1x1_kernel(%arg0: i32, %arg1: i32, %arg2: memref<1x32x64xf32, #tpu.memory_space<vmem>>, %arg3: memref<16x32xf32, #tpu.memory_space<vmem>>, %arg4: memref<16x1xf32, #tpu.memory_space<vmem>>, %arg5: memref<1x16x64xf32, #tpu.memory_space<vmem>>) attributes {dimension_semantics = [#tpu.dimension_semantics<parallel>, #tpu.dimension_semantics<parallel>], iteration_bounds = array<i64: 2, 1>, scalar_prefetch = 0 : i64, scratch_operands = 0 : i64, tpu.core_type = #tpu.core_type<tc>, window_params = [{transform_indices = @transform_0, window_bounds = array<i64: 1, 32, 64>}, {transform_indices = @transform_1, window_bounds = array<i64: 16, 32>}, {transform_indices = @transform_2, window_bounds = array<i64: 16, 1>}, {transform_indices = @transform_3, window_bounds = array<i64: 1, 16, 64>}]} {
    %c0 = arith.constant 0 : index
    %c0_0 = arith.constant 0 : index
    %c0_1 = arith.constant 0 : index
    %0 = vector.load %arg2[%c0, %c0_0, %c0_1] : memref<1x32x64xf32, #tpu.memory_space<vmem>>, vector<1x32x64xf32>
    %1 = vector.shape_cast %0 : vector<1x32x64xf32> to vector<32x64xf32>
    %c0_2 = arith.constant 0 : index
    %c0_3 = arith.constant 0 : index
    %2 = vector.load %arg3[%c0_2, %c0_3] : memref<16x32xf32, #tpu.memory_space<vmem>>, vector<16x32xf32>
    %cst = arith.constant dense<0.000000e+00> : vector<16x64xf32>
    %3 = tpu.matmul %2, %1, %cst {dimension_numbers = #tpu.dot_dimension_numbers<[1], [0], [0], [1], [0, 0, 1, 1], [], []>} : vector<16x32xf32>, vector<32x64xf32>, vector<16x64xf32> -> vector<16x64xf32>
    %c0_4 = arith.constant 0 : index
    %c0_5 = arith.constant 0 : index
    %4 = vector.load %arg4[%c0_4, %c0_5] : memref<16x1xf32, #tpu.memory_space<vmem>>, vector<16x1xf32>
    %5 = vector.broadcast %4 : vector<16x1xf32> to vector<16x64xf32>
    %6 = arith.addf %3, %5 : vector<16x64xf32>
    %c0_6 = arith.constant 0 : index
    %c0_7 = arith.constant 0 : index
    %c0_8 = arith.constant 0 : index
    %7 = vector.load %arg5[%c0_6, %c0_7, %c0_8] : memref<1x16x64xf32, #tpu.memory_space<vmem>>, vector<1x16x64xf32>
    %8 = vector.shape_cast %7 : vector<1x16x64xf32> to vector<16x64xf32>
    %9 = vector.shape_cast %6 : vector<16x64xf32> to vector<1x16x64xf32>
    tpu.vector_store %arg5[%c0_6, %c0_7, %c0_8], %9 {strides = array<i32>} : memref<1x16x64xf32, #tpu.memory_space<vmem>>, vector<1x16x64xf32>,
    return
  }
  func.func @transform_0(%arg0: i32, %arg1: i32) -> (i32, i32, i32) {
    %c0_i32 = arith.constant 0 : i32
    %c0_i32_0 = arith.constant 0 : i32
    %c0_i32_1 = arith.constant 0 : i32
    return %arg0, %c0_i32, %c0_i32_0 : i32, i32, i32
  }
  func.func @transform_1(%arg0: i32, %arg1: i32) -> (i32, i32) {
    %c0_i32 = arith.constant 0 : i32
    %c0_i32_0 = arith.constant 0 : i32
    return %arg1, %c0_i32 : i32, i32
  }
  func.func @transform_2(%arg0: i32, %arg1: i32) -> (i32, i32) {
    %c0_i32 = arith.constant 0 : i32
    %c0_i32_0 = arith.constant 0 : i32
    return %arg1, %c0_i32 : i32, i32
  }
  func.func @transform_3(%arg0: i32, %arg1: i32) -> (i32, i32, i32) {
    %c0_i32 = arith.constant 0 : i32
    %c0_i32_0 = arith.constant 0 : i32
    return %arg0, %arg1, %c0_i32 : i32, i32, i32
  }
}

module attributes {stable_mosaic.version = 11 : i64} {
  func.func @_tab_proj_kernel(%arg0: i32, %arg1: i32, %arg2: memref<1x16x64xf32, #tpu.memory_space<vmem>>, %arg3: memref<64x64xf32, #tpu.memory_space<vmem>>, %arg4: memref<64x64xf32, #tpu.memory_space<vmem>>, %arg5: memref<1x64xf32, #tpu.memory_space<vmem>>, %arg6: memref<1x64xf32, #tpu.memory_space<vmem>>, %arg7: memref<1x16x64xf32, #tpu.memory_space<vmem>>, %arg8: memref<1x64x16xf32, #tpu.memory_space<vmem>>) attributes {dimension_semantics = [#tpu.dimension_semantics<parallel>, #tpu.dimension_semantics<parallel>], iteration_bounds = array<i64: 2, 1>, scalar_prefetch = 0 : i64, scratch_operands = 0 : i64, tpu.core_type = #tpu.core_type<tc>, window_params = [{transform_indices = @transform_0, window_bounds = array<i64: 1, 16, 64>}, {pipeline_mode = #tpu.pipeline_mode<synchronous>, transform_indices = @transform_1, window_bounds = array<i64: 64, 64>}, {pipeline_mode = #tpu.pipeline_mode<synchronous>, transform_indices = @transform_2, window_bounds = array<i64: 64, 64>}, {pipeline_mode = #tpu.pipeline_mode<synchronous>, transform_indices = @transform_3, window_bounds = array<i64: 1, 64>}, {pipeline_mode = #tpu.pipeline_mode<synchronous>, transform_indices = @transform_4, window_bounds = array<i64: 1, 64>}, {transform_indices = @transform_5, window_bounds = array<i64: 1, 16, 64>}, {transform_indices = @transform_6, window_bounds = array<i64: 1, 64, 16>}]} {
    %c0 = arith.constant 0 : index
    %c0_0 = arith.constant 0 : index
    %c0_1 = arith.constant 0 : index
    %0 = vector.load %arg2[%c0, %c0_0, %c0_1] : memref<1x16x64xf32, #tpu.memory_space<vmem>>, vector<1x16x64xf32>
    %1 = vector.shape_cast %0 : vector<1x16x64xf32> to vector<16x64xf32>
    %c0_2 = arith.constant 0 : index
    %c0_3 = arith.constant 0 : index
    %2 = vector.load %arg3[%c0_2, %c0_3] : memref<64x64xf32, #tpu.memory_space<vmem>>, vector<64x64xf32>
    %c0_4 = arith.constant 0 : index
    %c0_5 = arith.constant 0 : index
    %3 = vector.load %arg4[%c0_4, %c0_5] : memref<64x64xf32, #tpu.memory_space<vmem>>, vector<64x64xf32>
    %cst = arith.constant dense<0.000000e+00> : vector<16x64xf32>
    %4 = tpu.matmul %1, %2, %cst {dimension_numbers = #tpu.dot_dimension_numbers<[1], [0], [0], [1], [0, 0, 1, 1], [], []>} : vector<16x64xf32>, vector<64x64xf32>, vector<16x64xf32> -> vector<16x64xf32>
    %c0_6 = arith.constant 0 : index
    %c0_7 = arith.constant 0 : index
    %5 = vector.load %arg5[%c0_6, %c0_7] : memref<1x64xf32, #tpu.memory_space<vmem>>, vector<1x64xf32>
    %6 = vector.broadcast %5 : vector<1x64xf32> to vector<16x64xf32>
    %7 = arith.addf %4, %6 : vector<16x64xf32>
    %cst_8 = arith.constant dense<0.000000e+00> : vector<16x64xf32>
    %8 = tpu.matmul %1, %3, %cst_8 {dimension_numbers = #tpu.dot_dimension_numbers<[1], [0], [0], [1], [0, 0, 1, 1], [], []>} : vector<16x64xf32>, vector<64x64xf32>, vector<16x64xf32> -> vector<16x64xf32>
    %c0_9 = arith.constant 0 : index
    %c0_10 = arith.constant 0 : index
    %9 = vector.load %arg6[%c0_9, %c0_10] : memref<1x64xf32, #tpu.memory_space<vmem>>, vector<1x64xf32>
    %10 = vector.broadcast %9 : vector<1x64xf32> to vector<16x64xf32>
    %11 = arith.addf %8, %10 : vector<16x64xf32>
    %c0_11 = arith.constant 0 : index
    %c0_12 = arith.constant 0 : index
    %c0_13 = arith.constant 0 : index
    %12 = vector.load %arg7[%c0_11, %c0_12, %c0_13] : memref<1x16x64xf32, #tpu.memory_space<vmem>>, vector<1x16x64xf32>
    %13 = vector.shape_cast %12 : vector<1x16x64xf32> to vector<16x64xf32>
    %14 = vector.shape_cast %7 : vector<16x64xf32> to vector<1x16x64xf32>
    tpu.vector_store %arg7[%c0_11, %c0_12, %c0_13], %14 {strides = array<i32>} : memref<1x16x64xf32, #tpu.memory_space<vmem>>, vector<1x16x64xf32>,
    %15 = tpu.transpose %11, [1, 0] : vector<16x64xf32> -> vector<64x16xf32>
    %c0_14 = arith.constant 0 : index
    %c0_15 = arith.constant 0 : index
    %c0_16 = arith.constant 0 : index
    %16 = vector.load %arg8[%c0_14, %c0_15, %c0_16] : memref<1x64x16xf32, #tpu.memory_space<vmem>>, vector<1x64x16xf32>
    %17 = vector.shape_cast %16 : vector<1x64x16xf32> to vector<64x16xf32>
    %18 = vector.shape_cast %15 : vector<64x16xf32> to vector<1x64x16xf32>
    tpu.vector_store %arg8[%c0_14, %c0_15, %c0_16], %18 {strides = array<i32>} : memref<1x64x16xf32, #tpu.memory_space<vmem>>, vector<1x64x16xf32>,
    return
  }
  func.func @transform_0(%arg0: i32, %arg1: i32) -> (i32, i32, i32) {
    %c0_i32 = arith.constant 0 : i32
    %c0_i32_0 = arith.constant 0 : i32
    return %arg0, %arg1, %c0_i32 : i32, i32, i32
  }
  func.func @transform_1(%arg0: i32, %arg1: i32) -> (i32, i32) {
    %c0_i32 = arith.constant 0 : i32
    %c0_i32_0 = arith.constant 0 : i32
    %c0_i32_1 = arith.constant 0 : i32
    return %c0_i32, %c0_i32_0 : i32, i32
  }
  func.func @transform_2(%arg0: i32, %arg1: i32) -> (i32, i32) {
    %c0_i32 = arith.constant 0 : i32
    %c0_i32_0 = arith.constant 0 : i32
    %c0_i32_1 = arith.constant 0 : i32
    return %c0_i32, %c0_i32_0 : i32, i32
  }
  func.func @transform_3(%arg0: i32, %arg1: i32) -> (i32, i32) {
    %c0_i32 = arith.constant 0 : i32
    %c0_i32_0 = arith.constant 0 : i32
    %c0_i32_1 = arith.constant 0 : i32
    return %c0_i32, %c0_i32_0 : i32, i32
  }
  func.func @transform_4(%arg0: i32, %arg1: i32) -> (i32, i32) {
    %c0_i32 = arith.constant 0 : i32
    %c0_i32_0 = arith.constant 0 : i32
    %c0_i32_1 = arith.constant 0 : i32
    return %c0_i32, %c0_i32_0 : i32, i32
  }
  func.func @transform_5(%arg0: i32, %arg1: i32) -> (i32, i32, i32) {
    %c0_i32 = arith.constant 0 : i32
    %c0_i32_0 = arith.constant 0 : i32
    return %arg0, %arg1, %c0_i32 : i32, i32, i32
  }
  func.func @transform_6(%arg0: i32, %arg1: i32) -> (i32, i32, i32) {
    %c0_i32 = arith.constant 0 : i32
    %c0_i32_0 = arith.constant 0 : i32
    return %arg0, %c0_i32, %arg1 : i32, i32, i32
  }
}

module attributes {stable_mosaic.version = 11 : i64} {
  func.func @_tab_attn_kernel(%arg0: i32, %arg1: i32, %arg2: memref<1x16x64xf32, #tpu.memory_space<vmem>>, %arg3: memref<1x16x64xf32, #tpu.memory_space<vmem>>, %arg4: memref<1x64x16xf32, #tpu.memory_space<vmem>>, %arg5: memref<1x64x16xf32, #tpu.memory_space<vmem>>, %arg6: memref<64x64xf32, #tpu.memory_space<vmem>>, %arg7: memref<1x64xf32, #tpu.memory_space<vmem>>, %arg8: memref<1x64x16xf32, #tpu.memory_space<vmem>>) attributes {dimension_semantics = [#tpu.dimension_semantics<parallel>, #tpu.dimension_semantics<parallel>], iteration_bounds = array<i64: 2, 1>, scalar_prefetch = 0 : i64, scratch_operands = 0 : i64, tpu.core_type = #tpu.core_type<tc>, window_params = [{transform_indices = @transform_0, window_bounds = array<i64: 1, 16, 64>}, {transform_indices = @transform_1, window_bounds = array<i64: 1, 16, 64>}, {transform_indices = @transform_2, window_bounds = array<i64: 1, 64, 16>}, {transform_indices = @transform_3, window_bounds = array<i64: 1, 64, 16>}, {pipeline_mode = #tpu.pipeline_mode<synchronous>, transform_indices = @transform_4, window_bounds = array<i64: 64, 64>}, {pipeline_mode = #tpu.pipeline_mode<synchronous>, transform_indices = @transform_5, window_bounds = array<i64: 1, 64>}, {transform_indices = @transform_6, window_bounds = array<i64: 1, 64, 16>}]} {
    %c0 = arith.constant 0 : index
    %c0_0 = arith.constant 0 : index
    %c0_1 = arith.constant 0 : index
    %0 = vector.load %arg2[%c0, %c0_0, %c0_1] : memref<1x16x64xf32, #tpu.memory_space<vmem>>, vector<1x16x64xf32>
    %1 = vector.shape_cast %0 : vector<1x16x64xf32> to vector<16x64xf32>
    %c0_2 = arith.constant 0 : index
    %c0_3 = arith.constant 0 : index
    %2 = vector.load %arg6[%c0_2, %c0_3] : memref<64x64xf32, #tpu.memory_space<vmem>>, vector<64x64xf32>
    %cst = arith.constant dense<0.000000e+00> : vector<16x64xf32>
    %3 = tpu.matmul %1, %2, %cst {dimension_numbers = #tpu.dot_dimension_numbers<[1], [0], [0], [1], [0, 0, 1, 1], [], []>} : vector<16x64xf32>, vector<64x64xf32>, vector<16x64xf32> -> vector<16x64xf32>
    %c0_4 = arith.constant 0 : index
    %c0_5 = arith.constant 0 : index
    %4 = vector.load %arg7[%c0_4, %c0_5] : memref<1x64xf32, #tpu.memory_space<vmem>>, vector<1x64xf32>
    %5 = vector.broadcast %4 : vector<1x64xf32> to vector<16x64xf32>
    %6 = arith.addf %3, %5 : vector<16x64xf32>
    %c0_6 = arith.constant 0 : index
    %c0_7 = arith.constant 0 : index
    %c0_8 = arith.constant 0 : index
    %7 = vector.load %arg3[%c0_6, %c0_7, %c0_8] : memref<1x16x64xf32, #tpu.memory_space<vmem>>, vector<1x16x64xf32>
    %8 = vector.shape_cast %7 : vector<1x16x64xf32> to vector<16x64xf32>
    %cst_9 = arith.constant dense<0.000000e+00> : vector<16x16xf32>
    %9 = tpu.matmul %6, %8, %cst_9 {dimension_numbers = #tpu.dot_dimension_numbers<[1], [1], [0], [0], [0, 0, 1, 0], [], []>} : vector<16x64xf32>, vector<16x64xf32>, vector<16x16xf32> -> vector<16x16xf32>
    %cst_10 = arith.constant 1.250000e-01 : f32
    %10 = vector.broadcast %cst_10 : f32 to vector<16x16xf32>
    %11 = arith.mulf %9, %10 : vector<16x16xf32>
    %cst_11 = arith.constant dense<0xFF800000> : vector<16xf32>
    %12 = vector.multi_reduction <maximumf>, %11, %cst_11 [1] : vector<16x16xf32> to vector<16xf32>
    %13 = vector.shape_cast %12 : vector<16xf32> to vector<16x1xf32>
    %14 = vector.broadcast %13 : vector<16x1xf32> to vector<16x16xf32>
    %15 = arith.subf %11, %14 : vector<16x16xf32>
    %16 = math.exp %15 : vector<16x16xf32>
    %cst_12 = arith.constant dense<0.000000e+00> : vector<16xf32>
    %17 = vector.multi_reduction <add>, %16, %cst_12 [1] : vector<16x16xf32> to vector<16xf32>
    %18 = vector.shape_cast %17 : vector<16xf32> to vector<16x1xf32>
    %19 = vector.broadcast %18 : vector<16x1xf32> to vector<16x16xf32>
    %20 = arith.divf %16, %19 : vector<16x16xf32>
    %c0_13 = arith.constant 0 : index
    %c0_14 = arith.constant 0 : index
    %c0_15 = arith.constant 0 : index
    %21 = vector.load %arg4[%c0_13, %c0_14, %c0_15] : memref<1x64x16xf32, #tpu.memory_space<vmem>>, vector<1x64x16xf32>
    %22 = vector.shape_cast %21 : vector<1x64x16xf32> to vector<64x16xf32>
    %cst_16 = arith.constant dense<0.000000e+00> : vector<64x16xf32>
    %23 = tpu.matmul %22, %20, %cst_16 {dimension_numbers = #tpu.dot_dimension_numbers<[1], [1], [0], [0], [0, 0, 1, 0], [], []>} : vector<64x16xf32>, vector<16x16xf32>, vector<64x16xf32> -> vector<64x16xf32>
    %c0_17 = arith.constant 0 : index
    %c0_18 = arith.constant 0 : index
    %c0_19 = arith.constant 0 : index
    %24 = vector.load %arg5[%c0_17, %c0_18, %c0_19] : memref<1x64x16xf32, #tpu.memory_space<vmem>>, vector<1x64x16xf32>
    %25 = vector.shape_cast %24 : vector<1x64x16xf32> to vector<64x16xf32>
    %26 = arith.addf %23, %25 : vector<64x16xf32>
    %c0_20 = arith.constant 0 : index
    %c0_21 = arith.constant 0 : index
    %c0_22 = arith.constant 0 : index
    %27 = vector.load %arg8[%c0_20, %c0_21, %c0_22] : memref<1x64x16xf32, #tpu.memory_space<vmem>>, vector<1x64x16xf32>
    %28 = vector.shape_cast %27 : vector<1x64x16xf32> to vector<64x16xf32>
    %29 = vector.shape_cast %26 : vector<64x16xf32> to vector<1x64x16xf32>
    tpu.vector_store %arg8[%c0_20, %c0_21, %c0_22], %29 {strides = array<i32>} : memref<1x64x16xf32, #tpu.memory_space<vmem>>, vector<1x64x16xf32>,
    return
  }
  func.func @transform_0(%arg0: i32, %arg1: i32) -> (i32, i32, i32) {
    %c0_i32 = arith.constant 0 : i32
    %c0_i32_0 = arith.constant 0 : i32
    return %arg0, %arg1, %c0_i32 : i32, i32, i32
  }
  func.func @transform_1(%arg0: i32, %arg1: i32) -> (i32, i32, i32) {
    %c0_i32 = arith.constant 0 : i32
    %c0_i32_0 = arith.constant 0 : i32
    %c0_i32_1 = arith.constant 0 : i32
    return %arg0, %c0_i32, %c0_i32_0 : i32, i32, i32
  }
  func.func @transform_2(%arg0: i32, %arg1: i32) -> (i32, i32, i32) {
    %c0_i32 = arith.constant 0 : i32
    %c0_i32_0 = arith.constant 0 : i32
    %c0_i32_1 = arith.constant 0 : i32
    return %arg0, %c0_i32, %c0_i32_0 : i32, i32, i32
  }
  func.func @transform_3(%arg0: i32, %arg1: i32) -> (i32, i32, i32) {
    %c0_i32 = arith.constant 0 : i32
    %c0_i32_0 = arith.constant 0 : i32
    return %arg0, %c0_i32, %arg1 : i32, i32, i32
  }
  func.func @transform_4(%arg0: i32, %arg1: i32) -> (i32, i32) {
    %c0_i32 = arith.constant 0 : i32
    %c0_i32_0 = arith.constant 0 : i32
    %c0_i32_1 = arith.constant 0 : i32
    return %c0_i32, %c0_i32_0 : i32, i32
  }
  func.func @transform_5(%arg0: i32, %arg1: i32) -> (i32, i32) {
    %c0_i32 = arith.constant 0 : i32
    %c0_i32_0 = arith.constant 0 : i32
    %c0_i32_1 = arith.constant 0 : i32
    return %c0_i32, %c0_i32_0 : i32, i32
  }
  func.func @transform_6(%arg0: i32, %arg1: i32) -> (i32, i32, i32) {
    %c0_i32 = arith.constant 0 : i32
    %c0_i32_0 = arith.constant 0 : i32
    return %arg0, %c0_i32, %arg1 : i32, i32, i32
  }
}

module attributes {stable_mosaic.version = 11 : i64} {
  func.func @_conv1x1_kernel(%arg0: i32, %arg1: i32, %arg2: memref<1x16x64xf32, #tpu.memory_space<vmem>>, %arg3: memref<16x16xf32, #tpu.memory_space<vmem>>, %arg4: memref<16x1xf32, #tpu.memory_space<vmem>>, %arg5: memref<1x16x64xf32, #tpu.memory_space<vmem>>) attributes {dimension_semantics = [#tpu.dimension_semantics<parallel>, #tpu.dimension_semantics<parallel>], iteration_bounds = array<i64: 2, 1>, scalar_prefetch = 0 : i64, scratch_operands = 0 : i64, tpu.core_type = #tpu.core_type<tc>, window_params = [{transform_indices = @transform_0, window_bounds = array<i64: 1, 16, 64>}, {transform_indices = @transform_1, window_bounds = array<i64: 16, 16>}, {transform_indices = @transform_2, window_bounds = array<i64: 16, 1>}, {transform_indices = @transform_3, window_bounds = array<i64: 1, 16, 64>}]} {
    %c0 = arith.constant 0 : index
    %c0_0 = arith.constant 0 : index
    %c0_1 = arith.constant 0 : index
    %0 = vector.load %arg2[%c0, %c0_0, %c0_1] : memref<1x16x64xf32, #tpu.memory_space<vmem>>, vector<1x16x64xf32>
    %1 = vector.shape_cast %0 : vector<1x16x64xf32> to vector<16x64xf32>
    %c0_2 = arith.constant 0 : index
    %c0_3 = arith.constant 0 : index
    %2 = vector.load %arg3[%c0_2, %c0_3] : memref<16x16xf32, #tpu.memory_space<vmem>>, vector<16x16xf32>
    %cst = arith.constant dense<0.000000e+00> : vector<16x64xf32>
    %3 = tpu.matmul %2, %1, %cst {dimension_numbers = #tpu.dot_dimension_numbers<[1], [0], [0], [1], [0, 0, 1, 1], [], []>} : vector<16x16xf32>, vector<16x64xf32>, vector<16x64xf32> -> vector<16x64xf32>
    %c0_4 = arith.constant 0 : index
    %c0_5 = arith.constant 0 : index
    %4 = vector.load %arg4[%c0_4, %c0_5] : memref<16x1xf32, #tpu.memory_space<vmem>>, vector<16x1xf32>
    %5 = vector.broadcast %4 : vector<16x1xf32> to vector<16x64xf32>
    %6 = arith.addf %3, %5 : vector<16x64xf32>
    %c0_6 = arith.constant 0 : index
    %c0_7 = arith.constant 0 : index
    %c0_8 = arith.constant 0 : index
    %7 = vector.load %arg5[%c0_6, %c0_7, %c0_8] : memref<1x16x64xf32, #tpu.memory_space<vmem>>, vector<1x16x64xf32>
    %8 = vector.shape_cast %7 : vector<1x16x64xf32> to vector<16x64xf32>
    %9 = vector.shape_cast %6 : vector<16x64xf32> to vector<1x16x64xf32>
    tpu.vector_store %arg5[%c0_6, %c0_7, %c0_8], %9 {strides = array<i32>} : memref<1x16x64xf32, #tpu.memory_space<vmem>>, vector<1x16x64xf32>,
    return
  }
  func.func @transform_0(%arg0: i32, %arg1: i32) -> (i32, i32, i32) {
    %c0_i32 = arith.constant 0 : i32
    %c0_i32_0 = arith.constant 0 : i32
    %c0_i32_1 = arith.constant 0 : i32
    return %arg0, %c0_i32, %c0_i32_0 : i32, i32, i32
  }
  func.func @transform_1(%arg0: i32, %arg1: i32) -> (i32, i32) {
    %c0_i32 = arith.constant 0 : i32
    %c0_i32_0 = arith.constant 0 : i32
    return %arg1, %c0_i32 : i32, i32
  }
  func.func @transform_2(%arg0: i32, %arg1: i32) -> (i32, i32) {
    %c0_i32 = arith.constant 0 : i32
    %c0_i32_0 = arith.constant 0 : i32
    return %arg1, %c0_i32 : i32, i32
  }
  func.func @transform_3(%arg0: i32, %arg1: i32) -> (i32, i32, i32) {
    %c0_i32 = arith.constant 0 : i32
    %c0_i32_0 = arith.constant 0 : i32
    return %arg0, %arg1, %c0_i32 : i32, i32, i32
  }
}

module attributes {stable_mosaic.version = 11 : i64} {
  func.func @_linear_kernel(%arg0: memref<2x128xf32, #tpu.memory_space<vmem>>, %arg1: memref<128x16xf32, #tpu.memory_space<vmem>>, %arg2: memref<1x16xf32, #tpu.memory_space<vmem>>, %arg3: memref<2x16xf32, #tpu.memory_space<vmem>>) attributes {dimension_semantics = [], scalar_prefetch = 0 : i64, scratch_operands = 0 : i64, tpu.core_type = #tpu.core_type<tc>} {
    %c0 = arith.constant 0 : index
    %c0_0 = arith.constant 0 : index
    %0 = vector.load %arg0[%c0, %c0_0] : memref<2x128xf32, #tpu.memory_space<vmem>>, vector<2x128xf32>
    %c0_1 = arith.constant 0 : index
    %c0_2 = arith.constant 0 : index
    %1 = vector.load %arg1[%c0_1, %c0_2] : memref<128x16xf32, #tpu.memory_space<vmem>>, vector<128x16xf32>
    %cst = arith.constant dense<0.000000e+00> : vector<2x16xf32>
    %2 = tpu.matmul %0, %1, %cst {dimension_numbers = #tpu.dot_dimension_numbers<[1], [0], [0], [1], [0, 0, 1, 1], [], []>} : vector<2x128xf32>, vector<128x16xf32>, vector<2x16xf32> -> vector<2x16xf32>
    %c0_3 = arith.constant 0 : index
    %c0_4 = arith.constant 0 : index
    %3 = vector.load %arg2[%c0_3, %c0_4] : memref<1x16xf32, #tpu.memory_space<vmem>>, vector<1x16xf32>
    %4 = vector.broadcast %3 : vector<1x16xf32> to vector<2x16xf32>
    %5 = arith.addf %2, %4 : vector<2x16xf32>
    %c0_5 = arith.constant 0 : index
    %c0_6 = arith.constant 0 : index
    %6 = vector.load %arg3[%c0_5, %c0_6] : memref<2x16xf32, #tpu.memory_space<vmem>>, vector<2x16xf32>
    tpu.vector_store %arg3[%c0_5, %c0_6], %5 {strides = array<i32>} : memref<2x16xf32, #tpu.memory_space<vmem>>, vector<2x16xf32>,
    return
  }
}

module attributes {stable_mosaic.version = 11 : i64} {
  func.func @_head_kernel(%arg0: i32, %arg1: memref<1x65x16xf32, #tpu.memory_space<vmem>>, %arg2: memref<16x32xf32, #tpu.memory_space<vmem>>, %arg3: memref<1x32xf32, #tpu.memory_space<vmem>>, %arg4: memref<32x2xf32, #tpu.memory_space<vmem>>, %arg5: memref<1x2xf32, #tpu.memory_space<vmem>>, %arg6: memref<1x1x1xf32, #tpu.memory_space<vmem>>) attributes {dimension_semantics = [#tpu.dimension_semantics<parallel>], iteration_bounds = array<i64: 2>, scalar_prefetch = 0 : i64, scratch_operands = 0 : i64, tpu.core_type = #tpu.core_type<tc>, window_params = [{transform_indices = @transform_0, window_bounds = array<i64: 1, 65, 16>}, {pipeline_mode = #tpu.pipeline_mode<synchronous>, transform_indices = @transform_1, window_bounds = array<i64: 16, 32>}, {pipeline_mode = #tpu.pipeline_mode<synchronous>, transform_indices = @transform_2, window_bounds = array<i64: 1, 32>}, {pipeline_mode = #tpu.pipeline_mode<synchronous>, transform_indices = @transform_3, window_bounds = array<i64: 32, 2>}, {pipeline_mode = #tpu.pipeline_mode<synchronous>, transform_indices = @transform_4, window_bounds = array<i64: 1, 2>}, {transform_indices = @transform_5, window_bounds = array<i64: 1, 1, 1>}]} {
    %c0 = arith.constant 0 : index
    %c0_0 = arith.constant 0 : index
    %c0_1 = arith.constant 0 : index
    %0 = vector.load %arg1[%c0, %c0_0, %c0_1] : memref<1x65x16xf32, #tpu.memory_space<vmem>>, vector<1x65x16xf32>
    %1 = vector.shape_cast %0 : vector<1x65x16xf32> to vector<65x16xf32>
    %c0_2 = arith.constant 0 : index
    %c0_3 = arith.constant 0 : index
    %2 = vector.load %arg2[%c0_2, %c0_3] : memref<16x32xf32, #tpu.memory_space<vmem>>, vector<16x32xf32>
    %cst = arith.constant dense<0.000000e+00> : vector<65x32xf32>
    %3 = tpu.matmul %1, %2, %cst {dimension_numbers = #tpu.dot_dimension_numbers<[1], [0], [0], [1], [0, 0, 1, 1], [], []>} : vector<65x16xf32>, vector<16x32xf32>, vector<65x32xf32> -> vector<65x32xf32>
    %c0_4 = arith.constant 0 : index
    %c0_5 = arith.constant 0 : index
    %4 = vector.load %arg3[%c0_4, %c0_5] : memref<1x32xf32, #tpu.memory_space<vmem>>, vector<1x32xf32>
    %5 = vector.broadcast %4 : vector<1x32xf32> to vector<65x32xf32>
    %6 = arith.addf %3, %5 : vector<65x32xf32>
    %cst_6 = arith.constant 0.000000e+00 : f32
    %7 = vector.broadcast %cst_6 : f32 to vector<65x32xf32>
    %8 = arith.maximumf %6, %7 : vector<65x32xf32>
    %c0_7 = arith.constant 0 : index
    %c0_8 = arith.constant 0 : index
    %9 = vector.load %arg4[%c0_7, %c0_8] : memref<32x2xf32, #tpu.memory_space<vmem>>, vector<32x2xf32>
    %cst_9 = arith.constant dense<0.000000e+00> : vector<65x2xf32>
    %10 = tpu.matmul %8, %9, %cst_9 {dimension_numbers = #tpu.dot_dimension_numbers<[1], [0], [0], [1], [0, 0, 1, 1], [], []>} : vector<65x32xf32>, vector<32x2xf32>, vector<65x2xf32> -> vector<65x2xf32>
    %c0_10 = arith.constant 0 : index
    %c0_11 = arith.constant 0 : index
    %11 = vector.load %arg5[%c0_10, %c0_11] : memref<1x2xf32, #tpu.memory_space<vmem>>, vector<1x2xf32>
    %12 = vector.broadcast %11 : vector<1x2xf32> to vector<65x2xf32>
    %13 = arith.addf %10, %12 : vector<65x2xf32>
    %14 = vector.extract_strided_slice %13 {offsets = [0, 0], sizes = [65, 1], strides = [1, 1]} : vector<65x2xf32> to vector<65x1xf32>
    %cst_12 = arith.constant 0.000000e+00 : f32
    %15 = vector.broadcast %cst_12 : f32 to vector<65x1xf32>
    %16 = arith.maximumf %14, %15 : vector<65x1xf32>
    %17 = vector.extract_strided_slice %13 {offsets = [0, 1], sizes = [65, 1], strides = [1, 1]} : vector<65x2xf32> to vector<65x1xf32>
    %18 = arith.negf %17 : vector<65x1xf32>
    %19 = math.exp %18 : vector<65x1xf32>
    %cst_13 = arith.constant 1.000000e+00 : f32
    %20 = vector.broadcast %cst_13 : f32 to vector<65x1xf32>
    %21 = arith.addf %20, %19 : vector<65x1xf32>
    %22 = arith.divf %20, %21 : vector<65x1xf32>
    %23 = arith.mulf %16, %22 : vector<65x1xf32>
    %cst_14 = arith.constant dense<0.000000e+00> : vector<1xf32>
    %24 = vector.multi_reduction <add>, %23, %cst_14 [0] : vector<65x1xf32> to vector<1xf32>
    %25 = vector.shape_cast %24 : vector<1xf32> to vector<1x1xf32>
    %cst_15 = arith.constant dense<0.000000e+00> : vector<1xf32>
    %26 = vector.multi_reduction <add>, %22, %cst_15 [0] : vector<65x1xf32> to vector<1xf32>
    %27 = vector.shape_cast %26 : vector<1xf32> to vector<1x1xf32>
    %28 = arith.divf %25, %27 : vector<1x1xf32>
    %c0_16 = arith.constant 0 : index
    %c0_17 = arith.constant 0 : index
    %c0_18 = arith.constant 0 : index
    %29 = vector.load %arg6[%c0_16, %c0_17, %c0_18] : memref<1x1x1xf32, #tpu.memory_space<vmem>>, vector<1x1x1xf32>
    %30 = vector.shape_cast %29 : vector<1x1x1xf32> to vector<1x1xf32>
    %31 = vector.shape_cast %28 : vector<1x1xf32> to vector<1x1x1xf32>
    tpu.vector_store %arg6[%c0_16, %c0_17, %c0_18], %31 {strides = array<i32>} : memref<1x1x1xf32, #tpu.memory_space<vmem>>, vector<1x1x1xf32>,
    return
  }
  func.func @transform_0(%arg0: i32) -> (i32, i32, i32) {
    %c0_i32 = arith.constant 0 : i32
    %c0_i32_0 = arith.constant 0 : i32
    %c0_i32_1 = arith.constant 0 : i32
    return %arg0, %c0_i32, %c0_i32_0 : i32, i32, i32
  }
  func.func @transform_1(%arg0: i32) -> (i32, i32) {
    %c0_i32 = arith.constant 0 : i32
    %c0_i32_0 = arith.constant 0 : i32
    %c0_i32_1 = arith.constant 0 : i32
    return %c0_i32, %c0_i32_0 : i32, i32
  }
  func.func @transform_2(%arg0: i32) -> (i32, i32) {
    %c0_i32 = arith.constant 0 : i32
    %c0_i32_0 = arith.constant 0 : i32
    %c0_i32_1 = arith.constant 0 : i32
    return %c0_i32, %c0_i32_0 : i32, i32
  }
  func.func @transform_3(%arg0: i32) -> (i32, i32) {
    %c0_i32 = arith.constant 0 : i32
    %c0_i32_0 = arith.constant 0 : i32
    %c0_i32_1 = arith.constant 0 : i32
    return %c0_i32, %c0_i32_0 : i32, i32
  }
  func.func @transform_4(%arg0: i32) -> (i32, i32) {
    %c0_i32 = arith.constant 0 : i32
    %c0_i32_0 = arith.constant 0 : i32
    %c0_i32_1 = arith.constant 0 : i32
    return %c0_i32, %c0_i32_0 : i32, i32
  }
  func.func @transform_5(%arg0: i32) -> (i32, i32, i32) {
    %c0_i32 = arith.constant 0 : i32
    %c0_i32_0 = arith.constant 0 : i32
    %c0_i32_1 = arith.constant 0 : i32
    return %arg0, %c0_i32, %c0_i32_0 : i32, i32, i32
  }
}

module attributes {stable_mosaic.version = 11 : i64} {
  func.func @_linear_kernel(%arg0: memref<2x32xf32, #tpu.memory_space<vmem>>, %arg1: memref<32x1xf32, #tpu.memory_space<vmem>>, %arg2: memref<1x1xf32, #tpu.memory_space<vmem>>, %arg3: memref<2x1xf32, #tpu.memory_space<vmem>>) attributes {dimension_semantics = [], scalar_prefetch = 0 : i64, scratch_operands = 0 : i64, tpu.core_type = #tpu.core_type<tc>} {
    %c0 = arith.constant 0 : index
    %c0_0 = arith.constant 0 : index
    %0 = vector.load %arg0[%c0, %c0_0] : memref<2x32xf32, #tpu.memory_space<vmem>>, vector<2x32xf32>
    %c0_1 = arith.constant 0 : index
    %c0_2 = arith.constant 0 : index
    %1 = vector.load %arg1[%c0_1, %c0_2] : memref<32x1xf32, #tpu.memory_space<vmem>>, vector<32x1xf32>
    %cst = arith.constant dense<0.000000e+00> : vector<2x1xf32>
    %2 = tpu.matmul %0, %1, %cst {dimension_numbers = #tpu.dot_dimension_numbers<[1], [0], [0], [1], [0, 0, 1, 1], [], []>} : vector<2x32xf32>, vector<32x1xf32>, vector<2x1xf32> -> vector<2x1xf32>
    %c0_3 = arith.constant 0 : index
    %c0_4 = arith.constant 0 : index
    %3 = vector.load %arg2[%c0_3, %c0_4] : memref<1x1xf32, #tpu.memory_space<vmem>>, vector<1x1xf32>
    %4 = vector.broadcast %3 : vector<1x1xf32> to vector<2x1xf32>
    %5 = arith.addf %2, %4 : vector<2x1xf32>
    %c0_5 = arith.constant 0 : index
    %c0_6 = arith.constant 0 : index
    %6 = vector.load %arg3[%c0_5, %c0_6] : memref<2x1xf32, #tpu.memory_space<vmem>>, vector<2x1xf32>
    tpu.vector_store %arg3[%c0_5, %c0_6], %5 {strides = array<i32>} : memref<2x1xf32, #tpu.memory_space<vmem>>, vector<2x1xf32>,
    return
  }
}

</mosaic_0001>

<llo_original>
// kernel: maniqa_forward.22
$region0: #{maniqa_forward.22}
  #allocation0 [shape = 'u32[]', space=smem, size = 0x4, offset = 0x4, fixed_abs, tag = 'smem constant byte address 0x4 - core index']
  #allocation1 [shape = 'u32[144,128]{1,0:T(1,128)}', space=vmem, size = 0x12000, scoped, tag = 'internal scratch']
  %s0 = inlined_call_operand.vmem [shape: f32[2,128,64], index: 0, kind: input, shape index: {}]
  %s1 = inlined_call_operand.vmem [shape: f32[32,128], index: 1, kind: input, shape index: {}]
  %s2 = inlined_call_operand.vmem [shape: f32[32,1], index: 2, kind: input, shape index: {}]
  %s3 = inlined_call_operand.vmem [shape: f32[2,32,64], index: 3, kind: output, shape index: {}]
  %s4 = sld [smem:[#allocation0]]
  $region45: #{maniqa_forward.22} parent=0
    _
  %s6 = ssub.s32 1, %s4
  %s7 = scalar_select 0, %s6, %s4
  loop: start=0, step=1, limit=4
  $region2: #{maniqa_forward.22} parent=0 // loop_pre_header
    _
  $region3: #{maniqa_forward.22} parent=0 // loop_header
    %s9 = sphi 0, %s13
    %p10 = scmp.ge.s32.totalorder %s9, 4
    %s16 = sphi 0, %s28
    %s17 = sphi 0, %s24
    %s18 = sphi 0, %s16
    %s19 = sphi 0, %s17
    %s20 = sphi 0, %s18
    %s21 = sphi 0, %s19
    %s31 = sphi 0, %s33
    %s34 = sphi 0, %s31
    %s35 = sphi 0, %s34
    %s51 = sphi 0, %s35
    %s57 = sphi 0, %s59
    %s60 = sphi 0, %s57
    %s61 = sphi 0, %s60
    %s77 = sphi 0, %s61
    %s83 = sphi 0, %s85
    %s86 = sphi 0, %s83
    %s87 = sphi 0, %s86
    %s103 = sphi 0, %s87
    %s111 = sphi 0, %s113
    %s114 = sphi 0, %s111
    %s115 = sphi 0, %s114
    %s131 = sphi 0, %s115
  $region4: #{maniqa_forward.22} parent=0 // loop_header_branch
    %12 = sbr.rel (%p10) target = $region8
  $region5: #{maniqa_forward.22} parent=0 // loop_body
    %s14 = ssub.s32 %s9, 1
    %s15 = ssub.s32 %s9, 2
    %s22 = sadd.s32 1, %s17
    %p23 = scmp.ge.s32.totalorder %s22, 1
    %s24 = scalar_select %p23, 0, %s22
    %s25 = sadd.s32 1, %s16
    %s26 = scalar_select %p23, %s25, %s16
    %p27 = scmp.ge.s32.totalorder %s26, 2
    %s28 = scalar_select %p27, 0, %s26
    %s29 = ssub.s32 %s16, %s28
    %p30 = scmp.eq.s32.totalorder %s29, 0
    %s32 = sadd.s32 %s31, 1
    %s33 = scalar_select %p30, %s31, %s32
    %p36 = pneg %p30
    %p37 = scmp.eq.s32.totalorder %s9, 1
    %p38 = por %p36, %p37
    %p39 = scmp.ne.s32.totalorder %s31, %s34
    %p40 = scmp.eq.s32.totalorder %s9, 0
    %p41 = por %p39, %p40
    %p42 = scmp.ne.s32.totalorder %s31, %s34
    %p43 = scmp.eq.s32.totalorder %s14, 1
    %p44 = por %p42, %p43
    %p45 = scmp.ne.s32.totalorder %s34, %s35
    %p46 = scmp.eq.s32.totalorder %s14, 0
    %p47 = por %p45, %p46
    %p48 = scmp.ne.s32.totalorder %s34, %s35
    %p49 = scmp.eq.s32.totalorder %s15, 1
    %p50 = por %p48, %p49
    %p52 = scmp.ne.s32.totalorder %s35, %s51
    %p53 = scmp.eq.s32.totalorder %s15, 0
    %p54 = por %p52, %p53
    %s55 = ssub.s32 %s17, %s24
    %p56 = scmp.eq.s32.totalorder %s55, 0
    %s58 = sadd.s32 %s57, 1
    %s59 = scalar_select %p56, %s57, %s58
    %p62 = pneg %p56
    %p63 = scmp.eq.s32.totalorder %s9, 1
    %p64 = por %p62, %p63
    %p65 = scmp.ne.s32.totalorder %s57, %s60
    %p66 = scmp.eq.s32.totalorder %s9, 0
    %p67 = por %p65, %p66
    %p68 = scmp.ne.s32.totalorder %s57, %s60
    %p69 = scmp.eq.s32.totalorder %s14, 1
    %p70 = por %p68, %p69
    %p71 = scmp.ne.s32.totalorder %s60, %s61
    %p72 = scmp.eq.s32.totalorder %s14, 0
    %p73 = por %p71, %p72
    %p74 = scmp.ne.s32.totalorder %s60, %s61
    %p75 = scmp.eq.s32.totalorder %s15, 1
    %p76 = por %p74, %p75
    %p78 = scmp.ne.s32.totalorder %s61, %s77
    %p79 = scmp.eq.s32.totalorder %s15, 0
    %p80 = por %p78, %p79
    %s81 = ssub.s32 %s17, %s24
    %p82 = scmp.eq.s32.totalorder %s81, 0
    %s84 = sadd.s32 %s83, 1
    %s85 = scalar_select %p82, %s83, %s84
    %p88 = pneg %p82
    %p89 = scmp.eq.s32.totalorder %s9, 1
    %p90 = por %p88, %p89
    %p91 = scmp.ne.s32.totalorder %s83, %s86
    %p92 = scmp.eq.s32.totalorder %s9, 0
    %p93 = por %p91, %p92
    %p94 = scmp.ne.s32.totalorder %s83, %s86
    %p95 = scmp.eq.s32.totalorder %s14, 1
    %p96 = por %p94, %p95
    %p97 = scmp.ne.s32.totalorder %s86, %s87
    %p98 = scmp.eq.s32.totalorder %s14, 0
    %p99 = por %p97, %p98
    %p100 = scmp.ne.s32.totalorder %s86, %s87
    %p101 = scmp.eq.s32.totalorder %s15, 1
    %p102 = por %p100, %p101
    %p104 = scmp.ne.s32.totalorder %s87, %s103
    %p105 = scmp.eq.s32.totalorder %s15, 0
    %p106 = por %p104, %p105
    %s107 = ssub.s32 %s16, %s28
    %s108 = ssub.s32 %s17, %s24
    %s109 = sor.u32 %s107, %s108
    %p110 = scmp.eq.s32.totalorder %s109, 0
    %s112 = sadd.s32 %s111, 1
    %s113 = scalar_select %p110, %s111, %s112
    %p116 = pneg %p110
    %p117 = scmp.eq.s32.totalorder %s9, 1
    %p118 = por %p116, %p117
    %p119 = scmp.ne.s32.totalorder %s111, %s114
    %p120 = scmp.eq.s32.totalorder %s9, 0
    %p121 = por %p119, %p120
    %p122 = scmp.ne.s32.totalorder %s111, %s114
    %p123 = scmp.eq.s32.totalorder %s14, 1
    %p124 = por %p122, %p123
    %p125 = scmp.ne.s32.totalorder %s114, %s115
    %p126 = scmp.eq.s32.totalorder %s14, 0
    %p127 = por %p125, %p126
    %p128 = scmp.ne.s32.totalorder %s114, %s115
    %p129 = scmp.eq.s32.totalorder %s15, 1
    %p130 = por %p128, %p129
    %p132 = scmp.ne.s32.totalorder %s115, %s131
    %p133 = scmp.eq.s32.totalorder %s15, 0
    %p134 = por %p132, %p133
    %p135 = scmp.le.s32.totalorder 1, %s9
    %p136 = scmp.lt.s32.totalorder %s9, 3
    %p137 = pnand %p135, %p136
    %p138 = pneg %p137
    // Predicated region
    $region9: #{maniqa_forward.22} parent=5 // pred_check
      _
    $region10: #{maniqa_forward.22} parent=5 // pred_check_branch
      %140 = sbr.rel (%p137) target = $region12
    $region11: #{maniqa_forward.22} parent=5 // pred_region
      %s141 = ssub.s32 %s9, 1
      // Predicated region
      $region13: #{maniqa_forward.22} parent=11 // pred_check
        %p142 = pneg %p73
      $region14: #{maniqa_forward.22} parent=11 // pred_check_branch
        %144 = sbr.rel (%p142) target = $region16
      $region15: #{maniqa_forward.22} parent=11 // pred_region
        %s145 = smul.u32 4, %s19
        %p146 = scmp.lt.s32.totalorder %s145, 3
        %s147 = scalar_select %p146, %s145, 3
        %s148 = smul.addr %s147, 8
        %s149 = scalar_lea.vmem %s1, %s148
        %s150 = smul.u32 4, %s19
      $region16: #{maniqa_forward.22} parent=11 // pred_fallthru
        _
      // Predicated region
      $region17: #{maniqa_forward.22} parent=11 // pred_check
        %p151 = pneg %p99
      $region18: #{maniqa_forward.22} parent=11 // pred_check_branch
        %153 = sbr.rel (%p151) target = $region20
      $region19: #{maniqa_forward.22} parent=11 // pred_region
        %s154 = smul.u32 4, %s19
        %p155 = scmp.lt.s32.totalorder %s154, 3
        %s156 = scalar_select %p155, %s154, 3
        %s157 = smul.addr %s156, 8
        %s158 = scalar_lea.vmem %s2, %s157
        %s159 = smul.u32 4, %s19
      $region20: #{maniqa_forward.22} parent=11 // pred_fallthru
        _
    $region12: #{maniqa_forward.22} parent=5 // pred_fallthru
      _
    %p160 = scmp.lt.s32.totalorder %s9, 2
    // Predicated region
    $region21: #{maniqa_forward.22} parent=5 // pred_check
      %p161 = pneg %p160
    $region22: #{maniqa_forward.22} parent=5 // pred_check_branch
      %163 = sbr.rel (%p161) target = $region24
    $region23: #{maniqa_forward.22} parent=5 // pred_region
      // Predicated region
      $region25: #{maniqa_forward.22} parent=23 // pred_check
        %p164 = pneg %p41
      $region26: #{maniqa_forward.22} parent=23 // pred_check_branch
        %166 = sbr.rel (%p164) target = $region28
      $region27: #{maniqa_forward.22} parent=23 // pred_region
        %p167 = scmp.lt.s32.totalorder %s16, 1
        %s168 = scalar_select %p167, %s16, 1
        %s169 = smul.addr %s168, 16
        %s170 = smul.addr %s169, 8
        %s171 = scalar_lea.vmem %s0, %s170
      $region28: #{maniqa_forward.22} parent=23 // pred_fallthru
        _
    $region24: #{maniqa_forward.22} parent=5 // pred_fallthru
      _
    %p172 = scmp.le.s32.totalorder 1, %s9
    %p173 = scmp.lt.s32.totalorder %s9, 3
    %p174 = pnand %p172, %p173
    %p175 = pneg %p174
    // Predicated region
    $region29: #{maniqa_forward.22} parent=5 // pred_check
      _
    $region30: #{maniqa_forward.22} parent=5 // pred_check_branch
      %177 = sbr.rel (%p174) target = $region32
    $region31: #{maniqa_forward.22} parent=5 // pred_region
      %s178 = ssub.s32 %s9, 1
      %p179 = scmp.lt.s32.totalorder %s18, 1
      %s180 = scalar_select %p179, %s18, 1
      %s181 = smul.addr %s180, 16
      %s182 = smul.addr %s181, 8
      %s183 = scalar_lea.vmem %s0, %s182
      %p184 = pneg %p47
      %p185 = pneg %p44
      %s186 = smul.u32 4, %s19
      %p187 = scmp.lt.s32.totalorder %s186, 3
      %s188 = scalar_select %p187, %s186, 3
      %s189 = smul.addr %s188, 8
      %s190 = scalar_lea.vmem %s1, %s189
      %p191 = pneg %p73
      %p192 = pneg %p70
      %s193 = smul.u32 4, %s19
      %p194 = scmp.lt.s32.totalorder %s193, 3
      %s195 = scalar_select %p194, %s193, 3
      %s196 = smul.addr %s195, 8
      %s197 = scalar_lea.vmem %s2, %s196
      %p198 = pneg %p99
      %p199 = pneg %p96
      %p200 = pneg %p127
      %p201 = pneg %p124
      %s202 = smul.u32 4, %s19
      %p203 = scmp.lt.s32.totalorder %s18, 1
      %s204 = scalar_select %p203, %s18, 1
      %p205 = scmp.lt.s32.totalorder %s202, 3
      %s206 = scalar_select %p205, %s202, 3
      %s207 = smul.addr %s204, 4
      %s208 = sadd.s32 %s206, %s207
      %s209 = smul.addr %s208, 8
      %s210 = scalar_lea.vmem %s3, %s209
      %p211 = scmp.lt.s32.totalorder %s18, 1
      %s212 = scalar_select %p211, %s18, 1
      %s213 = smul.addr %s212, 16
      %s214 = smul.addr %s213, 8
      %s215 = scalar_lea.vmem %s0, %s214
      %s216 = smul.u32 4, %s19
      %p217 = scmp.lt.s32.totalorder %s216, 3
      %s218 = scalar_select %p217, %s216, 3
      %s219 = smul.addr %s218, 8
      %s220 = scalar_lea.vmem %s1, %s219
      %s221 = smul.u32 4, %s19
      %s222 = smul.u32 4, %s19
      %p223 = scmp.lt.s32.totalorder %s222, 3
      %s224 = scalar_select %p223, %s222, 3
      %s225 = smul.addr %s224, 8
      %s226 = scalar_lea.vmem %s2, %s225
      %s227 = smul.u32 4, %s19
      %s228 = smul.u32 4, %s19
      %p229 = scmp.lt.s32.totalorder %s18, 1
      %s230 = scalar_select %p229, %s18, 1
      %p231 = scmp.lt.s32.totalorder %s228, 3
      %s232 = scalar_select %p231, %s228, 3
      %s233 = smul.addr %s230, 4
      %s234 = sadd.s32 %s232, %s233
      %s235 = smul.addr %s234, 8
      %s236 = scalar_lea.vmem %s3, %s235
      %s237 = smul.u32 4, %s19
      %v238 = vld [vmem:[%s215] sm:$0xff]
      %v239 = vld [vmem:[%s215 + $0x8] sm:$0xff]
      %v240 = vld [vmem:[%s215 + $0x10] sm:$0xff]
      %v241 = vld [vmem:[%s215 + $0x18] sm:$0xff]
      %v242 = vld [vmem:[%s215 + $0x20] sm:$0xff]
      %v243 = vld [vmem:[%s215 + $0x28] sm:$0xff]
      %v244 = vld [vmem:[%s215 + $0x30] sm:$0xff]
      %v245 = vld [vmem:[%s215 + $0x38] sm:$0xff]
      %v246 = vld [vmem:[%s215 + $0x40] sm:$0xff]
      %v247 = vld [vmem:[%s215 + $0x48] sm:$0xff]
      %v248 = vld [vmem:[%s215 + $0x50] sm:$0xff]
      %v249 = vld [vmem:[%s215 + $0x58] sm:$0xff]
      %v250 = vld [vmem:[%s215 + $0x60] sm:$0xff]
      %v251 = vld [vmem:[%s215 + $0x68] sm:$0xff]
      %v252 = vld [vmem:[%s215 + $0x70] sm:$0xff]
      %v253 = vld [vmem:[%s215 + $0x78] sm:$0xff]
      %v254 = vld [vmem:[%s220] sm:$0xff]
      %v255 = vld [vmem:[%s220 + $0x8] sm:$0xff]
      %v256 = vld [vmem:[%s220 + $0x10] sm:$0xff]
      %v257 = vld [vmem:[%s220 + $0x18] sm:$0xff]
      %v258 = vld [vmem:[%s226] sm:$0xff]
      %v259 = vld [vmem:[%s226 + $0x8] sm:$0xff]
      %v260 = vld [vmem:[%s226 + $0x10] sm:$0xff]
      %v261 = vld [vmem:[%s226 + $0x18] sm:$0xff]
      %263 = vset.pattern.permute.xlu0 0
      %264 = vperm.xlu0 %263, %v258
      %v265 = vpop.permute.xlu0 %264
      %268 = vset.pattern.permute.xlu0 0
      %269 = vperm.xlu0 %268, %v259
      %v270 = vpop.permute.xlu0 %269
      %273 = vset.pattern.permute.xlu0 0
      %274 = vperm.xlu0 %273, %v260
      %v275 = vpop.permute.xlu0 %274
      %278 = vset.pattern.permute.xlu0 0
      %279 = vperm.xlu0 %278, %v261
      %v280 = vpop.permute.xlu0 %279
      %282 = vmatprep.subr.mxu0 0.0
      %283 = vmatpush1.msra.mxu0 %v238
      %284 = vmatprep.subr.mxu0 0.0
      %285 = vmatpush1.msra.mxu0 %v239
      %286 = vmatprep.subr.mxu0 0.0
      %287 = vmatpush1.msra.mxu0 %v240
      %288 = vmatprep.subr.mxu0 0.0
      %289 = vmatpush1.msra.mxu0 %v241
      %290 = vmatprep.subr.mxu0 0.0
      %291 = vmatpush1.msra.mxu0 %v242
      %292 = vmatprep.subr.mxu0 0.0
      %293 = vmatpush1.msra.mxu0 %v243
      %294 = vmatprep.subr.mxu0 0.0
      %295 = vmatpush1.msra.mxu0 %v244
      %296 = vmatprep.subr.mxu0 0.0
      %297 = vmatpush1.msra.mxu0 %v245
      %298 = vmatprep.subr.mxu0 0.0
      %299 = vmatpush1.msra.mxu0 %v246
      %300 = vmatprep.subr.mxu0 0.0
      %301 = vmatpush1.msra.mxu0 %v247
      %302 = vmatprep.subr.mxu0 0.0
      %303 = vmatpush1.msra.mxu0 %v248
      %304 = vmatprep.subr.mxu0 0.0
      %305 = vmatpush1.msra.mxu0 %v249
      %306 = vmatprep.subr.mxu0 0.0
      %307 = vmatpush1.msra.mxu0 %v250
      %308 = vmatprep.subr.mxu0 0.0
      %309 = vmatpush1.msra.mxu0 %v251
      %310 = vmatprep.subr.mxu0 0.0
      %311 = vmatpush1.msra.mxu0 %v252
      %312 = vmatprep.subr.mxu0 0.0
      %313 = vmatpush1.msra.mxu0 %v253
      %314 = vmatprep.subr.mxu0 0.0
      %315 = vmatpush1.msra.mxu0 0.0
      %316 = vmatprep.subr.mxu0 0.0
      %317 = vmatpush1.msra.mxu0 0.0
      %318 = vmatprep.subr.mxu0 0.0
      %319 = vmatpush1.msra.mxu0 0.0
      %320 = vmatprep.subr.mxu0 0.0
      %321 = vmatpush1.msra.mxu0 0.0
      %322 = vmatprep.subr.mxu0 0.0
      %323 = vmatpush1.msra.mxu0 0.0
      %324 = vmatprep.subr.mxu0 0.0
      %325 = vmatpush1.msra.mxu0 0.0
      %326 = vmatprep.subr.mxu0 0.0
      %327 = vmatpush1.msra.mxu0 0.0
      %328 = vmatprep.subr.mxu0 0.0
      %329 = vmatpush1.msra.mxu0 0.0
      %330 = vmatprep.subr.mxu0 0.0
      %331 = vmatpush1.msra.mxu0 0.0
      %332 = vmatprep.subr.mxu0 0.0
      %333 = vmatpush1.msra.mxu0 0.0
      %334 = vmatprep.subr.mxu0 0.0
      %335 = vmatpush1.msra.mxu0 0.0
      %336 = vmatprep.subr.mxu0 0.0
      %337 = vmatpush1.msra.mxu0 0.0
      %338 = vmatprep.subr.mxu0 0.0
      %339 = vmatpush1.msra.mxu0 0.0
      %340 = vmatprep.subr.mxu0 0.0
      %341 = vmatpush1.msra.mxu0 0.0
      %342 = vmatprep.subr.mxu0 0.0
      %343 = vmatpush1.msra.mxu0 0.0
      %344 = vmatprep.subr.mxu0 0.0
      %345 = vmatpush1.msra.mxu0 0.0
      %346 = vmatprep.mubr.f32.mxu0 0.0
      %347 = vmatmul.mubr.f32.gmra.mrb[0].mxu0 %v254
      %v348 = vpop.f32.mrb[0].mxu0
      %v349 = vadd.f32 %v265, %v348
      %v350 = vpop.f32.mrb[0].mxu0
      %351 = vmatprep.mubr.f32.mxu0 0.0
      %352 = vmatmul.mubr.f32.gmra.mrb[0].mxu0 %v255
      %v353 = vpop.f32.mrb[0].mxu0
      %v354 = vadd.f32 %v270, %v353
      %v355 = vpop.f32.mrb[0].mxu0
      %356 = vmatprep.mubr.f32.mxu0 0.0
      %357 = vmatmul.mubr.f32.gmra.mrb[0].mxu0 %v256
      %v358 = vpop.f32.mrb[0].mxu0
      %v359 = vadd.f32 %v275, %v358
      %v360 = vpop.f32.mrb[0].mxu0
      %361 = vmatprep.mubr.f32.mxu0 0.0
      %362 = vmatmul.mubr.f32.gmra.mrb[0].mxu0 %v257
      %v363 = vpop.f32.mrb[0].mxu0
      %v364 = vadd.f32 %v280, %v363
      %v365 = vpop.f32.mrb[0].mxu0
      %366 = vdwg.mxu0
      %vm367 = vcmask 523264
      %368 = vst.msk [vmem:[%s236] sm:$0xff] %vm367, %v349
      %369 = vst.msk [vmem:[%s236 + $0x8] sm:$0xff] %vm367, %v354
      %370 = vst.msk [vmem:[%s236 + $0x10] sm:$0xff] %vm367, %v359
      %371 = vst.msk [vmem:[%s236 + $0x18] sm:$0xff] %vm367, %v364
      %s372 = smul.u32 4, %s19
      %p373 = scmp.lt.s32.totalorder %s18, 1
      %s374 = scalar_select %p373, %s18, 1
      %p375 = scmp.lt.s32.totalorder %s372, 3
      %s376 = scalar_select %p375, %s372, 3
      %s377 = smul.addr %s374, 4
      %s378 = sadd.s32 %s376, %s377
      %s379 = smul.addr %s378, 8
      %s380 = scalar_lea.vmem %s3, %s379
      // Predicated region
      $region33: #{maniqa_forward.22} parent=31 // pred_check
        %p381 = pneg %p124
      $region34: #{maniqa_forward.22} parent=31 // pred_check_branch
        %383 = sbr.rel (%p381) target = $region36
      $region35: #{maniqa_forward.22} parent=31 // pred_region
        %s384 = smul.u32 4, %s19
      $region36: #{maniqa_forward.22} parent=31 // pred_fallthru
        _
    $region32: #{maniqa_forward.22} parent=5 // pred_fallthru
      _
    %p385 = scmp.le.s32.totalorder 2, %s9
    // Predicated region
    $region37: #{maniqa_forward.22} parent=5 // pred_check
      %p386 = pneg %p385
    $region38: #{maniqa_forward.22} parent=5 // pred_check_branch
      %388 = sbr.rel (%p386) target = $region40
    $region39: #{maniqa_forward.22} parent=5 // pred_region
      %s389 = ssub.s32 %s9, 2
      // Predicated region
      $region41: #{maniqa_forward.22} parent=39 // pred_check
        %p390 = pneg %p130
      $region42: #{maniqa_forward.22} parent=39 // pred_check_branch
        %392 = sbr.rel (%p390) target = $region44
      $region43: #{maniqa_forward.22} parent=39 // pred_region
        %s393 = smul.u32 4, %s21
        %p394 = scmp.lt.s32.totalorder %s20, 1
        %s395 = scalar_select %p394, %s20, 1
        %p396 = scmp.lt.s32.totalorder %s393, 3
        %s397 = scalar_select %p396, %s393, 3
        %s398 = smul.addr %s395, 4
        %s399 = sadd.s32 %s397, %s398
        %s400 = smul.addr %s399, 8
        %s401 = scalar_lea.vmem %s3, %s400
      $region44: #{maniqa_forward.22} parent=39 // pred_fallthru
        _
    $region40: #{maniqa_forward.22} parent=5 // pred_fallthru
      _
  $region6: #{maniqa_forward.22} parent=0 // loop_footer
    %s13 = sadd.s32 1, %s9
  $region7: #{maniqa_forward.22} parent=0 // loop_footer_branch
    %8 = sbr.rel target = $region3
  $region8: #{maniqa_forward.22} parent=0 // loop_exit
    _

// kernel: maniqa_forward.23
$region0: #{maniqa_forward.23}
  #allocation0 [shape = 'u32[]', space=smem, size = 0x4, offset = 0x4, fixed_abs, tag = 'smem constant byte address 0x4 - core index']
  #allocation1 [shape = 'u32[144,128]{1,0:T(1,128)}', space=vmem, size = 0x12000, scoped, tag = 'internal scratch']
  %s0 = inlined_call_operand.vmem [shape: f32[2,32,64], index: 0, kind: input, shape index: {}]
  %s1 = inlined_call_operand.vmem [shape: f32[64,64], index: 1, kind: input, shape index: {}]
  %s2 = inlined_call_operand.vmem [shape: f32[64,64], index: 2, kind: input, shape index: {}]
  %s3 = inlined_call_operand.vmem [shape: f32[1,64], index: 3, kind: input, shape index: {}]
  %s4 = inlined_call_operand.vmem [shape: f32[1,64], index: 4, kind: input, shape index: {}]
  %s5 = inlined_call_operand.hbm [shape: f32[2,32,64], index: 5, kind: output, shape index: {0}]
  %s6 = inlined_call_operand.hbm [shape: f32[2,64,32], index: 6, kind: output, shape index: {1}]
  %7 = xla_tuple %s5, %s6
  %s8 = sld [smem:[#allocation0]]
  $region61: #{maniqa_forward.23} parent=0
    _
  %s10 = ssub.s32 1, %s8
  %s11 = scalar_select 0, %s10, %s8
  $region1: #{maniqa_forward.23} parent=0
    #allocation2 [shape = 'u8[32768]{0}', space=vmem, size = 0x8000, scoped, tag = 'output window, operand 0']
    #allocation3 [shape = 's32[2]{0}', space=sflag, size = 0x8, scoped, tag = 'scoped memory for maniqa_forward.23']
    #allocation4 [shape = 'u8[65536]{0}', space=vmem, size = 0x10000, scoped, tag = 'output window, operand 1']
    #allocation5 [shape = 's32[2]{0}', space=sflag, size = 0x8, scoped, tag = 'scoped memory for maniqa_forward.23']
    %12 = vsyncpa [#allocation3], 0
    %s13 = scalar_lea.sflag [#allocation3], 1
    %14 = vsyncpa %s13, 0
    %15 = vsyncpa [#allocation5], 0
    %s16 = scalar_lea.sflag [#allocation5], 1
    %17 = vsyncpa %s16, 0
    loop: start=0, step=1, limit=4
    $region2: #{maniqa_forward.23} parent=1 // loop_pre_header
      _
    $region3: #{maniqa_forward.23} parent=1 // loop_header
      %s19 = sphi 0, %s23
      %p20 = scmp.ge.s32.totalorder %s19, 4
      %s26 = sphi 0, %s38
      %s27 = sphi 0, %s34
      %s28 = sphi 0, %s26
      %s29 = sphi 0, %s27
      %s30 = sphi 0, %s28
      %s31 = sphi 0, %s29
      %s43 = sphi 0, %s45
      %s46 = sphi 0, %s43
      %s47 = sphi 0, %s46
      %s63 = sphi 0, %s47
      %s67 = sphi 0, %s67
      %s69 = sphi 0, %s67
      %s70 = sphi 0, %s69
      %s84 = sphi 0, %s70
      %s88 = sphi 0, %s88
      %s90 = sphi 0, %s88
      %s91 = sphi 0, %s90
      %s105 = sphi 0, %s91
      %s109 = sphi 0, %s109
      %s111 = sphi 0, %s109
      %s112 = sphi 0, %s111
      %s126 = sphi 0, %s112
      %s130 = sphi 0, %s130
      %s132 = sphi 0, %s130
      %s133 = sphi 0, %s132
      %s147 = sphi 0, %s133
      %s155 = sphi 0, %s157
      %s158 = sphi 0, %s155
      %s159 = sphi 0, %s158
      %s175 = sphi 0, %s159
      %s183 = sphi 0, %s185
      %s186 = sphi 0, %s183
      %s187 = sphi 0, %s186
      %s203 = sphi 0, %s187
    $region4: #{maniqa_forward.23} parent=1 // loop_header_branch
      %22 = sbr.rel (%p20) target = $region8
    $region5: #{maniqa_forward.23} parent=1 // loop_body
      %s24 = ssub.s32 %s19, 1
      %s25 = ssub.s32 %s19, 2
      %s32 = sadd.s32 1, %s27
      %p33 = scmp.ge.s32.totalorder %s32, 1
      %s34 = scalar_select %p33, 0, %s32
      %s35 = sadd.s32 1, %s26
      %s36 = scalar_select %p33, %s35, %s26
      %p37 = scmp.ge.s32.totalorder %s36, 2
      %s38 = scalar_select %p37, 0, %s36
      %s39 = ssub.s32 %s26, %s38
      %s40 = ssub.s32 %s27, %s34
      %s41 = sor.u32 %s39, %s40
      %p42 = scmp.eq.s32.totalorder %s41, 0
      %s44 = sadd.s32 %s43, 1
      %s45 = scalar_select %p42, %s43, %s44
      %p48 = pneg %p42
      %p49 = scmp.eq.s32.totalorder %s19, 1
      %p50 = por %p48, %p49
      %p51 = scmp.ne.s32.totalorder %s43, %s46
      %p52 = scmp.eq.s32.totalorder %s19, 0
      %p53 = por %p51, %p52
      %p54 = scmp.ne.s32.totalorder %s43, %s46
      %p55 = scmp.eq.s32.totalorder %s24, 1
      %p56 = por %p54, %p55
      %p57 = scmp.ne.s32.totalorder %s46, %s47
      %p58 = scmp.eq.s32.totalorder %s24, 0
      %p59 = por %p57, %p58
      %p60 = scmp.ne.s32.totalorder %s46, %s47
      %p61 = scmp.eq.s32.totalorder %s25, 1
      %p62 = por %p60, %p61
      %p64 = scmp.ne.s32.totalorder %s47, %s63
      %p65 = scmp.eq.s32.totalorder %s25, 0
      %p66 = por %p64, %p65
      %s68 = sadd.s32 %s67, 1
      %p71 = scmp.eq.s32.totalorder %s19, 1
      %p72 = scmp.ne.s32.totalorder %s67, %s69
      %p73 = scmp.eq.s32.totalorder %s19, 0
      %p74 = por %p72, %p73
      %p75 = scmp.ne.s32.totalorder %s67, %s69
      %p76 = scmp.eq.s32.totalorder %s24, 1
      %p77 = por %p75, %p76
      %p78 = scmp.ne.s32.totalorder %s69, %s70
      %p79 = scmp.eq.s32.totalorder %s24, 0
      %p80 = por %p78, %p79
      %p81 = scmp.ne.s32.totalorder %s69, %s70
      %p82 = scmp.eq.s32.totalorder %s25, 1
      %p83 = por %p81, %p82
      %p85 = scmp.ne.s32.totalorder %s70, %s84
      %p86 = scmp.eq.s32.totalorder %s25, 0
      %p87 = por %p85, %p86
      %s89 = sadd.s32 %s88, 1
      %p92 = scmp.eq.s32.totalorder %s19, 1
      %p93 = scmp.ne.s32.totalorder %s88, %s90
      %p94 = scmp.eq.s32.totalorder %s19, 0
      %p95 = por %p93, %p94
      %p96 = scmp.ne.s32.totalorder %s88, %s90
      %p97 = scmp.eq.s32.totalorder %s24, 1
      %p98 = por %p96, %p97
      %p99 = scmp.ne.s32.totalorder %s90, %s91
      %p100 = scmp.eq.s32.totalorder %s24, 0
      %p101 = por %p99, %p100
      %p102 = scmp.ne.s32.totalorder %s90, %s91
      %p103 = scmp.eq.s32.totalorder %s25, 1
      %p104 = por %p102, %p103
      %p106 = scmp.ne.s32.totalorder %s91, %s105
      %p107 = scmp.eq.s32.totalorder %s25, 0
      %p108 = por %p106, %p107
      %s110 = sadd.s32 %s109, 1
      %p113 = scmp.eq.s32.totalorder %s19, 1
      %p114 = scmp.ne.s32.totalorder %s109, %s111
      %p115 = scmp.eq.s32.totalorder %s19, 0
      %p116 = por %p114, %p115
      %p117 = scmp.ne.s32.totalorder %s109, %s111
      %p118 = scmp.eq.s32.totalorder %s24, 1
      %p119 = por %p117, %p118
      %p120 = scmp.ne.s32.totalorder %s111, %s112
      %p121 = scmp.eq.s32.totalorder %s24, 0
      %p122 = por %p120, %p121
      %p123 = scmp.ne.s32.totalorder %s111, %s112
      %p124 = scmp.eq.s32.totalorder %s25, 1
      %p125 = por %p123, %p124
      %p127 = scmp.ne.s32.totalorder %s112, %s126
      %p128 = scmp.eq.s32.totalorder %s25, 0
      %p129 = por %p127, %p128
      %s131 = sadd.s32 %s130, 1
      %p134 = scmp.eq.s32.totalorder %s19, 1
      %p135 = scmp.ne.s32.totalorder %s130, %s132
      %p136 = scmp.eq.s32.totalorder %s19, 0
      %p137 = por %p135, %p136
      %p138 = scmp.ne.s32.totalorder %s130, %s132
      %p139 = scmp.eq.s32.totalorder %s24, 1
      %p140 = por %p138, %p139
      %p141 = scmp.ne.s32.totalorder %s132, %s133
      %p142 = scmp.eq.s32.totalorder %s24, 0
      %p143 = por %p141, %p142
      %p144 = scmp.ne.s32.totalorder %s132, %s133
      %p145 = scmp.eq.s32.totalorder %s25, 1
      %p146 = por %p144, %p145
      %p148 = scmp.ne.s32.totalorder %s133, %s147
      %p149 = scmp.eq.s32.totalorder %s25, 0
      %p150 = por %p148, %p149
      %s151 = ssub.s32 %s26, %s38
      %s152 = ssub.s32 %s27, %s34
      %s153 = sor.u32 %s151, %s152
      %p154 = scmp.eq.s32.totalorder %s153, 0
      %s156 = sadd.s32 %s155, 1
      %s157 = scalar_select %p154, %s155, %s156
      %p160 = pneg %p154
      %p161 = scmp.eq.s32.totalorder %s19, 1
      %p162 = por %p160, %p161
      %p163 = scmp.ne.s32.totalorder %s155, %s158
      %p164 = scmp.eq.s32.totalorder %s19, 0
      %p165 = por %p163, %p164
      %p166 = scmp.ne.s32.totalorder %s155, %s158
      %p167 = scmp.eq.s32.totalorder %s24, 1
      %p168 = por %p166, %p167
      %p169 = scmp.ne.s32.totalorder %s158, %s159
      %p170 = scmp.eq.s32.totalorder %s24, 0
      %p171 = por %p169, %p170
      %p172 = scmp.ne.s32.totalorder %s158, %s159
      %p173 = scmp.eq.s32.totalorder %s25, 1
      %p174 = por %p172, %p173
      %p176 = scmp.ne.s32.totalorder %s159, %s175
      %p177 = scmp.eq.s32.totalorder %s25, 0
      %p178 = por %p176, %p177
      %s179 = ssub.s32 %s26, %s38
      %s180 = ssub.s32 %s27, %s34
      %s181 = sor.u32 %s179, %s180
      %p182 = scmp.eq.s32.totalorder %s181, 0
      %s184 = sadd.s32 %s183, 1
      %s185 = scalar_select %p182, %s183, %s184
      %p188 = pneg %p182
      %p189 = scmp.eq.s32.totalorder %s19, 1
      %p190 = por %p188, %p189
      %p191 = scmp.ne.s32.totalorder %s183, %s186
      %p192 = scmp.eq.s32.totalorder %s19, 0
      %p193 = por %p191, %p192
      %p194 = scmp.ne.s32.totalorder %s183, %s186
      %p195 = scmp.eq.s32.totalorder %s24, 1
      %p196 = por %p194, %p195
      %p197 = scmp.ne.s32.totalorder %s186, %s187
      %p198 = scmp.eq.s32.totalorder %s24, 0
      %p199 = por %p197, %p198
      %p200 = scmp.ne.s32.totalorder %s186, %s187
      %p201 = scmp.eq.s32.totalorder %s25, 1
      %p202 = por %p200, %p201
      %p204 = scmp.ne.s32.totalorder %s187, %s203
      %p205 = scmp.eq.s32.totalorder %s25, 0
      %p206 = por %p204, %p205
      %p207 = scmp.le.s32.totalorder 1, %s19
      %p208 = scmp.lt.s32.totalorder %s19, 3
      %p209 = pnand %p207, %p208
      %p210 = pneg %p209
      // Predicated region
      $region9: #{maniqa_forward.23} parent=5 // pred_check
        _
      $region10: #{maniqa_forward.23} parent=5 // pred_check_branch
        %212 = sbr.rel (%p209) target = $region12
      $region11: #{maniqa_forward.23} parent=5 // pred_region
        %s213 = ssub.s32 %s19, 1
        // Predicated region
        $region13: #{maniqa_forward.23} parent=11 // pred_check
          %p214 = pneg %p80
        $region14: #{maniqa_forward.23} parent=11 // pred_check_branch
          %216 = sbr.rel (%p214) target = $region16
        $region15: #{maniqa_forward.23} parent=11 // pred_region
          _
        $region16: #{maniqa_forward.23} parent=11 // pred_fallthru
          _
        // Predicated region
        $region17: #{maniqa_forward.23} parent=11 // pred_check
          %p217 = pneg %p101
        $region18: #{maniqa_forward.23} parent=11 // pred_check_branch
          %219 = sbr.rel (%p217) target = $region20
        $region19: #{maniqa_forward.23} parent=11 // pred_region
          _
        $region20: #{maniqa_forward.23} parent=11 // pred_fallthru
          _
        // Predicated region
        $region21: #{maniqa_forward.23} parent=11 // pred_check
          %p220 = pneg %p122
        $region22: #{maniqa_forward.23} parent=11 // pred_check_branch
          %222 = sbr.rel (%p220) target = $region24
        $region23: #{maniqa_forward.23} parent=11 // pred_region
          _
        $region24: #{maniqa_forward.23} parent=11 // pred_fallthru
          _
        // Predicated region
        $region25: #{maniqa_forward.23} parent=11 // pred_check
          %p223 = pneg %p143
        $region26: #{maniqa_forward.23} parent=11 // pred_check_branch
          %225 = sbr.rel (%p223) target = $region28
        $region27: #{maniqa_forward.23} parent=11 // pred_region
          _
        $region28: #{maniqa_forward.23} parent=11 // pred_fallthru
          _
      $region12: #{maniqa_forward.23} parent=5 // pred_fallthru
        _
      %p226 = scmp.lt.s32.totalorder %s19, 2
      // Predicated region
      $region29: #{maniqa_forward.23} parent=5 // pred_check
        %p227 = pneg %p226
      $region30: #{maniqa_forward.23} parent=5 // pred_check_branch
        %229 = sbr.rel (%p227) target = $region32
      $region31: #{maniqa_forward.23} parent=5 // pred_region
        // Predicated region
        $region33: #{maniqa_forward.23} parent=31 // pred_check
          %p230 = pneg %p53
        $region34: #{maniqa_forward.23} parent=31 // pred_check_branch
          %232 = sbr.rel (%p230) target = $region36
        $region35: #{maniqa_forward.23} parent=31 // pred_region
          %s233 = smul.u32 4, %s27
          %p234 = scmp.lt.s32.totalorder %s26, 1
          %s235 = scalar_select %p234, %s26, 1
          %p236 = scmp.lt.s32.totalorder %s233, 3
          %s237 = scalar_select %p236, %s233, 3
          %s238 = smul.addr %s235, 4
          %s239 = sadd.s32 %s237, %s238
          %s240 = smul.addr %s239, 8
          %s241 = scalar_lea.vmem %s0, %s240
          %s242 = smul.u32 4, %s27
        $region36: #{maniqa_forward.23} parent=31 // pred_fallthru
          _
      $region32: #{maniqa_forward.23} parent=5 // pred_fallthru
        _
      %p243 = scmp.le.s32.totalorder 1, %s19
      %p244 = scmp.lt.s32.totalorder %s19, 3
      %p245 = pnand %p243, %p244
      %p246 = pneg %p245
      // Predicated region
      $region37: #{maniqa_forward.23} parent=5 // pred_check
        _
      $region38: #{maniqa_forward.23} parent=5 // pred_check_branch
        %248 = sbr.rel (%p245) target = $region40
      $region39: #{maniqa_forward.23} parent=5 // pred_region
        %s249 = ssub.s32 %s19, 1
        %s250 = smul.u32 4, %s29
        %p251 = scmp.lt.s32.totalorder %s28, 1
        %s252 = scalar_select %p251, %s28, 1
        %p253 = scmp.lt.s32.totalorder %s250, 3
        %s254 = scalar_select %p253, %s250, 3
        %s255 = smul.addr %s252, 4
        %s256 = sadd.s32 %s254, %s255
        %s257 = smul.addr %s256, 8
        %s258 = scalar_lea.vmem %s0, %s257
        %p259 = pneg %p59
        %p260 = pneg %p56
        %p261 = pneg %p80
        %p262 = pneg %p77
        %p263 = pneg %p101
        %p264 = pneg %p98
        %p265 = pneg %p122
        %p266 = pneg %p119
        %p267 = pneg %p143
        %p268 = pneg %p140
        %p269 = pneg %p171
        %p270 = pneg %p168
        %s271 = sand.u32 %s158, 1
        %s272 = scalar_lea.sflag [#allocation3], %s271
        %s273 = sand.u32 %s158, 1
        %s274 = smul.addr %s273, 32
        %s275 = scalar_lea.vmem [#allocation2], %s274
        %p276 = pneg %p199
        %p277 = pneg %p196
        %s278 = sand.u32 %s186, 1
        %s279 = scalar_lea.sflag [#allocation5], %s278
        %s280 = sand.u32 %s186, 1
        %s281 = smul.addr %s280, 64
        %s282 = scalar_lea.vmem [#allocation4], %s281
        %s283 = smul.u32 4, %s29
        %p284 = scmp.lt.s32.totalorder %s28, 1
        %s285 = scalar_select %p284, %s28, 1
        %p286 = scmp.lt.s32.totalorder %s283, 3
        %s287 = scalar_select %p286, %s283, 3
        %s288 = smul.addr %s285, 4
        %s289 = sadd.s32 %s287, %s288
        %s290 = smul.addr %s289, 8
        %s291 = scalar_lea.vmem %s0, %s290
        %s292 = smul.u32 4, %s29
        %s293 = smul.u32 4, %s29
        %v294 = vld [vmem:[%s291] sm:$0xff]
        %v295 = vld [vmem:[%s291 + $0x8] sm:$0xff]
        %v296 = vld [vmem:[%s291 + $0x10] sm:$0xff]
        %v297 = vld [vmem:[%s291 + $0x18] sm:$0xff]
        %v298 = vld [vmem:[%s1] sm:$0xff]
        %v299 = vld [vmem:[%s1 + $0x8] sm:$0xff]
        %v300 = vld [vmem:[%s1 + $0x10] sm:$0xff]
        %v301 = vld [vmem:[%s1 + $0x18] sm:$0xff]
        %v302 = vld [vmem:[%s1 + $0x20] sm:$0xff]
        %v303 = vld [vmem:[%s1 + $0x28] sm:$0xff]
        %v304 = vld [vmem:[%s1 + $0x30] sm:$0xff]
        %v305 = vld [vmem:[%s1 + $0x38] sm:$0xff]
        %v306 = vld [vmem:[%s2] sm:$0xff]
        %v307 = vld [vmem:[%s2 + $0x8] sm:$0xff]
        %v308 = vld [vmem:[%s2 + $0x10] sm:$0xff]
        %v309 = vld [vmem:[%s2 + $0x18] sm:$0xff]
        %v310 = vld [vmem:[%s2 + $0x20] sm:$0xff]
        %v311 = vld [vmem:[%s2 + $0x28] sm:$0xff]
        %v312 = vld [vmem:[%s2 + $0x30] sm:$0xff]
        %v313 = vld [vmem:[%s2 + $0x38] sm:$0xff]
        %v314 = vld [vmem:[%s3] sm:$0x1]
        %v316 = vlaneseq
        %v317 = vshrl.u32 %v316, 7
        %v318 = vsub.s32 0, %v317
        %v319 = vrot.slane %v314, %v318
        %vm321 = vcmask 523264
        %v323 = vsel %vm321, %v294, 0
        %v326 = vsel %vm321, %v295, 0
        %v329 = vsel %vm321, %v296, 0
        %v332 = vsel %vm321, %v297, 0
        %334 = vmatprep.subr.mxu0 0.0
        %335 = vmatpush1.msra.mxu0 %v298
        %336 = vmatprep.subr.mxu0 0.0
        %337 = vmatpush1.msra.mxu0 %v299
        %338 = vmatprep.subr.mxu0 0.0
        %339 = vmatpush1.msra.mxu0 %v300
        %340 = vmatprep.subr.mxu0 0.0
        %341 = vmatpush1.msra.mxu0 %v301
        %342 = vmatprep.subr.mxu0 0.0
        %343 = vmatpush1.msra.mxu0 %v302
        %344 = vmatprep.subr.mxu0 0.0
        %345 = vmatpush1.msra.mxu0 %v303
        %346 = vmatprep.subr.mxu0 0.0
        %347 = vmatpush1.msra.mxu0 %v304
        %348 = vmatprep.subr.mxu0 0.0
        %349 = vmatpush1.msra.mxu0 %v305
        %350 = vmatprep.subr.mxu0 0.0
        %351 = vmatpush1.msra.mxu0 0.0
        %352 = vmatprep.subr.mxu0 0.0
        %353 = vmatpush1.msra.mxu0 0.0
        %354 = vmatprep.subr.mxu0 0.0
        %355 = vmatpush1.msra.mxu0 0.0
        %356 = vmatprep.subr.mxu0 0.0
        %357 = vmatpush1.msra.mxu0 0.0
        %358 = vmatprep.subr.mxu0 0.0
        %359 = vmatpush1.msra.mxu0 0.0
        %360 = vmatprep.subr.mxu0 0.0
        %361 = vmatpush1.msra.mxu0 0.0
        %362 = vmatprep.subr.mxu0 0.0
        %363 = vmatpush1.msra.mxu0 0.0
        %364 = vmatprep.subr.mxu0 0.0
        %365 = vmatpush1.msra.mxu0 0.0
        %366 = vmatprep.subr.mxu0 0.0
        %367 = vmatpush1.msra.mxu0 0.0
        %368 = vmatprep.subr.mxu0 0.0
        %369 = vmatpush1.msra.mxu0 0.0
        %370 = vmatprep.subr.mxu0 0.0
        %371 = vmatpush1.msra.mxu0 0.0
        %372 = vmatprep.subr.mxu0 0.0
        %373 = vmatpush1.msra.mxu0 0.0
        %374 = vmatprep.subr.mxu0 0.0
        %375 = vmatpush1.msra.mxu0 0.0
        %376 = vmatprep.subr.mxu0 0.0
        %377 = vmatpush1.msra.mxu0 0.0
        %378 = vmatprep.subr.mxu0 0.0
        %379 = vmatpush1.msra.mxu0 0.0
        %380 = vmatprep.subr.mxu0 0.0
        %381 = vmatpush1.msra.mxu0 0.0
        %382 = vmatprep.subr.mxu0 0.0
        %383 = vmatpush1.msra.mxu0 0.0
        %384 = vmatprep.subr.mxu0 0.0
        %385 = vmatpush1.msra.mxu0 0.0
        %386 = vmatprep.subr.mxu0 0.0
        %387 = vmatpush1.msra.mxu0 0.0
        %388 = vmatprep.subr.mxu0 0.0
        %389 = vmatpush1.msra.mxu0 0.0
        %390 = vmatprep.subr.mxu0 0.0
        %391 = vmatpush1.msra.mxu0 0.0
        %392 = vmatprep.subr.mxu0 0.0
        %393 = vmatpush1.msra.mxu0 0.0
        %394 = vmatprep.subr.mxu0 0.0
        %395 = vmatpush1.msra.mxu0 0.0
        %396 = vmatprep.subr.mxu0 0.0
        %397 = vmatpush1.msra.mxu0 0.0
        %398 = vmatprep.mubr.f32.mxu0 0.0
        %399 = vmatmul.mubr.f32.gmra.mrb[0].mxu0 %v323
        %v400 = vpop.f32.mrb[0].mxu0
        %v401 = vadd.f32 %v319, %v400
        %v402 = vpop.f32.mrb[0].mxu0
        %403 = vmatprep.mubr.f32.mxu0 0.0
        %404 = vmatmul.mubr.f32.gmra.mrb[0].mxu0 %v326
        %v405 = vpop.f32.mrb[0].mxu0
        %v406 = vadd.f32 %v319, %v405
        %v407 = vpop.f32.mrb[0].mxu0
        %408 = vmatprep.mubr.f32.mxu0 0.0
        %409 = vmatmul.mubr.f32.gmra.mrb[0].mxu0 %v329
        %v410 = vpop.f32.mrb[0].mxu0
        %v411 = vadd.f32 %v319, %v410
        %v412 = vpop.f32.mrb[0].mxu0
        %413 = vmatprep.mubr.f32.mxu0 0.0
        %414 = vmatmul.mubr.f32.gmra.mrb[0].mxu0 %v332
        %v415 = vpop.f32.mrb[0].mxu0
        %v416 = vadd.f32 %v319, %v415
        %v417 = vpop.f32.mrb[0].mxu0
        %418 = vdwg.mxu0
        %v419 = vld [vmem:[%s4] sm:$0x1]
        %v421 = vlaneseq
        %v422 = vshrl.u32 %v421, 7
        %v423 = vsub.s32 0, %v422
        %v424 = vrot.slane %v419, %v423
        %426 = vmatprep.subr.mxu0 0.0
        %427 = vmatpush1.msra.mxu0 %v306
        %428 = vmatprep.subr.mxu0 0.0
        %429 = vmatpush1.msra.mxu0 %v307
        %430 = vmatprep.subr.mxu0 0.0
        %431 = vmatpush1.msra.mxu0 %v308
        %432 = vmatprep.subr.mxu0 0.0
        %433 = vmatpush1.msra.mxu0 %v309
        %434 = vmatprep.subr.mxu0 0.0
        %435 = vmatpush1.msra.mxu0 %v310
        %436 = vmatprep.subr.mxu0 0.0
        %437 = vmatpush1.msra.mxu0 %v311
        %438 = vmatprep.subr.mxu0 0.0
        %439 = vmatpush1.msra.mxu0 %v312
        %440 = vmatprep.subr.mxu0 0.0
        %441 = vmatpush1.msra.mxu0 %v313
        %442 = vmatprep.subr.mxu0 0.0
        %443 = vmatpush1.msra.mxu0 0.0
        %444 = vmatprep.subr.mxu0 0.0
        %445 = vmatpush1.msra.mxu0 0.0
        %446 = vmatprep.subr.mxu0 0.0
        %447 = vmatpush1.msra.mxu0 0.0
        %448 = vmatprep.subr.mxu0 0.0
        %449 = vmatpush1.msra.mxu0 0.0
        %450 = vmatprep.subr.mxu0 0.0
        %451 = vmatpush1.msra.mxu0 0.0
        %452 = vmatprep.subr.mxu0 0.0
        %453 = vmatpush1.msra.mxu0 0.0
        %454 = vmatprep.subr.mxu0 0.0
        %455 = vmatpush1.msra.mxu0 0.0
        %456 = vmatprep.subr.mxu0 0.0
        %457 = vmatpush1.msra.mxu0 0.0
        %458 = vmatprep.subr.mxu0 0.0
        %459 = vmatpush1.msra.mxu0 0.0
        %460 = vmatprep.subr.mxu0 0.0
        %461 = vmatpush1.msra.mxu0 0.0
        %462 = vmatprep.subr.mxu0 0.0
        %463 = vmatpush1.msra.mxu0 0.0
        %464 = vmatprep.subr.mxu0 0.0
        %465 = vmatpush1.msra.mxu0 0.0
        %466 = vmatprep.subr.mxu0 0.0
        %467 = vmatpush1.msra.mxu0 0.0
        %468 = vmatprep.subr.mxu0 0.0
        %469 = vmatpush1.msra.mxu0 0.0
        %470 = vmatprep.subr.mxu0 0.0
        %471 = vmatpush1.msra.mxu0 0.0
        %472 = vmatprep.subr.mxu0 0.0
        %473 = vmatpush1.msra.mxu0 0.0
        %474 = vmatprep.subr.mxu0 0.0
        %475 = vmatpush1.msra.mxu0 0.0
        %476 = vmatprep.subr.mxu0 0.0
        %477 = vmatpush1.msra.mxu0 0.0
        %478 = vmatprep.subr.mxu0 0.0
        %479 = vmatpush1.msra.mxu0 0.0
        %480 = vmatprep.subr.mxu0 0.0
        %481 = vmatpush1.msra.mxu0 0.0
        %482 = vmatprep.subr.mxu0 0.0
        %483 = vmatpush1.msra.mxu0 0.0
        %484 = vmatprep.subr.mxu0 0.0
        %485 = vmatpush1.msra.mxu0 0.0
        %486 = vmatprep.subr.mxu0 0.0
        %487 = vmatpush1.msra.mxu0 0.0
        %488 = vmatprep.subr.mxu0 0.0
        %489 = vmatpush1.msra.mxu0 0.0
        %490 = vmatprep.mubr.f32.mxu0 0.0
        %491 = vmatmul.mubr.f32.gmra.mrb[0].mxu0 %v323
        %v492 = vpop.f32.mrb[0].mxu0
        %v493 = vadd.f32 %v424, %v492
        %v494 = vpop.f32.mrb[0].mxu0
        %495 = vmatprep.mubr.f32.mxu0 0.0
        %496 = vmatmul.mubr.f32.gmra.mrb[0].mxu0 %v326
        %v497 = vpop.f32.mrb[0].mxu0
        %v498 = vadd.f32 %v424, %v497
        %v499 = vpop.f32.mrb[0].mxu0
        %500 = vmatprep.mubr.f32.mxu0 0.0
        %501 = vmatmul.mubr.f32.gmra.mrb[0].mxu0 %v329
        %v502 = vpop.f32.mrb[0].mxu0
        %v503 = vadd.f32 %v424, %v502
        %v504 = vpop.f32.mrb[0].mxu0
        %505 = vmatprep.mubr.f32.mxu0 0.0
        %506 = vmatmul.mubr.f32.gmra.mrb[0].mxu0 %v332
        %v507 = vpop.f32.mrb[0].mxu0
        %v508 = vadd.f32 %v424, %v507
        %v509 = vpop.f32.mrb[0].mxu0
        %510 = vdwg.mxu0
        %511 = vst.msk [vmem:[%s275] sm:$0xff] %vm321, %v401
        %512 = vst.msk [vmem:[%s275 + $0x8] sm:$0xff] %vm321, %v406
        %513 = vst.msk [vmem:[%s275 + $0x10] sm:$0xff] %vm321, %v411
        %514 = vst.msk [vmem:[%s275 + $0x18] sm:$0xff] %vm321, %v416
        %515 = vxpose.xlu0.b32.start [1/16] %v493, 128
        %516 = vxpose.xlu0.b32.cont [2/16] %v498, 128
        %517 = vxpose.xlu0.b32.cont [3/16] %v503, 128
        %518 = vxpose.xlu0.b32.cont [4/16] %v508, 128
        %519 = vxpose.xlu0.b32.cont [5/16] 0.0, 128
        %520 = vxpose.xlu0.b32.cont [6/16] 0.0, 128
        %521 = vxpose.xlu0.b32.cont [7/16] 0.0, 128
        %522 = vxpose.xlu0.b32.cont [8/16] 0.0, 128
        %523 = vxpose.xlu0.b32.cont [9/16] 0.0, 128
        %524 = vxpose.xlu0.b32.cont [10/16] 0.0, 128
        %525 = vxpose.xlu0.b32.cont [11/16] 0.0, 128
        %526 = vxpose.xlu0.b32.cont [12/16] 0.0, 128
        %527 = vxpose.xlu0.b32.cont [13/16] 0.0, 128
        %528 = vxpose.xlu0.b32.cont [14/16] 0.0, 128
        %529 = vxpose.xlu0.b32.cont [15/16] 0.0, 128
        %530 = vxpose.xlu0.b32.end [16/16] 0.0, 128
        %v531 = vpop.trf.xlu0
        %v532 = vpop.trf.xlu0
        %v533 = vpop.trf.xlu0
        %v534 = vpop.trf.xlu0
        %v535 = vpop.trf.xlu0
        %v536 = vpop.trf.xlu0
        %v537 = vpop.trf.xlu0
        %v538 = vpop.trf.xlu0
        %v539 = vpop.trf.xlu0
        %v540 = vpop.trf.xlu0
        %v541 = vpop.trf.xlu0
        %v542 = vpop.trf.xlu0
        %v543 = vpop.trf.xlu0
        %v544 = vpop.trf.xlu0
        %v545 = vpop.trf.xlu0
        %v546 = vpop.trf.xlu0
        %vm547 = vcmask 261120
        %548 = vst.msk [vmem:[%s282] sm:$0xff] %vm547, %v531
        %549 = vst.msk [vmem:[%s282 + $0x8] sm:$0xff] %vm547, %v532
        %550 = vst.msk [vmem:[%s282 + $0x10] sm:$0xff] %vm547, %v533
        %551 = vst.msk [vmem:[%s282 + $0x18] sm:$0xff] %vm547, %v534
        %552 = vst.msk [vmem:[%s282 + $0x20] sm:$0xff] %vm547, %v535
        %553 = vst.msk [vmem:[%s282 + $0x28] sm:$0xff] %vm547, %v536
        %554 = vst.msk [vmem:[%s282 + $0x30] sm:$0xff] %vm547, %v537
        %555 = vst.msk [vmem:[%s282 + $0x38] sm:$0xff] %vm547, %v538
        %s556 = sand.u32 %s158, 1
        %s557 = scalar_lea.sflag [#allocation3], %s556
        %s558 = sand.u32 %s158, 1
        %s559 = smul.addr %s558, 32
        %s560 = scalar_lea.vmem [#allocation2], %s559
        %s561 = sand.u32 %s186, 1
        %s562 = scalar_lea.sflag [#allocation5], %s561
        %s563 = sand.u32 %s186, 1
        %s564 = smul.addr %s563, 64
        %s565 = scalar_lea.vmem [#allocation4], %s564
        // Predicated region
        $region41: #{maniqa_forward.23} parent=39 // pred_check
          %p566 = pneg %p168
        $region42: #{maniqa_forward.23} parent=39 // pred_check_branch
          %568 = sbr.rel (%p566) target = $region44
        $region43: #{maniqa_forward.23} parent=39 // pred_region
          %s569 = smul.u32 4, %s29
          %s571 = ssub.s32 512, 512
          %572 = vsyncadd %s557, %s571
          %s573 = smul.addr %s28, 4
          %s574 = sadd.s32 %s569, %s573
          %s575 = smul.addr %s574, 128
          %s576 = scalar_lea.hbm %s5, %s575
          %s577 = sshll.u32 %s560, 4
          %s578 = int_to_ptr.vmem [resolvable:$true] %s577
          %583 = dma.vmem_to_hbm [thread:$0]  %s578, 512, %s576, %s557, 128, 128, 8
        $region44: #{maniqa_forward.23} parent=39 // pred_fallthru
          _
        // Predicated region
        $region45: #{maniqa_forward.23} parent=39 // pred_check
          %p584 = pneg %p196
        $region46: #{maniqa_forward.23} parent=39 // pred_check_branch
          %586 = sbr.rel (%p584) target = $region48
        $region47: #{maniqa_forward.23} parent=39 // pred_region
          %s588 = ssub.s32 1024, 1024
          %589 = vsyncadd %s562, %s588
          %s590 = smul.addr %s28, 8
          %s591 = sadd.s32 %s29, %s590
          %s592 = smul.addr %s591, 128
          %s593 = scalar_lea.hbm %s6, %s592
          %s594 = sshll.u32 %s565, 4
          %s595 = int_to_ptr.vmem [resolvable:$true] %s594
          %600 = dma.vmem_to_hbm [thread:$0]  %s595, 1024, %s593, %s562, 128, 128, 8
        $region48: #{maniqa_forward.23} parent=39 // pred_fallthru
          _
      $region40: #{maniqa_forward.23} parent=5 // pred_fallthru
        _
      %p601 = scmp.le.s32.totalorder 2, %s19
      // Predicated region
      $region49: #{maniqa_forward.23} parent=5 // pred_check
        %p602 = pneg %p601
      $region50: #{maniqa_forward.23} parent=5 // pred_check_branch
        %604 = sbr.rel (%p602) target = $region52
      $region51: #{maniqa_forward.23} parent=5 // pred_region
        %s605 = ssub.s32 %s19, 2
        // Predicated region
        $region53: #{maniqa_forward.23} parent=51 // pred_check
          %p606 = pneg %p174
        $region54: #{maniqa_forward.23} parent=51 // pred_check_branch
          %608 = sbr.rel (%p606) target = $region56
        $region55: #{maniqa_forward.23} parent=51 // pred_region
          %s609 = sand.u32 %s159, 1
          %s610 = scalar_lea.sflag [#allocation3], %s609
          %s611 = sand.u32 %s159, 1
          %s612 = smul.addr %s611, 32
          %s613 = scalar_lea.vmem [#allocation2], %s612
          %614 = dma.done %s610, 512
        $region56: #{maniqa_forward.23} parent=51 // pred_fallthru
          _
        // Predicated region
        $region57: #{maniqa_forward.23} parent=51 // pred_check
          %p615 = pneg %p202
        $region58: #{maniqa_forward.23} parent=51 // pred_check_branch
          %617 = sbr.rel (%p615) target = $region60
        $region59: #{maniqa_forward.23} parent=51 // pred_region
          %s618 = sand.u32 %s187, 1
          %s619 = scalar_lea.sflag [#allocation5], %s618
          %s620 = sand.u32 %s187, 1
          %s621 = smul.addr %s620, 64
          %s622 = scalar_lea.vmem [#allocation4], %s621
          %623 = dma.done %s619, 1024
        $region60: #{maniqa_forward.23} parent=51 // pred_fallthru
          _
      $region52: #{maniqa_forward.23} parent=5 // pred_fallthru
        _
    $region6: #{maniqa_forward.23} parent=1 // loop_footer
      %s23 = sadd.s32 1, %s19
    $region7: #{maniqa_forward.23} parent=1 // loop_footer_branch
      %18 = sbr.rel target = $region3
    $region8: #{maniqa_forward.23} parent=1 // loop_exit
      _
    %624 = vsyncpa [#allocation3], 1
    %s625 = scalar_lea.sflag [#allocation3], 1
    %626 = vsyncpa %s625, 1
    %627 = vsyncpa [#allocation5], 1
    %s628 = scalar_lea.sflag [#allocation5], 1
    %629 = vsyncpa %s628, 1

// kernel: maniqa_forward.18
$region0: #{maniqa_forward.18}
  #allocation0 [shape = 'u32[]', space=smem, size = 0x4, offset = 0x4, fixed_abs, tag = 'smem constant byte address 0x4 - core index']
  #allocation1 [shape = 'u32[144,128]{1,0:T(1,128)}', space=vmem, size = 0x12000, scoped, tag = 'internal scratch']
  %s0 = inlined_call_operand.vmem [shape: f32[2,128,64], index: 0, kind: input, shape index: {}]
  %s1 = inlined_call_operand.vmem [shape: f32[64,64], index: 1, kind: input, shape index: {}]
  %s2 = inlined_call_operand.vmem [shape: f32[64,64], index: 2, kind: input, shape index: {}]
  %s3 = inlined_call_operand.vmem [shape: f32[1,64], index: 3, kind: input, shape index: {}]
  %s4 = inlined_call_operand.vmem [shape: f32[1,64], index: 4, kind: input, shape index: {}]
  %s5 = inlined_call_operand.hbm [shape: f32[2,128,64], index: 5, kind: output, shape index: {0}]
  %s6 = inlined_call_operand.hbm [shape: f32[2,64,128], index: 6, kind: output, shape index: {1}]
  %7 = xla_tuple %s5, %s6
  %s8 = sld [smem:[#allocation0]]
  $region61: #{maniqa_forward.18} parent=0
    _
  %s10 = ssub.s32 1, %s8
  %s11 = scalar_select 0, %s10, %s8
  $region1: #{maniqa_forward.18} parent=0
    #allocation2 [shape = 'u8[131072]{0}', space=vmem, size = 0x20000, scoped, tag = 'output window, operand 0']
    #allocation3 [shape = 's32[2]{0}', space=sflag, size = 0x8, scoped, tag = 'scoped memory for maniqa_forward.18']
    #allocation4 [shape = 'u8[65536]{0}', space=vmem, size = 0x10000, scoped, tag = 'output window, operand 1']
    #allocation5 [shape = 's32[2]{0}', space=sflag, size = 0x8, scoped, tag = 'scoped memory for maniqa_forward.18']
    %12 = vsyncpa [#allocation3], 0
    %s13 = scalar_lea.sflag [#allocation3], 1
    %14 = vsyncpa %s13, 0
    %15 = vsyncpa [#allocation5], 0
    %s16 = scalar_lea.sflag [#allocation5], 1
    %17 = vsyncpa %s16, 0
    loop: start=0, step=1, limit=4
    $region2: #{maniqa_forward.18} parent=1 // loop_pre_header
      _
    $region3: #{maniqa_forward.18} parent=1 // loop_header
      %s19 = sphi 0, %s23
      %p20 = scmp.ge.s32.totalorder %s19, 4
      %s26 = sphi 0, %s38
      %s27 = sphi 0, %s34
      %s28 = sphi 0, %s26
      %s29 = sphi 0, %s27
      %s30 = sphi 0, %s28
      %s31 = sphi 0, %s29
      %s43 = sphi 0, %s45
      %s46 = sphi 0, %s43
      %s47 = sphi 0, %s46
      %s63 = sphi 0, %s47
      %s67 = sphi 0, %s67
      %s69 = sphi 0, %s67
      %s70 = sphi 0, %s69
      %s84 = sphi 0, %s70
      %s88 = sphi 0, %s88
      %s90 = sphi 0, %s88
      %s91 = sphi 0, %s90
      %s105 = sphi 0, %s91
      %s109 = sphi 0, %s109
      %s111 = sphi 0, %s109
      %s112 = sphi 0, %s111
      %s126 = sphi 0, %s112
      %s130 = sphi 0, %s130
      %s132 = sphi 0, %s130
      %s133 = sphi 0, %s132
      %s147 = sphi 0, %s133
      %s155 = sphi 0, %s157
      %s158 = sphi 0, %s155
      %s159 = sphi 0, %s158
      %s175 = sphi 0, %s159
      %s183 = sphi 0, %s185
      %s186 = sphi 0, %s183
      %s187 = sphi 0, %s186
      %s203 = sphi 0, %s187
    $region4: #{maniqa_forward.18} parent=1 // loop_header_branch
      %22 = sbr.rel (%p20) target = $region8
    $region5: #{maniqa_forward.18} parent=1 // loop_body
      %s24 = ssub.s32 %s19, 1
      %s25 = ssub.s32 %s19, 2
      %s32 = sadd.s32 1, %s27
      %p33 = scmp.ge.s32.totalorder %s32, 1
      %s34 = scalar_select %p33, 0, %s32
      %s35 = sadd.s32 1, %s26
      %s36 = scalar_select %p33, %s35, %s26
      %p37 = scmp.ge.s32.totalorder %s36, 2
      %s38 = scalar_select %p37, 0, %s36
      %s39 = ssub.s32 %s26, %s38
      %s40 = ssub.s32 %s27, %s34
      %s41 = sor.u32 %s39, %s40
      %p42 = scmp.eq.s32.totalorder %s41, 0
      %s44 = sadd.s32 %s43, 1
      %s45 = scalar_select %p42, %s43, %s44
      %p48 = pneg %p42
      %p49 = scmp.eq.s32.totalorder %s19, 1
      %p50 = por %p48, %p49
      %p51 = scmp.ne.s32.totalorder %s43, %s46
      %p52 = scmp.eq.s32.totalorder %s19, 0
      %p53 = por %p51, %p52
      %p54 = scmp.ne.s32.totalorder %s43, %s46
      %p55 = scmp.eq.s32.totalorder %s24, 1
      %p56 = por %p54, %p55
      %p57 = scmp.ne.s32.totalorder %s46, %s47
      %p58 = scmp.eq.s32.totalorder %s24, 0
      %p59 = por %p57, %p58
      %p60 = scmp.ne.s32.totalorder %s46, %s47
      %p61 = scmp.eq.s32.totalorder %s25, 1
      %p62 = por %p60, %p61
      %p64 = scmp.ne.s32.totalorder %s47, %s63
      %p65 = scmp.eq.s32.totalorder %s25, 0
      %p66 = por %p64, %p65
      %s68 = sadd.s32 %s67, 1
      %p71 = scmp.eq.s32.totalorder %s19, 1
      %p72 = scmp.ne.s32.totalorder %s67, %s69
      %p73 = scmp.eq.s32.totalorder %s19, 0
      %p74 = por %p72, %p73
      %p75 = scmp.ne.s32.totalorder %s67, %s69
      %p76 = scmp.eq.s32.totalorder %s24, 1
      %p77 = por %p75, %p76
      %p78 = scmp.ne.s32.totalorder %s69, %s70
      %p79 = scmp.eq.s32.totalorder %s24, 0
      %p80 = por %p78, %p79
      %p81 = scmp.ne.s32.totalorder %s69, %s70
      %p82 = scmp.eq.s32.totalorder %s25, 1
      %p83 = por %p81, %p82
      %p85 = scmp.ne.s32.totalorder %s70, %s84
      %p86 = scmp.eq.s32.totalorder %s25, 0
      %p87 = por %p85, %p86
      %s89 = sadd.s32 %s88, 1
      %p92 = scmp.eq.s32.totalorder %s19, 1
      %p93 = scmp.ne.s32.totalorder %s88, %s90
      %p94 = scmp.eq.s32.totalorder %s19, 0
      %p95 = por %p93, %p94
      %p96 = scmp.ne.s32.totalorder %s88, %s90
      %p97 = scmp.eq.s32.totalorder %s24, 1
      %p98 = por %p96, %p97
      %p99 = scmp.ne.s32.totalorder %s90, %s91
      %p100 = scmp.eq.s32.totalorder %s24, 0
      %p101 = por %p99, %p100
      %p102 = scmp.ne.s32.totalorder %s90, %s91
      %p103 = scmp.eq.s32.totalorder %s25, 1
      %p104 = por %p102, %p103
      %p106 = scmp.ne.s32.totalorder %s91, %s105
      %p107 = scmp.eq.s32.totalorder %s25, 0
      %p108 = por %p106, %p107
      %s110 = sadd.s32 %s109, 1
      %p113 = scmp.eq.s32.totalorder %s19, 1
      %p114 = scmp.ne.s32.totalorder %s109, %s111
      %p115 = scmp.eq.s32.totalorder %s19, 0
      %p116 = por %p114, %p115
      %p117 = scmp.ne.s32.totalorder %s109, %s111
      %p118 = scmp.eq.s32.totalorder %s24, 1
      %p119 = por %p117, %p118
      %p120 = scmp.ne.s32.totalorder %s111, %s112
      %p121 = scmp.eq.s32.totalorder %s24, 0
      %p122 = por %p120, %p121
      %p123 = scmp.ne.s32.totalorder %s111, %s112
      %p124 = scmp.eq.s32.totalorder %s25, 1
      %p125 = por %p123, %p124
      %p127 = scmp.ne.s32.totalorder %s112, %s126
      %p128 = scmp.eq.s32.totalorder %s25, 0
      %p129 = por %p127, %p128
      %s131 = sadd.s32 %s130, 1
      %p134 = scmp.eq.s32.totalorder %s19, 1
      %p135 = scmp.ne.s32.totalorder %s130, %s132
      %p136 = scmp.eq.s32.totalorder %s19, 0
      %p137 = por %p135, %p136
      %p138 = scmp.ne.s32.totalorder %s130, %s132
      %p139 = scmp.eq.s32.totalorder %s24, 1
      %p140 = por %p138, %p139
      %p141 = scmp.ne.s32.totalorder %s132, %s133
      %p142 = scmp.eq.s32.totalorder %s24, 0
      %p143 = por %p141, %p142
      %p144 = scmp.ne.s32.totalorder %s132, %s133
      %p145 = scmp.eq.s32.totalorder %s25, 1
      %p146 = por %p144, %p145
      %p148 = scmp.ne.s32.totalorder %s133, %s147
      %p149 = scmp.eq.s32.totalorder %s25, 0
      %p150 = por %p148, %p149
      %s151 = ssub.s32 %s26, %s38
      %s152 = ssub.s32 %s27, %s34
      %s153 = sor.u32 %s151, %s152
      %p154 = scmp.eq.s32.totalorder %s153, 0
      %s156 = sadd.s32 %s155, 1
      %s157 = scalar_select %p154, %s155, %s156
      %p160 = pneg %p154
      %p161 = scmp.eq.s32.totalorder %s19, 1
      %p162 = por %p160, %p161
      %p163 = scmp.ne.s32.totalorder %s155, %s158
      %p164 = scmp.eq.s32.totalorder %s19, 0
      %p165 = por %p163, %p164
      %p166 = scmp.ne.s32.totalorder %s155, %s158
      %p167 = scmp.eq.s32.totalorder %s24, 1
      %p168 = por %p166, %p167
      %p169 = scmp.ne.s32.totalorder %s158, %s159
      %p170 = scmp.eq.s32.totalorder %s24, 0
      %p171 = por %p169, %p170
      %p172 = scmp.ne.s32.totalorder %s158, %s159
      %p173 = scmp.eq.s32.totalorder %s25, 1
      %p174 = por %p172, %p173
      %p176 = scmp.ne.s32.totalorder %s159, %s175
      %p177 = scmp.eq.s32.totalorder %s25, 0
      %p178 = por %p176, %p177
      %s179 = ssub.s32 %s26, %s38
      %s180 = ssub.s32 %s27, %s34
      %s181 = sor.u32 %s179, %s180
      %p182 = scmp.eq.s32.totalorder %s181, 0
      %s184 = sadd.s32 %s183, 1
      %s185 = scalar_select %p182, %s183, %s184
      %p188 = pneg %p182
      %p189 = scmp.eq.s32.totalorder %s19, 1
      %p190 = por %p188, %p189
      %p191 = scmp.ne.s32.totalorder %s183, %s186
      %p192 = scmp.eq.s32.totalorder %s19, 0
      %p193 = por %p191, %p192
      %p194 = scmp.ne.s32.totalorder %s183, %s186
      %p195 = scmp.eq.s32.totalorder %s24, 1
      %p196 = por %p194, %p195
      %p197 = scmp.ne.s32.totalorder %s186, %s187
      %p198 = scmp.eq.s32.totalorder %s24, 0
      %p199 = por %p197, %p198
      %p200 = scmp.ne.s32.totalorder %s186, %s187
      %p201 = scmp.eq.s32.totalorder %s25, 1
      %p202 = por %p200, %p201
      %p204 = scmp.ne.s32.totalorder %s187, %s203
      %p205 = scmp.eq.s32.totalorder %s25, 0
      %p206 = por %p204, %p205
      %p207 = scmp.le.s32.totalorder 1, %s19
      %p208 = scmp.lt.s32.totalorder %s19, 3
      %p209 = pnand %p207, %p208
      %p210 = pneg %p209
      // Predicated region
      $region9: #{maniqa_forward.18} parent=5 // pred_check
        _
      $region10: #{maniqa_forward.18} parent=5 // pred_check_branch
        %212 = sbr.rel (%p209) target = $region12
      $region11: #{maniqa_forward.18} parent=5 // pred_region
        %s213 = ssub.s32 %s19, 1
        // Predicated region
        $region13: #{maniqa_forward.18} parent=11 // pred_check
          %p214 = pneg %p80
        $region14: #{maniqa_forward.18} parent=11 // pred_check_branch
          %216 = sbr.rel (%p214) target = $region16
        $region15: #{maniqa_forward.18} parent=11 // pred_region
          _
        $region16: #{maniqa_forward.18} parent=11 // pred_fallthru
          _
        // Predicated region
        $region17: #{maniqa_forward.18} parent=11 // pred_check
          %p217 = pneg %p101
        $region18: #{maniqa_forward.18} parent=11 // pred_check_branch
          %219 = sbr.rel (%p217) target = $region20
        $region19: #{maniqa_forward.18} parent=11 // pred_region
          _
        $region20: #{maniqa_forward.18} parent=11 // pred_fallthru
          _
        // Predicated region
        $region21: #{maniqa_forward.18} parent=11 // pred_check
          %p220 = pneg %p122
        $region22: #{maniqa_forward.18} parent=11 // pred_check_branch
          %222 = sbr.rel (%p220) target = $region24
        $region23: #{maniqa_forward.18} parent=11 // pred_region
          _
        $region24: #{maniqa_forward.18} parent=11 // pred_fallthru
          _
        // Predicated region
        $region25: #{maniqa_forward.18} parent=11 // pred_check
          %p223 = pneg %p143
        $region26: #{maniqa_forward.18} parent=11 // pred_check_branch
          %225 = sbr.rel (%p223) target = $region28
        $region27: #{maniqa_forward.18} parent=11 // pred_region
          _
        $region28: #{maniqa_forward.18} parent=11 // pred_fallthru
          _
      $region12: #{maniqa_forward.18} parent=5 // pred_fallthru
        _
      %p226 = scmp.lt.s32.totalorder %s19, 2
      // Predicated region
      $region29: #{maniqa_forward.18} parent=5 // pred_check
        %p227 = pneg %p226
      $region30: #{maniqa_forward.18} parent=5 // pred_check_branch
        %229 = sbr.rel (%p227) target = $region32
      $region31: #{maniqa_forward.18} parent=5 // pred_region
        // Predicated region
        $region33: #{maniqa_forward.18} parent=31 // pred_check
          %p230 = pneg %p53
        $region34: #{maniqa_forward.18} parent=31 // pred_check_branch
          %232 = sbr.rel (%p230) target = $region36
        $region35: #{maniqa_forward.18} parent=31 // pred_region
          %s233 = smul.u32 16, %s27
          %p234 = scmp.lt.s32.totalorder %s26, 1
          %s235 = scalar_select %p234, %s26, 1
          %p236 = scmp.lt.s32.totalorder %s233, 15
          %s237 = scalar_select %p236, %s233, 15
          %s238 = smul.addr %s235, 16
          %s239 = sadd.s32 %s237, %s238
          %s240 = smul.addr %s239, 8
          %s241 = scalar_lea.vmem %s0, %s240
          %s242 = smul.u32 16, %s27
        $region36: #{maniqa_forward.18} parent=31 // pred_fallthru
          _
      $region32: #{maniqa_forward.18} parent=5 // pred_fallthru
        _
      %p243 = scmp.le.s32.totalorder 1, %s19
      %p244 = scmp.lt.s32.totalorder %s19, 3
      %p245 = pnand %p243, %p244
      %p246 = pneg %p245
      // Predicated region
      $region37: #{maniqa_forward.18} parent=5 // pred_check
        _
      $region38: #{maniqa_forward.18} parent=5 // pred_check_branch
        %248 = sbr.rel (%p245) target = $region40
      $region39: #{maniqa_forward.18} parent=5 // pred_region
        %s249 = ssub.s32 %s19, 1
        %s250 = smul.u32 16, %s29
        %p251 = scmp.lt.s32.totalorder %s28, 1
        %s252 = scalar_select %p251, %s28, 1
        %p253 = scmp.lt.s32.totalorder %s250, 15
        %s254 = scalar_select %p253, %s250, 15
        %s255 = smul.addr %s252, 16
        %s256 = sadd.s32 %s254, %s255
        %s257 = smul.addr %s256, 8
        %s258 = scalar_lea.vmem %s0, %s257
        %p259 = pneg %p59
        %p260 = pneg %p56
        %p261 = pneg %p80
        %p262 = pneg %p77
        %p263 = pneg %p101
        %p264 = pneg %p98
        %p265 = pneg %p122
        %p266 = pneg %p119
        %p267 = pneg %p143
        %p268 = pneg %p140
        %p269 = pneg %p171
        %p270 = pneg %p168
        %s271 = sand.u32 %s158, 1
        %s272 = scalar_lea.sflag [#allocation3], %s271
        %s273 = sand.u32 %s158, 1
        %s274 = smul.addr %s273, 128
        %s275 = scalar_lea.vmem [#allocation2], %s274
        %p276 = pneg %p199
        %p277 = pneg %p196
        %s278 = sand.u32 %s186, 1
        %s279 = scalar_lea.sflag [#allocation5], %s278
        %s280 = sand.u32 %s186, 1
        %s281 = smul.addr %s280, 64
        %s282 = scalar_lea.vmem [#allocation4], %s281
        %s283 = smul.u32 16, %s29
        %p284 = scmp.lt.s32.totalorder %s28, 1
        %s285 = scalar_select %p284, %s28, 1
        %p286 = scmp.lt.s32.totalorder %s283, 15
        %s287 = scalar_select %p286, %s283, 15
        %s288 = smul.addr %s285, 16
        %s289 = sadd.s32 %s287, %s288
        %s290 = smul.addr %s289, 8
        %s291 = scalar_lea.vmem %s0, %s290
        %s292 = smul.u32 16, %s29
        %s293 = smul.u32 16, %s29
        %v294 = vld [vmem:[%s291] sm:$0xff]
        %v295 = vld [vmem:[%s291 + $0x8] sm:$0xff]
        %v296 = vld [vmem:[%s291 + $0x10] sm:$0xff]
        %v297 = vld [vmem:[%s291 + $0x18] sm:$0xff]
        %v298 = vld [vmem:[%s291 + $0x20] sm:$0xff]
        %v299 = vld [vmem:[%s291 + $0x28] sm:$0xff]
        %v300 = vld [vmem:[%s291 + $0x30] sm:$0xff]
        %v301 = vld [vmem:[%s291 + $0x38] sm:$0xff]
        %v302 = vld [vmem:[%s291 + $0x40] sm:$0xff]
        %v303 = vld [vmem:[%s291 + $0x48] sm:$0xff]
        %v304 = vld [vmem:[%s291 + $0x50] sm:$0xff]
        %v305 = vld [vmem:[%s291 + $0x58] sm:$0xff]
        %v306 = vld [vmem:[%s291 + $0x60] sm:$0xff]
        %v307 = vld [vmem:[%s291 + $0x68] sm:$0xff]
        %v308 = vld [vmem:[%s291 + $0x70] sm:$0xff]
        %v309 = vld [vmem:[%s291 + $0x78] sm:$0xff]
        %v310 = vld [vmem:[%s1] sm:$0xff]
        %v311 = vld [vmem:[%s1 + $0x8] sm:$0xff]
        %v312 = vld [vmem:[%s1 + $0x10] sm:$0xff]
        %v313 = vld [vmem:[%s1 + $0x18] sm:$0xff]
        %v314 = vld [vmem:[%s1 + $0x20] sm:$0xff]
        %v315 = vld [vmem:[%s1 + $0x28] sm:$0xff]
        %v316 = vld [vmem:[%s1 + $0x30] sm:$0xff]
        %v317 = vld [vmem:[%s1 + $0x38] sm:$0xff]
        %v318 = vld [vmem:[%s2] sm:$0xff]
        %v319 = vld [vmem:[%s2 + $0x8] sm:$0xff]
        %v320 = vld [vmem:[%s2 + $0x10] sm:$0xff]
        %v321 = vld [vmem:[%s2 + $0x18] sm:$0xff]
        %v322 = vld [vmem:[%s2 + $0x20] sm:$0xff]
        %v323 = vld [vmem:[%s2 + $0x28] sm:$0xff]
        %v324 = vld [vmem:[%s2 + $0x30] sm:$0xff]
        %v325 = vld [vmem:[%s2 + $0x38] sm:$0xff]
        %v326 = vld [vmem:[%s3] sm:$0x1]
        %v328 = vlaneseq
        %v329 = vshrl.u32 %v328, 7
        %v330 = vsub.s32 0, %v329
        %v331 = vrot.slane %v326, %v330
        %vm333 = vcmask 523264
        %v335 = vsel %vm333, %v294, 0
        %v338 = vsel %vm333, %v295, 0
        %v341 = vsel %vm333, %v296, 0
        %v344 = vsel %vm333, %v297, 0
        %v347 = vsel %vm333, %v298, 0
        %v350 = vsel %vm333, %v299, 0
        %v353 = vsel %vm333, %v300, 0
        %v356 = vsel %vm333, %v301, 0
        %v359 = vsel %vm333, %v302, 0
        %v362 = vsel %vm333, %v303, 0
        %v365 = vsel %vm333, %v304, 0
        %v368 = vsel %vm333, %v305, 0
        %v371 = vsel %vm333, %v306, 0
        %v374 = vsel %vm333, %v307, 0
        %v377 = vsel %vm333, %v308, 0
        %v380 = vsel %vm333, %v309, 0
        %382 = vmatprep.subr.mxu0 0.0
        %383 = vmatpush1.msra.mxu0 %v310
        %384 = vmatprep.subr.mxu0 0.0
        %385 = vmatpush1.msra.mxu0 %v311
        %386 = vmatprep.subr.mxu0 0.0
        %387 = vmatpush1.msra.mxu0 %v312
        %388 = vmatprep.subr.mxu0 0.0
        %389 = vmatpush1.msra.mxu0 %v313
        %390 = vmatprep.subr.mxu0 0.0
        %391 = vmatpush1.msra.mxu0 %v314
        %392 = vmatprep.subr.mxu0 0.0
        %393 = vmatpush1.msra.mxu0 %v315
        %394 = vmatprep.subr.mxu0 0.0
        %395 = vmatpush1.msra.mxu0 %v316
        %396 = vmatprep.subr.mxu0 0.0
        %397 = vmatpush1.msra.mxu0 %v317
        %398 = vmatprep.subr.mxu0 0.0
        %399 = vmatpush1.msra.mxu0 0.0
        %400 = vmatprep.subr.mxu0 0.0
        %401 = vmatpush1.msra.mxu0 0.0
        %402 = vmatprep.subr.mxu0 0.0
        %403 = vmatpush1.msra.mxu0 0.0
        %404 = vmatprep.subr.mxu0 0.0
        %405 = vmatpush1.msra.mxu0 0.0
        %406 = vmatprep.subr.mxu0 0.0
        %407 = vmatpush1.msra.mxu0 0.0
        %408 = vmatprep.subr.mxu0 0.0
        %409 = vmatpush1.msra.mxu0 0.0
        %410 = vmatprep.subr.mxu0 0.0
        %411 = vmatpush1.msra.mxu0 0.0
        %412 = vmatprep.subr.mxu0 0.0
        %413 = vmatpush1.msra.mxu0 0.0
        %414 = vmatprep.subr.mxu0 0.0
        %415 = vmatpush1.msra.mxu0 0.0
        %416 = vmatprep.subr.mxu0 0.0
        %417 = vmatpush1.msra.mxu0 0.0
        %418 = vmatprep.subr.mxu0 0.0
        %419 = vmatpush1.msra.mxu0 0.0
        %420 = vmatprep.subr.mxu0 0.0
        %421 = vmatpush1.msra.mxu0 0.0
        %422 = vmatprep.subr.mxu0 0.0
        %423 = vmatpush1.msra.mxu0 0.0
        %424 = vmatprep.subr.mxu0 0.0
        %425 = vmatpush1.msra.mxu0 0.0
        %426 = vmatprep.subr.mxu0 0.0
        %427 = vmatpush1.msra.mxu0 0.0
        %428 = vmatprep.subr.mxu0 0.0
        %429 = vmatpush1.msra.mxu0 0.0
        %430 = vmatprep.subr.mxu0 0.0
        %431 = vmatpush1.msra.mxu0 0.0
        %432 = vmatprep.subr.mxu0 0.0
        %433 = vmatpush1.msra.mxu0 0.0
        %434 = vmatprep.subr.mxu0 0.0
        %435 = vmatpush1.msra.mxu0 0.0
        %436 = vmatprep.subr.mxu0 0.0
        %437 = vmatpush1.msra.mxu0 0.0
        %438 = vmatprep.subr.mxu0 0.0
        %439 = vmatpush1.msra.mxu0 0.0
        %440 = vmatprep.subr.mxu0 0.0
        %441 = vmatpush1.msra.mxu0 0.0
        %442 = vmatprep.subr.mxu0 0.0
        %443 = vmatpush1.msra.mxu0 0.0
        %444 = vmatprep.subr.mxu0 0.0
        %445 = vmatpush1.msra.mxu0 0.0
        %446 = vmatprep.mubr.f32.mxu0 0.0
        %447 = vmatmul.mubr.f32.gmra.mrb[0].mxu0 %v335
        %v448 = vpop.f32.mrb[0].mxu0
        %v449 = vadd.f32 %v331, %v448
        %v450 = vpop.f32.mrb[0].mxu0
        %451 = vmatprep.mubr.f32.mxu0 0.0
        %452 = vmatmul.mubr.f32.gmra.mrb[0].mxu0 %v338
        %v453 = vpop.f32.mrb[0].mxu0
        %v454 = vadd.f32 %v331, %v453
        %v455 = vpop.f32.mrb[0].mxu0
        %456 = vmatprep.mubr.f32.mxu0 0.0
        %457 = vmatmul.mubr.f32.gmra.mrb[0].mxu0 %v341
        %v458 = vpop.f32.mrb[0].mxu0
        %v459 = vadd.f32 %v331, %v458
        %v460 = vpop.f32.mrb[0].mxu0
        %461 = vmatprep.mubr.f32.mxu0 0.0
        %462 = vmatmul.mubr.f32.gmra.mrb[0].mxu0 %v344
        %v463 = vpop.f32.mrb[0].mxu0
        %v464 = vadd.f32 %v331, %v463
        %v465 = vpop.f32.mrb[0].mxu0
        %466 = vmatprep.mubr.f32.mxu0 0.0
        %467 = vmatmul.mubr.f32.gmra.mrb[0].mxu0 %v347
        %v468 = vpop.f32.mrb[0].mxu0
        %v469 = vadd.f32 %v331, %v468
        %v470 = vpop.f32.mrb[0].mxu0
        %471 = vmatprep.mubr.f32.mxu0 0.0
        %472 = vmatmul.mubr.f32.gmra.mrb[0].mxu0 %v350
        %v473 = vpop.f32.mrb[0].mxu0
        %v474 = vadd.f32 %v331, %v473
        %v475 = vpop.f32.mrb[0].mxu0
        %476 = vmatprep.mubr.f32.mxu0 0.0
        %477 = vmatmul.mubr.f32.gmra.mrb[0].mxu0 %v353
        %v478 = vpop.f32.mrb[0].mxu0
        %v479 = vadd.f32 %v331, %v478
        %v480 = vpop.f32.mrb[0].mxu0
        %481 = vmatprep.mubr.f32.mxu0 0.0
        %482 = vmatmul.mubr.f32.gmra.mrb[0].mxu0 %v356
        %v483 = vpop.f32.mrb[0].mxu0
        %v484 = vadd.f32 %v331, %v483
        %v485 = vpop.f32.mrb[0].mxu0
        %486 = vmatprep.mubr.f32.mxu0 0.0
        %487 = vmatmul.mubr.f32.gmra.mrb[0].mxu0 %v359
        %v488 = vpop.f32.mrb[0].mxu0
        %v489 = vadd.f32 %v331, %v488
        %v490 = vpop.f32.mrb[0].mxu0
        %491 = vmatprep.mubr.f32.mxu0 0.0
        %492 = vmatmul.mubr.f32.gmra.mrb[0].mxu0 %v362
        %v493 = vpop.f32.mrb[0].mxu0
        %v494 = vadd.f32 %v331, %v493
        %v495 = vpop.f32.mrb[0].mxu0
        %496 = vmatprep.mubr.f32.mxu0 0.0
        %497 = vmatmul.mubr.f32.gmra.mrb[0].mxu0 %v365
        %v498 = vpop.f32.mrb[0].mxu0
        %v499 = vadd.f32 %v331, %v498
        %v500 = vpop.f32.mrb[0].mxu0
        %501 = vmatprep.mubr.f32.mxu0 0.0
        %502 = vmatmul.mubr.f32.gmra.mrb[0].mxu0 %v368
        %v503 = vpop.f32.mrb[0].mxu0
        %v504 = vadd.f32 %v331, %v503
        %v505 = vpop.f32.mrb[0].mxu0
        %506 = vmatprep.mubr.f32.mxu0 0.0
        %507 = vmatmul.mubr.f32.gmra.mrb[0].mxu0 %v371
        %v508 = vpop.f32.mrb[0].mxu0
        %v509 = vadd.f32 %v331, %v508
        %v510 = vpop.f32.mrb[0].mxu0
        %511 = vmatprep.mubr.f32.mxu0 0.0
        %512 = vmatmul.mubr.f32.gmra.mrb[0].mxu0 %v374
        %v513 = vpop.f32.mrb[0].mxu0
        %v514 = vadd.f32 %v331, %v513
        %v515 = vpop.f32.mrb[0].mxu0
        %516 = vmatprep.mubr.f32.mxu0 0.0
        %517 = vmatmul.mubr.f32.gmra.mrb[0].mxu0 %v377
        %v518 = vpop.f32.mrb[0].mxu0
        %v519 = vadd.f32 %v331, %v518
        %v520 = vpop.f32.mrb[0].mxu0
        %521 = vmatprep.mubr.f32.mxu0 0.0
        %522 = vmatmul.mubr.f32.gmra.mrb[0].mxu0 %v380
        %v523 = vpop.f32.mrb[0].mxu0
        %v524 = vadd.f32 %v331, %v523
        %v525 = vpop.f32.mrb[0].mxu0
        %526 = vdwg.mxu0
        %v527 = vld [vmem:[%s4] sm:$0x1]
        %v529 = vlaneseq
        %v530 = vshrl.u32 %v529, 7
        %v531 = vsub.s32 0, %v530
        %v532 = vrot.slane %v527, %v531
        %534 = vmatprep.subr.mxu0 0.0
        %535 = vmatpush1.msra.mxu0 %v318
        %536 = vmatprep.subr.mxu0 0.0
        %537 = vmatpush1.msra.mxu0 %v319
        %538 = vmatprep.subr.mxu0 0.0
        %539 = vmatpush1.msra.mxu0 %v320
        %540 = vmatprep.subr.mxu0 0.0
        %541 = vmatpush1.msra.mxu0 %v321
        %542 = vmatprep.subr.mxu0 0.0
        %543 = vmatpush1.msra.mxu0 %v322
        %544 = vmatprep.subr.mxu0 0.0
        %545 = vmatpush1.msra.mxu0 %v323
        %546 = vmatprep.subr.mxu0 0.0
        %547 = vmatpush1.msra.mxu0 %v324
        %548 = vmatprep.subr.mxu0 0.0
        %549 = vmatpush1.msra.mxu0 %v325
        %550 = vmatprep.subr.mxu0 0.0
        %551 = vmatpush1.msra.mxu0 0.0
        %552 = vmatprep.subr.mxu0 0.0
        %553 = vmatpush1.msra.mxu0 0.0
        %554 = vmatprep.subr.mxu0 0.0
        %555 = vmatpush1.msra.mxu0 0.0
        %556 = vmatprep.subr.mxu0 0.0
        %557 = vmatpush1.msra.mxu0 0.0
        %558 = vmatprep.subr.mxu0 0.0
        %559 = vmatpush1.msra.mxu0 0.0
        %560 = vmatprep.subr.mxu0 0.0
        %561 = vmatpush1.msra.mxu0 0.0
        %562 = vmatprep.subr.mxu0 0.0
        %563 = vmatpush1.msra.mxu0 0.0
        %564 = vmatprep.subr.mxu0 0.0
        %565 = vmatpush1.msra.mxu0 0.0
        %566 = vmatprep.subr.mxu0 0.0
        %567 = vmatpush1.msra.mxu0 0.0
        %568 = vmatprep.subr.mxu0 0.0
        %569 = vmatpush1.msra.mxu0 0.0
        %570 = vmatprep.subr.mxu0 0.0
        %571 = vmatpush1.msra.mxu0 0.0
        %572 = vmatprep.subr.mxu0 0.0
        %573 = vmatpush1.msra.mxu0 0.0
        %574 = vmatprep.subr.mxu0 0.0
        %575 = vmatpush1.msra.mxu0 0.0
        %576 = vmatprep.subr.mxu0 0.0
        %577 = vmatpush1.msra.mxu0 0.0
        %578 = vmatprep.subr.mxu0 0.0
        %579 = vmatpush1.msra.mxu0 0.0
        %580 = vmatprep.subr.mxu0 0.0
        %581 = vmatpush1.msra.mxu0 0.0
        %582 = vmatprep.subr.mxu0 0.0
        %583 = vmatpush1.msra.mxu0 0.0
        %584 = vmatprep.subr.mxu0 0.0
        %585 = vmatpush1.msra.mxu0 0.0
        %586 = vmatprep.subr.mxu0 0.0
        %587 = vmatpush1.msra.mxu0 0.0
        %588 = vmatprep.subr.mxu0 0.0
        %589 = vmatpush1.msra.mxu0 0.0
        %590 = vmatprep.subr.mxu0 0.0
        %591 = vmatpush1.msra.mxu0 0.0
        %592 = vmatprep.subr.mxu0 0.0
        %593 = vmatpush1.msra.mxu0 0.0
        %594 = vmatprep.subr.mxu0 0.0
        %595 = vmatpush1.msra.mxu0 0.0
        %596 = vmatprep.subr.mxu0 0.0
        %597 = vmatpush1.msra.mxu0 0.0
        %598 = vmatprep.mubr.f32.mxu0 0.0
        %599 = vmatmul.mubr.f32.gmra.mrb[0].mxu0 %v335
        %v600 = vpop.f32.mrb[0].mxu0
        %v601 = vadd.f32 %v532, %v600
        %v602 = vpop.f32.mrb[0].mxu0
        %603 = vmatprep.mubr.f32.mxu0 0.0
        %604 = vmatmul.mubr.f32.gmra.mrb[0].mxu0 %v338
        %v605 = vpop.f32.mrb[0].mxu0
        %v606 = vadd.f32 %v532, %v605
        %v607 = vpop.f32.mrb[0].mxu0
        %608 = vmatprep.mubr.f32.mxu0 0.0
        %609 = vmatmul.mubr.f32.gmra.mrb[0].mxu0 %v341
        %v610 = vpop.f32.mrb[0].mxu0
        %v611 = vadd.f32 %v532, %v610
        %v612 = vpop.f32.mrb[0].mxu0
        %613 = vmatprep.mubr.f32.mxu0 0.0
        %614 = vmatmul.mubr.f32.gmra.mrb[0].mxu0 %v344
        %v615 = vpop.f32.mrb[0].mxu0
        %v616 = vadd.f32 %v532, %v615
        %v617 = vpop.f32.mrb[0].mxu0
        %618 = vmatprep.mubr.f32.mxu0 0.0
        %619 = vmatmul.mubr.f32.gmra.mrb[0].mxu0 %v347
        %v620 = vpop.f32.mrb[0].mxu0
        %v621 = vadd.f32 %v532, %v620
        %v622 = vpop.f32.mrb[0].mxu0
        %623 = vmatprep.mubr.f32.mxu0 0.0
        %624 = vmatmul.mubr.f32.gmra.mrb[0].mxu0 %v350
        %v625 = vpop.f32.mrb[0].mxu0
        %v626 = vadd.f32 %v532, %v625
        %v627 = vpop.f32.mrb[0].mxu0
        %628 = vmatprep.mubr.f32.mxu0 0.0
        %629 = vmatmul.mubr.f32.gmra.mrb[0].mxu0 %v353
        %v630 = vpop.f32.mrb[0].mxu0
        %v631 = vadd.f32 %v532, %v630
        %v632 = vpop.f32.mrb[0].mxu0
        %633 = vmatprep.mubr.f32.mxu0 0.0
        %634 = vmatmul.mubr.f32.gmra.mrb[0].mxu0 %v356
        %v635 = vpop.f32.mrb[0].mxu0
        %v636 = vadd.f32 %v532, %v635
        %v637 = vpop.f32.mrb[0].mxu0
        %638 = vmatprep.mubr.f32.mxu0 0.0
        %639 = vmatmul.mubr.f32.gmra.mrb[0].mxu0 %v359
        %v640 = vpop.f32.mrb[0].mxu0
        %v641 = vadd.f32 %v532, %v640
        %v642 = vpop.f32.mrb[0].mxu0
        %643 = vmatprep.mubr.f32.mxu0 0.0
        %644 = vmatmul.mubr.f32.gmra.mrb[0].mxu0 %v362
        %v645 = vpop.f32.mrb[0].mxu0
        %v646 = vadd.f32 %v532, %v645
        %v647 = vpop.f32.mrb[0].mxu0
        %648 = vmatprep.mubr.f32.mxu0 0.0
        %649 = vmatmul.mubr.f32.gmra.mrb[0].mxu0 %v365
        %v650 = vpop.f32.mrb[0].mxu0
        %v651 = vadd.f32 %v532, %v650
        %v652 = vpop.f32.mrb[0].mxu0
        %653 = vmatprep.mubr.f32.mxu0 0.0
        %654 = vmatmul.mubr.f32.gmra.mrb[0].mxu0 %v368
        %v655 = vpop.f32.mrb[0].mxu0
        %v656 = vadd.f32 %v532, %v655
        %v657 = vpop.f32.mrb[0].mxu0
        %658 = vmatprep.mubr.f32.mxu0 0.0
        %659 = vmatmul.mubr.f32.gmra.mrb[0].mxu0 %v371
        %v660 = vpop.f32.mrb[0].mxu0
        %v661 = vadd.f32 %v532, %v660
        %v662 = vpop.f32.mrb[0].mxu0
        %663 = vmatprep.mubr.f32.mxu0 0.0
        %664 = vmatmul.mubr.f32.gmra.mrb[0].mxu0 %v374
        %v665 = vpop.f32.mrb[0].mxu0
        %v666 = vadd.f32 %v532, %v665
        %v667 = vpop.f32.mrb[0].mxu0
        %668 = vmatprep.mubr.f32.mxu0 0.0
        %669 = vmatmul.mubr.f32.gmra.mrb[0].mxu0 %v377
        %v670 = vpop.f32.mrb[0].mxu0
        %v671 = vadd.f32 %v532, %v670
        %v672 = vpop.f32.mrb[0].mxu0
        %673 = vmatprep.mubr.f32.mxu0 0.0
        %674 = vmatmul.mubr.f32.gmra.mrb[0].mxu0 %v380
        %v675 = vpop.f32.mrb[0].mxu0
        %v676 = vadd.f32 %v532, %v675
        %v677 = vpop.f32.mrb[0].mxu0
        %678 = vdwg.mxu0
        %679 = vst.msk [vmem:[%s275] sm:$0xff] %vm333, %v449
        %680 = vst.msk [vmem:[%s275 + $0x8] sm:$0xff] %vm333, %v454
        %681 = vst.msk [vmem:[%s275 + $0x10] sm:$0xff] %vm333, %v459
        %682 = vst.msk [vmem:[%s275 + $0x18] sm:$0xff] %vm333, %v464
        %683 = vst.msk [vmem:[%s275 + $0x20] sm:$0xff] %vm333, %v469
        %684 = vst.msk [vmem:[%s275 + $0x28] sm:$0xff] %vm333, %v474
        %685 = vst.msk [vmem:[%s275 + $0x30] sm:$0xff] %vm333, %v479
        %686 = vst.msk [vmem:[%s275 + $0x38] sm:$0xff] %vm333, %v484
        %687 = vst.msk [vmem:[%s275 + $0x40] sm:$0xff] %vm333, %v489
        %688 = vst.msk [vmem:[%s275 + $0x48] sm:$0xff] %vm333, %v494
        %689 = vst.msk [vmem:[%s275 + $0x50] sm:$0xff] %vm333, %v499
        %690 = vst.msk [vmem:[%s275 + $0x58] sm:$0xff] %vm333, %v504
        %691 = vst.msk [vmem:[%s275 + $0x60] sm:$0xff] %vm333, %v509
        %692 = vst.msk [vmem:[%s275 + $0x68] sm:$0xff] %vm333, %v514
        %693 = vst.msk [vmem:[%s275 + $0x70] sm:$0xff] %vm333, %v519
        %694 = vst.msk [vmem:[%s275 + $0x78] sm:$0xff] %vm333, %v524
        %695 = vxpose.xlu0.b32.start [1/16] %v601, 128
        %696 = vxpose.xlu0.b32.cont [2/16] %v606, 128
        %697 = vxpose.xlu0.b32.cont [3/16] %v611, 128
        %698 = vxpose.xlu0.b32.cont [4/16] %v616, 128
        %699 = vxpose.xlu0.b32.cont [5/16] %v621, 128
        %700 = vxpose.xlu0.b32.cont [6/16] %v626, 128
        %701 = vxpose.xlu0.b32.cont [7/16] %v631, 128
        %702 = vxpose.xlu0.b32.cont [8/16] %v636, 128
        %703 = vxpose.xlu0.b32.cont [9/16] %v641, 128
        %704 = vxpose.xlu0.b32.cont [10/16] %v646, 128
        %705 = vxpose.xlu0.b32.cont [11/16] %v651, 128
        %706 = vxpose.xlu0.b32.cont [12/16] %v656, 128
        %707 = vxpose.xlu0.b32.cont [13/16] %v661, 128
        %708 = vxpose.xlu0.b32.cont [14/16] %v666, 128
        %709 = vxpose.xlu0.b32.cont [15/16] %v671, 128
        %710 = vxpose.xlu0.b32.end [16/16] %v676, 128
        %v711 = vpop.trf.xlu0
        %v712 = vpop.trf.xlu0
        %v713 = vpop.trf.xlu0
        %v714 = vpop.trf.xlu0
        %v715 = vpop.trf.xlu0
        %v716 = vpop.trf.xlu0
        %v717 = vpop.trf.xlu0
        %v718 = vpop.trf.xlu0
        %v719 = vpop.trf.xlu0
        %v720 = vpop.trf.xlu0
        %v721 = vpop.trf.xlu0
        %v722 = vpop.trf.xlu0
        %v723 = vpop.trf.xlu0
        %v724 = vpop.trf.xlu0
        %v725 = vpop.trf.xlu0
        %v726 = vpop.trf.xlu0
        %727 = vst [vmem:[%s282] sm:$0xff] %v711
        %728 = vst [vmem:[%s282 + $0x8] sm:$0xff] %v712
        %729 = vst [vmem:[%s282 + $0x10] sm:$0xff] %v713
        %730 = vst [vmem:[%s282 + $0x18] sm:$0xff] %v714
        %731 = vst [vmem:[%s282 + $0x20] sm:$0xff] %v715
        %732 = vst [vmem:[%s282 + $0x28] sm:$0xff] %v716
        %733 = vst [vmem:[%s282 + $0x30] sm:$0xff] %v717
        %734 = vst [vmem:[%s282 + $0x38] sm:$0xff] %v718
        %s735 = sand.u32 %s158, 1
        %s736 = scalar_lea.sflag [#allocation3], %s735
        %s737 = sand.u32 %s158, 1
        %s738 = smul.addr %s737, 128
        %s739 = scalar_lea.vmem [#allocation2], %s738
        %s740 = sand.u32 %s186, 1
        %s741 = scalar_lea.sflag [#allocation5], %s740
        %s742 = sand.u32 %s186, 1
        %s743 = smul.addr %s742, 64
        %s744 = scalar_lea.vmem [#allocation4], %s743
        // Predicated region
        $region41: #{maniqa_forward.18} parent=39 // pred_check
          %p745 = pneg %p168
        $region42: #{maniqa_forward.18} parent=39 // pred_check_branch
          %747 = sbr.rel (%p745) target = $region44
        $region43: #{maniqa_forward.18} parent=39 // pred_region
          %s748 = smul.u32 16, %s29
          %s750 = ssub.s32 2048, 2048
          %751 = vsyncadd %s736, %s750
          %s752 = smul.addr %s28, 16
          %s753 = sadd.s32 %s748, %s752
          %s754 = smul.addr %s753, 128
          %s755 = scalar_lea.hbm %s5, %s754
          %s756 = sshll.u32 %s739, 4
          %s757 = int_to_ptr.vmem [resolvable:$true] %s756
          %762 = dma.vmem_to_hbm [thread:$0]  %s757, 2048, %s755, %s736, 128, 128, 8
        $region44: #{maniqa_forward.18} parent=39 // pred_fallthru
          _
        // Predicated region
        $region45: #{maniqa_forward.18} parent=39 // pred_check
          %p763 = pneg %p196
        $region46: #{maniqa_forward.18} parent=39 // pred_check_branch
          %765 = sbr.rel (%p763) target = $region48
        $region47: #{maniqa_forward.18} parent=39 // pred_region
          %s767 = ssub.s32 1024, 1024
          %768 = vsyncadd %s741, %s767
          %s769 = smul.addr %s28, 8
          %s770 = sadd.s32 %s29, %s769
          %s771 = smul.addr %s770, 128
          %s772 = scalar_lea.hbm %s6, %s771
          %s773 = sshll.u32 %s744, 4
          %s774 = int_to_ptr.vmem [resolvable:$true] %s773
          %779 = dma.vmem_to_hbm [thread:$0]  %s774, 1024, %s772, %s741, 128, 128, 8
        $region48: #{maniqa_forward.18} parent=39 // pred_fallthru
          _
      $region40: #{maniqa_forward.18} parent=5 // pred_fallthru
        _
      %p780 = scmp.le.s32.totalorder 2, %s19
      // Predicated region
      $region49: #{maniqa_forward.18} parent=5 // pred_check
        %p781 = pneg %p780
      $region50: #{maniqa_forward.18} parent=5 // pred_check_branch
        %783 = sbr.rel (%p781) target = $region52
      $region51: #{maniqa_forward.18} parent=5 // pred_region
        %s784 = ssub.s32 %s19, 2
        // Predicated region
        $region53: #{maniqa_forward.18} parent=51 // pred_check
          %p785 = pneg %p174
        $region54: #{maniqa_forward.18} parent=51 // pred_check_branch
          %787 = sbr.rel (%p785) target = $region56
        $region55: #{maniqa_forward.18} parent=51 // pred_region
          %s788 = sand.u32 %s159, 1
          %s789 = scalar_lea.sflag [#allocation3], %s788
          %s790 = sand.u32 %s159, 1
          %s791 = smul.addr %s790, 128
          %s792 = scalar_lea.vmem [#allocation2], %s791
          %793 = dma.done %s789, 2048
        $region56: #{maniqa_forward.18} parent=51 // pred_fallthru
          _
        // Predicated region
        $region57: #{maniqa_forward.18} parent=51 // pred_check
          %p794 = pneg %p202
        $region58: #{maniqa_forward.18} parent=51 // pred_check_branch
          %796 = sbr.rel (%p794) target = $region60
        $region59: #{maniqa_forward.18} parent=51 // pred_region
          %s797 = sand.u32 %s187, 1
          %s798 = scalar_lea.sflag [#allocation5], %s797
          %s799 = sand.u32 %s187, 1
          %s800 = smul.addr %s799, 64
          %s801 = scalar_lea.vmem [#allocation4], %s800
          %802 = dma.done %s798, 1024
        $region60: #{maniqa_forward.18} parent=51 // pred_fallthru
          _
      $region52: #{maniqa_forward.18} parent=5 // pred_fallthru
        _
    $region6: #{maniqa_forward.18} parent=1 // loop_footer
      %s23 = sadd.s32 1, %s19
    $region7: #{maniqa_forward.18} parent=1 // loop_footer_branch
      %18 = sbr.rel target = $region3
    $region8: #{maniqa_forward.18} parent=1 // loop_exit
      _
    %803 = vsyncpa [#allocation3], 1
    %s804 = scalar_lea.sflag [#allocation3], 1
    %805 = vsyncpa %s804, 1
    %806 = vsyncpa [#allocation5], 1
    %s807 = scalar_lea.sflag [#allocation5], 1
    %808 = vsyncpa %s807, 1

// kernel: maniqa_forward.19
$region0: #{maniqa_forward.19}
  #allocation0 [shape = 'u32[]', space=smem, size = 0x4, offset = 0x4, fixed_abs, tag = 'smem constant byte address 0x4 - core index']
  #allocation1 [shape = 'u32[144,128]{1,0:T(1,128)}', space=vmem, size = 0x12000, scoped, tag = 'internal scratch']
  %s0 = inlined_call_operand.hbm [shape: f32[2,128,64], index: 0, kind: input, shape index: {}]
  %s1 = inlined_call_operand.hbm [shape: f32[2,128,64], index: 1, kind: input, shape index: {}]
  %s2 = inlined_call_operand.hbm [shape: f32[2,64,128], index: 2, kind: input, shape index: {}]
  %s3 = inlined_call_operand.hbm [shape: f32[2,64,128], index: 3, kind: input, shape index: {}]
  %s4 = inlined_call_operand.hbm [shape: f32[64,64], index: 4, kind: input, shape index: {}]
  %s5 = inlined_call_operand.hbm [shape: f32[1,64], index: 5, kind: input, shape index: {}]
  %s6 = inlined_call_operand.hbm [shape: f32[2,64,128], index: 6, kind: output, shape index: {}]
  %s7 = sld [smem:[#allocation0]]
  $region81: #{maniqa_forward.19} parent=0
    _
  %s9 = ssub.s32 1, %s7
  %s10 = scalar_select 0, %s9, %s7
  $region1: #{maniqa_forward.19} parent=0
    #allocation2 [shape = 'u8[131072]{0}', space=vmem, size = 0x20000, scoped, tag = 'input window, operand 0']
    #allocation3 [shape = 's32[2]{0}', space=sflag, size = 0x8, scoped, tag = 'scoped memory for maniqa_forward.19']
    #allocation4 [shape = 's32[2]{0}', space=sflag, size = 0x8, scoped, tag = 'scoped memory for maniqa_forward.19']
    #allocation5 [shape = 'u8[131072]{0}', space=vmem, size = 0x20000, scoped, tag = 'input window, operand 1']
    #allocation6 [shape = 's32[2]{0}', space=sflag, size = 0x8, scoped, tag = 'scoped memory for maniqa_forward.19']
    #allocation7 [shape = 'u8[65536]{0}', space=vmem, size = 0x10000, scoped, tag = 'input window, operand 2']
    #allocation8 [shape = 'u8[65536]{0}', space=vmem, size = 0x10000, scoped, tag = 'input window, operand 3']
    #allocation9 [shape = 's32[2]{0}', space=sflag, size = 0x8, scoped, tag = 'scoped memory for maniqa_forward.19']
    #allocation10 [shape = 'u8[32768]{0}', space=vmem, size = 0x8000, scoped, tag = 'input window, operand 4, single buffered']
    #allocation11 [shape = 'u8[512]{0}', space=vmem, size = 0x400, scoped, tag = 'input window, operand 5, single buffered']
    #allocation12 [shape = 's32[1]{0}', space=sflag, size = 0x4, scoped, tag = 'scoped memory for maniqa_forward.19']
    #allocation13 [shape = 'u8[65536]{0}', space=vmem, size = 0x10000, scoped, tag = 'output window, operand 0']
    %11 = vsyncpa [#allocation3], 0
    %s12 = scalar_lea.sflag [#allocation3], 1
    %13 = vsyncpa %s12, 0
    %14 = vsyncpa [#allocation6], 0
    %s15 = scalar_lea.sflag [#allocation6], 1
    %16 = vsyncpa %s15, 0
    %17 = vsyncpa [#allocation9], 0
    %s18 = scalar_lea.sflag [#allocation9], 1
    %19 = vsyncpa %s18, 0
    %20 = vsyncpa [#allocation12], 0
    %21 = vsyncpa [#allocation4], 0
    %s22 = scalar_lea.sflag [#allocation4], 1
    %23 = vsyncpa %s22, 0
    loop: start=0, step=1, limit=4
    $region2: #{maniqa_forward.19} parent=1 // loop_pre_header
      _
    $region3: #{maniqa_forward.19} parent=1 // loop_header
      %s25 = sphi 0, %s29
      %p26 = scmp.ge.s32.totalorder %s25, 4
      %s32 = sphi 0, %s44
      %s33 = sphi 0, %s40
      %s34 = sphi 0, %s32
      %s35 = sphi 0, %s33
      %s36 = sphi 0, %s34
      %s37 = sphi 0, %s35
      %s49 = sphi 0, %s51
      %s52 = sphi 0, %s49
      %s53 = sphi 0, %s52
      %s69 = sphi 0, %s53
      %s75 = sphi 0, %s77
      %s78 = sphi 0, %s75
      %s79 = sphi 0, %s78
      %s95 = sphi 0, %s79
      %s101 = sphi 0, %s103
      %s104 = sphi 0, %s101
      %s105 = sphi 0, %s104
      %s121 = sphi 0, %s105
      %s129 = sphi 0, %s131
      %s132 = sphi 0, %s129
      %s133 = sphi 0, %s132
      %s149 = sphi 0, %s133
      %s153 = sphi 0, %s153
      %s155 = sphi 0, %s153
      %s156 = sphi 0, %s155
      %s170 = sphi 0, %s156
      %s174 = sphi 0, %s174
      %s176 = sphi 0, %s174
      %s177 = sphi 0, %s176
      %s191 = sphi 0, %s177
      %s199 = sphi 0, %s201
      %s202 = sphi 0, %s199
      %s203 = sphi 0, %s202
      %s219 = sphi 0, %s203
    $region4: #{maniqa_forward.19} parent=1 // loop_header_branch
      %28 = sbr.rel (%p26) target = $region8
    $region5: #{maniqa_forward.19} parent=1 // loop_body
      %s30 = ssub.s32 %s25, 1
      %s31 = ssub.s32 %s25, 2
      %s38 = sadd.s32 1, %s33
      %p39 = scmp.ge.s32.totalorder %s38, 1
      %s40 = scalar_select %p39, 0, %s38
      %s41 = sadd.s32 1, %s32
      %s42 = scalar_select %p39, %s41, %s32
      %p43 = scmp.ge.s32.totalorder %s42, 2
      %s44 = scalar_select %p43, 0, %s42
      %s45 = ssub.s32 %s32, %s44
      %s46 = ssub.s32 %s33, %s40
      %s47 = sor.u32 %s45, %s46
      %p48 = scmp.eq.s32.totalorder %s47, 0
      %s50 = sadd.s32 %s49, 1
      %s51 = scalar_select %p48, %s49, %s50
      %p54 = pneg %p48
      %p55 = scmp.eq.s32.totalorder %s25, 1
      %p56 = por %p54, %p55
      %p57 = scmp.ne.s32.totalorder %s49, %s52
      %p58 = scmp.eq.s32.totalorder %s25, 0
      %p59 = por %p57, %p58
      %p60 = scmp.ne.s32.totalorder %s49, %s52
      %p61 = scmp.eq.s32.totalorder %s30, 1
      %p62 = por %p60, %p61
      %p63 = scmp.ne.s32.totalorder %s52, %s53
      %p64 = scmp.eq.s32.totalorder %s30, 0
      %p65 = por %p63, %p64
      %p66 = scmp.ne.s32.totalorder %s52, %s53
      %p67 = scmp.eq.s32.totalorder %s31, 1
      %p68 = por %p66, %p67
      %p70 = scmp.ne.s32.totalorder %s53, %s69
      %p71 = scmp.eq.s32.totalorder %s31, 0
      %p72 = por %p70, %p71
      %s73 = ssub.s32 %s32, %s44
      %p74 = scmp.eq.s32.totalorder %s73, 0
      %s76 = sadd.s32 %s75, 1
      %s77 = scalar_select %p74, %s75, %s76
      %p80 = pneg %p74
      %p81 = scmp.eq.s32.totalorder %s25, 1
      %p82 = por %p80, %p81
      %p83 = scmp.ne.s32.totalorder %s75, %s78
      %p84 = scmp.eq.s32.totalorder %s25, 0
      %p85 = por %p83, %p84
      %p86 = scmp.ne.s32.totalorder %s75, %s78
      %p87 = scmp.eq.s32.totalorder %s30, 1
      %p88 = por %p86, %p87
      %p89 = scmp.ne.s32.totalorder %s78, %s79
      %p90 = scmp.eq.s32.totalorder %s30, 0
      %p91 = por %p89, %p90
      %p92 = scmp.ne.s32.totalorder %s78, %s79
      %p93 = scmp.eq.s32.totalorder %s31, 1
      %p94 = por %p92, %p93
      %p96 = scmp.ne.s32.totalorder %s79, %s95
      %p97 = scmp.eq.s32.totalorder %s31, 0
      %p98 = por %p96, %p97
      %s99 = ssub.s32 %s32, %s44
      %p100 = scmp.eq.s32.totalorder %s99, 0
      %s102 = sadd.s32 %s101, 1
      %s103 = scalar_select %p100, %s101, %s102
      %p106 = pneg %p100
      %p107 = scmp.eq.s32.totalorder %s25, 1
      %p108 = por %p106, %p107
      %p109 = scmp.ne.s32.totalorder %s101, %s104
      %p110 = scmp.eq.s32.totalorder %s25, 0
      %p111 = por %p109, %p110
      %p112 = scmp.ne.s32.totalorder %s101, %s104
      %p113 = scmp.eq.s32.totalorder %s30, 1
      %p114 = por %p112, %p113
      %p115 = scmp.ne.s32.totalorder %s104, %s105
      %p116 = scmp.eq.s32.totalorder %s30, 0
      %p117 = por %p115, %p116
      %p118 = scmp.ne.s32.totalorder %s104, %s105
      %p119 = scmp.eq.s32.totalorder %s31, 1
      %p120 = por %p118, %p119
      %p122 = scmp.ne.s32.totalorder %s105, %s121
      %p123 = scmp.eq.s32.totalorder %s31, 0
      %p124 = por %p122, %p123
      %s125 = ssub.s32 %s32, %s44
      %s126 = ssub.s32 %s33, %s40
      %s127 = sor.u32 %s125, %s126
      %p128 = scmp.eq.s32.totalorder %s127, 0
      %s130 = sadd.s32 %s129, 1
      %s131 = scalar_select %p128, %s129, %s130
      %p134 = pneg %p128
      %p135 = scmp.eq.s32.totalorder %s25, 1
      %p136 = por %p134, %p135
      %p137 = scmp.ne.s32.totalorder %s129, %s132
      %p138 = scmp.eq.s32.totalorder %s25, 0
      %p139 = por %p137, %p138
      %p140 = scmp.ne.s32.totalorder %s129, %s132
      %p141 = scmp.eq.s32.totalorder %s30, 1
      %p142 = por %p140, %p141
      %p143 = scmp.ne.s32.totalorder %s132, %s133
      %p144 = scmp.eq.s32.totalorder %s30, 0
      %p145 = por %p143, %p144
      %p146 = scmp.ne.s32.totalorder %s132, %s133
      %p147 = scmp.eq.s32.totalorder %s31, 1
      %p148 = por %p146, %p147
      %p150 = scmp.ne.s32.totalorder %s133, %s149
      %p151 = scmp.eq.s32.totalorder %s31, 0
      %p152 = por %p150, %p151
      %s154 = sadd.s32 %s153, 1
      %p157 = scmp.eq.s32.totalorder %s25, 1
      %p158 = scmp.ne.s32.totalorder %s153, %s155
      %p159 = scmp.eq.s32.totalorder %s25, 0
      %p160 = por %p158, %p159
      %p161 = scmp.ne.s32.totalorder %s153, %s155
      %p162 = scmp.eq.s32.totalorder %s30, 1
      %p163 = por %p161, %p162
      %p164 = scmp.ne.s32.totalorder %s155, %s156
      %p165 = scmp.eq.s32.totalorder %s30, 0
      %p166 = por %p164, %p165
      %p167 = scmp.ne.s32.totalorder %s155, %s156
      %p168 = scmp.eq.s32.totalorder %s31, 1
      %p169 = por %p167, %p168
      %p171 = scmp.ne.s32.totalorder %s156, %s170
      %p172 = scmp.eq.s32.totalorder %s31, 0
      %p173 = por %p171, %p172
      %s175 = sadd.s32 %s174, 1
      %p178 = scmp.eq.s32.totalorder %s25, 1
      %p179 = scmp.ne.s32.totalorder %s174, %s176
      %p180 = scmp.eq.s32.totalorder %s25, 0
      %p181 = por %p179, %p180
      %p182 = scmp.ne.s32.totalorder %s174, %s176
      %p183 = scmp.eq.s32.totalorder %s30, 1
      %p184 = por %p182, %p183
      %p185 = scmp.ne.s32.totalorder %s176, %s177
      %p186 = scmp.eq.s32.totalorder %s30, 0
      %p187 = por %p185, %p186
      %p188 = scmp.ne.s32.totalorder %s176, %s177
      %p189 = scmp.eq.s32.totalorder %s31, 1
      %p190 = por %p188, %p189
      %p192 = scmp.ne.s32.totalorder %s177, %s191
      %p193 = scmp.eq.s32.totalorder %s31, 0
      %p194 = por %p192, %p193
      %s195 = ssub.s32 %s32, %s44
      %s196 = ssub.s32 %s33, %s40
      %s197 = sor.u32 %s195, %s196
      %p198 = scmp.eq.s32.totalorder %s197, 0
      %s200 = sadd.s32 %s199, 1
      %s201 = scalar_select %p198, %s199, %s200
      %p204 = pneg %p198
      %p205 = scmp.eq.s32.totalorder %s25, 1
      %p206 = por %p204, %p205
      %p207 = scmp.ne.s32.totalorder %s199, %s202
      %p208 = scmp.eq.s32.totalorder %s25, 0
      %p209 = por %p207, %p208
      %p210 = scmp.ne.s32.totalorder %s199, %s202
      %p211 = scmp.eq.s32.totalorder %s30, 1
      %p212 = por %p210, %p211
      %p213 = scmp.ne.s32.totalorder %s202, %s203
      %p214 = scmp.eq.s32.totalorder %s30, 0
      %p215 = por %p213, %p214
      %p216 = scmp.ne.s32.totalorder %s202, %s203
      %p217 = scmp.eq.s32.totalorder %s31, 1
      %p218 = por %p216, %p217
      %p220 = scmp.ne.s32.totalorder %s203, %s219
      %p221 = scmp.eq.s32.totalorder %s31, 0
      %p222 = por %p220, %p221
      %p223 = scmp.le.s32.totalorder 1, %s25
      %p224 = scmp.lt.s32.totalorder %s25, 3
      %p225 = pnand %p223, %p224
      %p226 = pneg %p225
      // Predicated region
      $region9: #{maniqa_forward.19} parent=5 // pred_check
        _
      $region10: #{maniqa_forward.19} parent=5 // pred_check_branch
        %228 = sbr.rel (%p225) target = $region12
      $region11: #{maniqa_forward.19} parent=5 // pred_region
        %s229 = ssub.s32 %s25, 1
        // Predicated region
        $region13: #{maniqa_forward.19} parent=11 // pred_check
          %p230 = pneg %p166
        $region14: #{maniqa_forward.19} parent=11 // pred_check_branch
          %232 = sbr.rel (%p230) target = $region16
        $region15: #{maniqa_forward.19} parent=11 // pred_region
          %s234 = ssub.s32 1024, 1024
          %235 = vsyncadd [#allocation9], %s234
          %s236 = sshll.u32 [#allocation10], 4
          %s237 = int_to_ptr.vmem [resolvable:$true] %s236
          %242 = dma.hbm_to_vmem [thread:$0]  %s4, 1024, %s237, [#allocation9], 128, 128, 8
        $region16: #{maniqa_forward.19} parent=11 // pred_fallthru
          _
        // Predicated region
        $region17: #{maniqa_forward.19} parent=11 // pred_check
          %p243 = pneg %p187
        $region18: #{maniqa_forward.19} parent=11 // pred_check_branch
          %245 = sbr.rel (%p243) target = $region20
        $region19: #{maniqa_forward.19} parent=11 // pred_region
          %s247 = ssub.s32 16, 16
          %248 = vsyncadd [#allocation12], %s247
          %s250 = sshll.u32 [#allocation11], 4
          %s251 = int_to_ptr.vmem [resolvable:$true] %s250
          %253 = dma.hbm_to_vmem [thread:$0]  %s5, 16, %s251, [#allocation12]
        $region20: #{maniqa_forward.19} parent=11 // pred_fallthru
          _
      $region12: #{maniqa_forward.19} parent=5 // pred_fallthru
        _
      %p254 = scmp.lt.s32.totalorder %s25, 2
      // Predicated region
      $region21: #{maniqa_forward.19} parent=5 // pred_check
        %p255 = pneg %p254
      $region22: #{maniqa_forward.19} parent=5 // pred_check_branch
        %257 = sbr.rel (%p255) target = $region24
      $region23: #{maniqa_forward.19} parent=5 // pred_region
        // Predicated region
        $region25: #{maniqa_forward.19} parent=23 // pred_check
          %p258 = pneg %p59
        $region26: #{maniqa_forward.19} parent=23 // pred_check_branch
          %260 = sbr.rel (%p258) target = $region28
        $region27: #{maniqa_forward.19} parent=23 // pred_region
          %s261 = sand.u32 %s49, 1
          %s262 = scalar_lea.sflag [#allocation3], %s261
          %s263 = sand.u32 %s49, 1
          %s264 = smul.addr %s263, 128
          %s265 = scalar_lea.vmem [#allocation2], %s264
          %s266 = smul.u32 16, %s33
          %s268 = ssub.s32 2048, 2048
          %269 = vsyncadd %s262, %s268
          %s270 = smul.addr %s32, 16
          %s271 = sadd.s32 %s266, %s270
          %s272 = smul.addr %s271, 128
          %s273 = scalar_lea.hbm %s0, %s272
          %s274 = sshll.u32 %s265, 4
          %s275 = int_to_ptr.vmem [resolvable:$true] %s274
          %280 = dma.hbm_to_vmem [thread:$0]  %s273, 2048, %s275, %s262, 128, 128, 8
        $region28: #{maniqa_forward.19} parent=23 // pred_fallthru
          _
        // Predicated region
        $region29: #{maniqa_forward.19} parent=23 // pred_check
          %p281 = pneg %p85
        $region30: #{maniqa_forward.19} parent=23 // pred_check_branch
          %283 = sbr.rel (%p281) target = $region32
        $region31: #{maniqa_forward.19} parent=23 // pred_region
          %s284 = sand.u32 %s25, 1
          %s285 = scalar_lea.sflag [#allocation6], %s284
          %s286 = sand.u32 %s75, 1
          %s287 = smul.addr %s286, 128
          %s288 = scalar_lea.vmem [#allocation5], %s287
          %s290 = ssub.s32 2048, 2048
          %291 = vsyncadd %s285, %s290
          %s292 = smul.addr %s32, 16
          %s293 = smul.addr %s292, 128
          %s294 = scalar_lea.hbm %s1, %s293
          %s295 = sshll.u32 %s288, 4
          %s296 = int_to_ptr.vmem [resolvable:$true] %s295
          %301 = dma.hbm_to_vmem [thread:$0]  %s294, 2048, %s296, %s285, 128, 128, 8
        $region32: #{maniqa_forward.19} parent=23 // pred_fallthru
          _
        // Predicated region
        $region33: #{maniqa_forward.19} parent=23 // pred_check
          %p302 = pneg %p111
        $region34: #{maniqa_forward.19} parent=23 // pred_check_branch
          %304 = sbr.rel (%p302) target = $region36
        $region35: #{maniqa_forward.19} parent=23 // pred_region
          %s305 = sand.u32 %s25, 1
          %s306 = scalar_lea.sflag [#allocation6], %s305
          %s307 = sand.u32 %s101, 1
          %s308 = smul.addr %s307, 64
          %s309 = scalar_lea.vmem [#allocation7], %s308
          %s311 = ssub.s32 1024, 1024
          %312 = vsyncadd %s306, %s311
          %s313 = smul.addr %s32, 8
          %s314 = smul.addr %s313, 128
          %s315 = scalar_lea.hbm %s2, %s314
          %s316 = sshll.u32 %s309, 4
          %s317 = int_to_ptr.vmem [resolvable:$true] %s316
          %322 = dma.hbm_to_vmem [thread:$0]  %s315, 1024, %s317, %s306, 128, 128, 8
        $region36: #{maniqa_forward.19} parent=23 // pred_fallthru
          _
        // Predicated region
        $region37: #{maniqa_forward.19} parent=23 // pred_check
          %p323 = pneg %p139
        $region38: #{maniqa_forward.19} parent=23 // pred_check_branch
          %325 = sbr.rel (%p323) target = $region40
        $region39: #{maniqa_forward.19} parent=23 // pred_region
          %s326 = sand.u32 %s25, 1
          %s327 = scalar_lea.sflag [#allocation9], %s326
          %s328 = sand.u32 %s129, 1
          %s329 = smul.addr %s328, 64
          %s330 = scalar_lea.vmem [#allocation8], %s329
          %s332 = ssub.s32 1024, 1024
          %333 = vsyncadd %s327, %s332
          %s334 = smul.addr %s32, 8
          %s335 = sadd.s32 %s33, %s334
          %s336 = smul.addr %s335, 128
          %s337 = scalar_lea.hbm %s3, %s336
          %s338 = sshll.u32 %s330, 4
          %s339 = int_to_ptr.vmem [resolvable:$true] %s338
          %344 = dma.hbm_to_vmem [thread:$0]  %s337, 1024, %s339, %s327, 128, 128, 8
        $region40: #{maniqa_forward.19} parent=23 // pred_fallthru
          _
      $region24: #{maniqa_forward.19} parent=5 // pred_fallthru
        _
      %p345 = scmp.le.s32.totalorder 1, %s25
      %p346 = scmp.lt.s32.totalorder %s25, 3
      %p347 = pnand %p345, %p346
      %p348 = pneg %p347
      // Predicated region
      $region41: #{maniqa_forward.19} parent=5 // pred_check
        _
      $region42: #{maniqa_forward.19} parent=5 // pred_check_branch
        %350 = sbr.rel (%p347) target = $region44
      $region43: #{maniqa_forward.19} parent=5 // pred_region
        %s351 = ssub.s32 %s25, 1
        %s352 = sand.u32 %s52, 1
        %s353 = scalar_lea.sflag [#allocation3], %s352
        %s354 = sand.u32 %s52, 1
        %s355 = smul.addr %s354, 128
        %s356 = scalar_lea.vmem [#allocation2], %s355
        // Predicated region
        $region45: #{maniqa_forward.19} parent=43 // pred_check
          %p357 = pneg %p65
        $region46: #{maniqa_forward.19} parent=43 // pred_check_branch
          %359 = sbr.rel (%p357) target = $region48
        $region47: #{maniqa_forward.19} parent=43 // pred_region
          %360 = dma.done %s353, 2048
        $region48: #{maniqa_forward.19} parent=43 // pred_fallthru
          _
        %s361 = sand.u32 %s30, 1
        %s362 = scalar_lea.sflag [#allocation6], %s361
        %s363 = sand.u32 %s78, 1
        %s364 = smul.addr %s363, 128
        %s365 = scalar_lea.vmem [#allocation5], %s364
        // Predicated region
        $region49: #{maniqa_forward.19} parent=43 // pred_check
          %p366 = pneg %p91
        $region50: #{maniqa_forward.19} parent=43 // pred_check_branch
          %368 = sbr.rel (%p366) target = $region52
        $region51: #{maniqa_forward.19} parent=43 // pred_region
          %369 = dma.done %s362, 2048
        $region52: #{maniqa_forward.19} parent=43 // pred_fallthru
          _
        %s370 = sand.u32 %s30, 1
        %s371 = scalar_lea.sflag [#allocation6], %s370
        %s372 = sand.u32 %s104, 1
        %s373 = smul.addr %s372, 64
        %s374 = scalar_lea.vmem [#allocation7], %s373
        // Predicated region
        $region53: #{maniqa_forward.19} parent=43 // pred_check
          %p375 = pneg %p117
        $region54: #{maniqa_forward.19} parent=43 // pred_check_branch
          %377 = sbr.rel (%p375) target = $region56
        $region55: #{maniqa_forward.19} parent=43 // pred_region
          %378 = dma.done %s371, 1024
        $region56: #{maniqa_forward.19} parent=43 // pred_fallthru
          _
        %s379 = sand.u32 %s30, 1
        %s380 = scalar_lea.sflag [#allocation9], %s379
        %s381 = sand.u32 %s132, 1
        %s382 = smul.addr %s381, 64
        %s383 = scalar_lea.vmem [#allocation8], %s382
        // Predicated region
        $region57: #{maniqa_forward.19} parent=43 // pred_check
          %p384 = pneg %p145
        $region58: #{maniqa_forward.19} parent=43 // pred_check_branch
          %386 = sbr.rel (%p384) target = $region60
        $region59: #{maniqa_forward.19} parent=43 // pred_region
          %387 = dma.done %s380, 1024
        $region60: #{maniqa_forward.19} parent=43 // pred_fallthru
          _
        // Predicated region
        $region61: #{maniqa_forward.19} parent=43 // pred_check
          %p388 = pneg %p166
        $region62: #{maniqa_forward.19} parent=43 // pred_check_branch
          %390 = sbr.rel (%p388) target = $region64
        $region63: #{maniqa_forward.19} parent=43 // pred_region
          %391 = dma.done [#allocation9], 1024
        $region64: #{maniqa_forward.19} parent=43 // pred_fallthru
          _
        // Predicated region
        $region65: #{maniqa_forward.19} parent=43 // pred_check
          %p392 = pneg %p187
        $region66: #{maniqa_forward.19} parent=43 // pred_check_branch
          %394 = sbr.rel (%p392) target = $region68
        $region67: #{maniqa_forward.19} parent=43 // pred_region
          %395 = dma.done [#allocation12], 16
        $region68: #{maniqa_forward.19} parent=43 // pred_fallthru
          _
        %s396 = sand.u32 %s52, 1
        %s397 = scalar_lea.sflag [#allocation3], %s396
        %s398 = sand.u32 %s52, 1
        %s399 = smul.addr %s398, 128
        %s400 = scalar_lea.vmem [#allocation2], %s399
        %p401 = pneg %p65
        %p402 = pneg %p62
        %s403 = sand.u32 %s30, 1
        %s404 = scalar_lea.sflag [#allocation6], %s403
        %s405 = sand.u32 %s78, 1
        %s406 = smul.addr %s405, 128
        %s407 = scalar_lea.vmem [#allocation5], %s406
        %p408 = pneg %p91
        %p409 = pneg %p88
        %s410 = sand.u32 %s30, 1
        %s411 = scalar_lea.sflag [#allocation6], %s410
        %s412 = sand.u32 %s104, 1
        %s413 = smul.addr %s412, 64
        %s414 = scalar_lea.vmem [#allocation7], %s413
        %p415 = pneg %p117
        %p416 = pneg %p114
        %s417 = sand.u32 %s30, 1
        %s418 = scalar_lea.sflag [#allocation9], %s417
        %s419 = sand.u32 %s132, 1
        %s420 = smul.addr %s419, 64
        %s421 = scalar_lea.vmem [#allocation8], %s420
        %p422 = pneg %p145
        %p423 = pneg %p142
        %p424 = pneg %p166
        %p425 = pneg %p163
        %p426 = pneg %p187
        %p427 = pneg %p184
        %p428 = pneg %p215
        %p429 = pneg %p212
        %s430 = sand.u32 %s202, 1
        %s431 = scalar_lea.sflag [#allocation4], %s430
        %s432 = sand.u32 %s202, 1
        %s433 = smul.addr %s432, 64
        %s434 = scalar_lea.vmem [#allocation13], %s433
        %s435 = smul.u32 16, %s35
        %v436 = vld [vmem:[%s356] sm:$0xff]
        %v437 = vld [vmem:[%s356 + $0x8] sm:$0xff]
        %v438 = vld [vmem:[%s356 + $0x10] sm:$0xff]
        %v439 = vld [vmem:[%s356 + $0x18] sm:$0xff]
        %v440 = vld [vmem:[%s356 + $0x20] sm:$0xff]
        %v441 = vld [vmem:[%s356 + $0x28] sm:$0xff]
        %v442 = vld [vmem:[%s356 + $0x30] sm:$0xff]
        %v443 = vld [vmem:[%s356 + $0x38] sm:$0xff]
        %v444 = vld [vmem:[%s356 + $0x40] sm:$0xff]
        %v445 = vld [vmem:[%s356 + $0x48] sm:$0xff]
        %v446 = vld [vmem:[%s356 + $0x50] sm:$0xff]
        %v447 = vld [vmem:[%s356 + $0x58] sm:$0xff]
        %v448 = vld [vmem:[%s356 + $0x60] sm:$0xff]
        %v449 = vld [vmem:[%s356 + $0x68] sm:$0xff]
        %v450 = vld [vmem:[%s356 + $0x70] sm:$0xff]
        %v451 = vld [vmem:[%s356 + $0x78] sm:$0xff]
        %v452 = vld [vmem:[#allocation10] sm:$0xff]
        %v453 = vld [vmem:[#allocation10 + $0x8] sm:$0xff]
        %v454 = vld [vmem:[#allocation10 + $0x10] sm:$0xff]
        %v455 = vld [vmem:[#allocation10 + $0x18] sm:$0xff]
        %v456 = vld [vmem:[#allocation10 + $0x20] sm:$0xff]
        %v457 = vld [vmem:[#allocation10 + $0x28] sm:$0xff]
        %v458 = vld [vmem:[#allocation10 + $0x30] sm:$0xff]
        %v459 = vld [vmem:[#allocation10 + $0x38] sm:$0xff]
        %v460 = vld [vmem:[#allocation11] sm:$0x1]
        %v462 = vlaneseq
        %v463 = vshrl.u32 %v462, 7
        %v464 = vsub.s32 0, %v463
        %v465 = vrot.slane %v460, %v464
        %vm467 = vcmask 523264
        %v469 = vsel %vm467, %v436, 0
        %v472 = vsel %vm467, %v437, 0
        %v475 = vsel %vm467, %v438, 0
        %v478 = vsel %vm467, %v439, 0
        %v481 = vsel %vm467, %v440, 0
        %v484 = vsel %vm467, %v441, 0
        %v487 = vsel %vm467, %v442, 0
        %v490 = vsel %vm467, %v443, 0
        %v493 = vsel %vm467, %v444, 0
        %v496 = vsel %vm467, %v445, 0
        %v499 = vsel %vm467, %v446, 0
        %v502 = vsel %vm467, %v447, 0
        %v505 = vsel %vm467, %v448, 0
        %v508 = vsel %vm467, %v449, 0
        %v511 = vsel %vm467, %v450, 0
        %v514 = vsel %vm467, %v451, 0
        %516 = vmatprep.subr.mxu0 0.0
        %517 = vmatpush1.msra.mxu0 %v452
        %518 = vmatprep.subr.mxu0 0.0
        %519 = vmatpush1.msra.mxu0 %v453
        %520 = vmatprep.subr.mxu0 0.0
        %521 = vmatpush1.msra.mxu0 %v454
        %522 = vmatprep.subr.mxu0 0.0
        %523 = vmatpush1.msra.mxu0 %v455
        %524 = vmatprep.subr.mxu0 0.0
        %525 = vmatpush1.msra.mxu0 %v456
        %526 = vmatprep.subr.mxu0 0.0
        %527 = vmatpush1.msra.mxu0 %v457
        %528 = vmatprep.subr.mxu0 0.0
        %529 = vmatpush1.msra.mxu0 %v458
        %530 = vmatprep.subr.mxu0 0.0
        %531 = vmatpush1.msra.mxu0 %v459
        %532 = vmatprep.subr.mxu0 0.0
        %533 = vmatpush1.msra.mxu0 0.0
        %534 = vmatprep.subr.mxu0 0.0
        %535 = vmatpush1.msra.mxu0 0.0
        %536 = vmatprep.subr.mxu0 0.0
        %537 = vmatpush1.msra.mxu0 0.0
        %538 = vmatprep.subr.mxu0 0.0
        %539 = vmatpush1.msra.mxu0 0.0
        %540 = vmatprep.subr.mxu0 0.0
        %541 = vmatpush1.msra.mxu0 0.0
        %542 = vmatprep.subr.mxu0 0.0
        %543 = vmatpush1.msra.mxu0 0.0
        %544 = vmatprep.subr.mxu0 0.0
        %545 = vmatpush1.msra.mxu0 0.0
        %546 = vmatprep.subr.mxu0 0.0
        %547 = vmatpush1.msra.mxu0 0.0
        %548 = vmatprep.subr.mxu0 0.0
        %549 = vmatpush1.msra.mxu0 0.0
        %550 = vmatprep.subr.mxu0 0.0
        %551 = vmatpush1.msra.mxu0 0.0
        %552 = vmatprep.subr.mxu0 0.0
        %553 = vmatpush1.msra.mxu0 0.0
        %554 = vmatprep.subr.mxu0 0.0
        %555 = vmatpush1.msra.mxu0 0.0
        %556 = vmatprep.subr.mxu0 0.0
        %557 = vmatpush1.msra.mxu0 0.0
        %558 = vmatprep.subr.mxu0 0.0
        %559 = vmatpush1.msra.mxu0 0.0
        %560 = vmatprep.subr.mxu0 0.0
        %561 = vmatpush1.msra.mxu0 0.0
        %562 = vmatprep.subr.mxu0 0.0
        %563 = vmatpush1.msra.mxu0 0.0
        %564 = vmatprep.subr.mxu0 0.0
        %565 = vmatpush1.msra.mxu0 0.0
        %566 = vmatprep.subr.mxu0 0.0
        %567 = vmatpush1.msra.mxu0 0.0
        %568 = vmatprep.subr.mxu0 0.0
        %569 = vmatpush1.msra.mxu0 0.0
        %570 = vmatprep.subr.mxu0 0.0
        %571 = vmatpush1.msra.mxu0 0.0
        %572 = vmatprep.subr.mxu0 0.0
        %573 = vmatpush1.msra.mxu0 0.0
        %574 = vmatprep.subr.mxu0 0.0
        %575 = vmatpush1.msra.mxu0 0.0
        %576 = vmatprep.subr.mxu0 0.0
        %577 = vmatpush1.msra.mxu0 0.0
        %578 = vmatprep.subr.mxu0 0.0
        %579 = vmatpush1.msra.mxu0 0.0
        %580 = vmatprep.mubr.f32.mxu0 0.0
        %581 = vmatmul.mubr.f32.gmra.mrb[0].mxu0 %v469
        %v582 = vpop.f32.mrb[0].mxu0
        %v583 = vadd.f32 %v465, %v582
        %v584 = vpop.f32.mrb[0].mxu0
        %585 = vmatprep.mubr.f32.mxu0 0.0
        %586 = vmatmul.mubr.f32.gmra.mrb[0].mxu0 %v472
        %v587 = vpop.f32.mrb[0].mxu0
        %v588 = vadd.f32 %v465, %v587
        %v589 = vpop.f32.mrb[0].mxu0
        %590 = vmatprep.mubr.f32.mxu0 0.0
        %591 = vmatmul.mubr.f32.gmra.mrb[0].mxu0 %v475
        %v592 = vpop.f32.mrb[0].mxu0
        %v593 = vadd.f32 %v465, %v592
        %v594 = vpop.f32.mrb[0].mxu0
        %595 = vmatprep.mubr.f32.mxu0 0.0
        %596 = vmatmul.mubr.f32.gmra.mrb[0].mxu0 %v478
        %v597 = vpop.f32.mrb[0].mxu0
        %v598 = vadd.f32 %v465, %v597
        %v599 = vpop.f32.mrb[0].mxu0
        %600 = vmatprep.mubr.f32.mxu0 0.0
        %601 = vmatmul.mubr.f32.gmra.mrb[0].mxu0 %v481
        %v602 = vpop.f32.mrb[0].mxu0
        %v603 = vadd.f32 %v465, %v602
        %v604 = vpop.f32.mrb[0].mxu0
        %605 = vmatprep.mubr.f32.mxu0 0.0
        %606 = vmatmul.mubr.f32.gmra.mrb[0].mxu0 %v484
        %v607 = vpop.f32.mrb[0].mxu0
        %v608 = vadd.f32 %v465, %v607
        %v609 = vpop.f32.mrb[0].mxu0
        %610 = vmatprep.mubr.f32.mxu0 0.0
        %611 = vmatmul.mubr.f32.gmra.mrb[0].mxu0 %v487
        %v612 = vpop.f32.mrb[0].mxu0
        %v613 = vadd.f32 %v465, %v612
        %v614 = vpop.f32.mrb[0].mxu0
        %615 = vmatprep.mubr.f32.mxu0 0.0
        %616 = vmatmul.mubr.f32.gmra.mrb[0].mxu0 %v490
        %v617 = vpop.f32.mrb[0].mxu0
        %v618 = vadd.f32 %v465, %v617
        %v619 = vpop.f32.mrb[0].mxu0
        %620 = vmatprep.mubr.f32.mxu0 0.0
        %621 = vmatmul.mubr.f32.gmra.mrb[0].mxu0 %v493
        %v622 = vpop.f32.mrb[0].mxu0
        %v623 = vadd.f32 %v465, %v622
        %v624 = vpop.f32.mrb[0].mxu0
        %625 = vmatprep.mubr.f32.mxu0 0.0
        %626 = vmatmul.mubr.f32.gmra.mrb[0].mxu0 %v496
        %v627 = vpop.f32.mrb[0].mxu0
        %v628 = vadd.f32 %v465, %v627
        %v629 = vpop.f32.mrb[0].mxu0
        %630 = vmatprep.mubr.f32.mxu0 0.0
        %631 = vmatmul.mubr.f32.gmra.mrb[0].mxu0 %v499
        %v632 = vpop.f32.mrb[0].mxu0
        %v633 = vadd.f32 %v465, %v632
        %v634 = vpop.f32.mrb[0].mxu0
        %635 = vmatprep.mubr.f32.mxu0 0.0
        %636 = vmatmul.mubr.f32.gmra.mrb[0].mxu0 %v502
        %v637 = vpop.f32.mrb[0].mxu0
        %v638 = vadd.f32 %v465, %v637
        %v639 = vpop.f32.mrb[0].mxu0
        %640 = vmatprep.mubr.f32.mxu0 0.0
        %641 = vmatmul.mubr.f32.gmra.mrb[0].mxu0 %v505
        %v642 = vpop.f32.mrb[0].mxu0
        %v643 = vadd.f32 %v465, %v642
        %v644 = vpop.f32.mrb[0].mxu0
        %645 = vmatprep.mubr.f32.mxu0 0.0
        %646 = vmatmul.mubr.f32.gmra.mrb[0].mxu0 %v508
        %v647 = vpop.f32.mrb[0].mxu0
        %v648 = vadd.f32 %v465, %v647
        %v649 = vpop.f32.mrb[0].mxu0
        %650 = vmatprep.mubr.f32.mxu0 0.0
        %651 = vmatmul.mubr.f32.gmra.mrb[0].mxu0 %v511
        %v652 = vpop.f32.mrb[0].mxu0
        %v653 = vadd.f32 %v465, %v652
        %v654 = vpop.f32.mrb[0].mxu0
        %655 = vmatprep.mubr.f32.mxu0 0.0
        %656 = vmatmul.mubr.f32.gmra.mrb[0].mxu0 %v514
        %v657 = vpop.f32.mrb[0].mxu0
        %v658 = vadd.f32 %v465, %v657
        %v659 = vpop.f32.mrb[0].mxu0
        %660 = vdwg.mxu0
        %v661 = vld [vmem:[%s365] sm:$0xff]
        %v662 = vld [vmem:[%s365 + $0x8] sm:$0xff]
        %v663 = vld [vmem:[%s365 + $0x10] sm:$0xff]
        %v664 = vld [vmem:[%s365 + $0x18] sm:$0xff]
        %v665 = vld [vmem:[%s365 + $0x20] sm:$0xff]
        %v666 = vld [vmem:[%s365 + $0x28] sm:$0xff]
        %v667 = vld [vmem:[%s365 + $0x30] sm:$0xff]
        %v668 = vld [vmem:[%s365 + $0x38] sm:$0xff]
        %v669 = vld [vmem:[%s365 + $0x40] sm:$0xff]
        %v670 = vld [vmem:[%s365 + $0x48] sm:$0xff]
        %v671 = vld [vmem:[%s365 + $0x50] sm:$0xff]
        %v672 = vld [vmem:[%s365 + $0x58] sm:$0xff]
        %v673 = vld [vmem:[%s365 + $0x60] sm:$0xff]
        %v674 = vld [vmem:[%s365 + $0x68] sm:$0xff]
        %v675 = vld [vmem:[%s365 + $0x70] sm:$0xff]
        %v676 = vld [vmem:[%s365 + $0x78] sm:$0xff]
        %v678 = vsel %vm467, %v583, 0
        %v681 = vsel %vm467, %v588, 0
        %v684 = vsel %vm467, %v593, 0
        %v687 = vsel %vm467, %v598, 0
        %v690 = vsel %vm467, %v603, 0
        %v693 = vsel %vm467, %v608, 0
        %v696 = vsel %vm467, %v613, 0
        %v699 = vsel %vm467, %v618, 0
        %v702 = vsel %vm467, %v623, 0
        %v705 = vsel %vm467, %v628, 0
        %v708 = vsel %vm467, %v633, 0
        %v711 = vsel %vm467, %v638, 0
        %v714 = vsel %vm467, %v643, 0
        %v717 = vsel %vm467, %v648, 0
        %v720 = vsel %vm467, %v653, 0
        %v723 = vsel %vm467, %v658, 0
        %v726 = vsel %vm467, %v661, 0
        %v729 = vsel %vm467, %v662, 0
        %v732 = vsel %vm467, %v663, 0
        %v735 = vsel %vm467, %v664, 0
        %v738 = vsel %vm467, %v665, 0
        %v741 = vsel %vm467, %v666, 0
        %v744 = vsel %vm467, %v667, 0
        %v747 = vsel %vm467, %v668, 0
        %v750 = vsel %vm467, %v669, 0
        %v753 = vsel %vm467, %v670, 0
        %v756 = vsel %vm467, %v671, 0
        %v759 = vsel %vm467, %v672, 0
        %v762 = vsel %vm467, %v673, 0
        %v765 = vsel %vm467, %v674, 0
        %v768 = vsel %vm467, %v675, 0
        %v771 = vsel %vm467, %v676, 0
        %773 = vmatprep.subr.mxu0 0.0
        %774 = vmatpush1.xpose.msra.mxu0 %v726
        %775 = vmatprep.subr.mxu0 0.0
        %776 = vmatpush1.xpose.msra.mxu0 %v729
        %777 = vmatprep.subr.mxu0 0.0
        %778 = vmatpush1.xpose.msra.mxu0 %v732
        %779 = vmatprep.subr.mxu0 0.0
        %780 = vmatpush1.xpose.msra.mxu0 %v735
        %781 = vmatprep.subr.mxu0 0.0
        %782 = vmatpush1.xpose.msra.mxu0 %v738
        %783 = vmatprep.subr.mxu0 0.0
        %784 = vmatpush1.xpose.msra.mxu0 %v741
        %785 = vmatprep.subr.mxu0 0.0
        %786 = vmatpush1.xpose.msra.mxu0 %v744
        %787 = vmatprep.subr.mxu0 0.0
        %788 = vmatpush1.xpose.msra.mxu0 %v747
        %789 = vmatprep.subr.mxu0 0.0
        %790 = vmatpush1.xpose.msra.mxu0 %v750
        %791 = vmatprep.subr.mxu0 0.0
        %792 = vmatpush1.xpose.msra.mxu0 %v753
        %793 = vmatprep.subr.mxu0 0.0
        %794 = vmatpush1.xpose.msra.mxu0 %v756
        %795 = vmatprep.subr.mxu0 0.0
        %796 = vmatpush1.xpose.msra.mxu0 %v759
        %797 = vmatprep.subr.mxu0 0.0
        %798 = vmatpush1.xpose.msra.mxu0 %v762
        %799 = vmatprep.subr.mxu0 0.0
        %800 = vmatpush1.xpose.msra.mxu0 %v765
        %801 = vmatprep.subr.mxu0 0.0
        %802 = vmatpush1.xpose.msra.mxu0 %v768
        %803 = vmatprep.subr.mxu0 0.0
        %804 = vmatpush1.xpose.msra.mxu0 %v771
        %805 = vmatprep.subr.mxu0 0.0
        %806 = vmatpush1.xpose.msra.mxu0 0.0
        %807 = vmatprep.subr.mxu0 0.0
        %808 = vmatpush1.xpose.msra.mxu0 0.0
        %809 = vmatprep.subr.mxu0 0.0
        %810 = vmatpush1.xpose.msra.mxu0 0.0
        %811 = vmatprep.subr.mxu0 0.0
        %812 = vmatpush1.xpose.msra.mxu0 0.0
        %813 = vmatprep.subr.mxu0 0.0
        %814 = vmatpush1.xpose.msra.mxu0 0.0
        %815 = vmatprep.subr.mxu0 0.0
        %816 = vmatpush1.xpose.msra.mxu0 0.0
        %817 = vmatprep.subr.mxu0 0.0
        %818 = vmatpush1.xpose.msra.mxu0 0.0
        %819 = vmatprep.subr.mxu0 0.0
        %820 = vmatpush1.xpose.msra.mxu0 0.0
        %821 = vmatprep.subr.mxu0 0.0
        %822 = vmatpush1.xpose.msra.mxu0 0.0
        %823 = vmatprep.subr.mxu0 0.0
        %824 = vmatpush1.xpose.msra.mxu0 0.0
        %825 = vmatprep.subr.mxu0 0.0
        %826 = vmatpush1.xpose.msra.mxu0 0.0
        %827 = vmatprep.subr.mxu0 0.0
        %828 = vmatpush1.xpose.msra.mxu0 0.0
        %829 = vmatprep.subr.mxu0 0.0
        %830 = vmatpush1.xpose.msra.mxu0 0.0
        %831 = vmatprep.subr.mxu0 0.0
        %832 = vmatpush1.xpose.msra.mxu0 0.0
        %833 = vmatprep.subr.mxu0 0.0
        %834 = vmatpush1.xpose.msra.mxu0 0.0
        %835 = vmatprep.subr.mxu0 0.0
        %836 = vmatpush1.xpose.msra.mxu0 0.0
        %837 = vmatprep.mubr.f32.mxu0 0.0
        %838 = vmatmul.mubr.f32.gmra.mrb[0].mxu0 %v678
        %v839 = vpop.f32.mrb[0].mxu0
        %v840 = vadd.f32 0.0, %v839
        %v841 = vpop.f32.mrb[0].mxu0
        %842 = vmatprep.mubr.f32.mxu0 0.0
        %843 = vmatmul.mubr.f32.gmra.mrb[0].mxu0 %v681
        %v844 = vpop.f32.mrb[0].mxu0
        %v845 = vadd.f32 0.0, %v844
        %v846 = vpop.f32.mrb[0].mxu0
        %847 = vmatprep.mubr.f32.mxu0 0.0
        %848 = vmatmul.mubr.f32.gmra.mrb[0].mxu0 %v684
        %v849 = vpop.f32.mrb[0].mxu0
        %v850 = vadd.f32 0.0, %v849
        %v851 = vpop.f32.mrb[0].mxu0
        %852 = vmatprep.mubr.f32.mxu0 0.0
        %853 = vmatmul.mubr.f32.gmra.mrb[0].mxu0 %v687
        %v854 = vpop.f32.mrb[0].mxu0
        %v855 = vadd.f32 0.0, %v854
        %v856 = vpop.f32.mrb[0].mxu0
        %857 = vmatprep.mubr.f32.mxu0 0.0
        %858 = vmatmul.mubr.f32.gmra.mrb[0].mxu0 %v690
        %v859 = vpop.f32.mrb[0].mxu0
        %v860 = vadd.f32 0.0, %v859
        %v861 = vpop.f32.mrb[0].mxu0
        %862 = vmatprep.mubr.f32.mxu0 0.0
        %863 = vmatmul.mubr.f32.gmra.mrb[0].mxu0 %v693
        %v864 = vpop.f32.mrb[0].mxu0
        %v865 = vadd.f32 0.0, %v864
        %v866 = vpop.f32.mrb[0].mxu0
        %867 = vmatprep.mubr.f32.mxu0 0.0
        %868 = vmatmul.mubr.f32.gmra.mrb[0].mxu0 %v696
        %v869 = vpop.f32.mrb[0].mxu0
        %v870 = vadd.f32 0.0, %v869
        %v871 = vpop.f32.mrb[0].mxu0
        %872 = vmatprep.mubr.f32.mxu0 0.0
        %873 = vmatmul.mubr.f32.gmra.mrb[0].mxu0 %v699
        %v874 = vpop.f32.mrb[0].mxu0
        %v875 = vadd.f32 0.0, %v874
        %v876 = vpop.f32.mrb[0].mxu0
        %877 = vmatprep.mubr.f32.mxu0 0.0
        %878 = vmatmul.mubr.f32.gmra.mrb[0].mxu0 %v702
        %v879 = vpop.f32.mrb[0].mxu0
        %v880 = vadd.f32 0.0, %v879
        %v881 = vpop.f32.mrb[0].mxu0
        %882 = vmatprep.mubr.f32.mxu0 0.0
        %883 = vmatmul.mubr.f32.gmra.mrb[0].mxu0 %v705
        %v884 = vpop.f32.mrb[0].mxu0
        %v885 = vadd.f32 0.0, %v884
        %v886 = vpop.f32.mrb[0].mxu0
        %887 = vmatprep.mubr.f32.mxu0 0.0
        %888 = vmatmul.mubr.f32.gmra.mrb[0].mxu0 %v708
        %v889 = vpop.f32.mrb[0].mxu0
        %v890 = vadd.f32 0.0, %v889
        %v891 = vpop.f32.mrb[0].mxu0
        %892 = vmatprep.mubr.f32.mxu0 0.0
        %893 = vmatmul.mubr.f32.gmra.mrb[0].mxu0 %v711
        %v894 = vpop.f32.mrb[0].mxu0
        %v895 = vadd.f32 0.0, %v894
        %v896 = vpop.f32.mrb[0].mxu0
        %897 = vmatprep.mubr.f32.mxu0 0.0
        %898 = vmatmul.mubr.f32.gmra.mrb[0].mxu0 %v714
        %v899 = vpop.f32.mrb[0].mxu0
        %v900 = vadd.f32 0.0, %v899
        %v901 = vpop.f32.mrb[0].mxu0
        %902 = vmatprep.mubr.f32.mxu0 0.0
        %903 = vmatmul.mubr.f32.gmra.mrb[0].mxu0 %v717
        %v904 = vpop.f32.mrb[0].mxu0
        %v905 = vadd.f32 0.0, %v904
        %v906 = vpop.f32.mrb[0].mxu0
        %907 = vmatprep.mubr.f32.mxu0 0.0
        %908 = vmatmul.mubr.f32.gmra.mrb[0].mxu0 %v720
        %v909 = vpop.f32.mrb[0].mxu0
        %v910 = vadd.f32 0.0, %v909
        %v911 = vpop.f32.mrb[0].mxu0
        %912 = vmatprep.mubr.f32.mxu0 0.0
        %913 = vmatmul.mubr.f32.gmra.mrb[0].mxu0 %v723
        %v914 = vpop.f32.mrb[0].mxu0
        %v915 = vadd.f32 0.0, %v914
        %v916 = vpop.f32.mrb[0].mxu0
        %917 = vdwg.mxu0
        %v918 = vmul.f32 %v840, 0.125
        %v919 = vmul.f32 %v845, 0.125
        %v920 = vmul.f32 %v850, 0.125
        %v921 = vmul.f32 %v855, 0.125
        %v922 = vmul.f32 %v860, 0.125
        %v923 = vmul.f32 %v865, 0.125
        %v924 = vmul.f32 %v870, 0.125
        %v925 = vmul.f32 %v875, 0.125
        %v926 = vmul.f32 %v880, 0.125
        %v927 = vmul.f32 %v885, 0.125
        %v928 = vmul.f32 %v890, 0.125
        %v929 = vmul.f32 %v895, 0.125
        %v930 = vmul.f32 %v900, 0.125
        %v931 = vmul.f32 %v905, 0.125
        %v932 = vmul.f32 %v910, 0.125
        %v933 = vmul.f32 %v915, 0.125
        %934 = vmax.xlane.f32.xlu0 %v918
        %v935 = vpop.xlane.xlu0 %934
        %936 = vmax.xlane.f32.xlu0 %v919
        %v937 = vpop.xlane.xlu0 %936
        %938 = vmax.xlane.f32.xlu0 %v920
        %v939 = vpop.xlane.xlu0 %938
        %940 = vmax.xlane.f32.xlu0 %v921
        %v941 = vpop.xlane.xlu0 %940
        %942 = vmax.xlane.f32.xlu0 %v922
        %v943 = vpop.xlane.xlu0 %942
        %944 = vmax.xlane.f32.xlu0 %v923
        %v945 = vpop.xlane.xlu0 %944
        %946 = vmax.xlane.f32.xlu0 %v924
        %v947 = vpop.xlane.xlu0 %946
        %948 = vmax.xlane.f32.xlu0 %v925
        %v949 = vpop.xlane.xlu0 %948
        %950 = vmax.xlane.f32.xlu0 %v926
        %v951 = vpop.xlane.xlu0 %950
        %952 = vmax.xlane.f32.xlu0 %v927
        %v953 = vpop.xlane.xlu0 %952
        %954 = vmax.xlane.f32.xlu0 %v928
        %v955 = vpop.xlane.xlu0 %954
        %956 = vmax.xlane.f32.xlu0 %v929
        %v957 = vpop.xlane.xlu0 %956
        %958 = vmax.xlane.f32.xlu0 %v930
        %v959 = vpop.xlane.xlu0 %958
        %960 = vmax.xlane.f32.xlu0 %v931
        %v961 = vpop.xlane.xlu0 %960
        %962 = vmax.xlane.f32.xlu0 %v932
        %v963 = vpop.xlane.xlu0 %962
        %964 = vmax.xlane.f32.xlu0 %v933
        %v965 = vpop.xlane.xlu0 %964
        %v966 = vsub.f32 %v918, %v935
        %v967 = vsub.f32 %v919, %v937
        %v968 = vsub.f32 %v920, %v939
        %v969 = vsub.f32 %v921, %v941
        %v970 = vsub.f32 %v922, %v943
        %v971 = vsub.f32 %v923, %v945
        %v972 = vsub.f32 %v924, %v947
        %v973 = vsub.f32 %v925, %v949
        %v974 = vsub.f32 %v926, %v951
        %v975 = vsub.f32 %v927, %v953
        %v976 = vsub.f32 %v928, %v955
        %v977 = vsub.f32 %v929, %v957
        %v978 = vsub.f32 %v930, %v959
        %v979 = vsub.f32 %v931, %v961
        %v980 = vsub.f32 %v932, %v963
        %v981 = vsub.f32 %v933, %v965
        %v982 = vmul.f32 %v966, 1.442695
        %v983 = vpow.pop %v982
        %v984 = vmul.f32 %v967, 1.442695
        %v985 = vpow.pop %v984
        %v986 = vmul.f32 %v968, 1.442695
        %v987 = vpow.pop %v986
        %v988 = vmul.f32 %v969, 1.442695
        %v989 = vpow.pop %v988
        %v990 = vmul.f32 %v970, 1.442695
        %v991 = vpow.pop %v990
        %v992 = vmul.f32 %v971, 1.442695
        %v993 = vpow.pop %v992
        %v994 = vmul.f32 %v972, 1.442695
        %v995 = vpow.pop %v994
        %v996 = vmul.f32 %v973, 1.442695
        %v997 = vpow.pop %v996
        %v998 = vmul.f32 %v974, 1.442695
        %v999 = vpow.pop %v998
        %v1000 = vmul.f32 %v975, 1.442695
        %v1001 = vpow.pop %v1000
        %v1002 = vmul.f32 %v976, 1.442695
        %v1003 = vpow.pop %v1002
        %v1004 = vmul.f32 %v977, 1.442695
        %v1005 = vpow.pop %v1004
        %v1006 = vmul.f32 %v978, 1.442695
        %v1007 = vpow.pop %v1006
        %v1008 = vmul.f32 %v979, 1.442695
        %v1009 = vpow.pop %v1008
        %v1010 = vmul.f32 %v980, 1.442695
        %v1011 = vpow.pop %v1010
        %v1012 = vmul.f32 %v981, 1.442695
        %v1013 = vpow.pop %v1012
        %1014 = vadd.xlane.f32.xlu0 %v983
        %v1015 = vpop.xlane.xlu0 %1014
        %1016 = vadd.xlane.f32.xlu0 %v985
        %v1017 = vpop.xlane.xlu0 %1016
        %1018 = vadd.xlane.f32.xlu0 %v987
        %v1019 = vpop.xlane.xlu0 %1018
        %1020 = vadd.xlane.f32.xlu0 %v989
        %v1021 = vpop.xlane.xlu0 %1020
        %1022 = vadd.xlane.f32.xlu0 %v991
        %v1023 = vpop.xlane.xlu0 %1022
        %1024 = vadd.xlane.f32.xlu0 %v993
        %v1025 = vpop.xlane.xlu0 %1024
        %1026 = vadd.xlane.f32.xlu0 %v995
        %v1027 = vpop.xlane.xlu0 %1026
        %1028 = vadd.xlane.f32.xlu0 %v997
        %v1029 = vpop.xlane.xlu0 %1028
        %1030 = vadd.xlane.f32.xlu0 %v999
        %v1031 = vpop.xlane.xlu0 %1030
        %1032 = vadd.xlane.f32.xlu0 %v1001
        %v1033 = vpop.xlane.xlu0 %1032
        %1034 = vadd.xlane.f32.xlu0 %v1003
        %v1035 = vpop.xlane.xlu0 %1034
        %1036 = vadd.xlane.f32.xlu0 %v1005
        %v1037 = vpop.xlane.xlu0 %1036
        %1038 = vadd.xlane.f32.xlu0 %v1007
        %v1039 = vpop.xlane.xlu0 %1038
        %1040 = vadd.xlane.f32.xlu0 %v1009
        %v1041 = vpop.xlane.xlu0 %1040
        %1042 = vadd.xlane.f32.xlu0 %v1011
        %v1043 = vpop.xlane.xlu0 %1042
        %1044 = vadd.xlane.f32.xlu0 %v1013
        %v1045 = vpop.xlane.xlu0 %1044
        %v1046 = vrcp.pop %v1015
        %v1047 = vmul.f32 %v983, %v1046
        %v1048 = vrcp.pop %v1017
        %v1049 = vmul.f32 %v985, %v1048
        %v1050 = vrcp.pop %v1019
        %v1051 = vmul.f32 %v987, %v1050
        %v1052 = vrcp.pop %v1021
        %v1053 = vmul.f32 %v989, %v1052
        %v1054 = vrcp.pop %v1023
        %v1055 = vmul.f32 %v991, %v1054
        %v1056 = vrcp.pop %v1025
        %v1057 = vmul.f32 %v993, %v1056
        %v1058 = vrcp.pop %v1027
        %v1059 = vmul.f32 %v995, %v1058
        %v1060 = vrcp.pop %v1029
        %v1061 = vmul.f32 %v997, %v1060
        %v1062 = vrcp.pop %v1031
        %v1063 = vmul.f32 %v999, %v1062
        %v1064 = vrcp.pop %v1033
        %v1065 = vmul.f32 %v1001, %v1064
        %v1066 = vrcp.pop %v1035
        %v1067 = vmul.f32 %v1003, %v1066
        %v1068 = vrcp.pop %v1037
        %v1069 = vmul.f32 %v1005, %v1068
        %v1070 = vrcp.pop %v1039
        %v1071 = vmul.f32 %v1007, %v1070
        %v1072 = vrcp.pop %v1041
        %v1073 = vmul.f32 %v1009, %v1072
        %v1074 = vrcp.pop %v1043
        %v1075 = vmul.f32 %v1011, %v1074
        %v1076 = vrcp.pop %v1045
        %v1077 = vmul.f32 %v1013, %v1076
        %v1078 = vld [vmem:[%s374] sm:$0xff]
        %v1079 = vld [vmem:[%s374 + $0x8] sm:$0xff]
        %v1080 = vld [vmem:[%s374 + $0x10] sm:$0xff]
        %v1081 = vld [vmem:[%s374 + $0x18] sm:$0xff]
        %v1082 = vld [vmem:[%s374 + $0x20] sm:$0xff]
        %v1083 = vld [vmem:[%s374 + $0x28] sm:$0xff]
        %v1084 = vld [vmem:[%s374 + $0x30] sm:$0xff]
        %v1085 = vld [vmem:[%s374 + $0x38] sm:$0xff]
        %v1086 = vld [vmem:[%s383] sm:$0xff]
        %v1087 = vld [vmem:[%s383 + $0x8] sm:$0xff]
        %v1088 = vld [vmem:[%s383 + $0x10] sm:$0xff]
        %v1089 = vld [vmem:[%s383 + $0x18] sm:$0xff]
        %v1090 = vld [vmem:[%s383 + $0x20] sm:$0xff]
        %v1091 = vld [vmem:[%s383 + $0x28] sm:$0xff]
        %v1092 = vld [vmem:[%s383 + $0x30] sm:$0xff]
        %v1093 = vld [vmem:[%s383 + $0x38] sm:$0xff]
        %1094 = vmatprep.subr.mxu0 0.0
        %1095 = vmatpush1.xpose.msra.mxu0 %v1047
        %1096 = vmatprep.subr.mxu0 0.0
        %1097 = vmatpush1.xpose.msra.mxu0 %v1049
        %1098 = vmatprep.subr.mxu0 0.0
        %1099 = vmatpush1.xpose.msra.mxu0 %v1051
        %1100 = vmatprep.subr.mxu0 0.0
        %1101 = vmatpush1.xpose.msra.mxu0 %v1053
        %1102 = vmatprep.subr.mxu0 0.0
        %1103 = vmatpush1.xpose.msra.mxu0 %v1055
        %1104 = vmatprep.subr.mxu0 0.0
        %1105 = vmatpush1.xpose.msra.mxu0 %v1057
        %1106 = vmatprep.subr.mxu0 0.0
        %1107 = vmatpush1.xpose.msra.mxu0 %v1059
        %1108 = vmatprep.subr.mxu0 0.0
        %1109 = vmatpush1.xpose.msra.mxu0 %v1061
        %1110 = vmatprep.subr.mxu0 0.0
        %1111 = vmatpush1.xpose.msra.mxu0 %v1063
        %1112 = vmatprep.subr.mxu0 0.0
        %1113 = vmatpush1.xpose.msra.mxu0 %v1065
        %1114 = vmatprep.subr.mxu0 0.0
        %1115 = vmatpush1.xpose.msra.mxu0 %v1067
        %1116 = vmatprep.subr.mxu0 0.0
        %1117 = vmatpush1.xpose.msra.mxu0 %v1069
        %1118 = vmatprep.subr.mxu0 0.0
        %1119 = vmatpush1.xpose.msra.mxu0 %v1071
        %1120 = vmatprep.subr.mxu0 0.0
        %1121 = vmatpush1.xpose.msra.mxu0 %v1073
        %1122 = vmatprep.subr.mxu0 0.0
        %1123 = vmatpush1.xpose.msra.mxu0 %v1075
        %1124 = vmatprep.subr.mxu0 0.0
        %1125 = vmatpush1.xpose.msra.mxu0 %v1077
        %1126 = vmatprep.subr.mxu0 0.0
        %1127 = vmatpush1.xpose.msra.mxu0 0.0
        %1128 = vmatprep.subr.mxu0 0.0
        %1129 = vmatpush1.xpose.msra.mxu0 0.0
        %1130 = vmatprep.subr.mxu0 0.0
        %1131 = vmatpush1.xpose.msra.mxu0 0.0
        %1132 = vmatprep.subr.mxu0 0.0
        %1133 = vmatpush1.xpose.msra.mxu0 0.0
        %1134 = vmatprep.subr.mxu0 0.0
        %1135 = vmatpush1.xpose.msra.mxu0 0.0
        %1136 = vmatprep.subr.mxu0 0.0
        %1137 = vmatpush1.xpose.msra.mxu0 0.0
        %1138 = vmatprep.subr.mxu0 0.0
        %1139 = vmatpush1.xpose.msra.mxu0 0.0
        %1140 = vmatprep.subr.mxu0 0.0
        %1141 = vmatpush1.xpose.msra.mxu0 0.0
        %1142 = vmatprep.subr.mxu0 0.0
        %1143 = vmatpush1.xpose.msra.mxu0 0.0
        %1144 = vmatprep.subr.mxu0 0.0
        %1145 = vmatpush1.xpose.msra.mxu0 0.0
        %1146 = vmatprep.subr.mxu0 0.0
        %1147 = vmatpush1.xpose.msra.mxu0 0.0
        %1148 = vmatprep.subr.mxu0 0.0
        %1149 = vmatpush1.xpose.msra.mxu0 0.0
        %1150 = vmatprep.subr.mxu0 0.0
        %1151 = vmatpush1.xpose.msra.mxu0 0.0
        %1152 = vmatprep.subr.mxu0 0.0
        %1153 = vmatpush1.xpose.msra.mxu0 0.0
        %1154 = vmatprep.subr.mxu0 0.0
        %1155 = vmatpush1.xpose.msra.mxu0 0.0
        %1156 = vmatprep.subr.mxu0 0.0
        %1157 = vmatpush1.xpose.msra.mxu0 0.0
        %1158 = vmatprep.mubr.f32.mxu0 0.0
        %1159 = vmatmul.mubr.f32.gmra.mrb[0].mxu0 %v1078
        %v1160 = vpop.f32.mrb[0].mxu0
        %v1161 = vadd.f32 %v1086, %v1160
        %v1162 = vpop.f32.mrb[0].mxu0
        %1163 = vmatprep.mubr.f32.mxu0 0.0
        %1164 = vmatmul.mubr.f32.gmra.mrb[0].mxu0 %v1079
        %v1165 = vpop.f32.mrb[0].mxu0
        %v1166 = vadd.f32 %v1087, %v1165
        %v1167 = vpop.f32.mrb[0].mxu0
        %1168 = vmatprep.mubr.f32.mxu0 0.0
        %1169 = vmatmul.mubr.f32.gmra.mrb[0].mxu0 %v1080
        %v1170 = vpop.f32.mrb[0].mxu0
        %v1171 = vadd.f32 %v1088, %v1170
        %v1172 = vpop.f32.mrb[0].mxu0
        %1173 = vmatprep.mubr.f32.mxu0 0.0
        %1174 = vmatmul.mubr.f32.gmra.mrb[0].mxu0 %v1081
        %v1175 = vpop.f32.mrb[0].mxu0
        %v1176 = vadd.f32 %v1089, %v1175
        %v1177 = vpop.f32.mrb[0].mxu0
        %1178 = vmatprep.mubr.f32.mxu0 0.0
        %1179 = vmatmul.mubr.f32.gmra.mrb[0].mxu0 %v1082
        %v1180 = vpop.f32.mrb[0].mxu0
        %v1181 = vadd.f32 %v1090, %v1180
        %v1182 = vpop.f32.mrb[0].mxu0
        %1183 = vmatprep.mubr.f32.mxu0 0.0
        %1184 = vmatmul.mubr.f32.gmra.mrb[0].mxu0 %v1083
        %v1185 = vpop.f32.mrb[0].mxu0
        %v1186 = vadd.f32 %v1091, %v1185
        %v1187 = vpop.f32.mrb[0].mxu0
        %1188 = vmatprep.mubr.f32.mxu0 0.0
        %1189 = vmatmul.mubr.f32.gmra.mrb[0].mxu0 %v1084
        %v1190 = vpop.f32.mrb[0].mxu0
        %v1191 = vadd.f32 %v1092, %v1190
        %v1192 = vpop.f32.mrb[0].mxu0
        %1193 = vmatprep.mubr.f32.mxu0 0.0
        %1194 = vmatmul.mubr.f32.gmra.mrb[0].mxu0 %v1085
        %v1195 = vpop.f32.mrb[0].mxu0
        %v1196 = vadd.f32 %v1093, %v1195
        %v1197 = vpop.f32.mrb[0].mxu0
        %1198 = vdwg.mxu0
        %1199 = vst [vmem:[%s434] sm:$0xff] %v1161
        %1200 = vst [vmem:[%s434 + $0x8] sm:$0xff] %v1166
        %1201 = vst [vmem:[%s434 + $0x10] sm:$0xff] %v1171
        %1202 = vst [vmem:[%s434 + $0x18] sm:$0xff] %v1176
        %1203 = vst [vmem:[%s434 + $0x20] sm:$0xff] %v1181
        %1204 = vst [vmem:[%s434 + $0x28] sm:$0xff] %v1186
        %1205 = vst [vmem:[%s434 + $0x30] sm:$0xff] %v1191
        %1206 = vst [vmem:[%s434 + $0x38] sm:$0xff] %v1196
        %s1207 = sand.u32 %s202, 1
        %s1208 = scalar_lea.sflag [#allocation4], %s1207
        %s1209 = sand.u32 %s202, 1
        %s1210 = smul.addr %s1209, 64
        %s1211 = scalar_lea.vmem [#allocation13], %s1210
        // Predicated region
        $region69: #{maniqa_forward.19} parent=43 // pred_check
          %p1212 = pneg %p212
        $region70: #{maniqa_forward.19} parent=43 // pred_check_branch
          %1214 = sbr.rel (%p1212) target = $region72
        $region71: #{maniqa_forward.19} parent=43 // pred_region
          %s1216 = ssub.s32 1024, 1024
          %1217 = vsyncadd %s1208, %s1216
          %s1218 = smul.addr %s34, 8
          %s1219 = sadd.s32 %s35, %s1218
          %s1220 = smul.addr %s1219, 128
          %s1221 = scalar_lea.hbm %s6, %s1220
          %s1222 = sshll.u32 %s1211, 4
          %s1223 = int_to_ptr.vmem [resolvable:$true] %s1222
          %1228 = dma.vmem_to_hbm [thread:$0]  %s1223, 1024, %s1221, %s1208, 128, 128, 8
        $region72: #{maniqa_forward.19} parent=43 // pred_fallthru
          _
      $region44: #{maniqa_forward.19} parent=5 // pred_fallthru
        _
      %p1229 = scmp.le.s32.totalorder 2, %s25
      // Predicated region
      $region73: #{maniqa_forward.19} parent=5 // pred_check
        %p1230 = pneg %p1229
      $region74: #{maniqa_forward.19} parent=5 // pred_check_branch
        %1232 = sbr.rel (%p1230) target = $region76
      $region75: #{maniqa_forward.19} parent=5 // pred_region
        %s1233 = ssub.s32 %s25, 2
        // Predicated region
        $region77: #{maniqa_forward.19} parent=75 // pred_check
          %p1234 = pneg %p218
        $region78: #{maniqa_forward.19} parent=75 // pred_check_branch
          %1236 = sbr.rel (%p1234) target = $region80
        $region79: #{maniqa_forward.19} parent=75 // pred_region
          %s1237 = sand.u32 %s203, 1
          %s1238 = scalar_lea.sflag [#allocation4], %s1237
          %s1239 = sand.u32 %s203, 1
          %s1240 = smul.addr %s1239, 64
          %s1241 = scalar_lea.vmem [#allocation13], %s1240
          %1242 = dma.done %s1238, 1024
        $region80: #{maniqa_forward.19} parent=75 // pred_fallthru
          _
      $region76: #{maniqa_forward.19} parent=5 // pred_fallthru
        _
    $region6: #{maniqa_forward.19} parent=1 // loop_footer
      %s29 = sadd.s32 1, %s25
    $region7: #{maniqa_forward.19} parent=1 // loop_footer_branch
      %24 = sbr.rel target = $region3
    $region8: #{maniqa_forward.19} parent=1 // loop_exit
      _
    %1243 = vsyncpa [#allocation3], 1
    %s1244 = scalar_lea.sflag [#allocation3], 1
    %1245 = vsyncpa %s1244, 1
    %1246 = vsyncpa [#allocation6], 1
    %s1247 = scalar_lea.sflag [#allocation6], 1
    %1248 = vsyncpa %s1247, 1
    %1249 = vsyncpa [#allocation9], 1
    %s1250 = scalar_lea.sflag [#allocation9], 1
    %1251 = vsyncpa %s1250, 1
    %1252 = vsyncpa [#allocation12], 1
    %1253 = vsyncpa [#allocation4], 1
    %s1254 = scalar_lea.sflag [#allocation4], 1
    %1255 = vsyncpa %s1254, 1

// kernel: maniqa_forward.27
$region0: #{maniqa_forward.27}
  #allocation0 [shape = 'u32[]', space=smem, size = 0x4, offset = 0x4, fixed_abs, tag = 'smem constant byte address 0x4 - core index']
  #allocation1 [shape = 'u32[144,128]{1,0:T(1,128)}', space=vmem, size = 0x12000, scoped, tag = 'internal scratch']
  %s0 = inlined_call_operand.vmem [shape: f32[2,32,64], index: 0, kind: input, shape index: {}]
  %s1 = inlined_call_operand.vmem [shape: f32[16,32], index: 1, kind: input, shape index: {}]
  %s2 = inlined_call_operand.vmem [shape: f32[16,1], index: 2, kind: input, shape index: {}]
  %s3 = inlined_call_operand.vmem [shape: f32[2,16,64], index: 3, kind: output, shape index: {}]
  %s4 = sld [smem:[#allocation0]]
  $region45: #{maniqa_forward.27} parent=0
    _
  %s6 = ssub.s32 1, %s4
  %s7 = scalar_select 0, %s6, %s4
  loop: start=0, step=1, limit=4
  $region2: #{maniqa_forward.27} parent=0 // loop_pre_header
    _
  $region3: #{maniqa_forward.27} parent=0 // loop_header
    %s9 = sphi 0, %s13
    %p10 = scmp.ge.s32.totalorder %s9, 4
    %s16 = sphi 0, %s28
    %s17 = sphi 0, %s24
    %s18 = sphi 0, %s16
    %s19 = sphi 0, %s17
    %s20 = sphi 0, %s18
    %s21 = sphi 0, %s19
    %s31 = sphi 0, %s33
    %s34 = sphi 0, %s31
    %s35 = sphi 0, %s34
    %s51 = sphi 0, %s35
    %s57 = sphi 0, %s59
    %s60 = sphi 0, %s57
    %s61 = sphi 0, %s60
    %s77 = sphi 0, %s61
    %s83 = sphi 0, %s85
    %s86 = sphi 0, %s83
    %s87 = sphi 0, %s86
    %s103 = sphi 0, %s87
    %s111 = sphi 0, %s113
    %s114 = sphi 0, %s111
    %s115 = sphi 0, %s114
    %s131 = sphi 0, %s115
  $region4: #{maniqa_forward.27} parent=0 // loop_header_branch
    %12 = sbr.rel (%p10) target = $region8
  $region5: #{maniqa_forward.27} parent=0 // loop_body
    %s14 = ssub.s32 %s9, 1
    %s15 = ssub.s32 %s9, 2
    %s22 = sadd.s32 1, %s17
    %p23 = scmp.ge.s32.totalorder %s22, 1
    %s24 = scalar_select %p23, 0, %s22
    %s25 = sadd.s32 1, %s16
    %s26 = scalar_select %p23, %s25, %s16
    %p27 = scmp.ge.s32.totalorder %s26, 2
    %s28 = scalar_select %p27, 0, %s26
    %s29 = ssub.s32 %s16, %s28
    %p30 = scmp.eq.s32.totalorder %s29, 0
    %s32 = sadd.s32 %s31, 1
    %s33 = scalar_select %p30, %s31, %s32
    %p36 = pneg %p30
    %p37 = scmp.eq.s32.totalorder %s9, 1
    %p38 = por %p36, %p37
    %p39 = scmp.ne.s32.totalorder %s31, %s34
    %p40 = scmp.eq.s32.totalorder %s9, 0
    %p41 = por %p39, %p40
    %p42 = scmp.ne.s32.totalorder %s31, %s34
    %p43 = scmp.eq.s32.totalorder %s14, 1
    %p44 = por %p42, %p43
    %p45 = scmp.ne.s32.totalorder %s34, %s35
    %p46 = scmp.eq.s32.totalorder %s14, 0
    %p47 = por %p45, %p46
    %p48 = scmp.ne.s32.totalorder %s34, %s35
    %p49 = scmp.eq.s32.totalorder %s15, 1
    %p50 = por %p48, %p49
    %p52 = scmp.ne.s32.totalorder %s35, %s51
    %p53 = scmp.eq.s32.totalorder %s15, 0
    %p54 = por %p52, %p53
    %s55 = ssub.s32 %s17, %s24
    %p56 = scmp.eq.s32.totalorder %s55, 0
    %s58 = sadd.s32 %s57, 1
    %s59 = scalar_select %p56, %s57, %s58
    %p62 = pneg %p56
    %p63 = scmp.eq.s32.totalorder %s9, 1
    %p64 = por %p62, %p63
    %p65 = scmp.ne.s32.totalorder %s57, %s60
    %p66 = scmp.eq.s32.totalorder %s9, 0
    %p67 = por %p65, %p66
    %p68 = scmp.ne.s32.totalorder %s57, %s60
    %p69 = scmp.eq.s32.totalorder %s14, 1
    %p70 = por %p68, %p69
    %p71 = scmp.ne.s32.totalorder %s60, %s61
    %p72 = scmp.eq.s32.totalorder %s14, 0
    %p73 = por %p71, %p72
    %p74 = scmp.ne.s32.totalorder %s60, %s61
    %p75 = scmp.eq.s32.totalorder %s15, 1
    %p76 = por %p74, %p75
    %p78 = scmp.ne.s32.totalorder %s61, %s77
    %p79 = scmp.eq.s32.totalorder %s15, 0
    %p80 = por %p78, %p79
    %s81 = ssub.s32 %s17, %s24
    %p82 = scmp.eq.s32.totalorder %s81, 0
    %s84 = sadd.s32 %s83, 1
    %s85 = scalar_select %p82, %s83, %s84
    %p88 = pneg %p82
    %p89 = scmp.eq.s32.totalorder %s9, 1
    %p90 = por %p88, %p89
    %p91 = scmp.ne.s32.totalorder %s83, %s86
    %p92 = scmp.eq.s32.totalorder %s9, 0
    %p93 = por %p91, %p92
    %p94 = scmp.ne.s32.totalorder %s83, %s86
    %p95 = scmp.eq.s32.totalorder %s14, 1
    %p96 = por %p94, %p95
    %p97 = scmp.ne.s32.totalorder %s86, %s87
    %p98 = scmp.eq.s32.totalorder %s14, 0
    %p99 = por %p97, %p98
    %p100 = scmp.ne.s32.totalorder %s86, %s87
    %p101 = scmp.eq.s32.totalorder %s15, 1
    %p102 = por %p100, %p101
    %p104 = scmp.ne.s32.totalorder %s87, %s103
    %p105 = scmp.eq.s32.totalorder %s15, 0
    %p106 = por %p104, %p105
    %s107 = ssub.s32 %s16, %s28
    %s108 = ssub.s32 %s17, %s24
    %s109 = sor.u32 %s107, %s108
    %p110 = scmp.eq.s32.totalorder %s109, 0
    %s112 = sadd.s32 %s111, 1
    %s113 = scalar_select %p110, %s111, %s112
    %p116 = pneg %p110
    %p117 = scmp.eq.s32.totalorder %s9, 1
    %p118 = por %p116, %p117
    %p119 = scmp.ne.s32.totalorder %s111, %s114
    %p120 = scmp.eq.s32.totalorder %s9, 0
    %p121 = por %p119, %p120
    %p122 = scmp.ne.s32.totalorder %s111, %s114
    %p123 = scmp.eq.s32.totalorder %s14, 1
    %p124 = por %p122, %p123
    %p125 = scmp.ne.s32.totalorder %s114, %s115
    %p126 = scmp.eq.s32.totalorder %s14, 0
    %p127 = por %p125, %p126
    %p128 = scmp.ne.s32.totalorder %s114, %s115
    %p129 = scmp.eq.s32.totalorder %s15, 1
    %p130 = por %p128, %p129
    %p132 = scmp.ne.s32.totalorder %s115, %s131
    %p133 = scmp.eq.s32.totalorder %s15, 0
    %p134 = por %p132, %p133
    %p135 = scmp.le.s32.totalorder 1, %s9
    %p136 = scmp.lt.s32.totalorder %s9, 3
    %p137 = pnand %p135, %p136
    %p138 = pneg %p137
    // Predicated region
    $region9: #{maniqa_forward.27} parent=5 // pred_check
      _
    $region10: #{maniqa_forward.27} parent=5 // pred_check_branch
      %140 = sbr.rel (%p137) target = $region12
    $region11: #{maniqa_forward.27} parent=5 // pred_region
      %s141 = ssub.s32 %s9, 1
      // Predicated region
      $region13: #{maniqa_forward.27} parent=11 // pred_check
        %p142 = pneg %p73
      $region14: #{maniqa_forward.27} parent=11 // pred_check_branch
        %144 = sbr.rel (%p142) target = $region16
      $region15: #{maniqa_forward.27} parent=11 // pred_region
        %s145 = smul.u32 2, %s19
        %p146 = scmp.lt.s32.totalorder %s145, 1
        %s147 = scalar_select %p146, %s145, 1
        %s148 = smul.addr %s147, 8
        %s149 = scalar_lea.vmem %s1, %s148
        %s150 = smul.u32 2, %s19
      $region16: #{maniqa_forward.27} parent=11 // pred_fallthru
        _
      // Predicated region
      $region17: #{maniqa_forward.27} parent=11 // pred_check
        %p151 = pneg %p99
      $region18: #{maniqa_forward.27} parent=11 // pred_check_branch
        %153 = sbr.rel (%p151) target = $region20
      $region19: #{maniqa_forward.27} parent=11 // pred_region
        %s154 = smul.u32 2, %s19
        %p155 = scmp.lt.s32.totalorder %s154, 1
        %s156 = scalar_select %p155, %s154, 1
        %s157 = smul.addr %s156, 8
        %s158 = scalar_lea.vmem %s2, %s157
        %s159 = smul.u32 2, %s19
      $region20: #{maniqa_forward.27} parent=11 // pred_fallthru
        _
    $region12: #{maniqa_forward.27} parent=5 // pred_fallthru
      _
    %p160 = scmp.lt.s32.totalorder %s9, 2
    // Predicated region
    $region21: #{maniqa_forward.27} parent=5 // pred_check
      %p161 = pneg %p160
    $region22: #{maniqa_forward.27} parent=5 // pred_check_branch
      %163 = sbr.rel (%p161) target = $region24
    $region23: #{maniqa_forward.27} parent=5 // pred_region
      // Predicated region
      $region25: #{maniqa_forward.27} parent=23 // pred_check
        %p164 = pneg %p41
      $region26: #{maniqa_forward.27} parent=23 // pred_check_branch
        %166 = sbr.rel (%p164) target = $region28
      $region27: #{maniqa_forward.27} parent=23 // pred_region
        %p167 = scmp.lt.s32.totalorder %s16, 1
        %s168 = scalar_select %p167, %s16, 1
        %s169 = smul.addr %s168, 4
        %s170 = smul.addr %s169, 8
        %s171 = scalar_lea.vmem %s0, %s170
      $region28: #{maniqa_forward.27} parent=23 // pred_fallthru
        _
    $region24: #{maniqa_forward.27} parent=5 // pred_fallthru
      _
    %p172 = scmp.le.s32.totalorder 1, %s9
    %p173 = scmp.lt.s32.totalorder %s9, 3
    %p174 = pnand %p172, %p173
    %p175 = pneg %p174
    // Predicated region
    $region29: #{maniqa_forward.27} parent=5 // pred_check
      _
    $region30: #{maniqa_forward.27} parent=5 // pred_check_branch
      %177 = sbr.rel (%p174) target = $region32
    $region31: #{maniqa_forward.27} parent=5 // pred_region
      %s178 = ssub.s32 %s9, 1
      %p179 = scmp.lt.s32.totalorder %s18, 1
      %s180 = scalar_select %p179, %s18, 1
      %s181 = smul.addr %s180, 4
      %s182 = smul.addr %s181, 8
      %s183 = scalar_lea.vmem %s0, %s182
      %p184 = pneg %p47
      %p185 = pneg %p44
      %s186 = smul.u32 2, %s19
      %p187 = scmp.lt.s32.totalorder %s186, 1
      %s188 = scalar_select %p187, %s186, 1
      %s189 = smul.addr %s188, 8
      %s190 = scalar_lea.vmem %s1, %s189
      %p191 = pneg %p73
      %p192 = pneg %p70
      %s193 = smul.u32 2, %s19
      %p194 = scmp.lt.s32.totalorder %s193, 1
      %s195 = scalar_select %p194, %s193, 1
      %s196 = smul.addr %s195, 8
      %s197 = scalar_lea.vmem %s2, %s196
      %p198 = pneg %p99
      %p199 = pneg %p96
      %p200 = pneg %p127
      %p201 = pneg %p124
      %s202 = smul.u32 2, %s19
      %p203 = scmp.lt.s32.totalorder %s18, 1
      %s204 = scalar_select %p203, %s18, 1
      %p205 = scmp.lt.s32.totalorder %s202, 1
      %s206 = scalar_select %p205, %s202, 1
      %s207 = smul.addr %s204, 2
      %s208 = sadd.s32 %s206, %s207
      %s209 = smul.addr %s208, 8
      %s210 = scalar_lea.vmem %s3, %s209
      %p211 = scmp.lt.s32.totalorder %s18, 1
      %s212 = scalar_select %p211, %s18, 1
      %s213 = smul.addr %s212, 4
      %s214 = smul.addr %s213, 8
      %s215 = scalar_lea.vmem %s0, %s214
      %s216 = smul.u32 2, %s19
      %p217 = scmp.lt.s32.totalorder %s216, 1
      %s218 = scalar_select %p217, %s216, 1
      %s219 = smul.addr %s218, 8
      %s220 = scalar_lea.vmem %s1, %s219
      %s221 = smul.u32 2, %s19
      %s222 = smul.u32 2, %s19
      %p223 = scmp.lt.s32.totalorder %s222, 1
      %s224 = scalar_select %p223, %s222, 1
      %s225 = smul.addr %s224, 8
      %s226 = scalar_lea.vmem %s2, %s225
      %s227 = smul.u32 2, %s19
      %s228 = smul.u32 2, %s19
      %p229 = scmp.lt.s32.totalorder %s18, 1
      %s230 = scalar_select %p229, %s18, 1
      %p231 = scmp.lt.s32.totalorder %s228, 1
      %s232 = scalar_select %p231, %s228, 1
      %s233 = smul.addr %s230, 2
      %s234 = sadd.s32 %s232, %s233
      %s235 = smul.addr %s234, 8
      %s236 = scalar_lea.vmem %s3, %s235
      %s237 = smul.u32 2, %s19
      %v238 = vld [vmem:[%s215] sm:$0xff]
      %v239 = vld [vmem:[%s215 + $0x8] sm:$0xff]
      %v240 = vld [vmem:[%s215 + $0x10] sm:$0xff]
      %v241 = vld [vmem:[%s215 + $0x18] sm:$0xff]
      %v242 = vld [vmem:[%s220] sm:$0xff]
      %v243 = vld [vmem:[%s220 + $0x8] sm:$0xff]
      %v244 = vld [vmem:[%s226] sm:$0xff]
      %v245 = vld [vmem:[%s226 + $0x8] sm:$0xff]
      %247 = vset.pattern.permute.xlu0 0
      %248 = vperm.xlu0 %247, %v244
      %v249 = vpop.permute.xlu0 %248
      %252 = vset.pattern.permute.xlu0 0
      %253 = vperm.xlu0 %252, %v245
      %v254 = vpop.permute.xlu0 %253
      %vm256 = vcmask 261120
      %v258 = vsel %vm256, %v242, 0
      %v261 = vsel %vm256, %v243, 0
      %263 = vmatprep.subr.mxu0 0.0
      %264 = vmatpush1.msra.mxu0 %v238
      %265 = vmatprep.subr.mxu0 0.0
      %266 = vmatpush1.msra.mxu0 %v239
      %267 = vmatprep.subr.mxu0 0.0
      %268 = vmatpush1.msra.mxu0 %v240
      %269 = vmatprep.subr.mxu0 0.0
      %270 = vmatpush1.msra.mxu0 %v241
      %271 = vmatprep.subr.mxu0 0.0
      %272 = vmatpush1.msra.mxu0 0.0
      %273 = vmatprep.subr.mxu0 0.0
      %274 = vmatpush1.msra.mxu0 0.0
      %275 = vmatprep.subr.mxu0 0.0
      %276 = vmatpush1.msra.mxu0 0.0
      %277 = vmatprep.subr.mxu0 0.0
      %278 = vmatpush1.msra.mxu0 0.0
      %279 = vmatprep.subr.mxu0 0.0
      %280 = vmatpush1.msra.mxu0 0.0
      %281 = vmatprep.subr.mxu0 0.0
      %282 = vmatpush1.msra.mxu0 0.0
      %283 = vmatprep.subr.mxu0 0.0
      %284 = vmatpush1.msra.mxu0 0.0
      %285 = vmatprep.subr.mxu0 0.0
      %286 = vmatpush1.msra.mxu0 0.0
      %287 = vmatprep.subr.mxu0 0.0
      %288 = vmatpush1.msra.mxu0 0.0
      %289 = vmatprep.subr.mxu0 0.0
      %290 = vmatpush1.msra.mxu0 0.0
      %291 = vmatprep.subr.mxu0 0.0
      %292 = vmatpush1.msra.mxu0 0.0
      %293 = vmatprep.subr.mxu0 0.0
      %294 = vmatpush1.msra.mxu0 0.0
      %295 = vmatprep.subr.mxu0 0.0
      %296 = vmatpush1.msra.mxu0 0.0
      %297 = vmatprep.subr.mxu0 0.0
      %298 = vmatpush1.msra.mxu0 0.0
      %299 = vmatprep.subr.mxu0 0.0
      %300 = vmatpush1.msra.mxu0 0.0
      %301 = vmatprep.subr.mxu0 0.0
      %302 = vmatpush1.msra.mxu0 0.0
      %303 = vmatprep.subr.mxu0 0.0
      %304 = vmatpush1.msra.mxu0 0.0
      %305 = vmatprep.subr.mxu0 0.0
      %306 = vmatpush1.msra.mxu0 0.0
      %307 = vmatprep.subr.mxu0 0.0
      %308 = vmatpush1.msra.mxu0 0.0
      %309 = vmatprep.subr.mxu0 0.0
      %310 = vmatpush1.msra.mxu0 0.0
      %311 = vmatprep.subr.mxu0 0.0
      %312 = vmatpush1.msra.mxu0 0.0
      %313 = vmatprep.subr.mxu0 0.0
      %314 = vmatpush1.msra.mxu0 0.0
      %315 = vmatprep.subr.mxu0 0.0
      %316 = vmatpush1.msra.mxu0 0.0
      %317 = vmatprep.subr.mxu0 0.0
      %318 = vmatpush1.msra.mxu0 0.0
      %319 = vmatprep.subr.mxu0 0.0
      %320 = vmatpush1.msra.mxu0 0.0
      %321 = vmatprep.subr.mxu0 0.0
      %322 = vmatpush1.msra.mxu0 0.0
      %323 = vmatprep.subr.mxu0 0.0
      %324 = vmatpush1.msra.mxu0 0.0
      %325 = vmatprep.subr.mxu0 0.0
      %326 = vmatpush1.msra.mxu0 0.0
      %327 = vmatprep.mubr.f32.mxu0 0.0
      %328 = vmatmul.mubr.f32.gmra.mrb[0].mxu0 %v258
      %v329 = vpop.f32.mrb[0].mxu0
      %v330 = vadd.f32 %v249, %v329
      %v331 = vpop.f32.mrb[0].mxu0
      %332 = vmatprep.mubr.f32.mxu0 0.0
      %333 = vmatmul.mubr.f32.gmra.mrb[0].mxu0 %v261
      %v334 = vpop.f32.mrb[0].mxu0
      %v335 = vadd.f32 %v254, %v334
      %v336 = vpop.f32.mrb[0].mxu0
      %337 = vdwg.mxu0
      %vm338 = vcmask 523264
      %339 = vst.msk [vmem:[%s236] sm:$0xff] %vm338, %v330
      %340 = vst.msk [vmem:[%s236 + $0x8] sm:$0xff] %vm338, %v335
      %s341 = smul.u32 2, %s19
      %p342 = scmp.lt.s32.totalorder %s18, 1
      %s343 = scalar_select %p342, %s18, 1
      %p344 = scmp.lt.s32.totalorder %s341, 1
      %s345 = scalar_select %p344, %s341, 1
      %s346 = smul.addr %s343, 2
      %s347 = sadd.s32 %s345, %s346
      %s348 = smul.addr %s347, 8
      %s349 = scalar_lea.vmem %s3, %s348
      // Predicated region
      $region33: #{maniqa_forward.27} parent=31 // pred_check
        %p350 = pneg %p124
      $region34: #{maniqa_forward.27} parent=31 // pred_check_branch
        %352 = sbr.rel (%p350) target = $region36
      $region35: #{maniqa_forward.27} parent=31 // pred_region
        %s353 = smul.u32 2, %s19
      $region36: #{maniqa_forward.27} parent=31 // pred_fallthru
        _
    $region32: #{maniqa_forward.27} parent=5 // pred_fallthru
      _
    %p354 = scmp.le.s32.totalorder 2, %s9
    // Predicated region
    $region37: #{maniqa_forward.27} parent=5 // pred_check
      %p355 = pneg %p354
    $region38: #{maniqa_forward.27} parent=5 // pred_check_branch
      %357 = sbr.rel (%p355) target = $region40
    $region39: #{maniqa_forward.27} parent=5 // pred_region
      %s358 = ssub.s32 %s9, 2
      // Predicated region
      $region41: #{maniqa_forward.27} parent=39 // pred_check
        %p359 = pneg %p130
      $region42: #{maniqa_forward.27} parent=39 // pred_check_branch
        %361 = sbr.rel (%p359) target = $region44
      $region43: #{maniqa_forward.27} parent=39 // pred_region
        %s362 = smul.u32 2, %s21
        %p363 = scmp.lt.s32.totalorder %s20, 1
        %s364 = scalar_select %p363, %s20, 1
        %p365 = scmp.lt.s32.totalorder %s362, 1
        %s366 = scalar_select %p365, %s362, 1
        %s367 = smul.addr %s364, 2
        %s368 = sadd.s32 %s366, %s367
        %s369 = smul.addr %s368, 8
        %s370 = scalar_lea.vmem %s3, %s369
      $region44: #{maniqa_forward.27} parent=39 // pred_fallthru
        _
    $region40: #{maniqa_forward.27} parent=5 // pred_fallthru
      _
  $region6: #{maniqa_forward.27} parent=0 // loop_footer
    %s13 = sadd.s32 1, %s9
  $region7: #{maniqa_forward.27} parent=0 // loop_footer_branch
    %8 = sbr.rel target = $region3
  $region8: #{maniqa_forward.27} parent=0 // loop_exit
    _

// kernel: maniqa_forward.24
$region0: #{maniqa_forward.24}
  #allocation0 [shape = 'u32[]', space=smem, size = 0x4, offset = 0x4, fixed_abs, tag = 'smem constant byte address 0x4 - core index']
  #allocation1 [shape = 'u32[144,128]{1,0:T(1,128)}', space=vmem, size = 0x12000, scoped, tag = 'internal scratch']
  %s0 = inlined_call_operand.hbm [shape: f32[2,32,64], index: 0, kind: input, shape index: {}]
  %s1 = inlined_call_operand.hbm [shape: f32[2,32,64], index: 1, kind: input, shape index: {}]
  %s2 = inlined_call_operand.hbm [shape: f32[2,64,32], index: 2, kind: input, shape index: {}]
  %s3 = inlined_call_operand.hbm [shape: f32[2,64,32], index: 3, kind: input, shape index: {}]
  %s4 = inlined_call_operand.hbm [shape: f32[64,64], index: 4, kind: input, shape index: {}]
  %s5 = inlined_call_operand.hbm [shape: f32[1,64], index: 5, kind: input, shape index: {}]
  %s6 = inlined_call_operand.hbm [shape: f32[2,64,32], index: 6, kind: output, shape index: {}]
  %s7 = sld [smem:[#allocation0]]
  $region81: #{maniqa_forward.24} parent=0
    _
  %s9 = ssub.s32 1, %s7
  %s10 = scalar_select 0, %s9, %s7
  $region1: #{maniqa_forward.24} parent=0
    #allocation2 [shape = 'u8[32768]{0}', space=vmem, size = 0x8000, scoped, tag = 'input window, operand 0']
    #allocation3 [shape = 's32[2]{0}', space=sflag, size = 0x8, scoped, tag = 'scoped memory for maniqa_forward.24']
    #allocation4 [shape = 's32[2]{0}', space=sflag, size = 0x8, scoped, tag = 'scoped memory for maniqa_forward.24']
    #allocation5 [shape = 'u8[32768]{0}', space=vmem, size = 0x8000, scoped, tag = 'input window, operand 1']
    #allocation6 [shape = 's32[2]{0}', space=sflag, size = 0x8, scoped, tag = 'scoped memory for maniqa_forward.24']
    #allocation7 [shape = 'u8[65536]{0}', space=vmem, size = 0x10000, scoped, tag = 'input window, operand 2']
    #allocation8 [shape = 'u8[65536]{0}', space=vmem, size = 0x10000, scoped, tag = 'input window, operand 3']
    #allocation9 [shape = 's32[2]{0}', space=sflag, size = 0x8, scoped, tag = 'scoped memory for maniqa_forward.24']
    #allocation10 [shape = 'u8[32768]{0}', space=vmem, size = 0x8000, scoped, tag = 'input window, operand 4, single buffered']
    #allocation11 [shape = 'u8[512]{0}', space=vmem, size = 0x400, scoped, tag = 'input window, operand 5, single buffered']
    #allocation12 [shape = 's32[1]{0}', space=sflag, size = 0x4, scoped, tag = 'scoped memory for maniqa_forward.24']
    #allocation13 [shape = 'u8[65536]{0}', space=vmem, size = 0x10000, scoped, tag = 'output window, operand 0']
    %11 = vsyncpa [#allocation3], 0
    %s12 = scalar_lea.sflag [#allocation3], 1
    %13 = vsyncpa %s12, 0
    %14 = vsyncpa [#allocation6], 0
    %s15 = scalar_lea.sflag [#allocation6], 1
    %16 = vsyncpa %s15, 0
    %17 = vsyncpa [#allocation9], 0
    %s18 = scalar_lea.sflag [#allocation9], 1
    %19 = vsyncpa %s18, 0
    %20 = vsyncpa [#allocation12], 0
    %21 = vsyncpa [#allocation4], 0
    %s22 = scalar_lea.sflag [#allocation4], 1
    %23 = vsyncpa %s22, 0
    loop: start=0, step=1, limit=4
    $region2: #{maniqa_forward.24} parent=1 // loop_pre_header
      _
    $region3: #{maniqa_forward.24} parent=1 // loop_header
      %s25 = sphi 0, %s29
      %p26 = scmp.ge.s32.totalorder %s25, 4
      %s32 = sphi 0, %s44
      %s33 = sphi 0, %s40
      %s34 = sphi 0, %s32
      %s35 = sphi 0, %s33
      %s36 = sphi 0, %s34
      %s37 = sphi 0, %s35
      %s49 = sphi 0, %s51
      %s52 = sphi 0, %s49
      %s53 = sphi 0, %s52
      %s69 = sphi 0, %s53
      %s75 = sphi 0, %s77
      %s78 = sphi 0, %s75
      %s79 = sphi 0, %s78
      %s95 = sphi 0, %s79
      %s101 = sphi 0, %s103
      %s104 = sphi 0, %s101
      %s105 = sphi 0, %s104
      %s121 = sphi 0, %s105
      %s129 = sphi 0, %s131
      %s132 = sphi 0, %s129
      %s133 = sphi 0, %s132
      %s149 = sphi 0, %s133
      %s153 = sphi 0, %s153
      %s155 = sphi 0, %s153
      %s156 = sphi 0, %s155
      %s170 = sphi 0, %s156
      %s174 = sphi 0, %s174
      %s176 = sphi 0, %s174
      %s177 = sphi 0, %s176
      %s191 = sphi 0, %s177
      %s199 = sphi 0, %s201
      %s202 = sphi 0, %s199
      %s203 = sphi 0, %s202
      %s219 = sphi 0, %s203
    $region4: #{maniqa_forward.24} parent=1 // loop_header_branch
      %28 = sbr.rel (%p26) target = $region8
    $region5: #{maniqa_forward.24} parent=1 // loop_body
      %s30 = ssub.s32 %s25, 1
      %s31 = ssub.s32 %s25, 2
      %s38 = sadd.s32 1, %s33
      %p39 = scmp.ge.s32.totalorder %s38, 1
      %s40 = scalar_select %p39, 0, %s38
      %s41 = sadd.s32 1, %s32
      %s42 = scalar_select %p39, %s41, %s32
      %p43 = scmp.ge.s32.totalorder %s42, 2
      %s44 = scalar_select %p43, 0, %s42
      %s45 = ssub.s32 %s32, %s44
      %s46 = ssub.s32 %s33, %s40
      %s47 = sor.u32 %s45, %s46
      %p48 = scmp.eq.s32.totalorder %s47, 0
      %s50 = sadd.s32 %s49, 1
      %s51 = scalar_select %p48, %s49, %s50
      %p54 = pneg %p48
      %p55 = scmp.eq.s32.totalorder %s25, 1
      %p56 = por %p54, %p55
      %p57 = scmp.ne.s32.totalorder %s49, %s52
      %p58 = scmp.eq.s32.totalorder %s25, 0
      %p59 = por %p57, %p58
      %p60 = scmp.ne.s32.totalorder %s49, %s52
      %p61 = scmp.eq.s32.totalorder %s30, 1
      %p62 = por %p60, %p61
      %p63 = scmp.ne.s32.totalorder %s52, %s53
      %p64 = scmp.eq.s32.totalorder %s30, 0
      %p65 = por %p63, %p64
      %p66 = scmp.ne.s32.totalorder %s52, %s53
      %p67 = scmp.eq.s32.totalorder %s31, 1
      %p68 = por %p66, %p67
      %p70 = scmp.ne.s32.totalorder %s53, %s69
      %p71 = scmp.eq.s32.totalorder %s31, 0
      %p72 = por %p70, %p71
      %s73 = ssub.s32 %s32, %s44
      %p74 = scmp.eq.s32.totalorder %s73, 0
      %s76 = sadd.s32 %s75, 1
      %s77 = scalar_select %p74, %s75, %s76
      %p80 = pneg %p74
      %p81 = scmp.eq.s32.totalorder %s25, 1
      %p82 = por %p80, %p81
      %p83 = scmp.ne.s32.totalorder %s75, %s78
      %p84 = scmp.eq.s32.totalorder %s25, 0
      %p85 = por %p83, %p84
      %p86 = scmp.ne.s32.totalorder %s75, %s78
      %p87 = scmp.eq.s32.totalorder %s30, 1
      %p88 = por %p86, %p87
      %p89 = scmp.ne.s32.totalorder %s78, %s79
      %p90 = scmp.eq.s32.totalorder %s30, 0
      %p91 = por %p89, %p90
      %p92 = scmp.ne.s32.totalorder %s78, %s79
      %p93 = scmp.eq.s32.totalorder %s31, 1
      %p94 = por %p92, %p93
      %p96 = scmp.ne.s32.totalorder %s79, %s95
      %p97 = scmp.eq.s32.totalorder %s31, 0
      %p98 = por %p96, %p97
      %s99 = ssub.s32 %s32, %s44
      %p100 = scmp.eq.s32.totalorder %s99, 0
      %s102 = sadd.s32 %s101, 1
      %s103 = scalar_select %p100, %s101, %s102
      %p106 = pneg %p100
      %p107 = scmp.eq.s32.totalorder %s25, 1
      %p108 = por %p106, %p107
      %p109 = scmp.ne.s32.totalorder %s101, %s104
      %p110 = scmp.eq.s32.totalorder %s25, 0
      %p111 = por %p109, %p110
      %p112 = scmp.ne.s32.totalorder %s101, %s104
      %p113 = scmp.eq.s32.totalorder %s30, 1
      %p114 = por %p112, %p113
      %p115 = scmp.ne.s32.totalorder %s104, %s105
      %p116 = scmp.eq.s32.totalorder %s30, 0
      %p117 = por %p115, %p116
      %p118 = scmp.ne.s32.totalorder %s104, %s105
      %p119 = scmp.eq.s32.totalorder %s31, 1
      %p120 = por %p118, %p119
      %p122 = scmp.ne.s32.totalorder %s105, %s121
      %p123 = scmp.eq.s32.totalorder %s31, 0
      %p124 = por %p122, %p123
      %s125 = ssub.s32 %s32, %s44
      %s126 = ssub.s32 %s33, %s40
      %s127 = sor.u32 %s125, %s126
      %p128 = scmp.eq.s32.totalorder %s127, 0
      %s130 = sadd.s32 %s129, 1
      %s131 = scalar_select %p128, %s129, %s130
      %p134 = pneg %p128
      %p135 = scmp.eq.s32.totalorder %s25, 1
      %p136 = por %p134, %p135
      %p137 = scmp.ne.s32.totalorder %s129, %s132
      %p138 = scmp.eq.s32.totalorder %s25, 0
      %p139 = por %p137, %p138
      %p140 = scmp.ne.s32.totalorder %s129, %s132
      %p141 = scmp.eq.s32.totalorder %s30, 1
      %p142 = por %p140, %p141
      %p143 = scmp.ne.s32.totalorder %s132, %s133
      %p144 = scmp.eq.s32.totalorder %s30, 0
      %p145 = por %p143, %p144
      %p146 = scmp.ne.s32.totalorder %s132, %s133
      %p147 = scmp.eq.s32.totalorder %s31, 1
      %p148 = por %p146, %p147
      %p150 = scmp.ne.s32.totalorder %s133, %s149
      %p151 = scmp.eq.s32.totalorder %s31, 0
      %p152 = por %p150, %p151
      %s154 = sadd.s32 %s153, 1
      %p157 = scmp.eq.s32.totalorder %s25, 1
      %p158 = scmp.ne.s32.totalorder %s153, %s155
      %p159 = scmp.eq.s32.totalorder %s25, 0
      %p160 = por %p158, %p159
      %p161 = scmp.ne.s32.totalorder %s153, %s155
      %p162 = scmp.eq.s32.totalorder %s30, 1
      %p163 = por %p161, %p162
      %p164 = scmp.ne.s32.totalorder %s155, %s156
      %p165 = scmp.eq.s32.totalorder %s30, 0
      %p166 = por %p164, %p165
      %p167 = scmp.ne.s32.totalorder %s155, %s156
      %p168 = scmp.eq.s32.totalorder %s31, 1
      %p169 = por %p167, %p168
      %p171 = scmp.ne.s32.totalorder %s156, %s170
      %p172 = scmp.eq.s32.totalorder %s31, 0
      %p173 = por %p171, %p172
      %s175 = sadd.s32 %s174, 1
      %p178 = scmp.eq.s32.totalorder %s25, 1
      %p179 = scmp.ne.s32.totalorder %s174, %s176
      %p180 = scmp.eq.s32.totalorder %s25, 0
      %p181 = por %p179, %p180
      %p182 = scmp.ne.s32.totalorder %s174, %s176
      %p183 = scmp.eq.s32.totalorder %s30, 1
      %p184 = por %p182, %p183
      %p185 = scmp.ne.s32.totalorder %s176, %s177
      %p186 = scmp.eq.s32.totalorder %s30, 0
      %p187 = por %p185, %p186
      %p188 = scmp.ne.s32.totalorder %s176, %s177
      %p189 = scmp.eq.s32.totalorder %s31, 1
      %p190 = por %p188, %p189
      %p192 = scmp.ne.s32.totalorder %s177, %s191
      %p193 = scmp.eq.s32.totalorder %s31, 0
      %p194 = por %p192, %p193
      %s195 = ssub.s32 %s32, %s44
      %s196 = ssub.s32 %s33, %s40
      %s197 = sor.u32 %s195, %s196
      %p198 = scmp.eq.s32.totalorder %s197, 0
      %s200 = sadd.s32 %s199, 1
      %s201 = scalar_select %p198, %s199, %s200
      %p204 = pneg %p198
      %p205 = scmp.eq.s32.totalorder %s25, 1
      %p206 = por %p204, %p205
      %p207 = scmp.ne.s32.totalorder %s199, %s202
      %p208 = scmp.eq.s32.totalorder %s25, 0
      %p209 = por %p207, %p208
      %p210 = scmp.ne.s32.totalorder %s199, %s202
      %p211 = scmp.eq.s32.totalorder %s30, 1
      %p212 = por %p210, %p211
      %p213 = scmp.ne.s32.totalorder %s202, %s203
      %p214 = scmp.eq.s32.totalorder %s30, 0
      %p215 = por %p213, %p214
      %p216 = scmp.ne.s32.totalorder %s202, %s203
      %p217 = scmp.eq.s32.totalorder %s31, 1
      %p218 = por %p216, %p217
      %p220 = scmp.ne.s32.totalorder %s203, %s219
      %p221 = scmp.eq.s32.totalorder %s31, 0
      %p222 = por %p220, %p221
      %p223 = scmp.le.s32.totalorder 1, %s25
      %p224 = scmp.lt.s32.totalorder %s25, 3
      %p225 = pnand %p223, %p224
      %p226 = pneg %p225
      // Predicated region
      $region9: #{maniqa_forward.24} parent=5 // pred_check
        _
      $region10: #{maniqa_forward.24} parent=5 // pred_check_branch
        %228 = sbr.rel (%p225) target = $region12
      $region11: #{maniqa_forward.24} parent=5 // pred_region
        %s229 = ssub.s32 %s25, 1
        // Predicated region
        $region13: #{maniqa_forward.24} parent=11 // pred_check
          %p230 = pneg %p166
        $region14: #{maniqa_forward.24} parent=11 // pred_check_branch
          %232 = sbr.rel (%p230) target = $region16
        $region15: #{maniqa_forward.24} parent=11 // pred_region
          %s234 = ssub.s32 1024, 1024
          %235 = vsyncadd [#allocation9], %s234
          %s236 = sshll.u32 [#allocation10], 4
          %s237 = int_to_ptr.vmem [resolvable:$true] %s236
          %242 = dma.hbm_to_vmem [thread:$0]  %s4, 1024, %s237, [#allocation9], 128, 128, 8
        $region16: #{maniqa_forward.24} parent=11 // pred_fallthru
          _
        // Predicated region
        $region17: #{maniqa_forward.24} parent=11 // pred_check
          %p243 = pneg %p187
        $region18: #{maniqa_forward.24} parent=11 // pred_check_branch
          %245 = sbr.rel (%p243) target = $region20
        $region19: #{maniqa_forward.24} parent=11 // pred_region
          %s247 = ssub.s32 16, 16
          %248 = vsyncadd [#allocation12], %s247
          %s250 = sshll.u32 [#allocation11], 4
          %s251 = int_to_ptr.vmem [resolvable:$true] %s250
          %253 = dma.hbm_to_vmem [thread:$0]  %s5, 16, %s251, [#allocation12]
        $region20: #{maniqa_forward.24} parent=11 // pred_fallthru
          _
      $region12: #{maniqa_forward.24} parent=5 // pred_fallthru
        _
      %p254 = scmp.lt.s32.totalorder %s25, 2
      // Predicated region
      $region21: #{maniqa_forward.24} parent=5 // pred_check
        %p255 = pneg %p254
      $region22: #{maniqa_forward.24} parent=5 // pred_check_branch
        %257 = sbr.rel (%p255) target = $region24
      $region23: #{maniqa_forward.24} parent=5 // pred_region
        // Predicated region
        $region25: #{maniqa_forward.24} parent=23 // pred_check
          %p258 = pneg %p59
        $region26: #{maniqa_forward.24} parent=23 // pred_check_branch
          %260 = sbr.rel (%p258) target = $region28
        $region27: #{maniqa_forward.24} parent=23 // pred_region
          %s261 = sand.u32 %s49, 1
          %s262 = scalar_lea.sflag [#allocation3], %s261
          %s263 = sand.u32 %s49, 1
          %s264 = smul.addr %s263, 32
          %s265 = scalar_lea.vmem [#allocation2], %s264
          %s266 = smul.u32 4, %s33
          %s268 = ssub.s32 512, 512
          %269 = vsyncadd %s262, %s268
          %s270 = smul.addr %s32, 4
          %s271 = sadd.s32 %s266, %s270
          %s272 = smul.addr %s271, 128
          %s273 = scalar_lea.hbm %s0, %s272
          %s274 = sshll.u32 %s265, 4
          %s275 = int_to_ptr.vmem [resolvable:$true] %s274
          %280 = dma.hbm_to_vmem [thread:$0]  %s273, 512, %s275, %s262, 128, 128, 8
        $region28: #{maniqa_forward.24} parent=23 // pred_fallthru
          _
        // Predicated region
        $region29: #{maniqa_forward.24} parent=23 // pred_check
          %p281 = pneg %p85
        $region30: #{maniqa_forward.24} parent=23 // pred_check_branch
          %283 = sbr.rel (%p281) target = $region32
        $region31: #{maniqa_forward.24} parent=23 // pred_region
          %s284 = sand.u32 %s25, 1
          %s285 = scalar_lea.sflag [#allocation6], %s284
          %s286 = sand.u32 %s75, 1
          %s287 = smul.addr %s286, 32
          %s288 = scalar_lea.vmem [#allocation5], %s287
          %s290 = ssub.s32 512, 512
          %291 = vsyncadd %s285, %s290
          %s292 = smul.addr %s32, 4
          %s293 = smul.addr %s292, 128
          %s294 = scalar_lea.hbm %s1, %s293
          %s295 = sshll.u32 %s288, 4
          %s296 = int_to_ptr.vmem [resolvable:$true] %s295
          %301 = dma.hbm_to_vmem [thread:$0]  %s294, 512, %s296, %s285, 128, 128, 8
        $region32: #{maniqa_forward.24} parent=23 // pred_fallthru
          _
        // Predicated region
        $region33: #{maniqa_forward.24} parent=23 // pred_check
          %p302 = pneg %p111
        $region34: #{maniqa_forward.24} parent=23 // pred_check_branch
          %304 = sbr.rel (%p302) target = $region36
        $region35: #{maniqa_forward.24} parent=23 // pred_region
          %s305 = sand.u32 %s25, 1
          %s306 = scalar_lea.sflag [#allocation6], %s305
          %s307 = sand.u32 %s101, 1
          %s308 = smul.addr %s307, 64
          %s309 = scalar_lea.vmem [#allocation7], %s308
          %s311 = ssub.s32 1024, 1024
          %312 = vsyncadd %s306, %s311
          %s313 = smul.addr %s32, 8
          %s314 = smul.addr %s313, 128
          %s315 = scalar_lea.hbm %s2, %s314
          %s316 = sshll.u32 %s309, 4
          %s317 = int_to_ptr.vmem [resolvable:$true] %s316
          %322 = dma.hbm_to_vmem [thread:$0]  %s315, 1024, %s317, %s306, 128, 128, 8
        $region36: #{maniqa_forward.24} parent=23 // pred_fallthru
          _
        // Predicated region
        $region37: #{maniqa_forward.24} parent=23 // pred_check
          %p323 = pneg %p139
        $region38: #{maniqa_forward.24} parent=23 // pred_check_branch
          %325 = sbr.rel (%p323) target = $region40
        $region39: #{maniqa_forward.24} parent=23 // pred_region
          %s326 = sand.u32 %s25, 1
          %s327 = scalar_lea.sflag [#allocation9], %s326
          %s328 = sand.u32 %s129, 1
          %s329 = smul.addr %s328, 64
          %s330 = scalar_lea.vmem [#allocation8], %s329
          %s332 = ssub.s32 1024, 1024
          %333 = vsyncadd %s327, %s332
          %s334 = smul.addr %s32, 8
          %s335 = sadd.s32 %s33, %s334
          %s336 = smul.addr %s335, 128
          %s337 = scalar_lea.hbm %s3, %s336
          %s338 = sshll.u32 %s330, 4
          %s339 = int_to_ptr.vmem [resolvable:$true] %s338
          %344 = dma.hbm_to_vmem [thread:$0]  %s337, 1024, %s339, %s327, 128, 128, 8
        $region40: #{maniqa_forward.24} parent=23 // pred_fallthru
          _
      $region24: #{maniqa_forward.24} parent=5 // pred_fallthru
        _
      %p345 = scmp.le.s32.totalorder 1, %s25
      %p346 = scmp.lt.s32.totalorder %s25, 3
      %p347 = pnand %p345, %p346
      %p348 = pneg %p347
      // Predicated region
      $region41: #{maniqa_forward.24} parent=5 // pred_check
        _
      $region42: #{maniqa_forward.24} parent=5 // pred_check_branch
        %350 = sbr.rel (%p347) target = $region44
      $region43: #{maniqa_forward.24} parent=5 // pred_region
        %s351 = ssub.s32 %s25, 1
        %s352 = sand.u32 %s52, 1
        %s353 = scalar_lea.sflag [#allocation3], %s352
        %s354 = sand.u32 %s52, 1
        %s355 = smul.addr %s354, 32
        %s356 = scalar_lea.vmem [#allocation2], %s355
        // Predicated region
        $region45: #{maniqa_forward.24} parent=43 // pred_check
          %p357 = pneg %p65
        $region46: #{maniqa_forward.24} parent=43 // pred_check_branch
          %359 = sbr.rel (%p357) target = $region48
        $region47: #{maniqa_forward.24} parent=43 // pred_region
          %360 = dma.done %s353, 512
        $region48: #{maniqa_forward.24} parent=43 // pred_fallthru
          _
        %s361 = sand.u32 %s30, 1
        %s362 = scalar_lea.sflag [#allocation6], %s361
        %s363 = sand.u32 %s78, 1
        %s364 = smul.addr %s363, 32
        %s365 = scalar_lea.vmem [#allocation5], %s364
        // Predicated region
        $region49: #{maniqa_forward.24} parent=43 // pred_check
          %p366 = pneg %p91
        $region50: #{maniqa_forward.24} parent=43 // pred_check_branch
          %368 = sbr.rel (%p366) target = $region52
        $region51: #{maniqa_forward.24} parent=43 // pred_region
          %369 = dma.done %s362, 512
        $region52: #{maniqa_forward.24} parent=43 // pred_fallthru
          _
        %s370 = sand.u32 %s30, 1
        %s371 = scalar_lea.sflag [#allocation6], %s370
        %s372 = sand.u32 %s104, 1
        %s373 = smul.addr %s372, 64
        %s374 = scalar_lea.vmem [#allocation7], %s373
        // Predicated region
        $region53: #{maniqa_forward.24} parent=43 // pred_check
          %p375 = pneg %p117
        $region54: #{maniqa_forward.24} parent=43 // pred_check_branch
          %377 = sbr.rel (%p375) target = $region56
        $region55: #{maniqa_forward.24} parent=43 // pred_region
          %378 = dma.done %s371, 1024
        $region56: #{maniqa_forward.24} parent=43 // pred_fallthru
          _
        %s379 = sand.u32 %s30, 1
        %s380 = scalar_lea.sflag [#allocation9], %s379
        %s381 = sand.u32 %s132, 1
        %s382 = smul.addr %s381, 64
        %s383 = scalar_lea.vmem [#allocation8], %s382
        // Predicated region
        $region57: #{maniqa_forward.24} parent=43 // pred_check
          %p384 = pneg %p145
        $region58: #{maniqa_forward.24} parent=43 // pred_check_branch
          %386 = sbr.rel (%p384) target = $region60
        $region59: #{maniqa_forward.24} parent=43 // pred_region
          %387 = dma.done %s380, 1024
        $region60: #{maniqa_forward.24} parent=43 // pred_fallthru
          _
        // Predicated region
        $region61: #{maniqa_forward.24} parent=43 // pred_check
          %p388 = pneg %p166
        $region62: #{maniqa_forward.24} parent=43 // pred_check_branch
          %390 = sbr.rel (%p388) target = $region64
        $region63: #{maniqa_forward.24} parent=43 // pred_region
          %391 = dma.done [#allocation9], 1024
        $region64: #{maniqa_forward.24} parent=43 // pred_fallthru
          _
        // Predicated region
        $region65: #{maniqa_forward.24} parent=43 // pred_check
          %p392 = pneg %p187
        $region66: #{maniqa_forward.24} parent=43 // pred_check_branch
          %394 = sbr.rel (%p392) target = $region68
        $region67: #{maniqa_forward.24} parent=43 // pred_region
          %395 = dma.done [#allocation12], 16
        $region68: #{maniqa_forward.24} parent=43 // pred_fallthru
          _
        %s396 = sand.u32 %s52, 1
        %s397 = scalar_lea.sflag [#allocation3], %s396
        %s398 = sand.u32 %s52, 1
        %s399 = smul.addr %s398, 32
        %s400 = scalar_lea.vmem [#allocation2], %s399
        %p401 = pneg %p65
        %p402 = pneg %p62
        %s403 = sand.u32 %s30, 1
        %s404 = scalar_lea.sflag [#allocation6], %s403
        %s405 = sand.u32 %s78, 1
        %s406 = smul.addr %s405, 32
        %s407 = scalar_lea.vmem [#allocation5], %s406
        %p408 = pneg %p91
        %p409 = pneg %p88
        %s410 = sand.u32 %s30, 1
        %s411 = scalar_lea.sflag [#allocation6], %s410
        %s412 = sand.u32 %s104, 1
        %s413 = smul.addr %s412, 64
        %s414 = scalar_lea.vmem [#allocation7], %s413
        %p415 = pneg %p117
        %p416 = pneg %p114
        %s417 = sand.u32 %s30, 1
        %s418 = scalar_lea.sflag [#allocation9], %s417
        %s419 = sand.u32 %s132, 1
        %s420 = smul.addr %s419, 64
        %s421 = scalar_lea.vmem [#allocation8], %s420
        %p422 = pneg %p145
        %p423 = pneg %p142
        %p424 = pneg %p166
        %p425 = pneg %p163
        %p426 = pneg %p187
        %p427 = pneg %p184
        %p428 = pneg %p215
        %p429 = pneg %p212
        %s430 = sand.u32 %s202, 1
        %s431 = scalar_lea.sflag [#allocation4], %s430
        %s432 = sand.u32 %s202, 1
        %s433 = smul.addr %s432, 64
        %s434 = scalar_lea.vmem [#allocation13], %s433
        %s435 = smul.u32 4, %s35
        %v436 = vld [vmem:[%s356] sm:$0xff]
        %v437 = vld [vmem:[%s356 + $0x8] sm:$0xff]
        %v438 = vld [vmem:[%s356 + $0x10] sm:$0xff]
        %v439 = vld [vmem:[%s356 + $0x18] sm:$0xff]
        %v440 = vld [vmem:[#allocation10] sm:$0xff]
        %v441 = vld [vmem:[#allocation10 + $0x8] sm:$0xff]
        %v442 = vld [vmem:[#allocation10 + $0x10] sm:$0xff]
        %v443 = vld [vmem:[#allocation10 + $0x18] sm:$0xff]
        %v444 = vld [vmem:[#allocation10 + $0x20] sm:$0xff]
        %v445 = vld [vmem:[#allocation10 + $0x28] sm:$0xff]
        %v446 = vld [vmem:[#allocation10 + $0x30] sm:$0xff]
        %v447 = vld [vmem:[#allocation10 + $0x38] sm:$0xff]
        %v448 = vld [vmem:[#allocation11] sm:$0x1]
        %v450 = vlaneseq
        %v451 = vshrl.u32 %v450, 7
        %v452 = vsub.s32 0, %v451
        %v453 = vrot.slane %v448, %v452
        %vm455 = vcmask 523264
        %v457 = vsel %vm455, %v436, 0
        %v460 = vsel %vm455, %v437, 0
        %v463 = vsel %vm455, %v438, 0
        %v466 = vsel %vm455, %v439, 0
        %468 = vmatprep.subr.mxu0 0.0
        %469 = vmatpush1.msra.mxu0 %v440
        %470 = vmatprep.subr.mxu0 0.0
        %471 = vmatpush1.msra.mxu0 %v441
        %472 = vmatprep.subr.mxu0 0.0
        %473 = vmatpush1.msra.mxu0 %v442
        %474 = vmatprep.subr.mxu0 0.0
        %475 = vmatpush1.msra.mxu0 %v443
        %476 = vmatprep.subr.mxu0 0.0
        %477 = vmatpush1.msra.mxu0 %v444
        %478 = vmatprep.subr.mxu0 0.0
        %479 = vmatpush1.msra.mxu0 %v445
        %480 = vmatprep.subr.mxu0 0.0
        %481 = vmatpush1.msra.mxu0 %v446
        %482 = vmatprep.subr.mxu0 0.0
        %483 = vmatpush1.msra.mxu0 %v447
        %484 = vmatprep.subr.mxu0 0.0
        %485 = vmatpush1.msra.mxu0 0.0
        %486 = vmatprep.subr.mxu0 0.0
        %487 = vmatpush1.msra.mxu0 0.0
        %488 = vmatprep.subr.mxu0 0.0
        %489 = vmatpush1.msra.mxu0 0.0
        %490 = vmatprep.subr.mxu0 0.0
        %491 = vmatpush1.msra.mxu0 0.0
        %492 = vmatprep.subr.mxu0 0.0
        %493 = vmatpush1.msra.mxu0 0.0
        %494 = vmatprep.subr.mxu0 0.0
        %495 = vmatpush1.msra.mxu0 0.0
        %496 = vmatprep.subr.mxu0 0.0
        %497 = vmatpush1.msra.mxu0 0.0
        %498 = vmatprep.subr.mxu0 0.0
        %499 = vmatpush1.msra.mxu0 0.0
        %500 = vmatprep.subr.mxu0 0.0
        %501 = vmatpush1.msra.mxu0 0.0
        %502 = vmatprep.subr.mxu0 0.0
        %503 = vmatpush1.msra.mxu0 0.0
        %504 = vmatprep.subr.mxu0 0.0
        %505 = vmatpush1.msra.mxu0 0.0
        %506 = vmatprep.subr.mxu0 0.0
        %507 = vmatpush1.msra.mxu0 0.0
        %508 = vmatprep.subr.mxu0 0.0
        %509 = vmatpush1.msra.mxu0 0.0
        %510 = vmatprep.subr.mxu0 0.0
        %511 = vmatpush1.msra.mxu0 0.0
        %512 = vmatprep.subr.mxu0 0.0
        %513 = vmatpush1.msra.mxu0 0.0
        %514 = vmatprep.subr.mxu0 0.0
        %515 = vmatpush1.msra.mxu0 0.0
        %516 = vmatprep.subr.mxu0 0.0
        %517 = vmatpush1.msra.mxu0 0.0
        %518 = vmatprep.subr.mxu0 0.0
        %519 = vmatpush1.msra.mxu0 0.0
        %520 = vmatprep.subr.mxu0 0.0
        %521 = vmatpush1.msra.mxu0 0.0
        %522 = vmatprep.subr.mxu0 0.0
        %523 = vmatpush1.msra.mxu0 0.0
        %524 = vmatprep.subr.mxu0 0.0
        %525 = vmatpush1.msra.mxu0 0.0
        %526 = vmatprep.subr.mxu0 0.0
        %527 = vmatpush1.msra.mxu0 0.0
        %528 = vmatprep.subr.mxu0 0.0
        %529 = vmatpush1.msra.mxu0 0.0
        %530 = vmatprep.subr.mxu0 0.0
        %531 = vmatpush1.msra.mxu0 0.0
        %532 = vmatprep.mubr.f32.mxu0 0.0
        %533 = vmatmul.mubr.f32.gmra.mrb[0].mxu0 %v457
        %v534 = vpop.f32.mrb[0].mxu0
        %v535 = vadd.f32 %v453, %v534
        %v536 = vpop.f32.mrb[0].mxu0
        %537 = vmatprep.mubr.f32.mxu0 0.0
        %538 = vmatmul.mubr.f32.gmra.mrb[0].mxu0 %v460
        %v539 = vpop.f32.mrb[0].mxu0
        %v540 = vadd.f32 %v453, %v539
        %v541 = vpop.f32.mrb[0].mxu0
        %542 = vmatprep.mubr.f32.mxu0 0.0
        %543 = vmatmul.mubr.f32.gmra.mrb[0].mxu0 %v463
        %v544 = vpop.f32.mrb[0].mxu0
        %v545 = vadd.f32 %v453, %v544
        %v546 = vpop.f32.mrb[0].mxu0
        %547 = vmatprep.mubr.f32.mxu0 0.0
        %548 = vmatmul.mubr.f32.gmra.mrb[0].mxu0 %v466
        %v549 = vpop.f32.mrb[0].mxu0
        %v550 = vadd.f32 %v453, %v549
        %v551 = vpop.f32.mrb[0].mxu0
        %552 = vdwg.mxu0
        %v553 = vld [vmem:[%s365] sm:$0xff]
        %v554 = vld [vmem:[%s365 + $0x8] sm:$0xff]
        %v555 = vld [vmem:[%s365 + $0x10] sm:$0xff]
        %v556 = vld [vmem:[%s365 + $0x18] sm:$0xff]
        %v558 = vsel %vm455, %v535, 0
        %v561 = vsel %vm455, %v540, 0
        %v564 = vsel %vm455, %v545, 0
        %v567 = vsel %vm455, %v550, 0
        %v570 = vsel %vm455, %v553, 0
        %v573 = vsel %vm455, %v554, 0
        %v576 = vsel %vm455, %v555, 0
        %v579 = vsel %vm455, %v556, 0
        %581 = vmatprep.subr.mxu0 0.0
        %582 = vmatpush1.xpose.msra.mxu0 %v570
        %583 = vmatprep.subr.mxu0 0.0
        %584 = vmatpush1.xpose.msra.mxu0 %v573
        %585 = vmatprep.subr.mxu0 0.0
        %586 = vmatpush1.xpose.msra.mxu0 %v576
        %587 = vmatprep.subr.mxu0 0.0
        %588 = vmatpush1.xpose.msra.mxu0 %v579
        %589 = vmatprep.subr.mxu0 0.0
        %590 = vmatpush1.xpose.msra.mxu0 0.0
        %591 = vmatprep.subr.mxu0 0.0
        %592 = vmatpush1.xpose.msra.mxu0 0.0
        %593 = vmatprep.subr.mxu0 0.0
        %594 = vmatpush1.xpose.msra.mxu0 0.0
        %595 = vmatprep.subr.mxu0 0.0
        %596 = vmatpush1.xpose.msra.mxu0 0.0
        %597 = vmatprep.subr.mxu0 0.0
        %598 = vmatpush1.xpose.msra.mxu0 0.0
        %599 = vmatprep.subr.mxu0 0.0
        %600 = vmatpush1.xpose.msra.mxu0 0.0
        %601 = vmatprep.subr.mxu0 0.0
        %602 = vmatpush1.xpose.msra.mxu0 0.0
        %603 = vmatprep.subr.mxu0 0.0
        %604 = vmatpush1.xpose.msra.mxu0 0.0
        %605 = vmatprep.subr.mxu0 0.0
        %606 = vmatpush1.xpose.msra.mxu0 0.0
        %607 = vmatprep.subr.mxu0 0.0
        %608 = vmatpush1.xpose.msra.mxu0 0.0
        %609 = vmatprep.subr.mxu0 0.0
        %610 = vmatpush1.xpose.msra.mxu0 0.0
        %611 = vmatprep.subr.mxu0 0.0
        %612 = vmatpush1.xpose.msra.mxu0 0.0
        %613 = vmatprep.subr.mxu0 0.0
        %614 = vmatpush1.xpose.msra.mxu0 0.0
        %615 = vmatprep.subr.mxu0 0.0
        %616 = vmatpush1.xpose.msra.mxu0 0.0
        %617 = vmatprep.subr.mxu0 0.0
        %618 = vmatpush1.xpose.msra.mxu0 0.0
        %619 = vmatprep.subr.mxu0 0.0
        %620 = vmatpush1.xpose.msra.mxu0 0.0
        %621 = vmatprep.subr.mxu0 0.0
        %622 = vmatpush1.xpose.msra.mxu0 0.0
        %623 = vmatprep.subr.mxu0 0.0
        %624 = vmatpush1.xpose.msra.mxu0 0.0
        %625 = vmatprep.subr.mxu0 0.0
        %626 = vmatpush1.xpose.msra.mxu0 0.0
        %627 = vmatprep.subr.mxu0 0.0
        %628 = vmatpush1.xpose.msra.mxu0 0.0
        %629 = vmatprep.subr.mxu0 0.0
        %630 = vmatpush1.xpose.msra.mxu0 0.0
        %631 = vmatprep.subr.mxu0 0.0
        %632 = vmatpush1.xpose.msra.mxu0 0.0
        %633 = vmatprep.subr.mxu0 0.0
        %634 = vmatpush1.xpose.msra.mxu0 0.0
        %635 = vmatprep.subr.mxu0 0.0
        %636 = vmatpush1.xpose.msra.mxu0 0.0
        %637 = vmatprep.subr.mxu0 0.0
        %638 = vmatpush1.xpose.msra.mxu0 0.0
        %639 = vmatprep.subr.mxu0 0.0
        %640 = vmatpush1.xpose.msra.mxu0 0.0
        %641 = vmatprep.subr.mxu0 0.0
        %642 = vmatpush1.xpose.msra.mxu0 0.0
        %643 = vmatprep.subr.mxu0 0.0
        %644 = vmatpush1.xpose.msra.mxu0 0.0
        %645 = vmatprep.mubr.f32.mxu0 0.0
        %646 = vmatmul.mubr.f32.gmra.mrb[0].mxu0 %v558
        %v647 = vpop.f32.mrb[0].mxu0
        %v648 = vadd.f32 0.0, %v647
        %v649 = vpop.f32.mrb[0].mxu0
        %650 = vmatprep.mubr.f32.mxu0 0.0
        %651 = vmatmul.mubr.f32.gmra.mrb[0].mxu0 %v561
        %v652 = vpop.f32.mrb[0].mxu0
        %v653 = vadd.f32 0.0, %v652
        %v654 = vpop.f32.mrb[0].mxu0
        %655 = vmatprep.mubr.f32.mxu0 0.0
        %656 = vmatmul.mubr.f32.gmra.mrb[0].mxu0 %v564
        %v657 = vpop.f32.mrb[0].mxu0
        %v658 = vadd.f32 0.0, %v657
        %v659 = vpop.f32.mrb[0].mxu0
        %660 = vmatprep.mubr.f32.mxu0 0.0
        %661 = vmatmul.mubr.f32.gmra.mrb[0].mxu0 %v567
        %v662 = vpop.f32.mrb[0].mxu0
        %v663 = vadd.f32 0.0, %v662
        %v664 = vpop.f32.mrb[0].mxu0
        %665 = vdwg.mxu0
        %v666 = vmul.f32 %v648, 0.125
        %v667 = vmul.f32 %v653, 0.125
        %v668 = vmul.f32 %v658, 0.125
        %v669 = vmul.f32 %v663, 0.125
        %vm670 = vcmask 261120
        %v671 = vsel %vm670, %v666, -inf
        %672 = vmax.xlane.f32.xlu0 %v671
        %v673 = vpop.xlane.xlu0 %672
        %v674 = vsel %vm670, %v667, -inf
        %675 = vmax.xlane.f32.xlu0 %v674
        %v676 = vpop.xlane.xlu0 %675
        %v677 = vsel %vm670, %v668, -inf
        %678 = vmax.xlane.f32.xlu0 %v677
        %v679 = vpop.xlane.xlu0 %678
        %v680 = vsel %vm670, %v669, -inf
        %681 = vmax.xlane.f32.xlu0 %v680
        %v682 = vpop.xlane.xlu0 %681
        %v683 = vsub.f32 %v666, %v673
        %v684 = vsub.f32 %v667, %v676
        %v685 = vsub.f32 %v668, %v679
        %v686 = vsub.f32 %v669, %v682
        %v687 = vmul.f32 %v683, 1.442695
        %v688 = vpow.pop %v687
        %v689 = vmul.f32 %v684, 1.442695
        %v690 = vpow.pop %v689
        %v691 = vmul.f32 %v685, 1.442695
        %v692 = vpow.pop %v691
        %v693 = vmul.f32 %v686, 1.442695
        %v694 = vpow.pop %v693
        %v695 = vsel %vm670, %v688, 0.0
        %696 = vadd.xlane.f32.xlu0 %v695
        %v697 = vpop.xlane.xlu0 %696
        %v698 = vsel %vm670, %v690, 0.0
        %699 = vadd.xlane.f32.xlu0 %v698
        %v700 = vpop.xlane.xlu0 %699
        %v701 = vsel %vm670, %v692, 0.0
        %702 = vadd.xlane.f32.xlu0 %v701
        %v703 = vpop.xlane.xlu0 %702
        %v704 = vsel %vm670, %v694, 0.0
        %705 = vadd.xlane.f32.xlu0 %v704
        %v706 = vpop.xlane.xlu0 %705
        %v707 = vrcp.pop %v697
        %v708 = vmul.f32 %v688, %v707
        %v709 = vrcp.pop %v700
        %v710 = vmul.f32 %v690, %v709
        %v711 = vrcp.pop %v703
        %v712 = vmul.f32 %v692, %v711
        %v713 = vrcp.pop %v706
        %v714 = vmul.f32 %v694, %v713
        %v715 = vld [vmem:[%s374] sm:$0xff]
        %v716 = vld [vmem:[%s374 + $0x8] sm:$0xff]
        %v717 = vld [vmem:[%s374 + $0x10] sm:$0xff]
        %v718 = vld [vmem:[%s374 + $0x18] sm:$0xff]
        %v719 = vld [vmem:[%s374 + $0x20] sm:$0xff]
        %v720 = vld [vmem:[%s374 + $0x28] sm:$0xff]
        %v721 = vld [vmem:[%s374 + $0x30] sm:$0xff]
        %v722 = vld [vmem:[%s374 + $0x38] sm:$0xff]
        %v723 = vld [vmem:[%s383] sm:$0xff]
        %v724 = vld [vmem:[%s383 + $0x8] sm:$0xff]
        %v725 = vld [vmem:[%s383 + $0x10] sm:$0xff]
        %v726 = vld [vmem:[%s383 + $0x18] sm:$0xff]
        %v727 = vld [vmem:[%s383 + $0x20] sm:$0xff]
        %v728 = vld [vmem:[%s383 + $0x28] sm:$0xff]
        %v729 = vld [vmem:[%s383 + $0x30] sm:$0xff]
        %v730 = vld [vmem:[%s383 + $0x38] sm:$0xff]
        %v732 = vsel %vm670, %v715, 0
        %v735 = vsel %vm670, %v716, 0
        %v738 = vsel %vm670, %v717, 0
        %v741 = vsel %vm670, %v718, 0
        %v744 = vsel %vm670, %v719, 0
        %v747 = vsel %vm670, %v720, 0
        %v750 = vsel %vm670, %v721, 0
        %v753 = vsel %vm670, %v722, 0
        %v756 = vsel %vm670, %v708, 0
        %v759 = vsel %vm670, %v710, 0
        %v762 = vsel %vm670, %v712, 0
        %v765 = vsel %vm670, %v714, 0
        %767 = vmatprep.subr.mxu0 0.0
        %768 = vmatpush1.xpose.msra.mxu0 %v756
        %769 = vmatprep.subr.mxu0 0.0
        %770 = vmatpush1.xpose.msra.mxu0 %v759
        %771 = vmatprep.subr.mxu0 0.0
        %772 = vmatpush1.xpose.msra.mxu0 %v762
        %773 = vmatprep.subr.mxu0 0.0
        %774 = vmatpush1.xpose.msra.mxu0 %v765
        %775 = vmatprep.subr.mxu0 0.0
        %776 = vmatpush1.xpose.msra.mxu0 0.0
        %777 = vmatprep.subr.mxu0 0.0
        %778 = vmatpush1.xpose.msra.mxu0 0.0
        %779 = vmatprep.subr.mxu0 0.0
        %780 = vmatpush1.xpose.msra.mxu0 0.0
        %781 = vmatprep.subr.mxu0 0.0
        %782 = vmatpush1.xpose.msra.mxu0 0.0
        %783 = vmatprep.subr.mxu0 0.0
        %784 = vmatpush1.xpose.msra.mxu0 0.0
        %785 = vmatprep.subr.mxu0 0.0
        %786 = vmatpush1.xpose.msra.mxu0 0.0
        %787 = vmatprep.subr.mxu0 0.0
        %788 = vmatpush1.xpose.msra.mxu0 0.0
        %789 = vmatprep.subr.mxu0 0.0
        %790 = vmatpush1.xpose.msra.mxu0 0.0
        %791 = vmatprep.subr.mxu0 0.0
        %792 = vmatpush1.xpose.msra.mxu0 0.0
        %793 = vmatprep.subr.mxu0 0.0
        %794 = vmatpush1.xpose.msra.mxu0 0.0
        %795 = vmatprep.subr.mxu0 0.0
        %796 = vmatpush1.xpose.msra.mxu0 0.0
        %797 = vmatprep.subr.mxu0 0.0
        %798 = vmatpush1.xpose.msra.mxu0 0.0
        %799 = vmatprep.subr.mxu0 0.0
        %800 = vmatpush1.xpose.msra.mxu0 0.0
        %801 = vmatprep.subr.mxu0 0.0
        %802 = vmatpush1.xpose.msra.mxu0 0.0
        %803 = vmatprep.subr.mxu0 0.0
        %804 = vmatpush1.xpose.msra.mxu0 0.0
        %805 = vmatprep.subr.mxu0 0.0
        %806 = vmatpush1.xpose.msra.mxu0 0.0
        %807 = vmatprep.subr.mxu0 0.0
        %808 = vmatpush1.xpose.msra.mxu0 0.0
        %809 = vmatprep.subr.mxu0 0.0
        %810 = vmatpush1.xpose.msra.mxu0 0.0
        %811 = vmatprep.subr.mxu0 0.0
        %812 = vmatpush1.xpose.msra.mxu0 0.0
        %813 = vmatprep.subr.mxu0 0.0
        %814 = vmatpush1.xpose.msra.mxu0 0.0
        %815 = vmatprep.subr.mxu0 0.0
        %816 = vmatpush1.xpose.msra.mxu0 0.0
        %817 = vmatprep.subr.mxu0 0.0
        %818 = vmatpush1.xpose.msra.mxu0 0.0
        %819 = vmatprep.subr.mxu0 0.0
        %820 = vmatpush1.xpose.msra.mxu0 0.0
        %821 = vmatprep.subr.mxu0 0.0
        %822 = vmatpush1.xpose.msra.mxu0 0.0
        %823 = vmatprep.subr.mxu0 0.0
        %824 = vmatpush1.xpose.msra.mxu0 0.0
        %825 = vmatprep.subr.mxu0 0.0
        %826 = vmatpush1.xpose.msra.mxu0 0.0
        %827 = vmatprep.subr.mxu0 0.0
        %828 = vmatpush1.xpose.msra.mxu0 0.0
        %829 = vmatprep.subr.mxu0 0.0
        %830 = vmatpush1.xpose.msra.mxu0 0.0
        %831 = vmatprep.mubr.f32.mxu0 0.0
        %832 = vmatmul.mubr.f32.gmra.mrb[0].mxu0 %v732
        %v833 = vpop.f32.mrb[0].mxu0
        %v834 = vadd.f32 %v723, %v833
        %v835 = vpop.f32.mrb[0].mxu0
        %836 = vmatprep.mubr.f32.mxu0 0.0
        %837 = vmatmul.mubr.f32.gmra.mrb[0].mxu0 %v735
        %v838 = vpop.f32.mrb[0].mxu0
        %v839 = vadd.f32 %v724, %v838
        %v840 = vpop.f32.mrb[0].mxu0
        %841 = vmatprep.mubr.f32.mxu0 0.0
        %842 = vmatmul.mubr.f32.gmra.mrb[0].mxu0 %v738
        %v843 = vpop.f32.mrb[0].mxu0
        %v844 = vadd.f32 %v725, %v843
        %v845 = vpop.f32.mrb[0].mxu0
        %846 = vmatprep.mubr.f32.mxu0 0.0
        %847 = vmatmul.mubr.f32.gmra.mrb[0].mxu0 %v741
        %v848 = vpop.f32.mrb[0].mxu0
        %v849 = vadd.f32 %v726, %v848
        %v850 = vpop.f32.mrb[0].mxu0
        %851 = vmatprep.mubr.f32.mxu0 0.0
        %852 = vmatmul.mubr.f32.gmra.mrb[0].mxu0 %v744
        %v853 = vpop.f32.mrb[0].mxu0
        %v854 = vadd.f32 %v727, %v853
        %v855 = vpop.f32.mrb[0].mxu0
        %856 = vmatprep.mubr.f32.mxu0 0.0
        %857 = vmatmul.mubr.f32.gmra.mrb[0].mxu0 %v747
        %v858 = vpop.f32.mrb[0].mxu0
        %v859 = vadd.f32 %v728, %v858
        %v860 = vpop.f32.mrb[0].mxu0
        %861 = vmatprep.mubr.f32.mxu0 0.0
        %862 = vmatmul.mubr.f32.gmra.mrb[0].mxu0 %v750
        %v863 = vpop.f32.mrb[0].mxu0
        %v864 = vadd.f32 %v729, %v863
        %v865 = vpop.f32.mrb[0].mxu0
        %866 = vmatprep.mubr.f32.mxu0 0.0
        %867 = vmatmul.mubr.f32.gmra.mrb[0].mxu0 %v753
        %v868 = vpop.f32.mrb[0].mxu0
        %v869 = vadd.f32 %v730, %v868
        %v870 = vpop.f32.mrb[0].mxu0
        %871 = vdwg.mxu0
        %872 = vst.msk [vmem:[%s434] sm:$0xff] %vm670, %v834
        %873 = vst.msk [vmem:[%s434 + $0x8] sm:$0xff] %vm670, %v839
        %874 = vst.msk [vmem:[%s434 + $0x10] sm:$0xff] %vm670, %v844
        %875 = vst.msk [vmem:[%s434 + $0x18] sm:$0xff] %vm670, %v849
        %876 = vst.msk [vmem:[%s434 + $0x20] sm:$0xff] %vm670, %v854
        %877 = vst.msk [vmem:[%s434 + $0x28] sm:$0xff] %vm670, %v859
        %878 = vst.msk [vmem:[%s434 + $0x30] sm:$0xff] %vm670, %v864
        %879 = vst.msk [vmem:[%s434 + $0x38] sm:$0xff] %vm670, %v869
        %s880 = sand.u32 %s202, 1
        %s881 = scalar_lea.sflag [#allocation4], %s880
        %s882 = sand.u32 %s202, 1
        %s883 = smul.addr %s882, 64
        %s884 = scalar_lea.vmem [#allocation13], %s883
        // Predicated region
        $region69: #{maniqa_forward.24} parent=43 // pred_check
          %p885 = pneg %p212
        $region70: #{maniqa_forward.24} parent=43 // pred_check_branch
          %887 = sbr.rel (%p885) target = $region72
        $region71: #{maniqa_forward.24} parent=43 // pred_region
          %s889 = ssub.s32 1024, 1024
          %890 = vsyncadd %s881, %s889
          %s891 = smul.addr %s34, 8
          %s892 = sadd.s32 %s35, %s891
          %s893 = smul.addr %s892, 128
          %s894 = scalar_lea.hbm %s6, %s893
          %s895 = sshll.u32 %s884, 4
          %s896 = int_to_ptr.vmem [resolvable:$true] %s895
          %901 = dma.vmem_to_hbm [thread:$0]  %s896, 1024, %s894, %s881, 128, 128, 8
        $region72: #{maniqa_forward.24} parent=43 // pred_fallthru
          _
      $region44: #{maniqa_forward.24} parent=5 // pred_fallthru
        _
      %p902 = scmp.le.s32.totalorder 2, %s25
      // Predicated region
      $region73: #{maniqa_forward.24} parent=5 // pred_check
        %p903 = pneg %p902
      $region74: #{maniqa_forward.24} parent=5 // pred_check_branch
        %905 = sbr.rel (%p903) target = $region76
      $region75: #{maniqa_forward.24} parent=5 // pred_region
        %s906 = ssub.s32 %s25, 2
        // Predicated region
        $region77: #{maniqa_forward.24} parent=75 // pred_check
          %p907 = pneg %p218
        $region78: #{maniqa_forward.24} parent=75 // pred_check_branch
          %909 = sbr.rel (%p907) target = $region80
        $region79: #{maniqa_forward.24} parent=75 // pred_region
          %s910 = sand.u32 %s203, 1
          %s911 = scalar_lea.sflag [#allocation4], %s910
          %s912 = sand.u32 %s203, 1
          %s913 = smul.addr %s912, 64
          %s914 = scalar_lea.vmem [#allocation13], %s913
          %915 = dma.done %s911, 1024
        $region80: #{maniqa_forward.24} parent=75 // pred_fallthru
          _
      $region76: #{maniqa_forward.24} parent=5 // pred_fallthru
        _
    $region6: #{maniqa_forward.24} parent=1 // loop_footer
      %s29 = sadd.s32 1, %s25
    $region7: #{maniqa_forward.24} parent=1 // loop_footer_branch
      %24 = sbr.rel target = $region3
    $region8: #{maniqa_forward.24} parent=1 // loop_exit
      _
    %916 = vsyncpa [#allocation3], 1
    %s917 = scalar_lea.sflag [#allocation3], 1
    %918 = vsyncpa %s917, 1
    %919 = vsyncpa [#allocation6], 1
    %s920 = scalar_lea.sflag [#allocation6], 1
    %921 = vsyncpa %s920, 1
    %922 = vsyncpa [#allocation9], 1
    %s923 = scalar_lea.sflag [#allocation9], 1
    %924 = vsyncpa %s923, 1
    %925 = vsyncpa [#allocation12], 1
    %926 = vsyncpa [#allocation4], 1
    %s927 = scalar_lea.sflag [#allocation4], 1
    %928 = vsyncpa %s927, 1

// kernel: maniqa_forward.28
$region0: #{maniqa_forward.28}
  #allocation0 [shape = 'u32[]', space=smem, size = 0x4, offset = 0x4, fixed_abs, tag = 'smem constant byte address 0x4 - core index']
  #allocation1 [shape = 'u32[144,128]{1,0:T(1,128)}', space=vmem, size = 0x12000, scoped, tag = 'internal scratch']
  %s0 = inlined_call_operand.vmem [shape: f32[2,16,64], index: 0, kind: input, shape index: {}]
  %s1 = inlined_call_operand.vmem [shape: f32[64,64], index: 1, kind: input, shape index: {}]
  %s2 = inlined_call_operand.vmem [shape: f32[64,64], index: 2, kind: input, shape index: {}]
  %s3 = inlined_call_operand.vmem [shape: f32[1,64], index: 3, kind: input, shape index: {}]
  %s4 = inlined_call_operand.vmem [shape: f32[1,64], index: 4, kind: input, shape index: {}]
  %s5 = inlined_call_operand.hbm [shape: f32[2,16,64], index: 5, kind: output, shape index: {0}]
  %s6 = inlined_call_operand.hbm [shape: f32[2,64,16], index: 6, kind: output, shape index: {1}]
  %7 = xla_tuple %s5, %s6
  %s8 = sld [smem:[#allocation0]]
  $region61: #{maniqa_forward.28} parent=0
    _
  %s10 = ssub.s32 1, %s8
  %s11 = scalar_select 0, %s10, %s8
  $region1: #{maniqa_forward.28} parent=0
    #allocation2 [shape = 'u8[16384]{0}', space=vmem, size = 0x4000, scoped, tag = 'output window, operand 0']
    #allocation3 [shape = 's32[2]{0}', space=sflag, size = 0x8, scoped, tag = 'scoped memory for maniqa_forward.28']
    #allocation4 [shape = 'u8[65536]{0}', space=vmem, size = 0x10000, scoped, tag = 'output window, operand 1']
    #allocation5 [shape = 's32[2]{0}', space=sflag, size = 0x8, scoped, tag = 'scoped memory for maniqa_forward.28']
    %12 = vsyncpa [#allocation3], 0
    %s13 = scalar_lea.sflag [#allocation3], 1
    %14 = vsyncpa %s13, 0
    %15 = vsyncpa [#allocation5], 0
    %s16 = scalar_lea.sflag [#allocation5], 1
    %17 = vsyncpa %s16, 0
    loop: start=0, step=1, limit=4
    $region2: #{maniqa_forward.28} parent=1 // loop_pre_header
      _
    $region3: #{maniqa_forward.28} parent=1 // loop_header
      %s19 = sphi 0, %s23
      %p20 = scmp.ge.s32.totalorder %s19, 4
      %s26 = sphi 0, %s38
      %s27 = sphi 0, %s34
      %s28 = sphi 0, %s26
      %s29 = sphi 0, %s27
      %s30 = sphi 0, %s28
      %s31 = sphi 0, %s29
      %s43 = sphi 0, %s45
      %s46 = sphi 0, %s43
      %s47 = sphi 0, %s46
      %s63 = sphi 0, %s47
      %s67 = sphi 0, %s67
      %s69 = sphi 0, %s67
      %s70 = sphi 0, %s69
      %s84 = sphi 0, %s70
      %s88 = sphi 0, %s88
      %s90 = sphi 0, %s88
      %s91 = sphi 0, %s90
      %s105 = sphi 0, %s91
      %s109 = sphi 0, %s109
      %s111 = sphi 0, %s109
      %s112 = sphi 0, %s111
      %s126 = sphi 0, %s112
      %s130 = sphi 0, %s130
      %s132 = sphi 0, %s130
      %s133 = sphi 0, %s132
      %s147 = sphi 0, %s133
      %s155 = sphi 0, %s157
      %s158 = sphi 0, %s155
      %s159 = sphi 0, %s158
      %s175 = sphi 0, %s159
      %s183 = sphi 0, %s185
      %s186 = sphi 0, %s183
      %s187 = sphi 0, %s186
      %s203 = sphi 0, %s187
    $region4: #{maniqa_forward.28} parent=1 // loop_header_branch
      %22 = sbr.rel (%p20) target = $region8
    $region5: #{maniqa_forward.28} parent=1 // loop_body
      %s24 = ssub.s32 %s19, 1
      %s25 = ssub.s32 %s19, 2
      %s32 = sadd.s32 1, %s27
      %p33 = scmp.ge.s32.totalorder %s32, 1
      %s34 = scalar_select %p33, 0, %s32
      %s35 = sadd.s32 1, %s26
      %s36 = scalar_select %p33, %s35, %s26
      %p37 = scmp.ge.s32.totalorder %s36, 2
      %s38 = scalar_select %p37, 0, %s36
      %s39 = ssub.s32 %s26, %s38
      %s40 = ssub.s32 %s27, %s34
      %s41 = sor.u32 %s39, %s40
      %p42 = scmp.eq.s32.totalorder %s41, 0
      %s44 = sadd.s32 %s43, 1
      %s45 = scalar_select %p42, %s43, %s44
      %p48 = pneg %p42
      %p49 = scmp.eq.s32.totalorder %s19, 1
      %p50 = por %p48, %p49
      %p51 = scmp.ne.s32.totalorder %s43, %s46
      %p52 = scmp.eq.s32.totalorder %s19, 0
      %p53 = por %p51, %p52
      %p54 = scmp.ne.s32.totalorder %s43, %s46
      %p55 = scmp.eq.s32.totalorder %s24, 1
      %p56 = por %p54, %p55
      %p57 = scmp.ne.s32.totalorder %s46, %s47
      %p58 = scmp.eq.s32.totalorder %s24, 0
      %p59 = por %p57, %p58
      %p60 = scmp.ne.s32.totalorder %s46, %s47
      %p61 = scmp.eq.s32.totalorder %s25, 1
      %p62 = por %p60, %p61
      %p64 = scmp.ne.s32.totalorder %s47, %s63
      %p65 = scmp.eq.s32.totalorder %s25, 0
      %p66 = por %p64, %p65
      %s68 = sadd.s32 %s67, 1
      %p71 = scmp.eq.s32.totalorder %s19, 1
      %p72 = scmp.ne.s32.totalorder %s67, %s69
      %p73 = scmp.eq.s32.totalorder %s19, 0
      %p74 = por %p72, %p73
      %p75 = scmp.ne.s32.totalorder %s67, %s69
      %p76 = scmp.eq.s32.totalorder %s24, 1
      %p77 = por %p75, %p76
      %p78 = scmp.ne.s32.totalorder %s69, %s70
      %p79 = scmp.eq.s32.totalorder %s24, 0
      %p80 = por %p78, %p79
      %p81 = scmp.ne.s32.totalorder %s69, %s70
      %p82 = scmp.eq.s32.totalorder %s25, 1
      %p83 = por %p81, %p82
      %p85 = scmp.ne.s32.totalorder %s70, %s84
      %p86 = scmp.eq.s32.totalorder %s25, 0
      %p87 = por %p85, %p86
      %s89 = sadd.s32 %s88, 1
      %p92 = scmp.eq.s32.totalorder %s19, 1
      %p93 = scmp.ne.s32.totalorder %s88, %s90
      %p94 = scmp.eq.s32.totalorder %s19, 0
      %p95 = por %p93, %p94
      %p96 = scmp.ne.s32.totalorder %s88, %s90
      %p97 = scmp.eq.s32.totalorder %s24, 1
      %p98 = por %p96, %p97
      %p99 = scmp.ne.s32.totalorder %s90, %s91
      %p100 = scmp.eq.s32.totalorder %s24, 0
      %p101 = por %p99, %p100
      %p102 = scmp.ne.s32.totalorder %s90, %s91
      %p103 = scmp.eq.s32.totalorder %s25, 1
      %p104 = por %p102, %p103
      %p106 = scmp.ne.s32.totalorder %s91, %s105
      %p107 = scmp.eq.s32.totalorder %s25, 0
      %p108 = por %p106, %p107
      %s110 = sadd.s32 %s109, 1
      %p113 = scmp.eq.s32.totalorder %s19, 1
      %p114 = scmp.ne.s32.totalorder %s109, %s111
      %p115 = scmp.eq.s32.totalorder %s19, 0
      %p116 = por %p114, %p115
      %p117 = scmp.ne.s32.totalorder %s109, %s111
      %p118 = scmp.eq.s32.totalorder %s24, 1
      %p119 = por %p117, %p118
      %p120 = scmp.ne.s32.totalorder %s111, %s112
      %p121 = scmp.eq.s32.totalorder %s24, 0
      %p122 = por %p120, %p121
      %p123 = scmp.ne.s32.totalorder %s111, %s112
      %p124 = scmp.eq.s32.totalorder %s25, 1
      %p125 = por %p123, %p124
      %p127 = scmp.ne.s32.totalorder %s112, %s126
      %p128 = scmp.eq.s32.totalorder %s25, 0
      %p129 = por %p127, %p128
      %s131 = sadd.s32 %s130, 1
      %p134 = scmp.eq.s32.totalorder %s19, 1
      %p135 = scmp.ne.s32.totalorder %s130, %s132
      %p136 = scmp.eq.s32.totalorder %s19, 0
      %p137 = por %p135, %p136
      %p138 = scmp.ne.s32.totalorder %s130, %s132
      %p139 = scmp.eq.s32.totalorder %s24, 1
      %p140 = por %p138, %p139
      %p141 = scmp.ne.s32.totalorder %s132, %s133
      %p142 = scmp.eq.s32.totalorder %s24, 0
      %p143 = por %p141, %p142
      %p144 = scmp.ne.s32.totalorder %s132, %s133
      %p145 = scmp.eq.s32.totalorder %s25, 1
      %p146 = por %p144, %p145
      %p148 = scmp.ne.s32.totalorder %s133, %s147
      %p149 = scmp.eq.s32.totalorder %s25, 0
      %p150 = por %p148, %p149
      %s151 = ssub.s32 %s26, %s38
      %s152 = ssub.s32 %s27, %s34
      %s153 = sor.u32 %s151, %s152
      %p154 = scmp.eq.s32.totalorder %s153, 0
      %s156 = sadd.s32 %s155, 1
      %s157 = scalar_select %p154, %s155, %s156
      %p160 = pneg %p154
      %p161 = scmp.eq.s32.totalorder %s19, 1
      %p162 = por %p160, %p161
      %p163 = scmp.ne.s32.totalorder %s155, %s158
      %p164 = scmp.eq.s32.totalorder %s19, 0
      %p165 = por %p163, %p164
      %p166 = scmp.ne.s32.totalorder %s155, %s158
      %p167 = scmp.eq.s32.totalorder %s24, 1
      %p168 = por %p166, %p167
      %p169 = scmp.ne.s32.totalorder %s158, %s159
      %p170 = scmp.eq.s32.totalorder %s24, 0
      %p171 = por %p169, %p170
      %p172 = scmp.ne.s32.totalorder %s158, %s159
      %p173 = scmp.eq.s32.totalorder %s25, 1
      %p174 = por %p172, %p173
      %p176 = scmp.ne.s32.totalorder %s159, %s175
      %p177 = scmp.eq.s32.totalorder %s25, 0
      %p178 = por %p176, %p177
      %s179 = ssub.s32 %s26, %s38
      %s180 = ssub.s32 %s27, %s34
      %s181 = sor.u32 %s179, %s180
      %p182 = scmp.eq.s32.totalorder %s181, 0
      %s184 = sadd.s32 %s183, 1
      %s185 = scalar_select %p182, %s183, %s184
      %p188 = pneg %p182
      %p189 = scmp.eq.s32.totalorder %s19, 1
      %p190 = por %p188, %p189
      %p191 = scmp.ne.s32.totalorder %s183, %s186
      %p192 = scmp.eq.s32.totalorder %s19, 0
      %p193 = por %p191, %p192
      %p194 = scmp.ne.s32.totalorder %s183, %s186
      %p195 = scmp.eq.s32.totalorder %s24, 1
      %p196 = por %p194, %p195
      %p197 = scmp.ne.s32.totalorder %s186, %s187
      %p198 = scmp.eq.s32.totalorder %s24, 0
      %p199 = por %p197, %p198
      %p200 = scmp.ne.s32.totalorder %s186, %s187
      %p201 = scmp.eq.s32.totalorder %s25, 1
      %p202 = por %p200, %p201
      %p204 = scmp.ne.s32.totalorder %s187, %s203
      %p205 = scmp.eq.s32.totalorder %s25, 0
      %p206 = por %p204, %p205
      %p207 = scmp.le.s32.totalorder 1, %s19
      %p208 = scmp.lt.s32.totalorder %s19, 3
      %p209 = pnand %p207, %p208
      %p210 = pneg %p209
      // Predicated region
      $region9: #{maniqa_forward.28} parent=5 // pred_check
        _
      $region10: #{maniqa_forward.28} parent=5 // pred_check_branch
        %212 = sbr.rel (%p209) target = $region12
      $region11: #{maniqa_forward.28} parent=5 // pred_region
        %s213 = ssub.s32 %s19, 1
        // Predicated region
        $region13: #{maniqa_forward.28} parent=11 // pred_check
          %p214 = pneg %p80
        $region14: #{maniqa_forward.28} parent=11 // pred_check_branch
          %216 = sbr.rel (%p214) target = $region16
        $region15: #{maniqa_forward.28} parent=11 // pred_region
          _
        $region16: #{maniqa_forward.28} parent=11 // pred_fallthru
          _
        // Predicated region
        $region17: #{maniqa_forward.28} parent=11 // pred_check
          %p217 = pneg %p101
        $region18: #{maniqa_forward.28} parent=11 // pred_check_branch
          %219 = sbr.rel (%p217) target = $region20
        $region19: #{maniqa_forward.28} parent=11 // pred_region
          _
        $region20: #{maniqa_forward.28} parent=11 // pred_fallthru
          _
        // Predicated region
        $region21: #{maniqa_forward.28} parent=11 // pred_check
          %p220 = pneg %p122
        $region22: #{maniqa_forward.28} parent=11 // pred_check_branch
          %222 = sbr.rel (%p220) target = $region24
        $region23: #{maniqa_forward.28} parent=11 // pred_region
          _
        $region24: #{maniqa_forward.28} parent=11 // pred_fallthru
          _
        // Predicated region
        $region25: #{maniqa_forward.28} parent=11 // pred_check
          %p223 = pneg %p143
        $region26: #{maniqa_forward.28} parent=11 // pred_check_branch
          %225 = sbr.rel (%p223) target = $region28
        $region27: #{maniqa_forward.28} parent=11 // pred_region
          _
        $region28: #{maniqa_forward.28} parent=11 // pred_fallthru
          _
      $region12: #{maniqa_forward.28} parent=5 // pred_fallthru
        _
      %p226 = scmp.lt.s32.totalorder %s19, 2
      // Predicated region
      $region29: #{maniqa_forward.28} parent=5 // pred_check
        %p227 = pneg %p226
      $region30: #{maniqa_forward.28} parent=5 // pred_check_branch
        %229 = sbr.rel (%p227) target = $region32
      $region31: #{maniqa_forward.28} parent=5 // pred_region
        // Predicated region
        $region33: #{maniqa_forward.28} parent=31 // pred_check
          %p230 = pneg %p53
        $region34: #{maniqa_forward.28} parent=31 // pred_check_branch
          %232 = sbr.rel (%p230) target = $region36
        $region35: #{maniqa_forward.28} parent=31 // pred_region
          %s233 = smul.u32 2, %s27
          %p234 = scmp.lt.s32.totalorder %s26, 1
          %s235 = scalar_select %p234, %s26, 1
          %p236 = scmp.lt.s32.totalorder %s233, 1
          %s237 = scalar_select %p236, %s233, 1
          %s238 = smul.addr %s235, 2
          %s239 = sadd.s32 %s237, %s238
          %s240 = smul.addr %s239, 8
          %s241 = scalar_lea.vmem %s0, %s240
          %s242 = smul.u32 2, %s27
        $region36: #{maniqa_forward.28} parent=31 // pred_fallthru
          _
      $region32: #{maniqa_forward.28} parent=5 // pred_fallthru
        _
      %p243 = scmp.le.s32.totalorder 1, %s19
      %p244 = scmp.lt.s32.totalorder %s19, 3
      %p245 = pnand %p243, %p244
      %p246 = pneg %p245
      // Predicated region
      $region37: #{maniqa_forward.28} parent=5 // pred_check
        _
      $region38: #{maniqa_forward.28} parent=5 // pred_check_branch
        %248 = sbr.rel (%p245) target = $region40
      $region39: #{maniqa_forward.28} parent=5 // pred_region
        %s249 = ssub.s32 %s19, 1
        %s250 = smul.u32 2, %s29
        %p251 = scmp.lt.s32.totalorder %s28, 1
        %s252 = scalar_select %p251, %s28, 1
        %p253 = scmp.lt.s32.totalorder %s250, 1
        %s254 = scalar_select %p253, %s250, 1
        %s255 = smul.addr %s252, 2
        %s256 = sadd.s32 %s254, %s255
        %s257 = smul.addr %s256, 8
        %s258 = scalar_lea.vmem %s0, %s257
        %p259 = pneg %p59
        %p260 = pneg %p56
        %p261 = pneg %p80
        %p262 = pneg %p77
        %p263 = pneg %p101
        %p264 = pneg %p98
        %p265 = pneg %p122
        %p266 = pneg %p119
        %p267 = pneg %p143
        %p268 = pneg %p140
        %p269 = pneg %p171
        %p270 = pneg %p168
        %s271 = sand.u32 %s158, 1
        %s272 = scalar_lea.sflag [#allocation3], %s271
        %s273 = sand.u32 %s158, 1
        %s274 = smul.addr %s273, 16
        %s275 = scalar_lea.vmem [#allocation2], %s274
        %p276 = pneg %p199
        %p277 = pneg %p196
        %s278 = sand.u32 %s186, 1
        %s279 = scalar_lea.sflag [#allocation5], %s278
        %s280 = sand.u32 %s186, 1
        %s281 = smul.addr %s280, 64
        %s282 = scalar_lea.vmem [#allocation4], %s281
        %s283 = smul.u32 2, %s29
        %p284 = scmp.lt.s32.totalorder %s28, 1
        %s285 = scalar_select %p284, %s28, 1
        %p286 = scmp.lt.s32.totalorder %s283, 1
        %s287 = scalar_select %p286, %s283, 1
        %s288 = smul.addr %s285, 2
        %s289 = sadd.s32 %s287, %s288
        %s290 = smul.addr %s289, 8
        %s291 = scalar_lea.vmem %s0, %s290
        %s292 = smul.u32 2, %s29
        %s293 = smul.u32 2, %s29
        %v294 = vld [vmem:[%s291] sm:$0xff]
        %v295 = vld [vmem:[%s291 + $0x8] sm:$0xff]
        %v296 = vld [vmem:[%s1] sm:$0xff]
        %v297 = vld [vmem:[%s1 + $0x8] sm:$0xff]
        %v298 = vld [vmem:[%s1 + $0x10] sm:$0xff]
        %v299 = vld [vmem:[%s1 + $0x18] sm:$0xff]
        %v300 = vld [vmem:[%s1 + $0x20] sm:$0xff]
        %v301 = vld [vmem:[%s1 + $0x28] sm:$0xff]
        %v302 = vld [vmem:[%s1 + $0x30] sm:$0xff]
        %v303 = vld [vmem:[%s1 + $0x38] sm:$0xff]
        %v304 = vld [vmem:[%s2] sm:$0xff]
        %v305 = vld [vmem:[%s2 + $0x8] sm:$0xff]
        %v306 = vld [vmem:[%s2 + $0x10] sm:$0xff]
        %v307 = vld [vmem:[%s2 + $0x18] sm:$0xff]
        %v308 = vld [vmem:[%s2 + $0x20] sm:$0xff]
        %v309 = vld [vmem:[%s2 + $0x28] sm:$0xff]
        %v310 = vld [vmem:[%s2 + $0x30] sm:$0xff]
        %v311 = vld [vmem:[%s2 + $0x38] sm:$0xff]
        %v312 = vld [vmem:[%s3] sm:$0x1]
        %v314 = vlaneseq
        %v315 = vshrl.u32 %v314, 7
        %v316 = vsub.s32 0, %v315
        %v317 = vrot.slane %v312, %v316
        %vm319 = vcmask 523264
        %v321 = vsel %vm319, %v294, 0
        %v324 = vsel %vm319, %v295, 0
        %326 = vmatprep.subr.mxu0 0.0
        %327 = vmatpush1.msra.mxu0 %v296
        %328 = vmatprep.subr.mxu0 0.0
        %329 = vmatpush1.msra.mxu0 %v297
        %330 = vmatprep.subr.mxu0 0.0
        %331 = vmatpush1.msra.mxu0 %v298
        %332 = vmatprep.subr.mxu0 0.0
        %333 = vmatpush1.msra.mxu0 %v299
        %334 = vmatprep.subr.mxu0 0.0
        %335 = vmatpush1.msra.mxu0 %v300
        %336 = vmatprep.subr.mxu0 0.0
        %337 = vmatpush1.msra.mxu0 %v301
        %338 = vmatprep.subr.mxu0 0.0
        %339 = vmatpush1.msra.mxu0 %v302
        %340 = vmatprep.subr.mxu0 0.0
        %341 = vmatpush1.msra.mxu0 %v303
        %342 = vmatprep.subr.mxu0 0.0
        %343 = vmatpush1.msra.mxu0 0.0
        %344 = vmatprep.subr.mxu0 0.0
        %345 = vmatpush1.msra.mxu0 0.0
        %346 = vmatprep.subr.mxu0 0.0
        %347 = vmatpush1.msra.mxu0 0.0
        %348 = vmatprep.subr.mxu0 0.0
        %349 = vmatpush1.msra.mxu0 0.0
        %350 = vmatprep.subr.mxu0 0.0
        %351 = vmatpush1.msra.mxu0 0.0
        %352 = vmatprep.subr.mxu0 0.0
        %353 = vmatpush1.msra.mxu0 0.0
        %354 = vmatprep.subr.mxu0 0.0
        %355 = vmatpush1.msra.mxu0 0.0
        %356 = vmatprep.subr.mxu0 0.0
        %357 = vmatpush1.msra.mxu0 0.0
        %358 = vmatprep.subr.mxu0 0.0
        %359 = vmatpush1.msra.mxu0 0.0
        %360 = vmatprep.subr.mxu0 0.0
        %361 = vmatpush1.msra.mxu0 0.0
        %362 = vmatprep.subr.mxu0 0.0
        %363 = vmatpush1.msra.mxu0 0.0
        %364 = vmatprep.subr.mxu0 0.0
        %365 = vmatpush1.msra.mxu0 0.0
        %366 = vmatprep.subr.mxu0 0.0
        %367 = vmatpush1.msra.mxu0 0.0
        %368 = vmatprep.subr.mxu0 0.0
        %369 = vmatpush1.msra.mxu0 0.0
        %370 = vmatprep.subr.mxu0 0.0
        %371 = vmatpush1.msra.mxu0 0.0
        %372 = vmatprep.subr.mxu0 0.0
        %373 = vmatpush1.msra.mxu0 0.0
        %374 = vmatprep.subr.mxu0 0.0
        %375 = vmatpush1.msra.mxu0 0.0
        %376 = vmatprep.subr.mxu0 0.0
        %377 = vmatpush1.msra.mxu0 0.0
        %378 = vmatprep.subr.mxu0 0.0
        %379 = vmatpush1.msra.mxu0 0.0
        %380 = vmatprep.subr.mxu0 0.0
        %381 = vmatpush1.msra.mxu0 0.0
        %382 = vmatprep.subr.mxu0 0.0
        %383 = vmatpush1.msra.mxu0 0.0
        %384 = vmatprep.subr.mxu0 0.0
        %385 = vmatpush1.msra.mxu0 0.0
        %386 = vmatprep.subr.mxu0 0.0
        %387 = vmatpush1.msra.mxu0 0.0
        %388 = vmatprep.subr.mxu0 0.0
        %389 = vmatpush1.msra.mxu0 0.0
        %390 = vmatprep.mubr.f32.mxu0 0.0
        %391 = vmatmul.mubr.f32.gmra.mrb[0].mxu0 %v321
        %v392 = vpop.f32.mrb[0].mxu0
        %v393 = vadd.f32 %v317, %v392
        %v394 = vpop.f32.mrb[0].mxu0
        %395 = vmatprep.mubr.f32.mxu0 0.0
        %396 = vmatmul.mubr.f32.gmra.mrb[0].mxu0 %v324
        %v397 = vpop.f32.mrb[0].mxu0
        %v398 = vadd.f32 %v317, %v397
        %v399 = vpop.f32.mrb[0].mxu0
        %400 = vdwg.mxu0
        %v401 = vld [vmem:[%s4] sm:$0x1]
        %v403 = vlaneseq
        %v404 = vshrl.u32 %v403, 7
        %v405 = vsub.s32 0, %v404
        %v406 = vrot.slane %v401, %v405
        %408 = vmatprep.subr.mxu0 0.0
        %409 = vmatpush1.msra.mxu0 %v304
        %410 = vmatprep.subr.mxu0 0.0
        %411 = vmatpush1.msra.mxu0 %v305
        %412 = vmatprep.subr.mxu0 0.0
        %413 = vmatpush1.msra.mxu0 %v306
        %414 = vmatprep.subr.mxu0 0.0
        %415 = vmatpush1.msra.mxu0 %v307
        %416 = vmatprep.subr.mxu0 0.0
        %417 = vmatpush1.msra.mxu0 %v308
        %418 = vmatprep.subr.mxu0 0.0
        %419 = vmatpush1.msra.mxu0 %v309
        %420 = vmatprep.subr.mxu0 0.0
        %421 = vmatpush1.msra.mxu0 %v310
        %422 = vmatprep.subr.mxu0 0.0
        %423 = vmatpush1.msra.mxu0 %v311
        %424 = vmatprep.subr.mxu0 0.0
        %425 = vmatpush1.msra.mxu0 0.0
        %426 = vmatprep.subr.mxu0 0.0
        %427 = vmatpush1.msra.mxu0 0.0
        %428 = vmatprep.subr.mxu0 0.0
        %429 = vmatpush1.msra.mxu0 0.0
        %430 = vmatprep.subr.mxu0 0.0
        %431 = vmatpush1.msra.mxu0 0.0
        %432 = vmatprep.subr.mxu0 0.0
        %433 = vmatpush1.msra.mxu0 0.0
        %434 = vmatprep.subr.mxu0 0.0
        %435 = vmatpush1.msra.mxu0 0.0
        %436 = vmatprep.subr.mxu0 0.0
        %437 = vmatpush1.msra.mxu0 0.0
        %438 = vmatprep.subr.mxu0 0.0
        %439 = vmatpush1.msra.mxu0 0.0
        %440 = vmatprep.subr.mxu0 0.0
        %441 = vmatpush1.msra.mxu0 0.0
        %442 = vmatprep.subr.mxu0 0.0
        %443 = vmatpush1.msra.mxu0 0.0
        %444 = vmatprep.subr.mxu0 0.0
        %445 = vmatpush1.msra.mxu0 0.0
        %446 = vmatprep.subr.mxu0 0.0
        %447 = vmatpush1.msra.mxu0 0.0
        %448 = vmatprep.subr.mxu0 0.0
        %449 = vmatpush1.msra.mxu0 0.0
        %450 = vmatprep.subr.mxu0 0.0
        %451 = vmatpush1.msra.mxu0 0.0
        %452 = vmatprep.subr.mxu0 0.0
        %453 = vmatpush1.msra.mxu0 0.0
        %454 = vmatprep.subr.mxu0 0.0
        %455 = vmatpush1.msra.mxu0 0.0
        %456 = vmatprep.subr.mxu0 0.0
        %457 = vmatpush1.msra.mxu0 0.0
        %458 = vmatprep.subr.mxu0 0.0
        %459 = vmatpush1.msra.mxu0 0.0
        %460 = vmatprep.subr.mxu0 0.0
        %461 = vmatpush1.msra.mxu0 0.0
        %462 = vmatprep.subr.mxu0 0.0
        %463 = vmatpush1.msra.mxu0 0.0
        %464 = vmatprep.subr.mxu0 0.0
        %465 = vmatpush1.msra.mxu0 0.0
        %466 = vmatprep.subr.mxu0 0.0
        %467 = vmatpush1.msra.mxu0 0.0
        %468 = vmatprep.subr.mxu0 0.0
        %469 = vmatpush1.msra.mxu0 0.0
        %470 = vmatprep.subr.mxu0 0.0
        %471 = vmatpush1.msra.mxu0 0.0
        %472 = vmatprep.mubr.f32.mxu0 0.0
        %473 = vmatmul.mubr.f32.gmra.mrb[0].mxu0 %v321
        %v474 = vpop.f32.mrb[0].mxu0
        %v475 = vadd.f32 %v406, %v474
        %v476 = vpop.f32.mrb[0].mxu0
        %477 = vmatprep.mubr.f32.mxu0 0.0
        %478 = vmatmul.mubr.f32.gmra.mrb[0].mxu0 %v324
        %v479 = vpop.f32.mrb[0].mxu0
        %v480 = vadd.f32 %v406, %v479
        %v481 = vpop.f32.mrb[0].mxu0
        %482 = vdwg.mxu0
        %483 = vst.msk [vmem:[%s275] sm:$0xff] %vm319, %v393
        %484 = vst.msk [vmem:[%s275 + $0x8] sm:$0xff] %vm319, %v398
        %485 = vxpose.xlu0.b32.start [1/16] %v475, 128
        %486 = vxpose.xlu0.b32.cont [2/16] %v480, 128
        %487 = vxpose.xlu0.b32.cont [3/16] 0.0, 128
        %488 = vxpose.xlu0.b32.cont [4/16] 0.0, 128
        %489 = vxpose.xlu0.b32.cont [5/16] 0.0, 128
        %490 = vxpose.xlu0.b32.cont [6/16] 0.0, 128
        %491 = vxpose.xlu0.b32.cont [7/16] 0.0, 128
        %492 = vxpose.xlu0.b32.cont [8/16] 0.0, 128
        %493 = vxpose.xlu0.b32.cont [9/16] 0.0, 128
        %494 = vxpose.xlu0.b32.cont [10/16] 0.0, 128
        %495 = vxpose.xlu0.b32.cont [11/16] 0.0, 128
        %496 = vxpose.xlu0.b32.cont [12/16] 0.0, 128
        %497 = vxpose.xlu0.b32.cont [13/16] 0.0, 128
        %498 = vxpose.xlu0.b32.cont [14/16] 0.0, 128
        %499 = vxpose.xlu0.b32.cont [15/16] 0.0, 128
        %500 = vxpose.xlu0.b32.end [16/16] 0.0, 128
        %v501 = vpop.trf.xlu0
        %v502 = vpop.trf.xlu0
        %v503 = vpop.trf.xlu0
        %v504 = vpop.trf.xlu0
        %v505 = vpop.trf.xlu0
        %v506 = vpop.trf.xlu0
        %v507 = vpop.trf.xlu0
        %v508 = vpop.trf.xlu0
        %v509 = vpop.trf.xlu0
        %v510 = vpop.trf.xlu0
        %v511 = vpop.trf.xlu0
        %v512 = vpop.trf.xlu0
        %v513 = vpop.trf.xlu0
        %v514 = vpop.trf.xlu0
        %v515 = vpop.trf.xlu0
        %v516 = vpop.trf.xlu0
        %vm517 = vcmask 130048
        %518 = vst.msk [vmem:[%s282] sm:$0xff] %vm517, %v501
        %519 = vst.msk [vmem:[%s282 + $0x8] sm:$0xff] %vm517, %v502
        %520 = vst.msk [vmem:[%s282 + $0x10] sm:$0xff] %vm517, %v503
        %521 = vst.msk [vmem:[%s282 + $0x18] sm:$0xff] %vm517, %v504
        %522 = vst.msk [vmem:[%s282 + $0x20] sm:$0xff] %vm517, %v505
        %523 = vst.msk [vmem:[%s282 + $0x28] sm:$0xff] %vm517, %v506
        %524 = vst.msk [vmem:[%s282 + $0x30] sm:$0xff] %vm517, %v507
        %525 = vst.msk [vmem:[%s282 + $0x38] sm:$0xff] %vm517, %v508
        %s526 = sand.u32 %s158, 1
        %s527 = scalar_lea.sflag [#allocation3], %s526
        %s528 = sand.u32 %s158, 1
        %s529 = smul.addr %s528, 16
        %s530 = scalar_lea.vmem [#allocation2], %s529
        %s531 = sand.u32 %s186, 1
        %s532 = scalar_lea.sflag [#allocation5], %s531
        %s533 = sand.u32 %s186, 1
        %s534 = smul.addr %s533, 64
        %s535 = scalar_lea.vmem [#allocation4], %s534
        // Predicated region
        $region41: #{maniqa_forward.28} parent=39 // pred_check
          %p536 = pneg %p168
        $region42: #{maniqa_forward.28} parent=39 // pred_check_branch
          %538 = sbr.rel (%p536) target = $region44
        $region43: #{maniqa_forward.28} parent=39 // pred_region
          %s539 = smul.u32 2, %s29
          %s541 = ssub.s32 256, 256
          %542 = vsyncadd %s527, %s541
          %s543 = smul.addr %s28, 2
          %s544 = sadd.s32 %s539, %s543
          %s545 = smul.addr %s544, 128
          %s546 = scalar_lea.hbm %s5, %s545
          %s547 = sshll.u32 %s530, 4
          %s548 = int_to_ptr.vmem [resolvable:$true] %s547
          %553 = dma.vmem_to_hbm [thread:$0]  %s548, 256, %s546, %s527, 128, 128, 8
        $region44: #{maniqa_forward.28} parent=39 // pred_fallthru
          _
        // Predicated region
        $region45: #{maniqa_forward.28} parent=39 // pred_check
          %p554 = pneg %p196
        $region46: #{maniqa_forward.28} parent=39 // pred_check_branch
          %556 = sbr.rel (%p554) target = $region48
        $region47: #{maniqa_forward.28} parent=39 // pred_region
          %s558 = ssub.s32 1024, 1024
          %559 = vsyncadd %s532, %s558
          %s560 = smul.addr %s28, 8
          %s561 = sadd.s32 %s29, %s560
          %s562 = smul.addr %s561, 128
          %s563 = scalar_lea.hbm %s6, %s562
          %s564 = sshll.u32 %s535, 4
          %s565 = int_to_ptr.vmem [resolvable:$true] %s564
          %570 = dma.vmem_to_hbm [thread:$0]  %s565, 1024, %s563, %s532, 128, 128, 8
        $region48: #{maniqa_forward.28} parent=39 // pred_fallthru
          _
      $region40: #{maniqa_forward.28} parent=5 // pred_fallthru
        _
      %p571 = scmp.le.s32.totalorder 2, %s19
      // Predicated region
      $region49: #{maniqa_forward.28} parent=5 // pred_check
        %p572 = pneg %p571
      $region50: #{maniqa_forward.28} parent=5 // pred_check_branch
        %574 = sbr.rel (%p572) target = $region52
      $region51: #{maniqa_forward.28} parent=5 // pred_region
        %s575 = ssub.s32 %s19, 2
        // Predicated region
        $region53: #{maniqa_forward.28} parent=51 // pred_check
          %p576 = pneg %p174
        $region54: #{maniqa_forward.28} parent=51 // pred_check_branch
          %578 = sbr.rel (%p576) target = $region56
        $region55: #{maniqa_forward.28} parent=51 // pred_region
          %s579 = sand.u32 %s159, 1
          %s580 = scalar_lea.sflag [#allocation3], %s579
          %s581 = sand.u32 %s159, 1
          %s582 = smul.addr %s581, 16
          %s583 = scalar_lea.vmem [#allocation2], %s582
          %584 = dma.done %s580, 256
        $region56: #{maniqa_forward.28} parent=51 // pred_fallthru
          _
        // Predicated region
        $region57: #{maniqa_forward.28} parent=51 // pred_check
          %p585 = pneg %p202
        $region58: #{maniqa_forward.28} parent=51 // pred_check_branch
          %587 = sbr.rel (%p585) target = $region60
        $region59: #{maniqa_forward.28} parent=51 // pred_region
          %s588 = sand.u32 %s187, 1
          %s589 = scalar_lea.sflag [#allocation5], %s588
          %s590 = sand.u32 %s187, 1
          %s591 = smul.addr %s590, 64
          %s592 = scalar_lea.vmem [#allocation4], %s591
          %593 = dma.done %s589, 1024
        $region60: #{maniqa_forward.28} parent=51 // pred_fallthru
          _
      $region52: #{maniqa_forward.28} parent=5 // pred_fallthru
        _
    $region6: #{maniqa_forward.28} parent=1 // loop_footer
      %s23 = sadd.s32 1, %s19
    $region7: #{maniqa_forward.28} parent=1 // loop_footer_branch
      %18 = sbr.rel target = $region3
    $region8: #{maniqa_forward.28} parent=1 // loop_exit
      _
    %594 = vsyncpa [#allocation3], 1
    %s595 = scalar_lea.sflag [#allocation3], 1
    %596 = vsyncpa %s595, 1
    %597 = vsyncpa [#allocation5], 1
    %s598 = scalar_lea.sflag [#allocation5], 1
    %599 = vsyncpa %s598, 1

// kernel: maniqa_forward.29
$region0: #{maniqa_forward.29}
  #allocation0 [shape = 'u32[]', space=smem, size = 0x4, offset = 0x4, fixed_abs, tag = 'smem constant byte address 0x4 - core index']
  #allocation1 [shape = 'u32[144,128]{1,0:T(1,128)}', space=vmem, size = 0x12000, scoped, tag = 'internal scratch']
  %s0 = inlined_call_operand.hbm [shape: f32[2,16,64], index: 0, kind: input, shape index: {}]
  %s1 = inlined_call_operand.hbm [shape: f32[2,16,64], index: 1, kind: input, shape index: {}]
  %s2 = inlined_call_operand.hbm [shape: f32[2,64,16], index: 2, kind: input, shape index: {}]
  %s3 = inlined_call_operand.hbm [shape: f32[2,64,16], index: 3, kind: input, shape index: {}]
  %s4 = inlined_call_operand.hbm [shape: f32[64,64], index: 4, kind: input, shape index: {}]
  %s5 = inlined_call_operand.hbm [shape: f32[1,64], index: 5, kind: input, shape index: {}]
  %s6 = inlined_call_operand.hbm [shape: f32[2,64,16], index: 6, kind: output, shape index: {}]
  %s7 = sld [smem:[#allocation0]]
  $region81: #{maniqa_forward.29} parent=0
    _
  %s9 = ssub.s32 1, %s7
  %s10 = scalar_select 0, %s9, %s7
  $region1: #{maniqa_forward.29} parent=0
    #allocation2 [shape = 'u8[16384]{0}', space=vmem, size = 0x4000, scoped, tag = 'input window, operand 0']
    #allocation3 [shape = 's32[2]{0}', space=sflag, size = 0x8, scoped, tag = 'scoped memory for maniqa_forward.29']
    #allocation4 [shape = 's32[2]{0}', space=sflag, size = 0x8, scoped, tag = 'scoped memory for maniqa_forward.29']
    #allocation5 [shape = 'u8[16384]{0}', space=vmem, size = 0x4000, scoped, tag = 'input window, operand 1']
    #allocation6 [shape = 's32[2]{0}', space=sflag, size = 0x8, scoped, tag = 'scoped memory for maniqa_forward.29']
    #allocation7 [shape = 'u8[65536]{0}', space=vmem, size = 0x10000, scoped, tag = 'input window, operand 2']
    #allocation8 [shape = 'u8[65536]{0}', space=vmem, size = 0x10000, scoped, tag = 'input window, operand 3']
    #allocation9 [shape = 's32[2]{0}', space=sflag, size = 0x8, scoped, tag = 'scoped memory for maniqa_forward.29']
    #allocation10 [shape = 'u8[32768]{0}', space=vmem, size = 0x8000, scoped, tag = 'input window, operand 4, single buffered']
    #allocation11 [shape = 'u8[512]{0}', space=vmem, size = 0x400, scoped, tag = 'input window, operand 5, single buffered']
    #allocation12 [shape = 's32[1]{0}', space=sflag, size = 0x4, scoped, tag = 'scoped memory for maniqa_forward.29']
    #allocation13 [shape = 'u8[65536]{0}', space=vmem, size = 0x10000, scoped, tag = 'output window, operand 0']
    %11 = vsyncpa [#allocation3], 0
    %s12 = scalar_lea.sflag [#allocation3], 1
    %13 = vsyncpa %s12, 0
    %14 = vsyncpa [#allocation6], 0
    %s15 = scalar_lea.sflag [#allocation6], 1
    %16 = vsyncpa %s15, 0
    %17 = vsyncpa [#allocation9], 0
    %s18 = scalar_lea.sflag [#allocation9], 1
    %19 = vsyncpa %s18, 0
    %20 = vsyncpa [#allocation12], 0
    %21 = vsyncpa [#allocation4], 0
    %s22 = scalar_lea.sflag [#allocation4], 1
    %23 = vsyncpa %s22, 0
    loop: start=0, step=1, limit=4
    $region2: #{maniqa_forward.29} parent=1 // loop_pre_header
      _
    $region3: #{maniqa_forward.29} parent=1 // loop_header
      %s25 = sphi 0, %s29
      %p26 = scmp.ge.s32.totalorder %s25, 4
      %s32 = sphi 0, %s44
      %s33 = sphi 0, %s40
      %s34 = sphi 0, %s32
      %s35 = sphi 0, %s33
      %s36 = sphi 0, %s34
      %s37 = sphi 0, %s35
      %s49 = sphi 0, %s51
      %s52 = sphi 0, %s49
      %s53 = sphi 0, %s52
      %s69 = sphi 0, %s53
      %s75 = sphi 0, %s77
      %s78 = sphi 0, %s75
      %s79 = sphi 0, %s78
      %s95 = sphi 0, %s79
      %s101 = sphi 0, %s103
      %s104 = sphi 0, %s101
      %s105 = sphi 0, %s104
      %s121 = sphi 0, %s105
      %s129 = sphi 0, %s131
      %s132 = sphi 0, %s129
      %s133 = sphi 0, %s132
      %s149 = sphi 0, %s133
      %s153 = sphi 0, %s153
      %s155 = sphi 0, %s153
      %s156 = sphi 0, %s155
      %s170 = sphi 0, %s156
      %s174 = sphi 0, %s174
      %s176 = sphi 0, %s174
      %s177 = sphi 0, %s176
      %s191 = sphi 0, %s177
      %s199 = sphi 0, %s201
      %s202 = sphi 0, %s199
      %s203 = sphi 0, %s202
      %s219 = sphi 0, %s203
    $region4: #{maniqa_forward.29} parent=1 // loop_header_branch
      %28 = sbr.rel (%p26) target = $region8
    $region5: #{maniqa_forward.29} parent=1 // loop_body
      %s30 = ssub.s32 %s25, 1
      %s31 = ssub.s32 %s25, 2
      %s38 = sadd.s32 1, %s33
      %p39 = scmp.ge.s32.totalorder %s38, 1
      %s40 = scalar_select %p39, 0, %s38
      %s41 = sadd.s32 1, %s32
      %s42 = scalar_select %p39, %s41, %s32
      %p43 = scmp.ge.s32.totalorder %s42, 2
      %s44 = scalar_select %p43, 0, %s42
      %s45 = ssub.s32 %s32, %s44
      %s46 = ssub.s32 %s33, %s40
      %s47 = sor.u32 %s45, %s46
      %p48 = scmp.eq.s32.totalorder %s47, 0
      %s50 = sadd.s32 %s49, 1
      %s51 = scalar_select %p48, %s49, %s50
      %p54 = pneg %p48
      %p55 = scmp.eq.s32.totalorder %s25, 1
      %p56 = por %p54, %p55
      %p57 = scmp.ne.s32.totalorder %s49, %s52
      %p58 = scmp.eq.s32.totalorder %s25, 0
      %p59 = por %p57, %p58
      %p60 = scmp.ne.s32.totalorder %s49, %s52
      %p61 = scmp.eq.s32.totalorder %s30, 1
      %p62 = por %p60, %p61
      %p63 = scmp.ne.s32.totalorder %s52, %s53
      %p64 = scmp.eq.s32.totalorder %s30, 0
      %p65 = por %p63, %p64
      %p66 = scmp.ne.s32.totalorder %s52, %s53
      %p67 = scmp.eq.s32.totalorder %s31, 1
      %p68 = por %p66, %p67
      %p70 = scmp.ne.s32.totalorder %s53, %s69
      %p71 = scmp.eq.s32.totalorder %s31, 0
      %p72 = por %p70, %p71
      %s73 = ssub.s32 %s32, %s44
      %p74 = scmp.eq.s32.totalorder %s73, 0
      %s76 = sadd.s32 %s75, 1
      %s77 = scalar_select %p74, %s75, %s76
      %p80 = pneg %p74
      %p81 = scmp.eq.s32.totalorder %s25, 1
      %p82 = por %p80, %p81
      %p83 = scmp.ne.s32.totalorder %s75, %s78
      %p84 = scmp.eq.s32.totalorder %s25, 0
      %p85 = por %p83, %p84
      %p86 = scmp.ne.s32.totalorder %s75, %s78
      %p87 = scmp.eq.s32.totalorder %s30, 1
      %p88 = por %p86, %p87
      %p89 = scmp.ne.s32.totalorder %s78, %s79
      %p90 = scmp.eq.s32.totalorder %s30, 0
      %p91 = por %p89, %p90
      %p92 = scmp.ne.s32.totalorder %s78, %s79
      %p93 = scmp.eq.s32.totalorder %s31, 1
      %p94 = por %p92, %p93
      %p96 = scmp.ne.s32.totalorder %s79, %s95
      %p97 = scmp.eq.s32.totalorder %s31, 0
      %p98 = por %p96, %p97
      %s99 = ssub.s32 %s32, %s44
      %p100 = scmp.eq.s32.totalorder %s99, 0
      %s102 = sadd.s32 %s101, 1
      %s103 = scalar_select %p100, %s101, %s102
      %p106 = pneg %p100
      %p107 = scmp.eq.s32.totalorder %s25, 1
      %p108 = por %p106, %p107
      %p109 = scmp.ne.s32.totalorder %s101, %s104
      %p110 = scmp.eq.s32.totalorder %s25, 0
      %p111 = por %p109, %p110
      %p112 = scmp.ne.s32.totalorder %s101, %s104
      %p113 = scmp.eq.s32.totalorder %s30, 1
      %p114 = por %p112, %p113
      %p115 = scmp.ne.s32.totalorder %s104, %s105
      %p116 = scmp.eq.s32.totalorder %s30, 0
      %p117 = por %p115, %p116
      %p118 = scmp.ne.s32.totalorder %s104, %s105
      %p119 = scmp.eq.s32.totalorder %s31, 1
      %p120 = por %p118, %p119
      %p122 = scmp.ne.s32.totalorder %s105, %s121
      %p123 = scmp.eq.s32.totalorder %s31, 0
      %p124 = por %p122, %p123
      %s125 = ssub.s32 %s32, %s44
      %s126 = ssub.s32 %s33, %s40
      %s127 = sor.u32 %s125, %s126
      %p128 = scmp.eq.s32.totalorder %s127, 0
      %s130 = sadd.s32 %s129, 1
      %s131 = scalar_select %p128, %s129, %s130
      %p134 = pneg %p128
      %p135 = scmp.eq.s32.totalorder %s25, 1
      %p136 = por %p134, %p135
      %p137 = scmp.ne.s32.totalorder %s129, %s132
      %p138 = scmp.eq.s32.totalorder %s25, 0
      %p139 = por %p137, %p138
      %p140 = scmp.ne.s32.totalorder %s129, %s132
      %p141 = scmp.eq.s32.totalorder %s30, 1
      %p142 = por %p140, %p141
      %p143 = scmp.ne.s32.totalorder %s132, %s133
      %p144 = scmp.eq.s32.totalorder %s30, 0
      %p145 = por %p143, %p144
      %p146 = scmp.ne.s32.totalorder %s132, %s133
      %p147 = scmp.eq.s32.totalorder %s31, 1
      %p148 = por %p146, %p147
      %p150 = scmp.ne.s32.totalorder %s133, %s149
      %p151 = scmp.eq.s32.totalorder %s31, 0
      %p152 = por %p150, %p151
      %s154 = sadd.s32 %s153, 1
      %p157 = scmp.eq.s32.totalorder %s25, 1
      %p158 = scmp.ne.s32.totalorder %s153, %s155
      %p159 = scmp.eq.s32.totalorder %s25, 0
      %p160 = por %p158, %p159
      %p161 = scmp.ne.s32.totalorder %s153, %s155
      %p162 = scmp.eq.s32.totalorder %s30, 1
      %p163 = por %p161, %p162
      %p164 = scmp.ne.s32.totalorder %s155, %s156
      %p165 = scmp.eq.s32.totalorder %s30, 0
      %p166 = por %p164, %p165
      %p167 = scmp.ne.s32.totalorder %s155, %s156
      %p168 = scmp.eq.s32.totalorder %s31, 1
      %p169 = por %p167, %p168
      %p171 = scmp.ne.s32.totalorder %s156, %s170
      %p172 = scmp.eq.s32.totalorder %s31, 0
      %p173 = por %p171, %p172
      %s175 = sadd.s32 %s174, 1
      %p178 = scmp.eq.s32.totalorder %s25, 1
      %p179 = scmp.ne.s32.totalorder %s174, %s176
      %p180 = scmp.eq.s32.totalorder %s25, 0
      %p181 = por %p179, %p180
      %p182 = scmp.ne.s32.totalorder %s174, %s176
      %p183 = scmp.eq.s32.totalorder %s30, 1
      %p184 = por %p182, %p183
      %p185 = scmp.ne.s32.totalorder %s176, %s177
      %p186 = scmp.eq.s32.totalorder %s30, 0
      %p187 = por %p185, %p186
      %p188 = scmp.ne.s32.totalorder %s176, %s177
      %p189 = scmp.eq.s32.totalorder %s31, 1
      %p190 = por %p188, %p189
      %p192 = scmp.ne.s32.totalorder %s177, %s191
      %p193 = scmp.eq.s32.totalorder %s31, 0
      %p194 = por %p192, %p193
      %s195 = ssub.s32 %s32, %s44
      %s196 = ssub.s32 %s33, %s40
      %s197 = sor.u32 %s195, %s196
      %p198 = scmp.eq.s32.totalorder %s197, 0
      %s200 = sadd.s32 %s199, 1
      %s201 = scalar_select %p198, %s199, %s200
      %p204 = pneg %p198
      %p205 = scmp.eq.s32.totalorder %s25, 1
      %p206 = por %p204, %p205
      %p207 = scmp.ne.s32.totalorder %s199, %s202
      %p208 = scmp.eq.s32.totalorder %s25, 0
      %p209 = por %p207, %p208
      %p210 = scmp.ne.s32.totalorder %s199, %s202
      %p211 = scmp.eq.s32.totalorder %s30, 1
      %p212 = por %p210, %p211
      %p213 = scmp.ne.s32.totalorder %s202, %s203
      %p214 = scmp.eq.s32.totalorder %s30, 0
      %p215 = por %p213, %p214
      %p216 = scmp.ne.s32.totalorder %s202, %s203
      %p217 = scmp.eq.s32.totalorder %s31, 1
      %p218 = por %p216, %p217
      %p220 = scmp.ne.s32.totalorder %s203, %s219
      %p221 = scmp.eq.s32.totalorder %s31, 0
      %p222 = por %p220, %p221
      %p223 = scmp.le.s32.totalorder 1, %s25
      %p224 = scmp.lt.s32.totalorder %s25, 3
      %p225 = pnand %p223, %p224
      %p226 = pneg %p225
      // Predicated region
      $region9: #{maniqa_forward.29} parent=5 // pred_check
        _
      $region10: #{maniqa_forward.29} parent=5 // pred_check_branch
        %228 = sbr.rel (%p225) target = $region12
      $region11: #{maniqa_forward.29} parent=5 // pred_region
        %s229 = ssub.s32 %s25, 1
        // Predicated region
        $region13: #{maniqa_forward.29} parent=11 // pred_check
          %p230 = pneg %p166
        $region14: #{maniqa_forward.29} parent=11 // pred_check_branch
          %232 = sbr.rel (%p230) target = $region16
        $region15: #{maniqa_forward.29} parent=11 // pred_region
          %s234 = ssub.s32 1024, 1024
          %235 = vsyncadd [#allocation9], %s234
          %s236 = sshll.u32 [#allocation10], 4
          %s237 = int_to_ptr.vmem [resolvable:$true] %s236
          %242 = dma.hbm_to_vmem [thread:$0]  %s4, 1024, %s237, [#allocation9], 128, 128, 8
        $region16: #{maniqa_forward.29} parent=11 // pred_fallthru
          _
        // Predicated region
        $region17: #{maniqa_forward.29} parent=11 // pred_check
          %p243 = pneg %p187
        $region18: #{maniqa_forward.29} parent=11 // pred_check_branch
          %245 = sbr.rel (%p243) target = $region20
        $region19: #{maniqa_forward.29} parent=11 // pred_region
          %s247 = ssub.s32 16, 16
          %248 = vsyncadd [#allocation12], %s247
          %s250 = sshll.u32 [#allocation11], 4
          %s251 = int_to_ptr.vmem [resolvable:$true] %s250
          %253 = dma.hbm_to_vmem [thread:$0]  %s5, 16, %s251, [#allocation12]
        $region20: #{maniqa_forward.29} parent=11 // pred_fallthru
          _
      $region12: #{maniqa_forward.29} parent=5 // pred_fallthru
        _
      %p254 = scmp.lt.s32.totalorder %s25, 2
      // Predicated region
      $region21: #{maniqa_forward.29} parent=5 // pred_check
        %p255 = pneg %p254
      $region22: #{maniqa_forward.29} parent=5 // pred_check_branch
        %257 = sbr.rel (%p255) target = $region24
      $region23: #{maniqa_forward.29} parent=5 // pred_region
        // Predicated region
        $region25: #{maniqa_forward.29} parent=23 // pred_check
          %p258 = pneg %p59
        $region26: #{maniqa_forward.29} parent=23 // pred_check_branch
          %260 = sbr.rel (%p258) target = $region28
        $region27: #{maniqa_forward.29} parent=23 // pred_region
          %s261 = sand.u32 %s49, 1
          %s262 = scalar_lea.sflag [#allocation3], %s261
          %s263 = sand.u32 %s49, 1
          %s264 = smul.addr %s263, 16
          %s265 = scalar_lea.vmem [#allocation2], %s264
          %s266 = smul.u32 2, %s33
          %s268 = ssub.s32 256, 256
          %269 = vsyncadd %s262, %s268
          %s270 = smul.addr %s32, 2
          %s271 = sadd.s32 %s266, %s270
          %s272 = smul.addr %s271, 128
          %s273 = scalar_lea.hbm %s0, %s272
          %s274 = sshll.u32 %s265, 4
          %s275 = int_to_ptr.vmem [resolvable:$true] %s274
          %280 = dma.hbm_to_vmem [thread:$0]  %s273, 256, %s275, %s262, 128, 128, 8
        $region28: #{maniqa_forward.29} parent=23 // pred_fallthru
          _
        // Predicated region
        $region29: #{maniqa_forward.29} parent=23 // pred_check
          %p281 = pneg %p85
        $region30: #{maniqa_forward.29} parent=23 // pred_check_branch
          %283 = sbr.rel (%p281) target = $region32
        $region31: #{maniqa_forward.29} parent=23 // pred_region
          %s284 = sand.u32 %s25, 1
          %s285 = scalar_lea.sflag [#allocation6], %s284
          %s286 = sand.u32 %s75, 1
          %s287 = smul.addr %s286, 16
          %s288 = scalar_lea.vmem [#allocation5], %s287
          %s290 = ssub.s32 256, 256
          %291 = vsyncadd %s285, %s290
          %s292 = smul.addr %s32, 2
          %s293 = smul.addr %s292, 128
          %s294 = scalar_lea.hbm %s1, %s293
          %s295 = sshll.u32 %s288, 4
          %s296 = int_to_ptr.vmem [resolvable:$true] %s295
          %301 = dma.hbm_to_vmem [thread:$0]  %s294, 256, %s296, %s285, 128, 128, 8
        $region32: #{maniqa_forward.29} parent=23 // pred_fallthru
          _
        // Predicated region
        $region33: #{maniqa_forward.29} parent=23 // pred_check
          %p302 = pneg %p111
        $region34: #{maniqa_forward.29} parent=23 // pred_check_branch
          %304 = sbr.rel (%p302) target = $region36
        $region35: #{maniqa_forward.29} parent=23 // pred_region
          %s305 = sand.u32 %s25, 1
          %s306 = scalar_lea.sflag [#allocation6], %s305
          %s307 = sand.u32 %s101, 1
          %s308 = smul.addr %s307, 64
          %s309 = scalar_lea.vmem [#allocation7], %s308
          %s311 = ssub.s32 1024, 1024
          %312 = vsyncadd %s306, %s311
          %s313 = smul.addr %s32, 8
          %s314 = smul.addr %s313, 128
          %s315 = scalar_lea.hbm %s2, %s314
          %s316 = sshll.u32 %s309, 4
          %s317 = int_to_ptr.vmem [resolvable:$true] %s316
          %322 = dma.hbm_to_vmem [thread:$0]  %s315, 1024, %s317, %s306, 128, 128, 8
        $region36: #{maniqa_forward.29} parent=23 // pred_fallthru
          _
        // Predicated region
        $region37: #{maniqa_forward.29} parent=23 // pred_check
          %p323 = pneg %p139
        $region38: #{maniqa_forward.29} parent=23 // pred_check_branch
          %325 = sbr.rel (%p323) target = $region40
        $region39: #{maniqa_forward.29} parent=23 // pred_region
          %s326 = sand.u32 %s25, 1
          %s327 = scalar_lea.sflag [#allocation9], %s326
          %s328 = sand.u32 %s129, 1
          %s329 = smul.addr %s328, 64
          %s330 = scalar_lea.vmem [#allocation8], %s329
          %s332 = ssub.s32 1024, 1024
          %333 = vsyncadd %s327, %s332
          %s334 = smul.addr %s32, 8
          %s335 = sadd.s32 %s33, %s334
          %s336 = smul.addr %s335, 128
          %s337 = scalar_lea.hbm %s3, %s336
          %s338 = sshll.u32 %s330, 4
          %s339 = int_to_ptr.vmem [resolvable:$true] %s338
          %344 = dma.hbm_to_vmem [thread:$0]  %s337, 1024, %s339, %s327, 128, 128, 8
        $region40: #{maniqa_forward.29} parent=23 // pred_fallthru
          _
      $region24: #{maniqa_forward.29} parent=5 // pred_fallthru
        _
      %p345 = scmp.le.s32.totalorder 1, %s25
      %p346 = scmp.lt.s32.totalorder %s25, 3
      %p347 = pnand %p345, %p346
      %p348 = pneg %p347
      // Predicated region
      $region41: #{maniqa_forward.29} parent=5 // pred_check
        _
      $region42: #{maniqa_forward.29} parent=5 // pred_check_branch
        %350 = sbr.rel (%p347) target = $region44
      $region43: #{maniqa_forward.29} parent=5 // pred_region
        %s351 = ssub.s32 %s25, 1
        %s352 = sand.u32 %s52, 1
        %s353 = scalar_lea.sflag [#allocation3], %s352
        %s354 = sand.u32 %s52, 1
        %s355 = smul.addr %s354, 16
        %s356 = scalar_lea.vmem [#allocation2], %s355
        // Predicated region
        $region45: #{maniqa_forward.29} parent=43 // pred_check
          %p357 = pneg %p65
        $region46: #{maniqa_forward.29} parent=43 // pred_check_branch
          %359 = sbr.rel (%p357) target = $region48
        $region47: #{maniqa_forward.29} parent=43 // pred_region
          %360 = dma.done %s353, 256
        $region48: #{maniqa_forward.29} parent=43 // pred_fallthru
          _
        %s361 = sand.u32 %s30, 1
        %s362 = scalar_lea.sflag [#allocation6], %s361
        %s363 = sand.u32 %s78, 1
        %s364 = smul.addr %s363, 16
        %s365 = scalar_lea.vmem [#allocation5], %s364
        // Predicated region
        $region49: #{maniqa_forward.29} parent=43 // pred_check
          %p366 = pneg %p91
        $region50: #{maniqa_forward.29} parent=43 // pred_check_branch
          %368 = sbr.rel (%p366) target = $region52
        $region51: #{maniqa_forward.29} parent=43 // pred_region
          %369 = dma.done %s362, 256
        $region52: #{maniqa_forward.29} parent=43 // pred_fallthru
          _
        %s370 = sand.u32 %s30, 1
        %s371 = scalar_lea.sflag [#allocation6], %s370
        %s372 = sand.u32 %s104, 1
        %s373 = smul.addr %s372, 64
        %s374 = scalar_lea.vmem [#allocation7], %s373
        // Predicated region
        $region53: #{maniqa_forward.29} parent=43 // pred_check
          %p375 = pneg %p117
        $region54: #{maniqa_forward.29} parent=43 // pred_check_branch
          %377 = sbr.rel (%p375) target = $region56
        $region55: #{maniqa_forward.29} parent=43 // pred_region
          %378 = dma.done %s371, 1024
        $region56: #{maniqa_forward.29} parent=43 // pred_fallthru
          _
        %s379 = sand.u32 %s30, 1
        %s380 = scalar_lea.sflag [#allocation9], %s379
        %s381 = sand.u32 %s132, 1
        %s382 = smul.addr %s381, 64
        %s383 = scalar_lea.vmem [#allocation8], %s382
        // Predicated region
        $region57: #{maniqa_forward.29} parent=43 // pred_check
          %p384 = pneg %p145
        $region58: #{maniqa_forward.29} parent=43 // pred_check_branch
          %386 = sbr.rel (%p384) target = $region60
        $region59: #{maniqa_forward.29} parent=43 // pred_region
          %387 = dma.done %s380, 1024
        $region60: #{maniqa_forward.29} parent=43 // pred_fallthru
          _
        // Predicated region
        $region61: #{maniqa_forward.29} parent=43 // pred_check
          %p388 = pneg %p166
        $region62: #{maniqa_forward.29} parent=43 // pred_check_branch
          %390 = sbr.rel (%p388) target = $region64
        $region63: #{maniqa_forward.29} parent=43 // pred_region
          %391 = dma.done [#allocation9], 1024
        $region64: #{maniqa_forward.29} parent=43 // pred_fallthru
          _
        // Predicated region
        $region65: #{maniqa_forward.29} parent=43 // pred_check
          %p392 = pneg %p187
        $region66: #{maniqa_forward.29} parent=43 // pred_check_branch
          %394 = sbr.rel (%p392) target = $region68
        $region67: #{maniqa_forward.29} parent=43 // pred_region
          %395 = dma.done [#allocation12], 16
        $region68: #{maniqa_forward.29} parent=43 // pred_fallthru
          _
        %s396 = sand.u32 %s52, 1
        %s397 = scalar_lea.sflag [#allocation3], %s396
        %s398 = sand.u32 %s52, 1
        %s399 = smul.addr %s398, 16
        %s400 = scalar_lea.vmem [#allocation2], %s399
        %p401 = pneg %p65
        %p402 = pneg %p62
        %s403 = sand.u32 %s30, 1
        %s404 = scalar_lea.sflag [#allocation6], %s403
        %s405 = sand.u32 %s78, 1
        %s406 = smul.addr %s405, 16
        %s407 = scalar_lea.vmem [#allocation5], %s406
        %p408 = pneg %p91
        %p409 = pneg %p88
        %s410 = sand.u32 %s30, 1
        %s411 = scalar_lea.sflag [#allocation6], %s410
        %s412 = sand.u32 %s104, 1
        %s413 = smul.addr %s412, 64
        %s414 = scalar_lea.vmem [#allocation7], %s413
        %p415 = pneg %p117
        %p416 = pneg %p114
        %s417 = sand.u32 %s30, 1
        %s418 = scalar_lea.sflag [#allocation9], %s417
        %s419 = sand.u32 %s132, 1
        %s420 = smul.addr %s419, 64
        %s421 = scalar_lea.vmem [#allocation8], %s420
        %p422 = pneg %p145
        %p423 = pneg %p142
        %p424 = pneg %p166
        %p425 = pneg %p163
        %p426 = pneg %p187
        %p427 = pneg %p184
        %p428 = pneg %p215
        %p429 = pneg %p212
        %s430 = sand.u32 %s202, 1
        %s431 = scalar_lea.sflag [#allocation4], %s430
        %s432 = sand.u32 %s202, 1
        %s433 = smul.addr %s432, 64
        %s434 = scalar_lea.vmem [#allocation13], %s433
        %s435 = smul.u32 2, %s35
        %v436 = vld [vmem:[%s356] sm:$0xff]
        %v437 = vld [vmem:[%s356 + $0x8] sm:$0xff]
        %v438 = vld [vmem:[#allocation10] sm:$0xff]
        %v439 = vld [vmem:[#allocation10 + $0x8] sm:$0xff]
        %v440 = vld [vmem:[#allocation10 + $0x10] sm:$0xff]
        %v441 = vld [vmem:[#allocation10 + $0x18] sm:$0xff]
        %v442 = vld [vmem:[#allocation10 + $0x20] sm:$0xff]
        %v443 = vld [vmem:[#allocation10 + $0x28] sm:$0xff]
        %v444 = vld [vmem:[#allocation10 + $0x30] sm:$0xff]
        %v445 = vld [vmem:[#allocation10 + $0x38] sm:$0xff]
        %v446 = vld [vmem:[#allocation11] sm:$0x1]
        %v448 = vlaneseq
        %v449 = vshrl.u32 %v448, 7
        %v450 = vsub.s32 0, %v449
        %v451 = vrot.slane %v446, %v450
        %vm453 = vcmask 523264
        %v455 = vsel %vm453, %v436, 0
        %v458 = vsel %vm453, %v437, 0
        %460 = vmatprep.subr.mxu0 0.0
        %461 = vmatpush1.msra.mxu0 %v438
        %462 = vmatprep.subr.mxu0 0.0
        %463 = vmatpush1.msra.mxu0 %v439
        %464 = vmatprep.subr.mxu0 0.0
        %465 = vmatpush1.msra.mxu0 %v440
        %466 = vmatprep.subr.mxu0 0.0
        %467 = vmatpush1.msra.mxu0 %v441
        %468 = vmatprep.subr.mxu0 0.0
        %469 = vmatpush1.msra.mxu0 %v442
        %470 = vmatprep.subr.mxu0 0.0
        %471 = vmatpush1.msra.mxu0 %v443
        %472 = vmatprep.subr.mxu0 0.0
        %473 = vmatpush1.msra.mxu0 %v444
        %474 = vmatprep.subr.mxu0 0.0
        %475 = vmatpush1.msra.mxu0 %v445
        %476 = vmatprep.subr.mxu0 0.0
        %477 = vmatpush1.msra.mxu0 0.0
        %478 = vmatprep.subr.mxu0 0.0
        %479 = vmatpush1.msra.mxu0 0.0
        %480 = vmatprep.subr.mxu0 0.0
        %481 = vmatpush1.msra.mxu0 0.0
        %482 = vmatprep.subr.mxu0 0.0
        %483 = vmatpush1.msra.mxu0 0.0
        %484 = vmatprep.subr.mxu0 0.0
        %485 = vmatpush1.msra.mxu0 0.0
        %486 = vmatprep.subr.mxu0 0.0
        %487 = vmatpush1.msra.mxu0 0.0
        %488 = vmatprep.subr.mxu0 0.0
        %489 = vmatpush1.msra.mxu0 0.0
        %490 = vmatprep.subr.mxu0 0.0
        %491 = vmatpush1.msra.mxu0 0.0
        %492 = vmatprep.subr.mxu0 0.0
        %493 = vmatpush1.msra.mxu0 0.0
        %494 = vmatprep.subr.mxu0 0.0
        %495 = vmatpush1.msra.mxu0 0.0
        %496 = vmatprep.subr.mxu0 0.0
        %497 = vmatpush1.msra.mxu0 0.0
        %498 = vmatprep.subr.mxu0 0.0
        %499 = vmatpush1.msra.mxu0 0.0
        %500 = vmatprep.subr.mxu0 0.0
        %501 = vmatpush1.msra.mxu0 0.0
        %502 = vmatprep.subr.mxu0 0.0
        %503 = vmatpush1.msra.mxu0 0.0
        %504 = vmatprep.subr.mxu0 0.0
        %505 = vmatpush1.msra.mxu0 0.0
        %506 = vmatprep.subr.mxu0 0.0
        %507 = vmatpush1.msra.mxu0 0.0
        %508 = vmatprep.subr.mxu0 0.0
        %509 = vmatpush1.msra.mxu0 0.0
        %510 = vmatprep.subr.mxu0 0.0
        %511 = vmatpush1.msra.mxu0 0.0
        %512 = vmatprep.subr.mxu0 0.0
        %513 = vmatpush1.msra.mxu0 0.0
        %514 = vmatprep.subr.mxu0 0.0
        %515 = vmatpush1.msra.mxu0 0.0
        %516 = vmatprep.subr.mxu0 0.0
        %517 = vmatpush1.msra.mxu0 0.0
        %518 = vmatprep.subr.mxu0 0.0
        %519 = vmatpush1.msra.mxu0 0.0
        %520 = vmatprep.subr.mxu0 0.0
        %521 = vmatpush1.msra.mxu0 0.0
        %522 = vmatprep.subr.mxu0 0.0
        %523 = vmatpush1.msra.mxu0 0.0
        %524 = vmatprep.mubr.f32.mxu0 0.0
        %525 = vmatmul.mubr.f32.gmra.mrb[0].mxu0 %v455
        %v526 = vpop.f32.mrb[0].mxu0
        %v527 = vadd.f32 %v451, %v526
        %v528 = vpop.f32.mrb[0].mxu0
        %529 = vmatprep.mubr.f32.mxu0 0.0
        %530 = vmatmul.mubr.f32.gmra.mrb[0].mxu0 %v458
        %v531 = vpop.f32.mrb[0].mxu0
        %v532 = vadd.f32 %v451, %v531
        %v533 = vpop.f32.mrb[0].mxu0
        %534 = vdwg.mxu0
        %v535 = vld [vmem:[%s365] sm:$0xff]
        %v536 = vld [vmem:[%s365 + $0x8] sm:$0xff]
        %v538 = vsel %vm453, %v527, 0
        %v541 = vsel %vm453, %v532, 0
        %v544 = vsel %vm453, %v535, 0
        %v547 = vsel %vm453, %v536, 0
        %549 = vmatprep.subr.mxu0 0.0
        %550 = vmatpush1.xpose.msra.mxu0 %v544
        %551 = vmatprep.subr.mxu0 0.0
        %552 = vmatpush1.xpose.msra.mxu0 %v547
        %553 = vmatprep.subr.mxu0 0.0
        %554 = vmatpush1.xpose.msra.mxu0 0.0
        %555 = vmatprep.subr.mxu0 0.0
        %556 = vmatpush1.xpose.msra.mxu0 0.0
        %557 = vmatprep.subr.mxu0 0.0
        %558 = vmatpush1.xpose.msra.mxu0 0.0
        %559 = vmatprep.subr.mxu0 0.0
        %560 = vmatpush1.xpose.msra.mxu0 0.0
        %561 = vmatprep.subr.mxu0 0.0
        %562 = vmatpush1.xpose.msra.mxu0 0.0
        %563 = vmatprep.subr.mxu0 0.0
        %564 = vmatpush1.xpose.msra.mxu0 0.0
        %565 = vmatprep.subr.mxu0 0.0
        %566 = vmatpush1.xpose.msra.mxu0 0.0
        %567 = vmatprep.subr.mxu0 0.0
        %568 = vmatpush1.xpose.msra.mxu0 0.0
        %569 = vmatprep.subr.mxu0 0.0
        %570 = vmatpush1.xpose.msra.mxu0 0.0
        %571 = vmatprep.subr.mxu0 0.0
        %572 = vmatpush1.xpose.msra.mxu0 0.0
        %573 = vmatprep.subr.mxu0 0.0
        %574 = vmatpush1.xpose.msra.mxu0 0.0
        %575 = vmatprep.subr.mxu0 0.0
        %576 = vmatpush1.xpose.msra.mxu0 0.0
        %577 = vmatprep.subr.mxu0 0.0
        %578 = vmatpush1.xpose.msra.mxu0 0.0
        %579 = vmatprep.subr.mxu0 0.0
        %580 = vmatpush1.xpose.msra.mxu0 0.0
        %581 = vmatprep.subr.mxu0 0.0
        %582 = vmatpush1.xpose.msra.mxu0 0.0
        %583 = vmatprep.subr.mxu0 0.0
        %584 = vmatpush1.xpose.msra.mxu0 0.0
        %585 = vmatprep.subr.mxu0 0.0
        %586 = vmatpush1.xpose.msra.mxu0 0.0
        %587 = vmatprep.subr.mxu0 0.0
        %588 = vmatpush1.xpose.msra.mxu0 0.0
        %589 = vmatprep.subr.mxu0 0.0
        %590 = vmatpush1.xpose.msra.mxu0 0.0
        %591 = vmatprep.subr.mxu0 0.0
        %592 = vmatpush1.xpose.msra.mxu0 0.0
        %593 = vmatprep.subr.mxu0 0.0
        %594 = vmatpush1.xpose.msra.mxu0 0.0
        %595 = vmatprep.subr.mxu0 0.0
        %596 = vmatpush1.xpose.msra.mxu0 0.0
        %597 = vmatprep.subr.mxu0 0.0
        %598 = vmatpush1.xpose.msra.mxu0 0.0
        %599 = vmatprep.subr.mxu0 0.0
        %600 = vmatpush1.xpose.msra.mxu0 0.0
        %601 = vmatprep.subr.mxu0 0.0
        %602 = vmatpush1.xpose.msra.mxu0 0.0
        %603 = vmatprep.subr.mxu0 0.0
        %604 = vmatpush1.xpose.msra.mxu0 0.0
        %605 = vmatprep.subr.mxu0 0.0
        %606 = vmatpush1.xpose.msra.mxu0 0.0
        %607 = vmatprep.subr.mxu0 0.0
        %608 = vmatpush1.xpose.msra.mxu0 0.0
        %609 = vmatprep.subr.mxu0 0.0
        %610 = vmatpush1.xpose.msra.mxu0 0.0
        %611 = vmatprep.subr.mxu0 0.0
        %612 = vmatpush1.xpose.msra.mxu0 0.0
        %613 = vmatprep.mubr.f32.mxu0 0.0
        %614 = vmatmul.mubr.f32.gmra.mrb[0].mxu0 %v538
        %v615 = vpop.f32.mrb[0].mxu0
        %v616 = vadd.f32 0.0, %v615
        %v617 = vpop.f32.mrb[0].mxu0
        %618 = vmatprep.mubr.f32.mxu0 0.0
        %619 = vmatmul.mubr.f32.gmra.mrb[0].mxu0 %v541
        %v620 = vpop.f32.mrb[0].mxu0
        %v621 = vadd.f32 0.0, %v620
        %v622 = vpop.f32.mrb[0].mxu0
        %623 = vdwg.mxu0
        %v624 = vmul.f32 %v616, 0.125
        %v625 = vmul.f32 %v621, 0.125
        %vm626 = vcmask 130048
        %v627 = vsel %vm626, %v624, -inf
        %628 = vmax.xlane.f32.xlu0 %v627
        %v629 = vpop.xlane.xlu0 %628
        %v630 = vsel %vm626, %v625, -inf
        %631 = vmax.xlane.f32.xlu0 %v630
        %v632 = vpop.xlane.xlu0 %631
        %v633 = vsub.f32 %v624, %v629
        %v634 = vsub.f32 %v625, %v632
        %v635 = vmul.f32 %v633, 1.442695
        %v636 = vpow.pop %v635
        %v637 = vmul.f32 %v634, 1.442695
        %v638 = vpow.pop %v637
        %v639 = vsel %vm626, %v636, 0.0
        %640 = vadd.xlane.f32.xlu0 %v639
        %v641 = vpop.xlane.xlu0 %640
        %v642 = vsel %vm626, %v638, 0.0
        %643 = vadd.xlane.f32.xlu0 %v642
        %v644 = vpop.xlane.xlu0 %643
        %v645 = vrcp.pop %v641
        %v646 = vmul.f32 %v636, %v645
        %v647 = vrcp.pop %v644
        %v648 = vmul.f32 %v638, %v647
        %v649 = vld [vmem:[%s374] sm:$0xff]
        %v650 = vld [vmem:[%s374 + $0x8] sm:$0xff]
        %v651 = vld [vmem:[%s374 + $0x10] sm:$0xff]
        %v652 = vld [vmem:[%s374 + $0x18] sm:$0xff]
        %v653 = vld [vmem:[%s374 + $0x20] sm:$0xff]
        %v654 = vld [vmem:[%s374 + $0x28] sm:$0xff]
        %v655 = vld [vmem:[%s374 + $0x30] sm:$0xff]
        %v656 = vld [vmem:[%s374 + $0x38] sm:$0xff]
        %v657 = vld [vmem:[%s383] sm:$0xff]
        %v658 = vld [vmem:[%s383 + $0x8] sm:$0xff]
        %v659 = vld [vmem:[%s383 + $0x10] sm:$0xff]
        %v660 = vld [vmem:[%s383 + $0x18] sm:$0xff]
        %v661 = vld [vmem:[%s383 + $0x20] sm:$0xff]
        %v662 = vld [vmem:[%s383 + $0x28] sm:$0xff]
        %v663 = vld [vmem:[%s383 + $0x30] sm:$0xff]
        %v664 = vld [vmem:[%s383 + $0x38] sm:$0xff]
        %v666 = vsel %vm626, %v649, 0
        %v669 = vsel %vm626, %v650, 0
        %v672 = vsel %vm626, %v651, 0
        %v675 = vsel %vm626, %v652, 0
        %v678 = vsel %vm626, %v653, 0
        %v681 = vsel %vm626, %v654, 0
        %v684 = vsel %vm626, %v655, 0
        %v687 = vsel %vm626, %v656, 0
        %v690 = vsel %vm626, %v646, 0
        %v693 = vsel %vm626, %v648, 0
        %695 = vmatprep.subr.mxu0 0.0
        %696 = vmatpush1.xpose.msra.mxu0 %v690
        %697 = vmatprep.subr.mxu0 0.0
        %698 = vmatpush1.xpose.msra.mxu0 %v693
        %699 = vmatprep.subr.mxu0 0.0
        %700 = vmatpush1.xpose.msra.mxu0 0.0
        %701 = vmatprep.subr.mxu0 0.0
        %702 = vmatpush1.xpose.msra.mxu0 0.0
        %703 = vmatprep.subr.mxu0 0.0
        %704 = vmatpush1.xpose.msra.mxu0 0.0
        %705 = vmatprep.subr.mxu0 0.0
        %706 = vmatpush1.xpose.msra.mxu0 0.0
        %707 = vmatprep.subr.mxu0 0.0
        %708 = vmatpush1.xpose.msra.mxu0 0.0
        %709 = vmatprep.subr.mxu0 0.0
        %710 = vmatpush1.xpose.msra.mxu0 0.0
        %711 = vmatprep.subr.mxu0 0.0
        %712 = vmatpush1.xpose.msra.mxu0 0.0
        %713 = vmatprep.subr.mxu0 0.0
        %714 = vmatpush1.xpose.msra.mxu0 0.0
        %715 = vmatprep.subr.mxu0 0.0
        %716 = vmatpush1.xpose.msra.mxu0 0.0
        %717 = vmatprep.subr.mxu0 0.0
        %718 = vmatpush1.xpose.msra.mxu0 0.0
        %719 = vmatprep.subr.mxu0 0.0
        %720 = vmatpush1.xpose.msra.mxu0 0.0
        %721 = vmatprep.subr.mxu0 0.0
        %722 = vmatpush1.xpose.msra.mxu0 0.0
        %723 = vmatprep.subr.mxu0 0.0
        %724 = vmatpush1.xpose.msra.mxu0 0.0
        %725 = vmatprep.subr.mxu0 0.0
        %726 = vmatpush1.xpose.msra.mxu0 0.0
        %727 = vmatprep.subr.mxu0 0.0
        %728 = vmatpush1.xpose.msra.mxu0 0.0
        %729 = vmatprep.subr.mxu0 0.0
        %730 = vmatpush1.xpose.msra.mxu0 0.0
        %731 = vmatprep.subr.mxu0 0.0
        %732 = vmatpush1.xpose.msra.mxu0 0.0
        %733 = vmatprep.subr.mxu0 0.0
        %734 = vmatpush1.xpose.msra.mxu0 0.0
        %735 = vmatprep.subr.mxu0 0.0
        %736 = vmatpush1.xpose.msra.mxu0 0.0
        %737 = vmatprep.subr.mxu0 0.0
        %738 = vmatpush1.xpose.msra.mxu0 0.0
        %739 = vmatprep.subr.mxu0 0.0
        %740 = vmatpush1.xpose.msra.mxu0 0.0
        %741 = vmatprep.subr.mxu0 0.0
        %742 = vmatpush1.xpose.msra.mxu0 0.0
        %743 = vmatprep.subr.mxu0 0.0
        %744 = vmatpush1.xpose.msra.mxu0 0.0
        %745 = vmatprep.subr.mxu0 0.0
        %746 = vmatpush1.xpose.msra.mxu0 0.0
        %747 = vmatprep.subr.mxu0 0.0
        %748 = vmatpush1.xpose.msra.mxu0 0.0
        %749 = vmatprep.subr.mxu0 0.0
        %750 = vmatpush1.xpose.msra.mxu0 0.0
        %751 = vmatprep.subr.mxu0 0.0
        %752 = vmatpush1.xpose.msra.mxu0 0.0
        %753 = vmatprep.subr.mxu0 0.0
        %754 = vmatpush1.xpose.msra.mxu0 0.0
        %755 = vmatprep.subr.mxu0 0.0
        %756 = vmatpush1.xpose.msra.mxu0 0.0
        %757 = vmatprep.subr.mxu0 0.0
        %758 = vmatpush1.xpose.msra.mxu0 0.0
        %759 = vmatprep.mubr.f32.mxu0 0.0
        %760 = vmatmul.mubr.f32.gmra.mrb[0].mxu0 %v666
        %v761 = vpop.f32.mrb[0].mxu0
        %v762 = vadd.f32 %v657, %v761
        %v763 = vpop.f32.mrb[0].mxu0
        %764 = vmatprep.mubr.f32.mxu0 0.0
        %765 = vmatmul.mubr.f32.gmra.mrb[0].mxu0 %v669
        %v766 = vpop.f32.mrb[0].mxu0
        %v767 = vadd.f32 %v658, %v766
        %v768 = vpop.f32.mrb[0].mxu0
        %769 = vmatprep.mubr.f32.mxu0 0.0
        %770 = vmatmul.mubr.f32.gmra.mrb[0].mxu0 %v672
        %v771 = vpop.f32.mrb[0].mxu0
        %v772 = vadd.f32 %v659, %v771
        %v773 = vpop.f32.mrb[0].mxu0
        %774 = vmatprep.mubr.f32.mxu0 0.0
        %775 = vmatmul.mubr.f32.gmra.mrb[0].mxu0 %v675
        %v776 = vpop.f32.mrb[0].mxu0
        %v777 = vadd.f32 %v660, %v776
        %v778 = vpop.f32.mrb[0].mxu0
        %779 = vmatprep.mubr.f32.mxu0 0.0
        %780 = vmatmul.mubr.f32.gmra.mrb[0].mxu0 %v678
        %v781 = vpop.f32.mrb[0].mxu0
        %v782 = vadd.f32 %v661, %v781
        %v783 = vpop.f32.mrb[0].mxu0
        %784 = vmatprep.mubr.f32.mxu0 0.0
        %785 = vmatmul.mubr.f32.gmra.mrb[0].mxu0 %v681
        %v786 = vpop.f32.mrb[0].mxu0
        %v787 = vadd.f32 %v662, %v786
        %v788 = vpop.f32.mrb[0].mxu0
        %789 = vmatprep.mubr.f32.mxu0 0.0
        %790 = vmatmul.mubr.f32.gmra.mrb[0].mxu0 %v684
        %v791 = vpop.f32.mrb[0].mxu0
        %v792 = vadd.f32 %v663, %v791
        %v793 = vpop.f32.mrb[0].mxu0
        %794 = vmatprep.mubr.f32.mxu0 0.0
        %795 = vmatmul.mubr.f32.gmra.mrb[0].mxu0 %v687
        %v796 = vpop.f32.mrb[0].mxu0
        %v797 = vadd.f32 %v664, %v796
        %v798 = vpop.f32.mrb[0].mxu0
        %799 = vdwg.mxu0
        %800 = vst.msk [vmem:[%s434] sm:$0xff] %vm626, %v762
        %801 = vst.msk [vmem:[%s434 + $0x8] sm:$0xff] %vm626, %v767
        %802 = vst.msk [vmem:[%s434 + $0x10] sm:$0xff] %vm626, %v772
        %803 = vst.msk [vmem:[%s434 + $0x18] sm:$0xff] %vm626, %v777
        %804 = vst.msk [vmem:[%s434 + $0x20] sm:$0xff] %vm626, %v782
        %805 = vst.msk [vmem:[%s434 + $0x28] sm:$0xff] %vm626, %v787
        %806 = vst.msk [vmem:[%s434 + $0x30] sm:$0xff] %vm626, %v792
        %807 = vst.msk [vmem:[%s434 + $0x38] sm:$0xff] %vm626, %v797
        %s808 = sand.u32 %s202, 1
        %s809 = scalar_lea.sflag [#allocation4], %s808
        %s810 = sand.u32 %s202, 1
        %s811 = smul.addr %s810, 64
        %s812 = scalar_lea.vmem [#allocation13], %s811
        // Predicated region
        $region69: #{maniqa_forward.29} parent=43 // pred_check
          %p813 = pneg %p212
        $region70: #{maniqa_forward.29} parent=43 // pred_check_branch
          %815 = sbr.rel (%p813) target = $region72
        $region71: #{maniqa_forward.29} parent=43 // pred_region
          %s817 = ssub.s32 1024, 1024
          %818 = vsyncadd %s809, %s817
          %s819 = smul.addr %s34, 8
          %s820 = sadd.s32 %s35, %s819
          %s821 = smul.addr %s820, 128
          %s822 = scalar_lea.hbm %s6, %s821
          %s823 = sshll.u32 %s812, 4
          %s824 = int_to_ptr.vmem [resolvable:$true] %s823
          %829 = dma.vmem_to_hbm [thread:$0]  %s824, 1024, %s822, %s809, 128, 128, 8
        $region72: #{maniqa_forward.29} parent=43 // pred_fallthru
          _
      $region44: #{maniqa_forward.29} parent=5 // pred_fallthru
        _
      %p830 = scmp.le.s32.totalorder 2, %s25
      // Predicated region
      $region73: #{maniqa_forward.29} parent=5 // pred_check
        %p831 = pneg %p830
      $region74: #{maniqa_forward.29} parent=5 // pred_check_branch
        %833 = sbr.rel (%p831) target = $region76
      $region75: #{maniqa_forward.29} parent=5 // pred_region
        %s834 = ssub.s32 %s25, 2
        // Predicated region
        $region77: #{maniqa_forward.29} parent=75 // pred_check
          %p835 = pneg %p218
        $region78: #{maniqa_forward.29} parent=75 // pred_check_branch
          %837 = sbr.rel (%p835) target = $region80
        $region79: #{maniqa_forward.29} parent=75 // pred_region
          %s838 = sand.u32 %s203, 1
          %s839 = scalar_lea.sflag [#allocation4], %s838
          %s840 = sand.u32 %s203, 1
          %s841 = smul.addr %s840, 64
          %s842 = scalar_lea.vmem [#allocation13], %s841
          %843 = dma.done %s839, 1024
        $region80: #{maniqa_forward.29} parent=75 // pred_fallthru
          _
      $region76: #{maniqa_forward.29} parent=5 // pred_fallthru
        _
    $region6: #{maniqa_forward.29} parent=1 // loop_footer
      %s29 = sadd.s32 1, %s25
    $region7: #{maniqa_forward.29} parent=1 // loop_footer_branch
      %24 = sbr.rel target = $region3
    $region8: #{maniqa_forward.29} parent=1 // loop_exit
      _
    %844 = vsyncpa [#allocation3], 1
    %s845 = scalar_lea.sflag [#allocation3], 1
    %846 = vsyncpa %s845, 1
    %847 = vsyncpa [#allocation6], 1
    %s848 = scalar_lea.sflag [#allocation6], 1
    %849 = vsyncpa %s848, 1
    %850 = vsyncpa [#allocation9], 1
    %s851 = scalar_lea.sflag [#allocation9], 1
    %852 = vsyncpa %s851, 1
    %853 = vsyncpa [#allocation12], 1
    %854 = vsyncpa [#allocation4], 1
    %s855 = scalar_lea.sflag [#allocation4], 1
    %856 = vsyncpa %s855, 1

// kernel: maniqa_forward.32
$region0: #{maniqa_forward.32}
  #allocation0 [shape = 'u32[]', space=smem, size = 0x4, offset = 0x4, fixed_abs, tag = 'smem constant byte address 0x4 - core index']
  #allocation1 [shape = 'u32[144,128]{1,0:T(1,128)}', space=vmem, size = 0x12000, scoped, tag = 'internal scratch']
  %s0 = inlined_call_operand.vmem [shape: f32[2,16,64], index: 0, kind: input, shape index: {}]
  %s1 = inlined_call_operand.vmem [shape: f32[16,16], index: 1, kind: input, shape index: {}]
  %s2 = inlined_call_operand.vmem [shape: f32[16,1], index: 2, kind: input, shape index: {}]
  %s3 = inlined_call_operand.vmem [shape: f32[2,16,64], index: 3, kind: output, shape index: {}]
  %s4 = sld [smem:[#allocation0]]
  $region45: #{maniqa_forward.32} parent=0
    _
  %s6 = ssub.s32 1, %s4
  %s7 = scalar_select 0, %s6, %s4
  loop: start=0, step=1, limit=4
  $region2: #{maniqa_forward.32} parent=0 // loop_pre_header
    _
  $region3: #{maniqa_forward.32} parent=0 // loop_header
    %s9 = sphi 0, %s13
    %p10 = scmp.ge.s32.totalorder %s9, 4
    %s16 = sphi 0, %s28
    %s17 = sphi 0, %s24
    %s18 = sphi 0, %s16
    %s19 = sphi 0, %s17
    %s20 = sphi 0, %s18
    %s21 = sphi 0, %s19
    %s31 = sphi 0, %s33
    %s34 = sphi 0, %s31
    %s35 = sphi 0, %s34
    %s51 = sphi 0, %s35
    %s57 = sphi 0, %s59
    %s60 = sphi 0, %s57
    %s61 = sphi 0, %s60
    %s77 = sphi 0, %s61
    %s83 = sphi 0, %s85
    %s86 = sphi 0, %s83
    %s87 = sphi 0, %s86
    %s103 = sphi 0, %s87
    %s111 = sphi 0, %s113
    %s114 = sphi 0, %s111
    %s115 = sphi 0, %s114
    %s131 = sphi 0, %s115
  $region4: #{maniqa_forward.32} parent=0 // loop_header_branch
    %12 = sbr.rel (%p10) target = $region8
  $region5: #{maniqa_forward.32} parent=0 // loop_body
    %s14 = ssub.s32 %s9, 1
    %s15 = ssub.s32 %s9, 2
    %s22 = sadd.s32 1, %s17
    %p23 = scmp.ge.s32.totalorder %s22, 1
    %s24 = scalar_select %p23, 0, %s22
    %s25 = sadd.s32 1, %s16
    %s26 = scalar_select %p23, %s25, %s16
    %p27 = scmp.ge.s32.totalorder %s26, 2
    %s28 = scalar_select %p27, 0, %s26
    %s29 = ssub.s32 %s16, %s28
    %p30 = scmp.eq.s32.totalorder %s29, 0
    %s32 = sadd.s32 %s31, 1
    %s33 = scalar_select %p30, %s31, %s32
    %p36 = pneg %p30
    %p37 = scmp.eq.s32.totalorder %s9, 1
    %p38 = por %p36, %p37
    %p39 = scmp.ne.s32.totalorder %s31, %s34
    %p40 = scmp.eq.s32.totalorder %s9, 0
    %p41 = por %p39, %p40
    %p42 = scmp.ne.s32.totalorder %s31, %s34
    %p43 = scmp.eq.s32.totalorder %s14, 1
    %p44 = por %p42, %p43
    %p45 = scmp.ne.s32.totalorder %s34, %s35
    %p46 = scmp.eq.s32.totalorder %s14, 0
    %p47 = por %p45, %p46
    %p48 = scmp.ne.s32.totalorder %s34, %s35
    %p49 = scmp.eq.s32.totalorder %s15, 1
    %p50 = por %p48, %p49
    %p52 = scmp.ne.s32.totalorder %s35, %s51
    %p53 = scmp.eq.s32.totalorder %s15, 0
    %p54 = por %p52, %p53
    %s55 = ssub.s32 %s17, %s24
    %p56 = scmp.eq.s32.totalorder %s55, 0
    %s58 = sadd.s32 %s57, 1
    %s59 = scalar_select %p56, %s57, %s58
    %p62 = pneg %p56
    %p63 = scmp.eq.s32.totalorder %s9, 1
    %p64 = por %p62, %p63
    %p65 = scmp.ne.s32.totalorder %s57, %s60
    %p66 = scmp.eq.s32.totalorder %s9, 0
    %p67 = por %p65, %p66
    %p68 = scmp.ne.s32.totalorder %s57, %s60
    %p69 = scmp.eq.s32.totalorder %s14, 1
    %p70 = por %p68, %p69
    %p71 = scmp.ne.s32.totalorder %s60, %s61
    %p72 = scmp.eq.s32.totalorder %s14, 0
    %p73 = por %p71, %p72
    %p74 = scmp.ne.s32.totalorder %s60, %s61
    %p75 = scmp.eq.s32.totalorder %s15, 1
    %p76 = por %p74, %p75
    %p78 = scmp.ne.s32.totalorder %s61, %s77
    %p79 = scmp.eq.s32.totalorder %s15, 0
    %p80 = por %p78, %p79
    %s81 = ssub.s32 %s17, %s24
    %p82 = scmp.eq.s32.totalorder %s81, 0
    %s84 = sadd.s32 %s83, 1
    %s85 = scalar_select %p82, %s83, %s84
    %p88 = pneg %p82
    %p89 = scmp.eq.s32.totalorder %s9, 1
    %p90 = por %p88, %p89
    %p91 = scmp.ne.s32.totalorder %s83, %s86
    %p92 = scmp.eq.s32.totalorder %s9, 0
    %p93 = por %p91, %p92
    %p94 = scmp.ne.s32.totalorder %s83, %s86
    %p95 = scmp.eq.s32.totalorder %s14, 1
    %p96 = por %p94, %p95
    %p97 = scmp.ne.s32.totalorder %s86, %s87
    %p98 = scmp.eq.s32.totalorder %s14, 0
    %p99 = por %p97, %p98
    %p100 = scmp.ne.s32.totalorder %s86, %s87
    %p101 = scmp.eq.s32.totalorder %s15, 1
    %p102 = por %p100, %p101
    %p104 = scmp.ne.s32.totalorder %s87, %s103
    %p105 = scmp.eq.s32.totalorder %s15, 0
    %p106 = por %p104, %p105
    %s107 = ssub.s32 %s16, %s28
    %s108 = ssub.s32 %s17, %s24
    %s109 = sor.u32 %s107, %s108
    %p110 = scmp.eq.s32.totalorder %s109, 0
    %s112 = sadd.s32 %s111, 1
    %s113 = scalar_select %p110, %s111, %s112
    %p116 = pneg %p110
    %p117 = scmp.eq.s32.totalorder %s9, 1
    %p118 = por %p116, %p117
    %p119 = scmp.ne.s32.totalorder %s111, %s114
    %p120 = scmp.eq.s32.totalorder %s9, 0
    %p121 = por %p119, %p120
    %p122 = scmp.ne.s32.totalorder %s111, %s114
    %p123 = scmp.eq.s32.totalorder %s14, 1
    %p124 = por %p122, %p123
    %p125 = scmp.ne.s32.totalorder %s114, %s115
    %p126 = scmp.eq.s32.totalorder %s14, 0
    %p127 = por %p125, %p126
    %p128 = scmp.ne.s32.totalorder %s114, %s115
    %p129 = scmp.eq.s32.totalorder %s15, 1
    %p130 = por %p128, %p129
    %p132 = scmp.ne.s32.totalorder %s115, %s131
    %p133 = scmp.eq.s32.totalorder %s15, 0
    %p134 = por %p132, %p133
    %p135 = scmp.le.s32.totalorder 1, %s9
    %p136 = scmp.lt.s32.totalorder %s9, 3
    %p137 = pnand %p135, %p136
    %p138 = pneg %p137
    // Predicated region
    $region9: #{maniqa_forward.32} parent=5 // pred_check
      _
    $region10: #{maniqa_forward.32} parent=5 // pred_check_branch
      %140 = sbr.rel (%p137) target = $region12
    $region11: #{maniqa_forward.32} parent=5 // pred_region
      %s141 = ssub.s32 %s9, 1
      // Predicated region
      $region13: #{maniqa_forward.32} parent=11 // pred_check
        %p142 = pneg %p73
      $region14: #{maniqa_forward.32} parent=11 // pred_check_branch
        %144 = sbr.rel (%p142) target = $region16
      $region15: #{maniqa_forward.32} parent=11 // pred_region
        %s145 = smul.u32 2, %s19
        %p146 = scmp.lt.s32.totalorder %s145, 1
        %s147 = scalar_select %p146, %s145, 1
        %s148 = smul.addr %s147, 8
        %s149 = scalar_lea.vmem %s1, %s148
        %s150 = smul.u32 2, %s19
      $region16: #{maniqa_forward.32} parent=11 // pred_fallthru
        _
      // Predicated region
      $region17: #{maniqa_forward.32} parent=11 // pred_check
        %p151 = pneg %p99
      $region18: #{maniqa_forward.32} parent=11 // pred_check_branch
        %153 = sbr.rel (%p151) target = $region20
      $region19: #{maniqa_forward.32} parent=11 // pred_region
        %s154 = smul.u32 2, %s19
        %p155 = scmp.lt.s32.totalorder %s154, 1
        %s156 = scalar_select %p155, %s154, 1
        %s157 = smul.addr %s156, 8
        %s158 = scalar_lea.vmem %s2, %s157
        %s159 = smul.u32 2, %s19
      $region20: #{maniqa_forward.32} parent=11 // pred_fallthru
        _
    $region12: #{maniqa_forward.32} parent=5 // pred_fallthru
      _
    %p160 = scmp.lt.s32.totalorder %s9, 2
    // Predicated region
    $region21: #{maniqa_forward.32} parent=5 // pred_check
      %p161 = pneg %p160
    $region22: #{maniqa_forward.32} parent=5 // pred_check_branch
      %163 = sbr.rel (%p161) target = $region24
    $region23: #{maniqa_forward.32} parent=5 // pred_region
      // Predicated region
      $region25: #{maniqa_forward.32} parent=23 // pred_check
        %p164 = pneg %p41
      $region26: #{maniqa_forward.32} parent=23 // pred_check_branch
        %166 = sbr.rel (%p164) target = $region28
      $region27: #{maniqa_forward.32} parent=23 // pred_region
        %p167 = scmp.lt.s32.totalorder %s16, 1
        %s168 = scalar_select %p167, %s16, 1
        %s169 = smul.addr %s168, 2
        %s170 = smul.addr %s169, 8
        %s171 = scalar_lea.vmem %s0, %s170
      $region28: #{maniqa_forward.32} parent=23 // pred_fallthru
        _
    $region24: #{maniqa_forward.32} parent=5 // pred_fallthru
      _
    %p172 = scmp.le.s32.totalorder 1, %s9
    %p173 = scmp.lt.s32.totalorder %s9, 3
    %p174 = pnand %p172, %p173
    %p175 = pneg %p174
    // Predicated region
    $region29: #{maniqa_forward.32} parent=5 // pred_check
      _
    $region30: #{maniqa_forward.32} parent=5 // pred_check_branch
      %177 = sbr.rel (%p174) target = $region32
    $region31: #{maniqa_forward.32} parent=5 // pred_region
      %s178 = ssub.s32 %s9, 1
      %p179 = scmp.lt.s32.totalorder %s18, 1
      %s180 = scalar_select %p179, %s18, 1
      %s181 = smul.addr %s180, 2
      %s182 = smul.addr %s181, 8
      %s183 = scalar_lea.vmem %s0, %s182
      %p184 = pneg %p47
      %p185 = pneg %p44
      %s186 = smul.u32 2, %s19
      %p187 = scmp.lt.s32.totalorder %s186, 1
      %s188 = scalar_select %p187, %s186, 1
      %s189 = smul.addr %s188, 8
      %s190 = scalar_lea.vmem %s1, %s189
      %p191 = pneg %p73
      %p192 = pneg %p70
      %s193 = smul.u32 2, %s19
      %p194 = scmp.lt.s32.totalorder %s193, 1
      %s195 = scalar_select %p194, %s193, 1
      %s196 = smul.addr %s195, 8
      %s197 = scalar_lea.vmem %s2, %s196
      %p198 = pneg %p99
      %p199 = pneg %p96
      %p200 = pneg %p127
      %p201 = pneg %p124
      %s202 = smul.u32 2, %s19
      %p203 = scmp.lt.s32.totalorder %s18, 1
      %s204 = scalar_select %p203, %s18, 1
      %p205 = scmp.lt.s32.totalorder %s202, 1
      %s206 = scalar_select %p205, %s202, 1
      %s207 = smul.addr %s204, 2
      %s208 = sadd.s32 %s206, %s207
      %s209 = smul.addr %s208, 8
      %s210 = scalar_lea.vmem %s3, %s209
      %p211 = scmp.lt.s32.totalorder %s18, 1
      %s212 = scalar_select %p211, %s18, 1
      %s213 = smul.addr %s212, 2
      %s214 = smul.addr %s213, 8
      %s215 = scalar_lea.vmem %s0, %s214
      %s216 = smul.u32 2, %s19
      %p217 = scmp.lt.s32.totalorder %s216, 1
      %s218 = scalar_select %p217, %s216, 1
      %s219 = smul.addr %s218, 8
      %s220 = scalar_lea.vmem %s1, %s219
      %s221 = smul.u32 2, %s19
      %s222 = smul.u32 2, %s19
      %p223 = scmp.lt.s32.totalorder %s222, 1
      %s224 = scalar_select %p223, %s222, 1
      %s225 = smul.addr %s224, 8
      %s226 = scalar_lea.vmem %s2, %s225
      %s227 = smul.u32 2, %s19
      %s228 = smul.u32 2, %s19
      %p229 = scmp.lt.s32.totalorder %s18, 1
      %s230 = scalar_select %p229, %s18, 1
      %p231 = scmp.lt.s32.totalorder %s228, 1
      %s232 = scalar_select %p231, %s228, 1
      %s233 = smul.addr %s230, 2
      %s234 = sadd.s32 %s232, %s233
      %s235 = smul.addr %s234, 8
      %s236 = scalar_lea.vmem %s3, %s235
      %s237 = smul.u32 2, %s19
      %v238 = vld [vmem:[%s215] sm:$0xff]
      %v239 = vld [vmem:[%s215 + $0x8] sm:$0xff]
      %v240 = vld [vmem:[%s220] sm:$0xff]
      %v241 = vld [vmem:[%s220 + $0x8] sm:$0xff]
      %v242 = vld [vmem:[%s226] sm:$0xff]
      %v243 = vld [vmem:[%s226 + $0x8] sm:$0xff]
      %245 = vset.pattern.permute.xlu0 0
      %246 = vperm.xlu0 %245, %v242
      %v247 = vpop.permute.xlu0 %246
      %250 = vset.pattern.permute.xlu0 0
      %251 = vperm.xlu0 %250, %v243
      %v252 = vpop.permute.xlu0 %251
      %vm254 = vcmask 130048
      %v256 = vsel %vm254, %v240, 0
      %v259 = vsel %vm254, %v241, 0
      %261 = vmatprep.subr.mxu0 0.0
      %262 = vmatpush1.msra.mxu0 %v238
      %263 = vmatprep.subr.mxu0 0.0
      %264 = vmatpush1.msra.mxu0 %v239
      %265 = vmatprep.subr.mxu0 0.0
      %266 = vmatpush1.msra.mxu0 0.0
      %267 = vmatprep.subr.mxu0 0.0
      %268 = vmatpush1.msra.mxu0 0.0
      %269 = vmatprep.subr.mxu0 0.0
      %270 = vmatpush1.msra.mxu0 0.0
      %271 = vmatprep.subr.mxu0 0.0
      %272 = vmatpush1.msra.mxu0 0.0
      %273 = vmatprep.subr.mxu0 0.0
      %274 = vmatpush1.msra.mxu0 0.0
      %275 = vmatprep.subr.mxu0 0.0
      %276 = vmatpush1.msra.mxu0 0.0
      %277 = vmatprep.subr.mxu0 0.0
      %278 = vmatpush1.msra.mxu0 0.0
      %279 = vmatprep.subr.mxu0 0.0
      %280 = vmatpush1.msra.mxu0 0.0
      %281 = vmatprep.subr.mxu0 0.0
      %282 = vmatpush1.msra.mxu0 0.0
      %283 = vmatprep.subr.mxu0 0.0
      %284 = vmatpush1.msra.mxu0 0.0
      %285 = vmatprep.subr.mxu0 0.0
      %286 = vmatpush1.msra.mxu0 0.0
      %287 = vmatprep.subr.mxu0 0.0
      %288 = vmatpush1.msra.mxu0 0.0
      %289 = vmatprep.subr.mxu0 0.0
      %290 = vmatpush1.msra.mxu0 0.0
      %291 = vmatprep.subr.mxu0 0.0
      %292 = vmatpush1.msra.mxu0 0.0
      %293 = vmatprep.subr.mxu0 0.0
      %294 = vmatpush1.msra.mxu0 0.0
      %295 = vmatprep.subr.mxu0 0.0
      %296 = vmatpush1.msra.mxu0 0.0
      %297 = vmatprep.subr.mxu0 0.0
      %298 = vmatpush1.msra.mxu0 0.0
      %299 = vmatprep.subr.mxu0 0.0
      %300 = vmatpush1.msra.mxu0 0.0
      %301 = vmatprep.subr.mxu0 0.0
      %302 = vmatpush1.msra.mxu0 0.0
      %303 = vmatprep.subr.mxu0 0.0
      %304 = vmatpush1.msra.mxu0 0.0
      %305 = vmatprep.subr.mxu0 0.0
      %306 = vmatpush1.msra.mxu0 0.0
      %307 = vmatprep.subr.mxu0 0.0
      %308 = vmatpush1.msra.mxu0 0.0
      %309 = vmatprep.subr.mxu0 0.0
      %310 = vmatpush1.msra.mxu0 0.0
      %311 = vmatprep.subr.mxu0 0.0
      %312 = vmatpush1.msra.mxu0 0.0
      %313 = vmatprep.subr.mxu0 0.0
      %314 = vmatpush1.msra.mxu0 0.0
      %315 = vmatprep.subr.mxu0 0.0
      %316 = vmatpush1.msra.mxu0 0.0
      %317 = vmatprep.subr.mxu0 0.0
      %318 = vmatpush1.msra.mxu0 0.0
      %319 = vmatprep.subr.mxu0 0.0
      %320 = vmatpush1.msra.mxu0 0.0
      %321 = vmatprep.subr.mxu0 0.0
      %322 = vmatpush1.msra.mxu0 0.0
      %323 = vmatprep.subr.mxu0 0.0
      %324 = vmatpush1.msra.mxu0 0.0
      %325 = vmatprep.mubr.f32.mxu0 0.0
      %326 = vmatmul.mubr.f32.gmra.mrb[0].mxu0 %v256
      %v327 = vpop.f32.mrb[0].mxu0
      %v328 = vadd.f32 %v247, %v327
      %v329 = vpop.f32.mrb[0].mxu0
      %330 = vmatprep.mubr.f32.mxu0 0.0
      %331 = vmatmul.mubr.f32.gmra.mrb[0].mxu0 %v259
      %v332 = vpop.f32.mrb[0].mxu0
      %v333 = vadd.f32 %v252, %v332
      %v334 = vpop.f32.mrb[0].mxu0
      %335 = vdwg.mxu0
      %vm336 = vcmask 523264
      %337 = vst.msk [vmem:[%s236] sm:$0xff] %vm336, %v328
      %338 = vst.msk [vmem:[%s236 + $0x8] sm:$0xff] %vm336, %v333
      %s339 = smul.u32 2, %s19
      %p340 = scmp.lt.s32.totalorder %s18, 1
      %s341 = scalar_select %p340, %s18, 1
      %p342 = scmp.lt.s32.totalorder %s339, 1
      %s343 = scalar_select %p342, %s339, 1
      %s344 = smul.addr %s341, 2
      %s345 = sadd.s32 %s343, %s344
      %s346 = smul.addr %s345, 8
      %s347 = scalar_lea.vmem %s3, %s346
      // Predicated region
      $region33: #{maniqa_forward.32} parent=31 // pred_check
        %p348 = pneg %p124
      $region34: #{maniqa_forward.32} parent=31 // pred_check_branch
        %350 = sbr.rel (%p348) target = $region36
      $region35: #{maniqa_forward.32} parent=31 // pred_region
        %s351 = smul.u32 2, %s19
      $region36: #{maniqa_forward.32} parent=31 // pred_fallthru
        _
    $region32: #{maniqa_forward.32} parent=5 // pred_fallthru
      _
    %p352 = scmp.le.s32.totalorder 2, %s9
    // Predicated region
    $region37: #{maniqa_forward.32} parent=5 // pred_check
      %p353 = pneg %p352
    $region38: #{maniqa_forward.32} parent=5 // pred_check_branch
      %355 = sbr.rel (%p353) target = $region40
    $region39: #{maniqa_forward.32} parent=5 // pred_region
      %s356 = ssub.s32 %s9, 2
      // Predicated region
      $region41: #{maniqa_forward.32} parent=39 // pred_check
        %p357 = pneg %p130
      $region42: #{maniqa_forward.32} parent=39 // pred_check_branch
        %359 = sbr.rel (%p357) target = $region44
      $region43: #{maniqa_forward.32} parent=39 // pred_region
        %s360 = smul.u32 2, %s21
        %p361 = scmp.lt.s32.totalorder %s20, 1
        %s362 = scalar_select %p361, %s20, 1
        %p363 = scmp.lt.s32.totalorder %s360, 1
        %s364 = scalar_select %p363, %s360, 1
        %s365 = smul.addr %s362, 2
        %s366 = sadd.s32 %s364, %s365
        %s367 = smul.addr %s366, 8
        %s368 = scalar_lea.vmem %s3, %s367
      $region44: #{maniqa_forward.32} parent=39 // pred_fallthru
        _
    $region40: #{maniqa_forward.32} parent=5 // pred_fallthru
      _
  $region6: #{maniqa_forward.32} parent=0 // loop_footer
    %s13 = sadd.s32 1, %s9
  $region7: #{maniqa_forward.32} parent=0 // loop_footer_branch
    %8 = sbr.rel target = $region3
  $region8: #{maniqa_forward.32} parent=0 // loop_exit
    _

// kernel: maniqa_forward.33
$region0: #{maniqa_forward.33}
  #allocation0 [shape = 'u32[]', space=smem, size = 0x4, offset = 0x4, fixed_abs, tag = 'smem constant byte address 0x4 - core index']
  #allocation1 [shape = 'u32[144,128]{1,0:T(1,128)}', space=vmem, size = 0x12000, scoped, tag = 'internal scratch']
  %s0 = inlined_call_operand.vmem [shape: f32[2,128], index: 0, kind: input, shape index: {}]
  %s1 = inlined_call_operand.vmem [shape: f32[128,16], index: 1, kind: input, shape index: {}]
  %s2 = inlined_call_operand.vmem [shape: f32[1,16], index: 2, kind: input, shape index: {}]
  %s3 = inlined_call_operand.vmem [shape: f32[2,16], index: 3, kind: output, shape index: {}]
  %s4 = sld [smem:[#allocation0]]
  $region22: #{maniqa_forward.33} parent=0
    _
  %s6 = ssub.s32 1, %s4
  %s7 = scalar_select 0, %s6, %s4
  // Predicated region
  $region2: #{maniqa_forward.33} parent=0 // pred_check
    _
  $region3: #{maniqa_forward.33} parent=0 // pred_check_branch
    %9 = sbr.rel (0) target = $region5
  $region4: #{maniqa_forward.33} parent=0 // pred_region
    _
  $region5: #{maniqa_forward.33} parent=0 // pred_fallthru
    _
  // Predicated region
  $region6: #{maniqa_forward.33} parent=0 // pred_check
    _
  $region7: #{maniqa_forward.33} parent=0 // pred_check_branch
    %11 = sbr.rel (0) target = $region9
  $region8: #{maniqa_forward.33} parent=0 // pred_region
    _
  $region9: #{maniqa_forward.33} parent=0 // pred_fallthru
    _
  // Predicated region
  $region10: #{maniqa_forward.33} parent=0 // pred_check
    _
  $region11: #{maniqa_forward.33} parent=0 // pred_check_branch
    %13 = sbr.rel (0) target = $region13
  $region12: #{maniqa_forward.33} parent=0 // pred_region
    _
  $region13: #{maniqa_forward.33} parent=0 // pred_fallthru
    _
  %v14 = vld [vmem:[%s0] sm:$0x3]
  %v15 = vld [vmem:[%s1] sm:$0xff]
  %v16 = vld [vmem:[%s1 + $0x8] sm:$0xff]
  %v17 = vld [vmem:[%s1 + $0x10] sm:$0xff]
  %v18 = vld [vmem:[%s1 + $0x18] sm:$0xff]
  %v19 = vld [vmem:[%s1 + $0x20] sm:$0xff]
  %v20 = vld [vmem:[%s1 + $0x28] sm:$0xff]
  %v21 = vld [vmem:[%s1 + $0x30] sm:$0xff]
  %v22 = vld [vmem:[%s1 + $0x38] sm:$0xff]
  %v23 = vld [vmem:[%s1 + $0x40] sm:$0xff]
  %v24 = vld [vmem:[%s1 + $0x48] sm:$0xff]
  %v25 = vld [vmem:[%s1 + $0x50] sm:$0xff]
  %v26 = vld [vmem:[%s1 + $0x58] sm:$0xff]
  %v27 = vld [vmem:[%s1 + $0x60] sm:$0xff]
  %v28 = vld [vmem:[%s1 + $0x68] sm:$0xff]
  %v29 = vld [vmem:[%s1 + $0x70] sm:$0xff]
  %v30 = vld [vmem:[%s1 + $0x78] sm:$0xff]
  %v31 = vld [vmem:[%s2] sm:$0x1]
  %v33 = vlaneseq
  %v34 = vshrl.u32 %v33, 7
  %v35 = vsub.s32 0, %v34
  %v36 = vrot.slane %v31, %v35
  %38 = vmatprep.subr.mxu0 0.0
  %39 = vmatpush1.msra.mxu0 %v15
  %40 = vmatprep.subr.mxu0 0.0
  %41 = vmatpush1.msra.mxu0 %v16
  %42 = vmatprep.subr.mxu0 0.0
  %43 = vmatpush1.msra.mxu0 %v17
  %44 = vmatprep.subr.mxu0 0.0
  %45 = vmatpush1.msra.mxu0 %v18
  %46 = vmatprep.subr.mxu0 0.0
  %47 = vmatpush1.msra.mxu0 %v19
  %48 = vmatprep.subr.mxu0 0.0
  %49 = vmatpush1.msra.mxu0 %v20
  %50 = vmatprep.subr.mxu0 0.0
  %51 = vmatpush1.msra.mxu0 %v21
  %52 = vmatprep.subr.mxu0 0.0
  %53 = vmatpush1.msra.mxu0 %v22
  %54 = vmatprep.subr.mxu0 0.0
  %55 = vmatpush1.msra.mxu0 %v23
  %56 = vmatprep.subr.mxu0 0.0
  %57 = vmatpush1.msra.mxu0 %v24
  %58 = vmatprep.subr.mxu0 0.0
  %59 = vmatpush1.msra.mxu0 %v25
  %60 = vmatprep.subr.mxu0 0.0
  %61 = vmatpush1.msra.mxu0 %v26
  %62 = vmatprep.subr.mxu0 0.0
  %63 = vmatpush1.msra.mxu0 %v27
  %64 = vmatprep.subr.mxu0 0.0
  %65 = vmatpush1.msra.mxu0 %v28
  %66 = vmatprep.subr.mxu0 0.0
  %67 = vmatpush1.msra.mxu0 %v29
  %68 = vmatprep.subr.mxu0 0.0
  %69 = vmatpush1.msra.mxu0 %v30
  %70 = vmatprep.subr.mxu0 0.0
  %71 = vmatpush1.msra.mxu0 0.0
  %72 = vmatprep.subr.mxu0 0.0
  %73 = vmatpush1.msra.mxu0 0.0
  %74 = vmatprep.subr.mxu0 0.0
  %75 = vmatpush1.msra.mxu0 0.0
  %76 = vmatprep.subr.mxu0 0.0
  %77 = vmatpush1.msra.mxu0 0.0
  %78 = vmatprep.subr.mxu0 0.0
  %79 = vmatpush1.msra.mxu0 0.0
  %80 = vmatprep.subr.mxu0 0.0
  %81 = vmatpush1.msra.mxu0 0.0
  %82 = vmatprep.subr.mxu0 0.0
  %83 = vmatpush1.msra.mxu0 0.0
  %84 = vmatprep.subr.mxu0 0.0
  %85 = vmatpush1.msra.mxu0 0.0
  %86 = vmatprep.subr.mxu0 0.0
  %87 = vmatpush1.msra.mxu0 0.0
  %88 = vmatprep.subr.mxu0 0.0
  %89 = vmatpush1.msra.mxu0 0.0
  %90 = vmatprep.subr.mxu0 0.0
  %91 = vmatpush1.msra.mxu0 0.0
  %92 = vmatprep.subr.mxu0 0.0
  %93 = vmatpush1.msra.mxu0 0.0
  %94 = vmatprep.subr.mxu0 0.0
  %95 = vmatpush1.msra.mxu0 0.0
  %96 = vmatprep.subr.mxu0 0.0
  %97 = vmatpush1.msra.mxu0 0.0
  %98 = vmatprep.subr.mxu0 0.0
  %99 = vmatpush1.msra.mxu0 0.0
  %100 = vmatprep.subr.mxu0 0.0
  %101 = vmatpush1.msra.mxu0 0.0
  %102 = vmatprep.mubr.f32.mxu0 0.0
  %103 = vmatmul.mubr.f32.gmra.mrb[0].mxu0 %v14
  %v104 = vpop.f32.mrb[0].mxu0
  %v105 = vadd.f32 %v36, %v104
  %v106 = vpop.f32.mrb[0].mxu0
  %107 = vdwg.mxu0
  %vm108 = vcmask 123904
  %109 = vst.msk [vmem:[%s3] sm:$0x3] %vm108, %v105
  // Predicated region
  $region14: #{maniqa_forward.33} parent=0 // pred_check
    _
  $region15: #{maniqa_forward.33} parent=0 // pred_check_branch
    %111 = sbr.rel (0) target = $region17
  $region16: #{maniqa_forward.33} parent=0 // pred_region
    _
  $region17: #{maniqa_forward.33} parent=0 // pred_fallthru
    _
  // Predicated region
  $region18: #{maniqa_forward.33} parent=0 // pred_check
    _
  $region19: #{maniqa_forward.33} parent=0 // pred_check_branch
    %113 = sbr.rel (0) target = $region21
  $region20: #{maniqa_forward.33} parent=0 // pred_region
    _
  $region21: #{maniqa_forward.33} parent=0 // pred_fallthru
    _

// kernel: maniqa_forward.34
$region0: #{maniqa_forward.34}
  #allocation0 [shape = 'u32[]', space=smem, size = 0x4, offset = 0x4, fixed_abs, tag = 'smem constant byte address 0x4 - core index']
  #allocation1 [shape = 'u32[144,128]{1,0:T(1,128)}', space=vmem, size = 0x12000, scoped, tag = 'internal scratch']
  %s0 = inlined_call_operand.vmem [shape: f32[2,65,16], index: 0, kind: input, shape index: {}]
  %s1 = inlined_call_operand.vmem [shape: f32[16,32], index: 1, kind: input, shape index: {}]
  %s2 = inlined_call_operand.vmem [shape: f32[1,32], index: 2, kind: input, shape index: {}]
  %s3 = inlined_call_operand.vmem [shape: f32[32,2], index: 3, kind: input, shape index: {}]
  %s4 = inlined_call_operand.vmem [shape: f32[1,2], index: 4, kind: input, shape index: {}]
  %s5 = inlined_call_operand.vmem [shape: f32[2,1,1], index: 5, kind: output, shape index: {}]
  %s6 = sld [smem:[#allocation0]]
  $region53: #{maniqa_forward.34} parent=0
    _
  %s8 = ssub.s32 1, %s6
  %s9 = scalar_select 0, %s8, %s6
  loop: start=0, step=1, limit=4
  $region2: #{maniqa_forward.34} parent=0 // loop_pre_header
    _
  $region3: #{maniqa_forward.34} parent=0 // loop_header
    %s11 = sphi 0, %s15
    %p12 = scmp.ge.s32.totalorder %s11, 4
    %s21 = sphi 0, %s23
    %s24 = sphi 0, %s21
    %s25 = sphi 0, %s24
    %s41 = sphi 0, %s25
    %s45 = sphi 0, %s45
    %s47 = sphi 0, %s45
    %s48 = sphi 0, %s47
    %s62 = sphi 0, %s48
    %s66 = sphi 0, %s66
    %s68 = sphi 0, %s66
    %s69 = sphi 0, %s68
    %s83 = sphi 0, %s69
    %s87 = sphi 0, %s87
    %s89 = sphi 0, %s87
    %s90 = sphi 0, %s89
    %s104 = sphi 0, %s90
    %s108 = sphi 0, %s108
    %s110 = sphi 0, %s108
    %s111 = sphi 0, %s110
    %s125 = sphi 0, %s111
    %s131 = sphi 0, %s133
    %s134 = sphi 0, %s131
    %s135 = sphi 0, %s134
    %s151 = sphi 0, %s135
  $region4: #{maniqa_forward.34} parent=0 // loop_header_branch
    %14 = sbr.rel (%p12) target = $region8
  $region5: #{maniqa_forward.34} parent=0 // loop_body
    %s16 = ssub.s32 %s11, 1
    %s17 = ssub.s32 %s11, 2
    %s18 = sadd.s32 %s11, 1
    %s19 = ssub.s32 %s11, %s18
    %p20 = scmp.eq.s32.totalorder %s19, 0
    %s22 = sadd.s32 %s21, 1
    %s23 = scalar_select %p20, %s21, %s22
    %p26 = pneg %p20
    %p27 = scmp.eq.s32.totalorder %s11, 1
    %p28 = por %p26, %p27
    %p29 = scmp.ne.s32.totalorder %s21, %s24
    %p30 = scmp.eq.s32.totalorder %s11, 0
    %p31 = por %p29, %p30
    %p32 = scmp.ne.s32.totalorder %s21, %s24
    %p33 = scmp.eq.s32.totalorder %s16, 1
    %p34 = por %p32, %p33
    %p35 = scmp.ne.s32.totalorder %s24, %s25
    %p36 = scmp.eq.s32.totalorder %s16, 0
    %p37 = por %p35, %p36
    %p38 = scmp.ne.s32.totalorder %s24, %s25
    %p39 = scmp.eq.s32.totalorder %s17, 1
    %p40 = por %p38, %p39
    %p42 = scmp.ne.s32.totalorder %s25, %s41
    %p43 = scmp.eq.s32.totalorder %s17, 0
    %p44 = por %p42, %p43
    %s46 = sadd.s32 %s45, 1
    %p49 = scmp.eq.s32.totalorder %s11, 1
    %p50 = scmp.ne.s32.totalorder %s45, %s47
    %p51 = scmp.eq.s32.totalorder %s11, 0
    %p52 = por %p50, %p51
    %p53 = scmp.ne.s32.totalorder %s45, %s47
    %p54 = scmp.eq.s32.totalorder %s16, 1
    %p55 = por %p53, %p54
    %p56 = scmp.ne.s32.totalorder %s47, %s48
    %p57 = scmp.eq.s32.totalorder %s16, 0
    %p58 = por %p56, %p57
    %p59 = scmp.ne.s32.totalorder %s47, %s48
    %p60 = scmp.eq.s32.totalorder %s17, 1
    %p61 = por %p59, %p60
    %p63 = scmp.ne.s32.totalorder %s48, %s62
    %p64 = scmp.eq.s32.totalorder %s17, 0
    %p65 = por %p63, %p64
    %s67 = sadd.s32 %s66, 1
    %p70 = scmp.eq.s32.totalorder %s11, 1
    %p71 = scmp.ne.s32.totalorder %s66, %s68
    %p72 = scmp.eq.s32.totalorder %s11, 0
    %p73 = por %p71, %p72
    %p74 = scmp.ne.s32.totalorder %s66, %s68
    %p75 = scmp.eq.s32.totalorder %s16, 1
    %p76 = por %p74, %p75
    %p77 = scmp.ne.s32.totalorder %s68, %s69
    %p78 = scmp.eq.s32.totalorder %s16, 0
    %p79 = por %p77, %p78
    %p80 = scmp.ne.s32.totalorder %s68, %s69
    %p81 = scmp.eq.s32.totalorder %s17, 1
    %p82 = por %p80, %p81
    %p84 = scmp.ne.s32.totalorder %s69, %s83
    %p85 = scmp.eq.s32.totalorder %s17, 0
    %p86 = por %p84, %p85
    %s88 = sadd.s32 %s87, 1
    %p91 = scmp.eq.s32.totalorder %s11, 1
    %p92 = scmp.ne.s32.totalorder %s87, %s89
    %p93 = scmp.eq.s32.totalorder %s11, 0
    %p94 = por %p92, %p93
    %p95 = scmp.ne.s32.totalorder %s87, %s89
    %p96 = scmp.eq.s32.totalorder %s16, 1
    %p97 = por %p95, %p96
    %p98 = scmp.ne.s32.totalorder %s89, %s90
    %p99 = scmp.eq.s32.totalorder %s16, 0
    %p100 = por %p98, %p99
    %p101 = scmp.ne.s32.totalorder %s89, %s90
    %p102 = scmp.eq.s32.totalorder %s17, 1
    %p103 = por %p101, %p102
    %p105 = scmp.ne.s32.totalorder %s90, %s104
    %p106 = scmp.eq.s32.totalorder %s17, 0
    %p107 = por %p105, %p106
    %s109 = sadd.s32 %s108, 1
    %p112 = scmp.eq.s32.totalorder %s11, 1
    %p113 = scmp.ne.s32.totalorder %s108, %s110
    %p114 = scmp.eq.s32.totalorder %s11, 0
    %p115 = por %p113, %p114
    %p116 = scmp.ne.s32.totalorder %s108, %s110
    %p117 = scmp.eq.s32.totalorder %s16, 1
    %p118 = por %p116, %p117
    %p119 = scmp.ne.s32.totalorder %s110, %s111
    %p120 = scmp.eq.s32.totalorder %s16, 0
    %p121 = por %p119, %p120
    %p122 = scmp.ne.s32.totalorder %s110, %s111
    %p123 = scmp.eq.s32.totalorder %s17, 1
    %p124 = por %p122, %p123
    %p126 = scmp.ne.s32.totalorder %s111, %s125
    %p127 = scmp.eq.s32.totalorder %s17, 0
    %p128 = por %p126, %p127
    %s129 = ssub.s32 %s11, %s18
    %p130 = scmp.eq.s32.totalorder %s129, 0
    %s132 = sadd.s32 %s131, 1
    %s133 = scalar_select %p130, %s131, %s132
    %p136 = pneg %p130
    %p137 = scmp.eq.s32.totalorder %s11, 1
    %p138 = por %p136, %p137
    %p139 = scmp.ne.s32.totalorder %s131, %s134
    %p140 = scmp.eq.s32.totalorder %s11, 0
    %p141 = por %p139, %p140
    %p142 = scmp.ne.s32.totalorder %s131, %s134
    %p143 = scmp.eq.s32.totalorder %s16, 1
    %p144 = por %p142, %p143
    %p145 = scmp.ne.s32.totalorder %s134, %s135
    %p146 = scmp.eq.s32.totalorder %s16, 0
    %p147 = por %p145, %p146
    %p148 = scmp.ne.s32.totalorder %s134, %s135
    %p149 = scmp.eq.s32.totalorder %s17, 1
    %p150 = por %p148, %p149
    %p152 = scmp.ne.s32.totalorder %s135, %s151
    %p153 = scmp.eq.s32.totalorder %s17, 0
    %p154 = por %p152, %p153
    %p155 = scmp.le.s32.totalorder 1, %s11
    %p156 = scmp.lt.s32.totalorder %s11, 3
    %p157 = pnand %p155, %p156
    %p158 = pneg %p157
    // Predicated region
    $region9: #{maniqa_forward.34} parent=5 // pred_check
      _
    $region10: #{maniqa_forward.34} parent=5 // pred_check_branch
      %160 = sbr.rel (%p157) target = $region12
    $region11: #{maniqa_forward.34} parent=5 // pred_region
      %s161 = ssub.s32 %s11, 1
      // Predicated region
      $region13: #{maniqa_forward.34} parent=11 // pred_check
        %p162 = pneg %p58
      $region14: #{maniqa_forward.34} parent=11 // pred_check_branch
        %164 = sbr.rel (%p162) target = $region16
      $region15: #{maniqa_forward.34} parent=11 // pred_region
        _
      $region16: #{maniqa_forward.34} parent=11 // pred_fallthru
        _
      // Predicated region
      $region17: #{maniqa_forward.34} parent=11 // pred_check
        %p165 = pneg %p79
      $region18: #{maniqa_forward.34} parent=11 // pred_check_branch
        %167 = sbr.rel (%p165) target = $region20
      $region19: #{maniqa_forward.34} parent=11 // pred_region
        _
      $region20: #{maniqa_forward.34} parent=11 // pred_fallthru
        _
      // Predicated region
      $region21: #{maniqa_forward.34} parent=11 // pred_check
        %p168 = pneg %p100
      $region22: #{maniqa_forward.34} parent=11 // pred_check_branch
        %170 = sbr.rel (%p168) target = $region24
      $region23: #{maniqa_forward.34} parent=11 // pred_region
        _
      $region24: #{maniqa_forward.34} parent=11 // pred_fallthru
        _
      // Predicated region
      $region25: #{maniqa_forward.34} parent=11 // pred_check
        %p171 = pneg %p121
      $region26: #{maniqa_forward.34} parent=11 // pred_check_branch
        %173 = sbr.rel (%p171) target = $region28
      $region27: #{maniqa_forward.34} parent=11 // pred_region
        _
      $region28: #{maniqa_forward.34} parent=11 // pred_fallthru
        _
    $region12: #{maniqa_forward.34} parent=5 // pred_fallthru
      _
    %p174 = scmp.lt.s32.totalorder %s11, 2
    // Predicated region
    $region29: #{maniqa_forward.34} parent=5 // pred_check
      %p175 = pneg %p174
    $region30: #{maniqa_forward.34} parent=5 // pred_check_branch
      %177 = sbr.rel (%p175) target = $region32
    $region31: #{maniqa_forward.34} parent=5 // pred_region
      // Predicated region
      $region33: #{maniqa_forward.34} parent=31 // pred_check
        %p178 = pneg %p31
      $region34: #{maniqa_forward.34} parent=31 // pred_check_branch
        %180 = sbr.rel (%p178) target = $region36
      $region35: #{maniqa_forward.34} parent=31 // pred_region
        %p181 = scmp.lt.s32.totalorder %s11, 1
        %s182 = scalar_select %p181, %s11, 1
        %s183 = smul.addr %s182, 9
        %s184 = smul.addr %s183, 8
        %s185 = scalar_lea.vmem %s0, %s184
      $region36: #{maniqa_forward.34} parent=31 // pred_fallthru
        _
    $region32: #{maniqa_forward.34} parent=5 // pred_fallthru
      _
    %p186 = scmp.le.s32.totalorder 1, %s11
    %p187 = scmp.lt.s32.totalorder %s11, 3
    %p188 = pnand %p186, %p187
    %p189 = pneg %p188
    // Predicated region
    $region37: #{maniqa_forward.34} parent=5 // pred_check
      _
    $region38: #{maniqa_forward.34} parent=5 // pred_check_branch
      %191 = sbr.rel (%p188) target = $region40
    $region39: #{maniqa_forward.34} parent=5 // pred_region
      %s192 = ssub.s32 %s11, 1
      %p193 = scmp.lt.s32.totalorder %s16, 1
      %s194 = scalar_select %p193, %s16, 1
      %s195 = smul.addr %s194, 9
      %s196 = smul.addr %s195, 8
      %s197 = scalar_lea.vmem %s0, %s196
      %p198 = pneg %p37
      %p199 = pneg %p34
      %p200 = pneg %p58
      %p201 = pneg %p55
      %p202 = pneg %p79
      %p203 = pneg %p76
      %p204 = pneg %p100
      %p205 = pneg %p97
      %p206 = pneg %p121
      %p207 = pneg %p118
      %p208 = pneg %p147
      %p209 = pneg %p144
      %p210 = scmp.lt.s32.totalorder %s16, 1
      %s211 = scalar_select %p210, %s16, 1
      %s212 = scalar_lea.vmem %s5, %s211
      %p213 = scmp.lt.s32.totalorder %s16, 1
      %s214 = scalar_select %p213, %s16, 1
      %s215 = smul.addr %s214, 9
      %s216 = smul.addr %s215, 8
      %s217 = scalar_lea.vmem %s0, %s216
      %p218 = scmp.lt.s32.totalorder %s16, 1
      %s219 = scalar_select %p218, %s16, 1
      %s220 = scalar_lea.vmem %s5, %s219
      %v221 = vld [vmem:[%s217] sm:$0xff]
      %v222 = vld [vmem:[%s217 + $0x8] sm:$0xff]
      %v223 = vld [vmem:[%s217 + $0x10] sm:$0xff]
      %v224 = vld [vmem:[%s217 + $0x18] sm:$0xff]
      %v225 = vld [vmem:[%s217 + $0x20] sm:$0xff]
      %v226 = vld [vmem:[%s217 + $0x28] sm:$0xff]
      %v227 = vld [vmem:[%s217 + $0x30] sm:$0xff]
      %v228 = vld [vmem:[%s217 + $0x38] sm:$0xff]
      %v229 = vld [vmem:[%s217 + $0x40] sm:$0x1]
      %v230 = vld [vmem:[%s1] sm:$0xff]
      %v231 = vld [vmem:[%s1 + $0x8] sm:$0xff]
      %v232 = vld [vmem:[%s2] sm:$0x1]
      %v234 = vlaneseq
      %v235 = vshrl.u32 %v234, 7
      %v236 = vsub.s32 0, %v235
      %v237 = vrot.slane %v232, %v236
      %vm239 = vcmask 130048
      %v241 = vsel %vm239, %v221, 0
      %v244 = vsel %vm239, %v222, 0
      %v247 = vsel %vm239, %v223, 0
      %v250 = vsel %vm239, %v224, 0
      %v253 = vsel %vm239, %v225, 0
      %v256 = vsel %vm239, %v226, 0
      %v259 = vsel %vm239, %v227, 0
      %v262 = vsel %vm239, %v228, 0
      %v265 = vsel %vm239, %v229, 0
      %267 = vmatprep.subr.mxu0 0.0
      %268 = vmatpush1.msra.mxu0 %v230
      %269 = vmatprep.subr.mxu0 0.0
      %270 = vmatpush1.msra.mxu0 %v231
      %271 = vmatprep.subr.mxu0 0.0
      %272 = vmatpush1.msra.mxu0 0.0
      %273 = vmatprep.subr.mxu0 0.0
      %274 = vmatpush1.msra.mxu0 0.0
      %275 = vmatprep.subr.mxu0 0.0
      %276 = vmatpush1.msra.mxu0 0.0
      %277 = vmatprep.subr.mxu0 0.0
      %278 = vmatpush1.msra.mxu0 0.0
      %279 = vmatprep.subr.mxu0 0.0
      %280 = vmatpush1.msra.mxu0 0.0
      %281 = vmatprep.subr.mxu0 0.0
      %282 = vmatpush1.msra.mxu0 0.0
      %283 = vmatprep.subr.mxu0 0.0
      %284 = vmatpush1.msra.mxu0 0.0
      %285 = vmatprep.subr.mxu0 0.0
      %286 = vmatpush1.msra.mxu0 0.0
      %287 = vmatprep.subr.mxu0 0.0
      %288 = vmatpush1.msra.mxu0 0.0
      %289 = vmatprep.subr.mxu0 0.0
      %290 = vmatpush1.msra.mxu0 0.0
      %291 = vmatprep.subr.mxu0 0.0
      %292 = vmatpush1.msra.mxu0 0.0
      %293 = vmatprep.subr.mxu0 0.0
      %294 = vmatpush1.msra.mxu0 0.0
      %295 = vmatprep.subr.mxu0 0.0
      %296 = vmatpush1.msra.mxu0 0.0
      %297 = vmatprep.subr.mxu0 0.0
      %298 = vmatpush1.msra.mxu0 0.0
      %299 = vmatprep.subr.mxu0 0.0
      %300 = vmatpush1.msra.mxu0 0.0
      %301 = vmatprep.subr.mxu0 0.0
      %302 = vmatpush1.msra.mxu0 0.0
      %303 = vmatprep.subr.mxu0 0.0
      %304 = vmatpush1.msra.mxu0 0.0
      %305 = vmatprep.subr.mxu0 0.0
      %306 = vmatpush1.msra.mxu0 0.0
      %307 = vmatprep.subr.mxu0 0.0
      %308 = vmatpush1.msra.mxu0 0.0
      %309 = vmatprep.subr.mxu0 0.0
      %310 = vmatpush1.msra.mxu0 0.0
      %311 = vmatprep.subr.mxu0 0.0
      %312 = vmatpush1.msra.mxu0 0.0
      %313 = vmatprep.subr.mxu0 0.0
      %314 = vmatpush1.msra.mxu0 0.0
      %315 = vmatprep.subr.mxu0 0.0
      %316 = vmatpush1.msra.mxu0 0.0
      %317 = vmatprep.subr.mxu0 0.0
      %318 = vmatpush1.msra.mxu0 0.0
      %319 = vmatprep.subr.mxu0 0.0
      %320 = vmatpush1.msra.mxu0 0.0
      %321 = vmatprep.subr.mxu0 0.0
      %322 = vmatpush1.msra.mxu0 0.0
      %323 = vmatprep.subr.mxu0 0.0
      %324 = vmatpush1.msra.mxu0 0.0
      %325 = vmatprep.subr.mxu0 0.0
      %326 = vmatpush1.msra.mxu0 0.0
      %327 = vmatprep.subr.mxu0 0.0
      %328 = vmatpush1.msra.mxu0 0.0
      %329 = vmatprep.subr.mxu0 0.0
      %330 = vmatpush1.msra.mxu0 0.0
      %331 = vmatprep.mubr.f32.mxu0 0.0
      %332 = vmatmul.mubr.f32.gmra.mrb[0].mxu0 %v241
      %v333 = vpop.f32.mrb[0].mxu0
      %v334 = vadd.f32 %v237, %v333
      %v335 = vpop.f32.mrb[0].mxu0
      %336 = vmatprep.mubr.f32.mxu0 0.0
      %337 = vmatmul.mubr.f32.gmra.mrb[0].mxu0 %v244
      %v338 = vpop.f32.mrb[0].mxu0
      %v339 = vadd.f32 %v237, %v338
      %v340 = vpop.f32.mrb[0].mxu0
      %341 = vmatprep.mubr.f32.mxu0 0.0
      %342 = vmatmul.mubr.f32.gmra.mrb[0].mxu0 %v247
      %v343 = vpop.f32.mrb[0].mxu0
      %v344 = vadd.f32 %v237, %v343
      %v345 = vpop.f32.mrb[0].mxu0
      %346 = vmatprep.mubr.f32.mxu0 0.0
      %347 = vmatmul.mubr.f32.gmra.mrb[0].mxu0 %v250
      %v348 = vpop.f32.mrb[0].mxu0
      %v349 = vadd.f32 %v237, %v348
      %v350 = vpop.f32.mrb[0].mxu0
      %351 = vmatprep.mubr.f32.mxu0 0.0
      %352 = vmatmul.mubr.f32.gmra.mrb[0].mxu0 %v253
      %v353 = vpop.f32.mrb[0].mxu0
      %v354 = vadd.f32 %v237, %v353
      %v355 = vpop.f32.mrb[0].mxu0
      %356 = vmatprep.mubr.f32.mxu0 0.0
      %357 = vmatmul.mubr.f32.gmra.mrb[0].mxu0 %v256
      %v358 = vpop.f32.mrb[0].mxu0
      %v359 = vadd.f32 %v237, %v358
      %v360 = vpop.f32.mrb[0].mxu0
      %361 = vmatprep.mubr.f32.mxu0 0.0
      %362 = vmatmul.mubr.f32.gmra.mrb[0].mxu0 %v259
      %v363 = vpop.f32.mrb[0].mxu0
      %v364 = vadd.f32 %v237, %v363
      %v365 = vpop.f32.mrb[0].mxu0
      %366 = vmatprep.mubr.f32.mxu0 0.0
      %367 = vmatmul.mubr.f32.gmra.mrb[0].mxu0 %v262
      %v368 = vpop.f32.mrb[0].mxu0
      %v369 = vadd.f32 %v237, %v368
      %v370 = vpop.f32.mrb[0].mxu0
      %371 = vmatprep.mubr.f32.mxu0 0.0
      %372 = vmatmul.mubr.f32.gmra.mrb[0].mxu0 %v265
      %v373 = vpop.f32.mrb[0].mxu0
      %v374 = vadd.f32 %v237, %v373
      %v375 = vpop.f32.mrb[0].mxu0
      %376 = vdwg.mxu0
      %v377 = vmax.f32 %v334, 0.0
      %v378 = vmax.f32 %v339, 0.0
      %v379 = vmax.f32 %v344, 0.0
      %v380 = vmax.f32 %v349, 0.0
      %v381 = vmax.f32 %v354, 0.0
      %v382 = vmax.f32 %v359, 0.0
      %v383 = vmax.f32 %v364, 0.0
      %v384 = vmax.f32 %v369, 0.0
      %v385 = vmax.f32 %v374, 0.0
      %v386 = vld [vmem:[%s3] sm:$0xff]
      %v387 = vld [vmem:[%s3 + $0x8] sm:$0xff]
      %v388 = vld [vmem:[%s3 + $0x10] sm:$0xff]
      %v389 = vld [vmem:[%s3 + $0x18] sm:$0xff]
      %v390 = vld [vmem:[%s4] sm:$0x1]
      %v392 = vlaneseq
      %v393 = vshrl.u32 %v392, 7
      %v394 = vsub.s32 0, %v393
      %v395 = vrot.slane %v390, %v394
      %vm397 = vcmask 261120
      %v399 = vsel %vm397, %v377, 0
      %v402 = vsel %vm397, %v378, 0
      %v405 = vsel %vm397, %v379, 0
      %v408 = vsel %vm397, %v380, 0
      %v411 = vsel %vm397, %v381, 0
      %v414 = vsel %vm397, %v382, 0
      %v417 = vsel %vm397, %v383, 0
      %v420 = vsel %vm397, %v384, 0
      %v423 = vsel %vm397, %v385, 0
      %425 = vmatprep.subr.mxu0 0.0
      %426 = vmatpush1.msra.mxu0 %v386
      %427 = vmatprep.subr.mxu0 0.0
      %428 = vmatpush1.msra.mxu0 %v387
      %429 = vmatprep.subr.mxu0 0.0
      %430 = vmatpush1.msra.mxu0 %v388
      %431 = vmatprep.subr.mxu0 0.0
      %432 = vmatpush1.msra.mxu0 %v389
      %433 = vmatprep.subr.mxu0 0.0
      %434 = vmatpush1.msra.mxu0 0.0
      %435 = vmatprep.subr.mxu0 0.0
      %436 = vmatpush1.msra.mxu0 0.0
      %437 = vmatprep.subr.mxu0 0.0
      %438 = vmatpush1.msra.mxu0 0.0
      %439 = vmatprep.subr.mxu0 0.0
      %440 = vmatpush1.msra.mxu0 0.0
      %441 = vmatprep.subr.mxu0 0.0
      %442 = vmatpush1.msra.mxu0 0.0
      %443 = vmatprep.subr.mxu0 0.0
      %444 = vmatpush1.msra.mxu0 0.0
      %445 = vmatprep.subr.mxu0 0.0
      %446 = vmatpush1.msra.mxu0 0.0
      %447 = vmatprep.subr.mxu0 0.0
      %448 = vmatpush1.msra.mxu0 0.0
      %449 = vmatprep.subr.mxu0 0.0
      %450 = vmatpush1.msra.mxu0 0.0
      %451 = vmatprep.subr.mxu0 0.0
      %452 = vmatpush1.msra.mxu0 0.0
      %453 = vmatprep.subr.mxu0 0.0
      %454 = vmatpush1.msra.mxu0 0.0
      %455 = vmatprep.subr.mxu0 0.0
      %456 = vmatpush1.msra.mxu0 0.0
      %457 = vmatprep.subr.mxu0 0.0
      %458 = vmatpush1.msra.mxu0 0.0
      %459 = vmatprep.subr.mxu0 0.0
      %460 = vmatpush1.msra.mxu0 0.0
      %461 = vmatprep.subr.mxu0 0.0
      %462 = vmatpush1.msra.mxu0 0.0
      %463 = vmatprep.subr.mxu0 0.0
      %464 = vmatpush1.msra.mxu0 0.0
      %465 = vmatprep.subr.mxu0 0.0
      %466 = vmatpush1.msra.mxu0 0.0
      %467 = vmatprep.subr.mxu0 0.0
      %468 = vmatpush1.msra.mxu0 0.0
      %469 = vmatprep.subr.mxu0 0.0
      %470 = vmatpush1.msra.mxu0 0.0
      %471 = vmatprep.subr.mxu0 0.0
      %472 = vmatpush1.msra.mxu0 0.0
      %473 = vmatprep.subr.mxu0 0.0
      %474 = vmatpush1.msra.mxu0 0.0
      %475 = vmatprep.subr.mxu0 0.0
      %476 = vmatpush1.msra.mxu0 0.0
      %477 = vmatprep.subr.mxu0 0.0
      %478 = vmatpush1.msra.mxu0 0.0
      %479 = vmatprep.subr.mxu0 0.0
      %480 = vmatpush1.msra.mxu0 0.0
      %481 = vmatprep.subr.mxu0 0.0
      %482 = vmatpush1.msra.mxu0 0.0
      %483 = vmatprep.subr.mxu0 0.0
      %484 = vmatpush1.msra.mxu0 0.0
      %485 = vmatprep.subr.mxu0 0.0
      %486 = vmatpush1.msra.mxu0 0.0
      %487 = vmatprep.subr.mxu0 0.0
      %488 = vmatpush1.msra.mxu0 0.0
      %489 = vmatprep.mubr.f32.mxu0 0.0
      %490 = vmatmul.mubr.f32.gmra.mrb[0].mxu0 %v399
      %v491 = vpop.f32.mrb[0].mxu0
      %v492 = vadd.f32 %v395, %v491
      %v493 = vpop.f32.mrb[0].mxu0
      %494 = vmatprep.mubr.f32.mxu0 0.0
      %495 = vmatmul.mubr.f32.gmra.mrb[0].mxu0 %v402
      %v496 = vpop.f32.mrb[0].mxu0
      %v497 = vadd.f32 %v395, %v496
      %v498 = vpop.f32.mrb[0].mxu0
      %499 = vmatprep.mubr.f32.mxu0 0.0
      %500 = vmatmul.mubr.f32.gmra.mrb[0].mxu0 %v405
      %v501 = vpop.f32.mrb[0].mxu0
      %v502 = vadd.f32 %v395, %v501
      %v503 = vpop.f32.mrb[0].mxu0
      %504 = vmatprep.mubr.f32.mxu0 0.0
      %505 = vmatmul.mubr.f32.gmra.mrb[0].mxu0 %v408
      %v506 = vpop.f32.mrb[0].mxu0
      %v507 = vadd.f32 %v395, %v506
      %v508 = vpop.f32.mrb[0].mxu0
      %509 = vmatprep.mubr.f32.mxu0 0.0
      %510 = vmatmul.mubr.f32.gmra.mrb[0].mxu0 %v411
      %v511 = vpop.f32.mrb[0].mxu0
      %v512 = vadd.f32 %v395, %v511
      %v513 = vpop.f32.mrb[0].mxu0
      %514 = vmatprep.mubr.f32.mxu0 0.0
      %515 = vmatmul.mubr.f32.gmra.mrb[0].mxu0 %v414
      %v516 = vpop.f32.mrb[0].mxu0
      %v517 = vadd.f32 %v395, %v516
      %v518 = vpop.f32.mrb[0].mxu0
      %519 = vmatprep.mubr.f32.mxu0 0.0
      %520 = vmatmul.mubr.f32.gmra.mrb[0].mxu0 %v417
      %v521 = vpop.f32.mrb[0].mxu0
      %v522 = vadd.f32 %v395, %v521
      %v523 = vpop.f32.mrb[0].mxu0
      %524 = vmatprep.mubr.f32.mxu0 0.0
      %525 = vmatmul.mubr.f32.gmra.mrb[0].mxu0 %v420
      %v526 = vpop.f32.mrb[0].mxu0
      %v527 = vadd.f32 %v395, %v526
      %v528 = vpop.f32.mrb[0].mxu0
      %529 = vmatprep.mubr.f32.mxu0 0.0
      %530 = vmatmul.mubr.f32.gmra.mrb[0].mxu0 %v423
      %v531 = vpop.f32.mrb[0].mxu0
      %v532 = vadd.f32 %v395, %v531
      %v533 = vpop.f32.mrb[0].mxu0
      %534 = vdwg.mxu0
      %v535 = vmax.f32 %v492, 0.0
      %v536 = vmax.f32 %v497, 0.0
      %v537 = vmax.f32 %v502, 0.0
      %v538 = vmax.f32 %v507, 0.0
      %v539 = vmax.f32 %v512, 0.0
      %v540 = vmax.f32 %v517, 0.0
      %v541 = vmax.f32 %v522, 0.0
      %v542 = vmax.f32 %v527, 0.0
      %v543 = vmax.f32 %v532, 0.0
      %v544 = vxor.u32 %v492, 2147483648
      %v545 = vxor.u32 %v497, 2147483648
      %v546 = vxor.u32 %v502, 2147483648
      %v547 = vxor.u32 %v507, 2147483648
      %v548 = vxor.u32 %v512, 2147483648
      %v549 = vxor.u32 %v517, 2147483648
      %v550 = vxor.u32 %v522, 2147483648
      %v551 = vxor.u32 %v527, 2147483648
      %v552 = vxor.u32 %v532, 2147483648
      %v553 = vmul.f32 %v544, 1.442695
      %v554 = vpow.pop %v553
      %v555 = vmul.f32 %v545, 1.442695
      %v556 = vpow.pop %v555
      %v557 = vmul.f32 %v546, 1.442695
      %v558 = vpow.pop %v557
      %v559 = vmul.f32 %v547, 1.442695
      %v560 = vpow.pop %v559
      %v561 = vmul.f32 %v548, 1.442695
      %v562 = vpow.pop %v561
      %v563 = vmul.f32 %v549, 1.442695
      %v564 = vpow.pop %v563
      %v565 = vmul.f32 %v550, 1.442695
      %v566 = vpow.pop %v565
      %v567 = vmul.f32 %v551, 1.442695
      %v568 = vpow.pop %v567
      %v569 = vmul.f32 %v552, 1.442695
      %v570 = vpow.pop %v569
      %v571 = vadd.f32 %v554, 1.0
      %v572 = vadd.f32 %v556, 1.0
      %v573 = vadd.f32 %v558, 1.0
      %v574 = vadd.f32 %v560, 1.0
      %v575 = vadd.f32 %v562, 1.0
      %v576 = vadd.f32 %v564, 1.0
      %v577 = vadd.f32 %v566, 1.0
      %v578 = vadd.f32 %v568, 1.0
      %v579 = vadd.f32 %v570, 1.0
      %v580 = vrcp.pop %v571
      %v581 = vmul.f32 1.0, %v580
      %v582 = vrcp.pop %v572
      %v583 = vmul.f32 1.0, %v582
      %v584 = vrcp.pop %v573
      %v585 = vmul.f32 1.0, %v584
      %v586 = vrcp.pop %v574
      %v587 = vmul.f32 1.0, %v586
      %v588 = vrcp.pop %v575
      %v589 = vmul.f32 1.0, %v588
      %v590 = vrcp.pop %v576
      %v591 = vmul.f32 1.0, %v590
      %v592 = vrcp.pop %v577
      %v593 = vmul.f32 1.0, %v592
      %v594 = vrcp.pop %v578
      %v595 = vmul.f32 1.0, %v594
      %v596 = vrcp.pop %v579
      %v597 = vmul.f32 1.0, %v596
      %607 = vrot.lane.b32.xlu0 %v581, 127
      %v608 = vpop.permute.xlu0 %607
      %609 = vrot.lane.b32.xlu0 %v583, 127
      %v610 = vpop.permute.xlu0 %609
      %611 = vrot.lane.b32.xlu0 %v585, 127
      %v612 = vpop.permute.xlu0 %611
      %613 = vrot.lane.b32.xlu0 %v587, 127
      %v614 = vpop.permute.xlu0 %613
      %615 = vrot.lane.b32.xlu0 %v589, 127
      %v616 = vpop.permute.xlu0 %615
      %617 = vrot.lane.b32.xlu0 %v591, 127
      %v618 = vpop.permute.xlu0 %617
      %619 = vrot.lane.b32.xlu0 %v593, 127
      %v620 = vpop.permute.xlu0 %619
      %621 = vrot.lane.b32.xlu0 %v595, 127
      %v622 = vpop.permute.xlu0 %621
      %623 = vrot.lane.b32.xlu0 %v597, 127
      %v624 = vpop.permute.xlu0 %623
      %v634 = vmul.f32 %v535, %v608
      %v635 = vmul.f32 %v536, %v610
      %v636 = vmul.f32 %v537, %v612
      %v637 = vmul.f32 %v538, %v614
      %v638 = vmul.f32 %v539, %v616
      %v639 = vmul.f32 %v540, %v618
      %v640 = vmul.f32 %v541, %v620
      %v641 = vmul.f32 %v542, %v622
      %v642 = vmul.f32 %v543, %v624
      %vm643 = vcmask 7168
      %v644 = vsel %vm643, %v634, 0.0
      %v645 = vsel %vm643, %v635, 0.0
      %v646 = vadd.f32 %v644, %v645
      %v647 = vsel %vm643, %v636, 0.0
      %v648 = vadd.f32 %v646, %v647
      %v649 = vsel %vm643, %v637, 0.0
      %v650 = vadd.f32 %v648, %v649
      %v651 = vsel %vm643, %v638, 0.0
      %v652 = vadd.f32 %v650, %v651
      %v653 = vsel %vm643, %v639, 0.0
      %v654 = vadd.f32 %v652, %v653
      %v655 = vsel %vm643, %v640, 0.0
      %v656 = vadd.f32 %v654, %v655
      %v657 = vsel %vm643, %v641, 0.0
      %v658 = vadd.f32 %v656, %v657
      %vm659 = vcmask 0
      %v660 = vsel %vm659, %v642, 0.0
      %v661 = vadd.f32 %v658, %v660
      %v662 = vrot.slane %v661, 4
      %v663 = vadd.f32 %v661, %v662
      %v664 = vrot.slane %v663, 2
      %v665 = vadd.f32 %v663, %v664
      %v666 = vrot.slane %v665, 1
      %v667 = vadd.f32 %v665, %v666
      %vm668 = vcmask 15368
      %v669 = vsel %vm668, %v581, 0.0
      %v670 = vsel %vm668, %v583, 0.0
      %v671 = vadd.f32 %v669, %v670
      %v672 = vsel %vm668, %v585, 0.0
      %v673 = vadd.f32 %v671, %v672
      %v674 = vsel %vm668, %v587, 0.0
      %v675 = vadd.f32 %v673, %v674
      %v676 = vsel %vm668, %v589, 0.0
      %v677 = vadd.f32 %v675, %v676
      %v678 = vsel %vm668, %v591, 0.0
      %v679 = vadd.f32 %v677, %v678
      %v680 = vsel %vm668, %v593, 0.0
      %v681 = vadd.f32 %v679, %v680
      %v682 = vsel %vm668, %v595, 0.0
      %v683 = vadd.f32 %v681, %v682
      %vm684 = vcmask 8200
      %v685 = vsel %vm684, %v597, 0.0
      %v686 = vadd.f32 %v683, %v685
      %v687 = vrot.slane %v686, 4
      %v688 = vadd.f32 %v686, %v687
      %v689 = vrot.slane %v688, 2
      %v690 = vadd.f32 %v688, %v689
      %v691 = vrot.slane %v690, 1
      %v692 = vadd.f32 %v690, %v691
      %694 = vrot.lane.b32.xlu0 %v692, 127
      %v695 = vpop.permute.xlu0 %694
      %v697 = vrcp.pop %v695
      %v698 = vmul.f32 %v667, %v697
      %699 = vst.msk [vmem:[%s220] sm:$0x1] %vm659, %v698
      %p700 = scmp.lt.s32.totalorder %s16, 1
      %s701 = scalar_select %p700, %s16, 1
      %s702 = scalar_lea.vmem %s5, %s701
      // Predicated region
      $region41: #{maniqa_forward.34} parent=39 // pred_check
        %p703 = pneg %p144
      $region42: #{maniqa_forward.34} parent=39 // pred_check_branch
        %705 = sbr.rel (%p703) target = $region44
      $region43: #{maniqa_forward.34} parent=39 // pred_region
        _
      $region44: #{maniqa_forward.34} parent=39 // pred_fallthru
        _
    $region40: #{maniqa_forward.34} parent=5 // pred_fallthru
      _
    %p706 = scmp.le.s32.totalorder 2, %s11
    // Predicated region
    $region45: #{maniqa_forward.34} parent=5 // pred_check
      %p707 = pneg %p706
    $region46: #{maniqa_forward.34} parent=5 // pred_check_branch
      %709 = sbr.rel (%p707) target = $region48
    $region47: #{maniqa_forward.34} parent=5 // pred_region
      %s710 = ssub.s32 %s11, 2
      // Predicated region
      $region49: #{maniqa_forward.34} parent=47 // pred_check
        %p711 = pneg %p150
      $region50: #{maniqa_forward.34} parent=47 // pred_check_branch
        %713 = sbr.rel (%p711) target = $region52
      $region51: #{maniqa_forward.34} parent=47 // pred_region
        %p714 = scmp.lt.s32.totalorder %s17, 1
        %s715 = scalar_select %p714, %s17, 1
        %s716 = scalar_lea.vmem %s5, %s715
      $region52: #{maniqa_forward.34} parent=47 // pred_fallthru
        _
    $region48: #{maniqa_forward.34} parent=5 // pred_fallthru
      _
  $region6: #{maniqa_forward.34} parent=0 // loop_footer
    %s15 = sadd.s32 1, %s11
  $region7: #{maniqa_forward.34} parent=0 // loop_footer_branch
    %10 = sbr.rel target = $region3
  $region8: #{maniqa_forward.34} parent=0 // loop_exit
    _

// kernel: maniqa_forward.35
$region0: #{maniqa_forward.35}
  #allocation0 [shape = 'u32[]', space=smem, size = 0x4, offset = 0x4, fixed_abs, tag = 'smem constant byte address 0x4 - core index']
  #allocation1 [shape = 'u32[144,128]{1,0:T(1,128)}', space=vmem, size = 0x12000, scoped, tag = 'internal scratch']
  #allocation2 [shape = 'f32[1,1]{1,0:T(1,128)S(1)}', space=vmem, size = 0x200, scoped, tag = 'scoped memory for maniqa_forward.35']
  %s0 = inlined_call_operand.vmem [shape: f32[2,32], index: 0, kind: input, shape index: {}]
  %s1 = inlined_call_operand.vmem [shape: f32[32,1], index: 1, kind: input, shape index: {}]
  %s2 = inlined_call_operand.<no memory space> [shape: f32[1,1], index: 2, kind: input, shape index: {}]
  %s3 = inlined_call_operand.vmem [shape: f32[2,1], index: 3, kind: output, shape index: {}]
  %s4 = sld [smem:[#allocation0]]
  $region22: #{maniqa_forward.35} parent=0
    _
  %s6 = ssub.s32 1, %s4
  %s7 = scalar_select 0, %s6, %s4
  %v8 = vstv %s2
  %9 = vst [vmem:[#allocation2] sm:$0x1] %v8
  // Predicated region
  $region2: #{maniqa_forward.35} parent=0 // pred_check
    _
  $region3: #{maniqa_forward.35} parent=0 // pred_check_branch
    %11 = sbr.rel (0) target = $region5
  $region4: #{maniqa_forward.35} parent=0 // pred_region
    _
  $region5: #{maniqa_forward.35} parent=0 // pred_fallthru
    _
  // Predicated region
  $region6: #{maniqa_forward.35} parent=0 // pred_check
    _
  $region7: #{maniqa_forward.35} parent=0 // pred_check_branch
    %13 = sbr.rel (0) target = $region9
  $region8: #{maniqa_forward.35} parent=0 // pred_region
    _
  $region9: #{maniqa_forward.35} parent=0 // pred_fallthru
    _
  // Predicated region
  $region10: #{maniqa_forward.35} parent=0 // pred_check
    _
  $region11: #{maniqa_forward.35} parent=0 // pred_check_branch
    %15 = sbr.rel (0) target = $region13
  $region12: #{maniqa_forward.35} parent=0 // pred_region
    _
  $region13: #{maniqa_forward.35} parent=0 // pred_fallthru
    _
  %v16 = vld [vmem:[%s0] sm:$0x3]
  %v17 = vld [vmem:[%s1] sm:$0xff]
  %v18 = vld [vmem:[%s1 + $0x8] sm:$0xff]
  %v19 = vld [vmem:[%s1 + $0x10] sm:$0xff]
  %v20 = vld [vmem:[%s1 + $0x18] sm:$0xff]
  %v21 = vld [vmem:[#allocation2] sm:$0x1]
  %v23 = vlaneseq
  %v24 = vshrl.u32 %v23, 7
  %v25 = vsub.s32 0, %v24
  %v26 = vrot.slane %v21, %v25
  %vm28 = vcmask 261120
  %v30 = vsel %vm28, %v16, 0
  %32 = vmatprep.subr.mxu0 0.0
  %33 = vmatpush1.msra.mxu0 %v17
  %34 = vmatprep.subr.mxu0 0.0
  %35 = vmatpush1.msra.mxu0 %v18
  %36 = vmatprep.subr.mxu0 0.0
  %37 = vmatpush1.msra.mxu0 %v19
  %38 = vmatprep.subr.mxu0 0.0
  %39 = vmatpush1.msra.mxu0 %v20
  %40 = vmatprep.subr.mxu0 0.0
  %41 = vmatpush1.msra.mxu0 0.0
  %42 = vmatprep.subr.mxu0 0.0
  %43 = vmatpush1.msra.mxu0 0.0
  %44 = vmatprep.subr.mxu0 0.0
  %45 = vmatpush1.msra.mxu0 0.0
  %46 = vmatprep.subr.mxu0 0.0
  %47 = vmatpush1.msra.mxu0 0.0
  %48 = vmatprep.subr.mxu0 0.0
  %49 = vmatpush1.msra.mxu0 0.0
  %50 = vmatprep.subr.mxu0 0.0
  %51 = vmatpush1.msra.mxu0 0.0
  %52 = vmatprep.subr.mxu0 0.0
  %53 = vmatpush1.msra.mxu0 0.0
  %54 = vmatprep.subr.mxu0 0.0
  %55 = vmatpush1.msra.mxu0 0.0
  %56 = vmatprep.subr.mxu0 0.0
  %57 = vmatpush1.msra.mxu0 0.0
  %58 = vmatprep.subr.mxu0 0.0
  %59 = vmatpush1.msra.mxu0 0.0
  %60 = vmatprep.subr.mxu0 0.0
  %61 = vmatpush1.msra.mxu0 0.0
  %62 = vmatprep.subr.mxu0 0.0
  %63 = vmatpush1.msra.mxu0 0.0
  %64 = vmatprep.subr.mxu0 0.0
  %65 = vmatpush1.msra.mxu0 0.0
  %66 = vmatprep.subr.mxu0 0.0
  %67 = vmatpush1.msra.mxu0 0.0
  %68 = vmatprep.subr.mxu0 0.0
  %69 = vmatpush1.msra.mxu0 0.0
  %70 = vmatprep.subr.mxu0 0.0
  %71 = vmatpush1.msra.mxu0 0.0
  %72 = vmatprep.subr.mxu0 0.0
  %73 = vmatpush1.msra.mxu0 0.0
  %74 = vmatprep.subr.mxu0 0.0
  %75 = vmatpush1.msra.mxu0 0.0
  %76 = vmatprep.subr.mxu0 0.0
  %77 = vmatpush1.msra.mxu0 0.0
  %78 = vmatprep.subr.mxu0 0.0
  %79 = vmatpush1.msra.mxu0 0.0
  %80 = vmatprep.subr.mxu0 0.0
  %81 = vmatpush1.msra.mxu0 0.0
  %82 = vmatprep.subr.mxu0 0.0
  %83 = vmatpush1.msra.mxu0 0.0
  %84 = vmatprep.subr.mxu0 0.0
  %85 = vmatpush1.msra.mxu0 0.0
  %86 = vmatprep.subr.mxu0 0.0
  %87 = vmatpush1.msra.mxu0 0.0
  %88 = vmatprep.subr.mxu0 0.0
  %89 = vmatpush1.msra.mxu0 0.0
  %90 = vmatprep.subr.mxu0 0.0
  %91 = vmatpush1.msra.mxu0 0.0
  %92 = vmatprep.subr.mxu0 0.0
  %93 = vmatpush1.msra.mxu0 0.0
  %94 = vmatprep.subr.mxu0 0.0
  %95 = vmatpush1.msra.mxu0 0.0
  %96 = vmatprep.mubr.f32.mxu0 0.0
  %97 = vmatmul.mubr.f32.gmra.mrb[0].mxu0 %v30
  %v98 = vpop.f32.mrb[0].mxu0
  %v99 = vadd.f32 %v26, %v98
  %v100 = vpop.f32.mrb[0].mxu0
  %101 = vdwg.mxu0
  %vm102 = vcmask 1024
  %103 = vst.msk [vmem:[%s3] sm:$0x3] %vm102, %v99
  // Predicated region
  $region14: #{maniqa_forward.35} parent=0 // pred_check
    _
  $region15: #{maniqa_forward.35} parent=0 // pred_check_branch
    %105 = sbr.rel (0) target = $region17
  $region16: #{maniqa_forward.35} parent=0 // pred_region
    _
  $region17: #{maniqa_forward.35} parent=0 // pred_fallthru
    _
  // Predicated region
  $region18: #{maniqa_forward.35} parent=0 // pred_check
    _
  $region19: #{maniqa_forward.35} parent=0 // pred_check_branch
    %107 = sbr.rel (0) target = $region21
  $region20: #{maniqa_forward.35} parent=0 // pred_region
    _
  $region21: #{maniqa_forward.35} parent=0 // pred_fallthru
    _

</llo_original>
